<compile_context>
chip_gen: v5e
topology: v5e:2x2
jax: 0.10.0
libtpu: 0.0.40
codegen_flags: <defaults>
</compile_context>

<pallas_src>
import functools

import jax
import jax.numpy as jnp
from jax.experimental import pallas as pl
from jax.experimental.pallas import tpu as pltpu


def _round_up(x, m):
    return (x + m - 1) // m * m


def _pick_tk(K, max_tk=2560):
    """Largest multiple of 128 that divides K and is <= max_tk."""
    assert K % 128 == 0, K
    best = 128
    for d in range(128, min(K, max_tk) + 1, 128):
        if K % d == 0:
            best = d
    return best


# ----------------------------------------------------------------------------
# Pallas kernel: parity-batched matmul with fused BN-affine + ReLU epilogue,
# optionally followed by the fused 1x1 "final_layer" head (small matmul+bias).
# ----------------------------------------------------------------------------
def _deconv_kernel(fuse_head, *refs):
    if fuse_head:
        (a_ref, b_ref, scale_ref, shift_ref, wf_ref, bf_ref,
         heat_ref, acc_ref) = refs
    else:
        a_ref, b_ref, scale_ref, shift_ref, o_ref, acc_ref = refs

    @pl.when(pl.program_id(3) == 0)
    def _():
        acc_ref[...] = jnp.zeros_like(acc_ref)

    acc_ref[...] += jnp.dot(a_ref[...], b_ref[...],
                            preferred_element_type=jnp.float32)

    @pl.when(pl.program_id(3) == pl.num_programs(3) - 1)
    def _():
        y = jnp.maximum(acc_ref[...] * scale_ref[...] + shift_ref[...], 0.0)
        if fuse_head:
            h = jnp.dot(y.astype(wf_ref.dtype), wf_ref[...],
                        preferred_element_type=jnp.float32)
            heat_ref[...] = (h + bf_ref[...]).astype(heat_ref.dtype)
        else:
            o_ref[...] = y.astype(o_ref.dtype)


def parity_matmul(A, B, scale, shift, *, head=None, tm_max=256, tk_max=2560):
    """out[p] = relu((A[p] @ B[p]) * scale + shift)   (optionally @ Wf + bias).

    A: (P, M, K) bf16, B: (P, K, Cout) bf16, scale/shift: (Cout,) f32.
    head: None -> returns (P, M, Cout) bf16 activation;
          (Wf (Cout, Hc) bf16, bias (1, Hc) f32) -> returns (P, M, Hc) f32.
    """
    P, M, K = A.shape
    Cout = B.shape[2]
    assert B.shape == (P, K, Cout)
    tn = Cout                                   # full Cout per tile (256)
    tm = min(tm_max, _round_up(M, 8))
    Mp = _round_up(M, tm)
    if Mp != M:
        A = jnp.pad(A, ((0, 0), (0, Mp - M), (0, 0)))
    tk = _pick_tk(K, tk_max)
    grid = (P, Mp // tm, Cout // tn, K // tk)

    scale2 = scale.reshape(1, Cout).astype(jnp.float32)
    shift2 = shift.reshape(1, Cout).astype(jnp.float32)

    in_specs = [
        pl.BlockSpec((None, tm, tk), lambda p, i, j, k: (p, i, k)),
        pl.BlockSpec((None, tk, tn), lambda p, i, j, k: (p, k, j)),
        pl.BlockSpec((1, tn), lambda p, i, j, k: (0, j)),
        pl.BlockSpec((1, tn), lambda p, i, j, k: (0, j)),
    ]
    args = [A, B, scale2, shift2]
    if head is None:
        out_specs = pl.BlockSpec((None, tm, tn), lambda p, i, j, k: (p, i, j))
        out_shape = jax.ShapeDtypeStruct((P, Mp, Cout), jnp.bfloat16)
    else:
        wf_pad, bf_pad = head
        Hc = wf_pad.shape[1]
        assert wf_pad.shape == (Cout, Hc) and Cout == tn  # single j block
        in_specs += [
            pl.BlockSpec((Cout, Hc), lambda p, i, j, k: (0, 0)),
            pl.BlockSpec((1, Hc), lambda p, i, j, k: (0, 0)),
        ]
        args += [wf_pad, bf_pad]
        out_specs = pl.BlockSpec((None, tm, Hc), lambda p, i, j, k: (p, i, 0))
        out_shape = jax.ShapeDtypeStruct((P, Mp, Hc), jnp.float32)

    out = pl.pallas_call(
        functools.partial(_deconv_kernel, head is not None),
        out_shape=out_shape,
        grid_spec=pltpu.PrefetchScalarGridSpec(
            num_scalar_prefetch=0,
            grid=grid,
            in_specs=in_specs,
            out_specs=out_specs,
            scratch_shapes=[pltpu.VMEM((tm, tn), jnp.float32)],
        ),
        compiler_params=pltpu.CompilerParams(
            dimension_semantics=("parallel", "parallel", "parallel",
                                 "arbitrary")),
    )(*args)
    return out[:, :M, :]


# ----------------------------------------------------------------------------
# Glue: output-parity decomposition of ConvTranspose2d(k=4, s=2, p=1).
# For output pixel (2i+ph, 2j+pw):
#   out = sum_{dh,dw in {0,1}} xpad[i+ph+dh, j+pw+dw, :] @ W[:, :, 3-ph-2dh, 3-pw-2dw]
# where xpad is the input padded by 1 on each spatial side.
# ----------------------------------------------------------------------------
def _im2col_parity(x_nhwc):
    """(N,H,W,C) -> (4, N*H*W, 4*C); parity p = ph*2+pw, tap order (dh,dw,c)."""
    N, H, W, C = x_nhwc.shape
    xp = jnp.pad(x_nhwc, ((0, 0), (1, 1), (1, 1), (0, 0)))
    parities = []
    for ph in (0, 1):
        for pw in (0, 1):
            taps = [xp[:, ph + dh:ph + dh + H, pw + dw:pw + dw + W, :]
                    for dh in (0, 1) for dw in (0, 1)]
            a = jnp.stack(taps, axis=3)                 # (N, H, W, 4, C)
            parities.append(a.reshape(N * H * W, 4 * C))
    return jnp.stack(parities, axis=0)                  # (4, N*H*W, 4*C)


def _deconv_weight_parity(wt):
    """PyTorch ConvTranspose2d weight (Cin, Cout, 4, 4) -> (4, 4*Cin, Cout)."""
    wk = jnp.transpose(wt, (2, 3, 0, 1))                # (kh, kw, Cin, Cout)
    mats = []
    for ph in (0, 1):
        for pw in (0, 1):
            taps = [wk[3 - ph - 2 * dh, 3 - pw - 2 * dw]
                    for dh in (0, 1) for dw in (0, 1)]  # each (Cin, Cout)
            mats.append(jnp.concatenate(taps, axis=0))  # (4*Cin, Cout)
    return jnp.stack(mats, axis=0)                      # (4, 4*Cin, Cout)


def _parity_to_spatial(out_p, N, H, W, C):
    """(4, N*H*W, C) with p = ph*2+pw  ->  (N, 2H, 2W, C)."""
    y = out_p.reshape(2, 2, N, H, W, C)
    y = jnp.transpose(y, (2, 3, 0, 4, 1, 5))            # (N, H, 2, W, 2, C)
    return y.reshape(N, 2 * H, 2 * W, C)


def hourglass_forward(x_nchw, params):
    x = jnp.transpose(x_nchw, (0, 2, 3, 1)).astype(jnp.bfloat16)   # NHWC bf16

    wf, bf = params["final"]
    num_joints, cmid = wf.shape[0], wf.shape[1]
    hc = 128                                     # pad 17 joints to lane width
    wf_pad = jnp.zeros((cmid, hc), jnp.bfloat16).at[:, :num_joints].set(
        wf.reshape(num_joints, cmid).T.astype(jnp.bfloat16))
    bf_pad = jnp.zeros((1, hc), jnp.float32).at[0, :num_joints].set(bf)

    n_layers = len(params["deconv"])
    for li, (wt, scale, shift) in enumerate(params["deconv"]):
        N, H, W, _ = x.shape
        A = _im2col_parity(x)
        B = _deconv_weight_parity(wt).astype(jnp.bfloat16)
        if li == n_layers - 1:
            # last deconv: fuse the 1x1 final conv into the epilogue
            heat_p = parity_matmul(A, B, scale, shift, head=(wf_pad, bf_pad))
            heat = _parity_to_spatial(heat_p, N, H, W, hc)[..., :num_joints]
            return jnp.transpose(heat, (0, 3, 1, 2))                # NCHW
        out_p = parity_matmul(A, B, scale, shift)
        x = _parity_to_spatial(out_p, N, H, W, B.shape[2])
    raise AssertionError("Hourglass requires at least one deconv layer")


# ----------------------------------------------------------------------------
# Deterministic parameter init (shapes from Hourglass.__init__)
# ----------------------------------------------------------------------------
def init_params(key):
    num_joints = 17
    chans = [1280, 256, 256, 256]
    keys = jax.random.split(key, 20)
    ki = 0
    params = {"deconv": [], "final": None}
    eps = 1e-5
    for i in range(3):
        cin, cout = chans[i], chans[i + 1]
        wt = jax.random.normal(keys[ki], (cin, cout, 4, 4), jnp.float32) \
            * (1.0 / jnp.sqrt(cin * 16.0)); ki += 1
        gamma = 1.0 + 0.1 * jax.random.normal(keys[ki], (cout,), jnp.float32); ki += 1
        beta = 0.1 * jax.random.normal(keys[ki], (cout,), jnp.float32); ki += 1
        rmean = 0.1 * jax.random.normal(keys[ki], (cout,), jnp.float32); ki += 1
        rvar = jax.random.uniform(keys[ki], (cout,), jnp.float32, 0.5, 1.5); ki += 1
        scale = gamma / jnp.sqrt(rvar + eps)
        shift = beta - rmean * scale
        params["deconv"].append((wt, scale, shift))
    wf = jax.random.normal(keys[ki], (num_joints, 256, 1, 1), jnp.float32) \
        * (1.0 / jnp.sqrt(256.0)); ki += 1
    bf = 0.01 * jax.random.normal(keys[ki], (num_joints,), jnp.float32)
    params["final"] = (wf, bf)
    return params


# ----------------------------------------------------------------------------
# Pure-JAX reference (XLA convs, f32) for a correctness sanity check
# ----------------------------------------------------------------------------
def ref_forward(x_nchw, params):
    x = jnp.transpose(x_nchw, (0, 2, 3, 1))
    for (wt, scale, shift) in params["deconv"]:
        rhs = jnp.transpose(jnp.flip(wt, axis=(2, 3)), (2, 3, 0, 1))  # HWIO
        x = jax.lax.conv_general_dilated(
            x, rhs, window_strides=(1, 1), padding=((2, 2), (2, 2)),
            lhs_dilation=(2, 2),
            dimension_numbers=("NHWC", "HWIO", "NHWC"))
        x = jnp.maximum(x * scale + shift, 0.0)
    wf, bf = params["final"]
    x = jnp.einsum("nhwc,oc->nhwo", x, wf.reshape(17, 256)) + bf
    return jnp.transpose(x, (0, 3, 1, 2))


if __name__ == "__main__":
    key = jax.random.PRNGKey(0)
    pkey, xkey = jax.random.split(key)
    params = init_params(pkey)

    # small spatial size; channel count (1280) is fixed by the module
    x = jax.random.normal(xkey, (2, 1280, 4, 4), jnp.float32)

    fwd = jax.jit(hourglass_forward)
    out = jax.block_until_ready(fwd(x, params))
    assert out.shape == (2, 17, 32, 32), out.shape
    assert bool(jnp.isfinite(out).all())

    ref = jax.block_until_ready(jax.jit(ref_forward)(x, params))
    rel_err = float(jnp.linalg.norm(out.astype(jnp.float32) - ref)
                    / (jnp.linalg.norm(ref) + 1e-8))
    assert rel_err < 5e-2, f"relative error too large: {rel_err}"

    print("KERNEL_OK")
</pallas_src>

<mosaic_0001>
module attributes {stable_mosaic.version = 11 : i64} {
  func.func @_deconv_kernel(%arg0: i32, %arg1: i32, %arg2: i32, %arg3: i32, %arg4: memref<1x32x2560xbf16, #tpu.memory_space<vmem>>, %arg5: memref<1x2560x256xbf16, #tpu.memory_space<vmem>>, %arg6: memref<1x256xf32, #tpu.memory_space<vmem>>, %arg7: memref<1x256xf32, #tpu.memory_space<vmem>>, %arg8: memref<1x32x256xbf16, #tpu.memory_space<vmem>>, %arg9: memref<32x256xf32, #tpu.memory_space<vmem>>) attributes {dimension_semantics = [#tpu.dimension_semantics<parallel>, #tpu.dimension_semantics<parallel>, #tpu.dimension_semantics<parallel>, #tpu.dimension_semantics<arbitrary>], iteration_bounds = array<i64: 4, 1, 1, 2>, scalar_prefetch = 0 : i64, scratch_operands = 1 : i64, tpu.core_type = #tpu.core_type<tc>, window_params = [{transform_indices = @transform_0, window_bounds = array<i64: 1, 32, 2560>}, {transform_indices = @transform_1, window_bounds = array<i64: 1, 2560, 256>}, {transform_indices = @transform_2, window_bounds = array<i64: 1, 256>}, {transform_indices = @transform_3, window_bounds = array<i64: 1, 256>}, {transform_indices = @transform_4, window_bounds = array<i64: 1, 32, 256>}]} {
    %c0_i32 = arith.constant 0 : i32
    %0 = arith.cmpi eq, %arg3, %c0_i32 : i32
    %1 = arith.extui %0 : i1 to i32
    %c0_i32_0 = arith.constant 0 : i32
    %2 = arith.cmpi ne, %1, %c0_i32_0 : i32
    scf.if %2 {
      %cst_11 = arith.constant 0.000000e+00 : f32
      %14 = vector.broadcast %cst_11 : f32 to vector<32x256xf32>
      %c0_12 = arith.constant 0 : index
      %c0_13 = arith.constant 0 : index
      %15 = vector.load %arg9[%c0_12, %c0_13] : memref<32x256xf32, #tpu.memory_space<vmem>>, vector<32x256xf32>
      tpu.vector_store %arg9[%c0_12, %c0_13], %14 {strides = array<i32>} : memref<32x256xf32, #tpu.memory_space<vmem>>, vector<32x256xf32>,
    } else {
    }
    %c0 = arith.constant 0 : index
    %c0_1 = arith.constant 0 : index
    %3 = vector.load %arg9[%c0, %c0_1] : memref<32x256xf32, #tpu.memory_space<vmem>>, vector<32x256xf32>
    %c0_2 = arith.constant 0 : index
    %c0_3 = arith.constant 0 : index
    %c0_4 = arith.constant 0 : index
    %4 = vector.load %arg4[%c0_2, %c0_3, %c0_4] : memref<1x32x2560xbf16, #tpu.memory_space<vmem>>, vector<1x32x2560xbf16>
    %5 = vector.shape_cast %4 : vector<1x32x2560xbf16> to vector<32x2560xbf16>
    %c0_5 = arith.constant 0 : index
    %c0_6 = arith.constant 0 : index
    %c0_7 = arith.constant 0 : index
    %6 = vector.load %arg5[%c0_5, %c0_6, %c0_7] : memref<1x2560x256xbf16, #tpu.memory_space<vmem>>, vector<1x2560x256xbf16>
    %7 = vector.shape_cast %6 : vector<1x2560x256xbf16> to vector<2560x256xbf16>
    %cst = arith.constant dense<0.000000e+00> : vector<32x256xf32>
    %8 = tpu.matmul %5, %7, %cst {dimension_numbers = #tpu.dot_dimension_numbers<[1], [0], [0], [1], [0, 0, 1, 1], [], []>} : vector<32x2560xbf16>, vector<2560x256xbf16>, vector<32x256xf32> -> vector<32x256xf32>
    %9 = arith.addf %3, %8 : vector<32x256xf32>
    %c0_8 = arith.constant 0 : index
    %c0_9 = arith.constant 0 : index
    %10 = vector.load %arg9[%c0_8, %c0_9] : memref<32x256xf32, #tpu.memory_space<vmem>>, vector<32x256xf32>
    tpu.vector_store %arg9[%c0_8, %c0_9], %9 {strides = array<i32>} : memref<32x256xf32, #tpu.memory_space<vmem>>, vector<32x256xf32>,
    %c1_i32 = arith.constant 1 : i32
    %11 = arith.cmpi eq, %arg3, %c1_i32 : i32
    %12 = arith.extui %11 : i1 to i32
    %c0_i32_10 = arith.constant 0 : i32
    %13 = arith.cmpi ne, %12, %c0_i32_10 : i32
    scf.if %13 {
      %c0_11 = arith.constant 0 : index
      %c0_12 = arith.constant 0 : index
      %14 = vector.load %arg9[%c0_11, %c0_12] : memref<32x256xf32, #tpu.memory_space<vmem>>, vector<32x256xf32>
      %c0_13 = arith.constant 0 : index
      %c0_14 = arith.constant 0 : index
      %15 = vector.load %arg6[%c0_13, %c0_14] : memref<1x256xf32, #tpu.memory_space<vmem>>, vector<1x256xf32>
      %16 = vector.broadcast %15 : vector<1x256xf32> to vector<32x256xf32>
      %17 = arith.mulf %14, %16 : vector<32x256xf32>
      %c0_15 = arith.constant 0 : index
      %c0_16 = arith.constant 0 : index
      %18 = vector.load %arg7[%c0_15, %c0_16] : memref<1x256xf32, #tpu.memory_space<vmem>>, vector<1x256xf32>
      %19 = vector.broadcast %18 : vector<1x256xf32> to vector<32x256xf32>
      %20 = arith.addf %17, %19 : vector<32x256xf32>
      %cst_17 = arith.constant 0.000000e+00 : f32
      %21 = vector.broadcast %cst_17 : f32 to vector<32x256xf32>
      %22 = arith.maximumf %20, %21 : vector<32x256xf32>
      %23 = arith.truncf %22 : vector<32x256xf32> to vector<32x256xbf16>
      %c0_18 = arith.constant 0 : index
      %c0_19 = arith.constant 0 : index
      %c0_20 = arith.constant 0 : index
      %24 = vector.load %arg8[%c0_18, %c0_19, %c0_20] : memref<1x32x256xbf16, #tpu.memory_space<vmem>>, vector<1x32x256xbf16>
      %25 = vector.shape_cast %24 : vector<1x32x256xbf16> to vector<32x256xbf16>
      %26 = vector.shape_cast %23 : vector<32x256xbf16> to vector<1x32x256xbf16>
      tpu.vector_store %arg8[%c0_18, %c0_19, %c0_20], %26 {strides = array<i32>} : memref<1x32x256xbf16, #tpu.memory_space<vmem>>, vector<1x32x256xbf16>,
    } else {
    }
    return
  }
  func.func @transform_0(%arg0: i32, %arg1: i32, %arg2: i32, %arg3: i32) -> (i32, i32, i32) {
    %c0_i32 = arith.constant 0 : i32
    return %arg0, %arg1, %arg3 : i32, i32, i32
  }
  func.func @transform_1(%arg0: i32, %arg1: i32, %arg2: i32, %arg3: i32) -> (i32, i32, i32) {
    %c0_i32 = arith.constant 0 : i32
    return %arg0, %arg3, %arg2 : i32, i32, i32
  }
  func.func @transform_2(%arg0: i32, %arg1: i32, %arg2: i32, %arg3: i32) -> (i32, i32) {
    %c0_i32 = arith.constant 0 : i32
    %c0_i32_0 = arith.constant 0 : i32
    return %c0_i32, %arg2 : i32, i32
  }
  func.func @transform_3(%arg0: i32, %arg1: i32, %arg2: i32, %arg3: i32) -> (i32, i32) {
    %c0_i32 = arith.constant 0 : i32
    %c0_i32_0 = arith.constant 0 : i32
    return %c0_i32, %arg2 : i32, i32
  }
  func.func @transform_4(%arg0: i32, %arg1: i32, %arg2: i32, %arg3: i32) -> (i32, i32, i32) {
    %c0_i32 = arith.constant 0 : i32
    return %arg0, %arg1, %arg2 : i32, i32, i32
  }
}

module attributes {stable_mosaic.version = 11 : i64} {
  func.func @_deconv_kernel(%arg0: i32, %arg1: i32, %arg2: i32, %arg3: i32, %arg4: memref<1x128x1024xbf16, #tpu.memory_space<vmem>>, %arg5: memref<1x1024x256xbf16, #tpu.memory_space<vmem>>, %arg6: memref<1x256xf32, #tpu.memory_space<vmem>>, %arg7: memref<1x256xf32, #tpu.memory_space<vmem>>, %arg8: memref<1x128x256xbf16, #tpu.memory_space<vmem>>, %arg9: memref<128x256xf32, #tpu.memory_space<vmem>>) attributes {dimension_semantics = [#tpu.dimension_semantics<parallel>, #tpu.dimension_semantics<parallel>, #tpu.dimension_semantics<parallel>, #tpu.dimension_semantics<arbitrary>], iteration_bounds = array<i64: 4, 1, 1, 1>, scalar_prefetch = 0 : i64, scratch_operands = 1 : i64, tpu.core_type = #tpu.core_type<tc>, window_params = [{transform_indices = @transform_0, window_bounds = array<i64: 1, 128, 1024>}, {transform_indices = @transform_1, window_bounds = array<i64: 1, 1024, 256>}, {transform_indices = @transform_2, window_bounds = array<i64: 1, 256>}, {transform_indices = @transform_3, window_bounds = array<i64: 1, 256>}, {transform_indices = @transform_4, window_bounds = array<i64: 1, 128, 256>}]} {
    %c0_i32 = arith.constant 0 : i32
    %0 = arith.cmpi eq, %arg3, %c0_i32 : i32
    %1 = arith.extui %0 : i1 to i32
    %c0_i32_0 = arith.constant 0 : i32
    %2 = arith.cmpi ne, %1, %c0_i32_0 : i32
    scf.if %2 {
      %cst_12 = arith.constant 0.000000e+00 : f32
      %14 = vector.broadcast %cst_12 : f32 to vector<128x256xf32>
      %c0_13 = arith.constant 0 : index
      %c0_14 = arith.constant 0 : index
      %15 = vector.load %arg9[%c0_13, %c0_14] : memref<128x256xf32, #tpu.memory_space<vmem>>, vector<128x256xf32>
      tpu.vector_store %arg9[%c0_13, %c0_14], %14 {strides = array<i32>} : memref<128x256xf32, #tpu.memory_space<vmem>>, vector<128x256xf32>,
    } else {
    }
    %c0 = arith.constant 0 : index
    %c0_1 = arith.constant 0 : index
    %3 = vector.load %arg9[%c0, %c0_1] : memref<128x256xf32, #tpu.memory_space<vmem>>, vector<128x256xf32>
    %c0_2 = arith.constant 0 : index
    %c0_3 = arith.constant 0 : index
    %c0_4 = arith.constant 0 : index
    %4 = vector.load %arg4[%c0_2, %c0_3, %c0_4] : memref<1x128x1024xbf16, #tpu.memory_space<vmem>>, vector<1x128x1024xbf16>
    %5 = vector.shape_cast %4 : vector<1x128x1024xbf16> to vector<128x1024xbf16>
    %c0_5 = arith.constant 0 : index
    %c0_6 = arith.constant 0 : index
    %c0_7 = arith.constant 0 : index
    %6 = vector.load %arg5[%c0_5, %c0_6, %c0_7] : memref<1x1024x256xbf16, #tpu.memory_space<vmem>>, vector<1x1024x256xbf16>
    %7 = vector.shape_cast %6 : vector<1x1024x256xbf16> to vector<1024x256xbf16>
    %cst = arith.constant dense<0.000000e+00> : vector<128x256xf32>
    %8 = tpu.matmul %5, %7, %cst {dimension_numbers = #tpu.dot_dimension_numbers<[1], [0], [0], [1], [0, 0, 1, 1], [], []>} : vector<128x1024xbf16>, vector<1024x256xbf16>, vector<128x256xf32> -> vector<128x256xf32>
    %9 = arith.addf %3, %8 : vector<128x256xf32>
    %c0_8 = arith.constant 0 : index
    %c0_9 = arith.constant 0 : index
    %10 = vector.load %arg9[%c0_8, %c0_9] : memref<128x256xf32, #tpu.memory_space<vmem>>, vector<128x256xf32>
    tpu.vector_store %arg9[%c0_8, %c0_9], %9 {strides = array<i32>} : memref<128x256xf32, #tpu.memory_space<vmem>>, vector<128x256xf32>,
    %c0_i32_10 = arith.constant 0 : i32
    %11 = arith.cmpi eq, %arg3, %c0_i32_10 : i32
    %12 = arith.extui %11 : i1 to i32
    %c0_i32_11 = arith.constant 0 : i32
    %13 = arith.cmpi ne, %12, %c0_i32_11 : i32
    scf.if %13 {
      %c0_12 = arith.constant 0 : index
      %c0_13 = arith.constant 0 : index
      %14 = vector.load %arg9[%c0_12, %c0_13] : memref<128x256xf32, #tpu.memory_space<vmem>>, vector<128x256xf32>
      %c0_14 = arith.constant 0 : index
      %c0_15 = arith.constant 0 : index
      %15 = vector.load %arg6[%c0_14, %c0_15] : memref<1x256xf32, #tpu.memory_space<vmem>>, vector<1x256xf32>
      %16 = vector.broadcast %15 : vector<1x256xf32> to vector<128x256xf32>
      %17 = arith.mulf %14, %16 : vector<128x256xf32>
      %c0_16 = arith.constant 0 : index
      %c0_17 = arith.constant 0 : index
      %18 = vector.load %arg7[%c0_16, %c0_17] : memref<1x256xf32, #tpu.memory_space<vmem>>, vector<1x256xf32>
      %19 = vector.broadcast %18 : vector<1x256xf32> to vector<128x256xf32>
      %20 = arith.addf %17, %19 : vector<128x256xf32>
      %cst_18 = arith.constant 0.000000e+00 : f32
      %21 = vector.broadcast %cst_18 : f32 to vector<128x256xf32>
      %22 = arith.maximumf %20, %21 : vector<128x256xf32>
      %23 = arith.truncf %22 : vector<128x256xf32> to vector<128x256xbf16>
      %c0_19 = arith.constant 0 : index
      %c0_20 = arith.constant 0 : index
      %c0_21 = arith.constant 0 : index
      %24 = vector.load %arg8[%c0_19, %c0_20, %c0_21] : memref<1x128x256xbf16, #tpu.memory_space<vmem>>, vector<1x128x256xbf16>
      %25 = vector.shape_cast %24 : vector<1x128x256xbf16> to vector<128x256xbf16>
      %26 = vector.shape_cast %23 : vector<128x256xbf16> to vector<1x128x256xbf16>
      tpu.vector_store %arg8[%c0_19, %c0_20, %c0_21], %26 {strides = array<i32>} : memref<1x128x256xbf16, #tpu.memory_space<vmem>>, vector<1x128x256xbf16>,
    } else {
    }
    return
  }
  func.func @transform_0(%arg0: i32, %arg1: i32, %arg2: i32, %arg3: i32) -> (i32, i32, i32) {
    %c0_i32 = arith.constant 0 : i32
    return %arg0, %arg1, %arg3 : i32, i32, i32
  }
  func.func @transform_1(%arg0: i32, %arg1: i32, %arg2: i32, %arg3: i32) -> (i32, i32, i32) {
    %c0_i32 = arith.constant 0 : i32
    return %arg0, %arg3, %arg2 : i32, i32, i32
  }
  func.func @transform_2(%arg0: i32, %arg1: i32, %arg2: i32, %arg3: i32) -> (i32, i32) {
    %c0_i32 = arith.constant 0 : i32
    %c0_i32_0 = arith.constant 0 : i32
    return %c0_i32, %arg2 : i32, i32
  }
  func.func @transform_3(%arg0: i32, %arg1: i32, %arg2: i32, %arg3: i32) -> (i32, i32) {
    %c0_i32 = arith.constant 0 : i32
    %c0_i32_0 = arith.constant 0 : i32
    return %c0_i32, %arg2 : i32, i32
  }
  func.func @transform_4(%arg0: i32, %arg1: i32, %arg2: i32, %arg3: i32) -> (i32, i32, i32) {
    %c0_i32 = arith.constant 0 : i32
    return %arg0, %arg1, %arg2 : i32, i32, i32
  }
}

module attributes {stable_mosaic.version = 11 : i64} {
  func.func @_deconv_kernel(%arg0: i32, %arg1: i32, %arg2: i32, %arg3: i32, %arg4: memref<1x256x1024xbf16, #tpu.memory_space<vmem>>, %arg5: memref<1x1024x256xbf16, #tpu.memory_space<vmem>>, %arg6: memref<1x256xf32, #tpu.memory_space<vmem>>, %arg7: memref<1x256xf32, #tpu.memory_space<vmem>>, %arg8: memref<256x128xbf16, #tpu.memory_space<vmem>>, %arg9: memref<1x128xf32, #tpu.memory_space<vmem>>, %arg10: memref<1x256x128xf32, #tpu.memory_space<vmem>>, %arg11: memref<256x256xf32, #tpu.memory_space<vmem>>) attributes {dimension_semantics = [#tpu.dimension_semantics<parallel>, #tpu.dimension_semantics<parallel>, #tpu.dimension_semantics<parallel>, #tpu.dimension_semantics<arbitrary>], iteration_bounds = array<i64: 4, 2, 1, 1>, scalar_prefetch = 0 : i64, scratch_operands = 1 : i64, tpu.core_type = #tpu.core_type<tc>, window_params = [{transform_indices = @transform_0, window_bounds = array<i64: 1, 256, 1024>}, {transform_indices = @transform_1, window_bounds = array<i64: 1, 1024, 256>}, {transform_indices = @transform_2, window_bounds = array<i64: 1, 256>}, {transform_indices = @transform_3, window_bounds = array<i64: 1, 256>}, {pipeline_mode = #tpu.pipeline_mode<synchronous>, transform_indices = @transform_4, window_bounds = array<i64: 256, 128>}, {pipeline_mode = #tpu.pipeline_mode<synchronous>, transform_indices = @transform_5, window_bounds = array<i64: 1, 128>}, {transform_indices = @transform_6, window_bounds = array<i64: 1, 256, 128>}]} {
    %c0_i32 = arith.constant 0 : i32
    %0 = arith.cmpi eq, %arg3, %c0_i32 : i32
    %1 = arith.extui %0 : i1 to i32
    %c0_i32_0 = arith.constant 0 : i32
    %2 = arith.cmpi ne, %1, %c0_i32_0 : i32
    scf.if %2 {
      %cst_12 = arith.constant 0.000000e+00 : f32
      %14 = vector.broadcast %cst_12 : f32 to vector<256x256xf32>
      %c0_13 = arith.constant 0 : index
      %c0_14 = arith.constant 0 : index
      %15 = vector.load %arg11[%c0_13, %c0_14] : memref<256x256xf32, #tpu.memory_space<vmem>>, vector<256x256xf32>
      tpu.vector_store %arg11[%c0_13, %c0_14], %14 {strides = array<i32>} : memref<256x256xf32, #tpu.memory_space<vmem>>, vector<256x256xf32>,
    } else {
    }
    %c0 = arith.constant 0 : index
    %c0_1 = arith.constant 0 : index
    %3 = vector.load %arg11[%c0, %c0_1] : memref<256x256xf32, #tpu.memory_space<vmem>>, vector<256x256xf32>
    %c0_2 = arith.constant 0 : index
    %c0_3 = arith.constant 0 : index
    %c0_4 = arith.constant 0 : index
    %4 = vector.load %arg4[%c0_2, %c0_3, %c0_4] : memref<1x256x1024xbf16, #tpu.memory_space<vmem>>, vector<1x256x1024xbf16>
    %5 = vector.shape_cast %4 : vector<1x256x1024xbf16> to vector<256x1024xbf16>
    %c0_5 = arith.constant 0 : index
    %c0_6 = arith.constant 0 : index
    %c0_7 = arith.constant 0 : index
    %6 = vector.load %arg5[%c0_5, %c0_6, %c0_7] : memref<1x1024x256xbf16, #tpu.memory_space<vmem>>, vector<1x1024x256xbf16>
    %7 = vector.shape_cast %6 : vector<1x1024x256xbf16> to vector<1024x256xbf16>
    %cst = arith.constant dense<0.000000e+00> : vector<256x256xf32>
    %8 = tpu.matmul %5, %7, %cst {dimension_numbers = #tpu.dot_dimension_numbers<[1], [0], [0], [1], [0, 0, 1, 1], [], []>} : vector<256x1024xbf16>, vector<1024x256xbf16>, vector<256x256xf32> -> vector<256x256xf32>
    %9 = arith.addf %3, %8 : vector<256x256xf32>
    %c0_8 = arith.constant 0 : index
    %c0_9 = arith.constant 0 : index
    %10 = vector.load %arg11[%c0_8, %c0_9] : memref<256x256xf32, #tpu.memory_space<vmem>>, vector<256x256xf32>
    tpu.vector_store %arg11[%c0_8, %c0_9], %9 {strides = array<i32>} : memref<256x256xf32, #tpu.memory_space<vmem>>, vector<256x256xf32>,
    %c0_i32_10 = arith.constant 0 : i32
    %11 = arith.cmpi eq, %arg3, %c0_i32_10 : i32
    %12 = arith.extui %11 : i1 to i32
    %c0_i32_11 = arith.constant 0 : i32
    %13 = arith.cmpi ne, %12, %c0_i32_11 : i32
    scf.if %13 {
      %c0_12 = arith.constant 0 : index
      %c0_13 = arith.constant 0 : index
      %14 = vector.load %arg11[%c0_12, %c0_13] : memref<256x256xf32, #tpu.memory_space<vmem>>, vector<256x256xf32>
      %c0_14 = arith.constant 0 : index
      %c0_15 = arith.constant 0 : index
      %15 = vector.load %arg6[%c0_14, %c0_15] : memref<1x256xf32, #tpu.memory_space<vmem>>, vector<1x256xf32>
      %16 = vector.broadcast %15 : vector<1x256xf32> to vector<256x256xf32>
      %17 = arith.mulf %14, %16 : vector<256x256xf32>
      %c0_16 = arith.constant 0 : index
      %c0_17 = arith.constant 0 : index
      %18 = vector.load %arg7[%c0_16, %c0_17] : memref<1x256xf32, #tpu.memory_space<vmem>>, vector<1x256xf32>
      %19 = vector.broadcast %18 : vector<1x256xf32> to vector<256x256xf32>
      %20 = arith.addf %17, %19 : vector<256x256xf32>
      %cst_18 = arith.constant 0.000000e+00 : f32
      %21 = vector.broadcast %cst_18 : f32 to vector<256x256xf32>
      %22 = arith.maximumf %20, %21 : vector<256x256xf32>
      %23 = arith.truncf %22 : vector<256x256xf32> to vector<256x256xbf16>
      %c0_19 = arith.constant 0 : index
      %c0_20 = arith.constant 0 : index
      %24 = vector.load %arg8[%c0_19, %c0_20] : memref<256x128xbf16, #tpu.memory_space<vmem>>, vector<256x128xbf16>
      %cst_21 = arith.constant dense<0.000000e+00> : vector<256x128xf32>
      %25 = tpu.matmul %23, %24, %cst_21 {dimension_numbers = #tpu.dot_dimension_numbers<[1], [0], [0], [1], [0, 0, 1, 1], [], []>} : vector<256x256xbf16>, vector<256x128xbf16>, vector<256x128xf32> -> vector<256x128xf32>
      %c0_22 = arith.constant 0 : index
      %c0_23 = arith.constant 0 : index
      %26 = vector.load %arg9[%c0_22, %c0_23] : memref<1x128xf32, #tpu.memory_space<vmem>>, vector<1x128xf32>
      %27 = vector.broadcast %26 : vector<1x128xf32> to vector<256x128xf32>
      %28 = arith.addf %25, %27 : vector<256x128xf32>
      %c0_24 = arith.constant 0 : index
      %c0_25 = arith.constant 0 : index
      %c0_26 = arith.constant 0 : index
      %29 = vector.load %arg10[%c0_24, %c0_25, %c0_26] : memref<1x256x128xf32, #tpu.memory_space<vmem>>, vector<1x256x128xf32>
      %30 = vector.shape_cast %29 : vector<1x256x128xf32> to vector<256x128xf32>
      %31 = vector.shape_cast %28 : vector<256x128xf32> to vector<1x256x128xf32>
      tpu.vector_store %arg10[%c0_24, %c0_25, %c0_26], %31 {strides = array<i32>} : memref<1x256x128xf32, #tpu.memory_space<vmem>>, vector<1x256x128xf32>,
    } else {
    }
    return
  }
  func.func @transform_0(%arg0: i32, %arg1: i32, %arg2: i32, %arg3: i32) -> (i32, i32, i32) {
    %c0_i32 = arith.constant 0 : i32
    return %arg0, %arg1, %arg3 : i32, i32, i32
  }
  func.func @transform_1(%arg0: i32, %arg1: i32, %arg2: i32, %arg3: i32) -> (i32, i32, i32) {
    %c0_i32 = arith.constant 0 : i32
    return %arg0, %arg3, %arg2 : i32, i32, i32
  }
  func.func @transform_2(%arg0: i32, %arg1: i32, %arg2: i32, %arg3: i32) -> (i32, i32) {
    %c0_i32 = arith.constant 0 : i32
    %c0_i32_0 = arith.constant 0 : i32
    return %c0_i32, %arg2 : i32, i32
  }
  func.func @transform_3(%arg0: i32, %arg1: i32, %arg2: i32, %arg3: i32) -> (i32, i32) {
    %c0_i32 = arith.constant 0 : i32
    %c0_i32_0 = arith.constant 0 : i32
    return %c0_i32, %arg2 : i32, i32
  }
  func.func @transform_4(%arg0: i32, %arg1: i32, %arg2: i32, %arg3: i32) -> (i32, i32) {
    %c0_i32 = arith.constant 0 : i32
    %c0_i32_0 = arith.constant 0 : i32
    %c0_i32_1 = arith.constant 0 : i32
    return %c0_i32, %c0_i32_0 : i32, i32
  }
  func.func @transform_5(%arg0: i32, %arg1: i32, %arg2: i32, %arg3: i32) -> (i32, i32) {
    %c0_i32 = arith.constant 0 : i32
    %c0_i32_0 = arith.constant 0 : i32
    %c0_i32_1 = arith.constant 0 : i32
    return %c0_i32, %c0_i32_0 : i32, i32
  }
  func.func @transform_6(%arg0: i32, %arg1: i32, %arg2: i32, %arg3: i32) -> (i32, i32, i32) {
    %c0_i32 = arith.constant 0 : i32
    %c0_i32_0 = arith.constant 0 : i32
    return %arg0, %arg1, %c0_i32 : i32, i32, i32
  }
}

</mosaic_0001>

<llo_original>
// kernel: hourglass_forward.3
$region0: #{hourglass_forward.3}
  #allocation0 [shape = 'u32[]', space=smem, size = 0x4, offset = 0x4, fixed_abs, tag = 'smem constant byte address 0x4 - core index']
  #allocation1 [shape = 'u32[72,128]{1,0:T(1,128)}', space=vmem, size = 0x9000, scoped, tag = 'internal scratch']
  #allocation2 [shape = 'f32[32,256]{1,0:T(8,128)}', space=vmem, size = 0x8000, scoped, tag = 'scratch operand']
  %s0 = inlined_call_operand.vmem [shape: bf16[4,32,5120], index: 0, kind: input, shape index: {}]
  %s1 = inlined_call_operand.vmem [shape: bf16[4,5120,256], index: 1, kind: input, shape index: {}]
  %s2 = inlined_call_operand.vmem [shape: f32[1,256], index: 2, kind: input, shape index: {}]
  %s3 = inlined_call_operand.vmem [shape: f32[1,256], index: 3, kind: input, shape index: {}]
  %s4 = inlined_call_operand.vmem [shape: bf16[4,32,256], index: 4, kind: output, shape index: {}]
  %s5 = sld [smem:[#allocation0]]
  $region80: #{hourglass_forward.3} parent=0
    _
  %s7 = ssub.s32 1, %s5
  %s8 = scalar_select 0, %s7, %s5
  $region1: #{hourglass_forward.3} parent=0
    #allocation3 [shape = 'u8[327680]{0}', space=vmem, size = 0x50000, scoped, tag = 'input window, operand 0']
    loop: start=0, step=1, limit=10
    $region2: #{hourglass_forward.3} parent=1 // loop_pre_header
      _
    $region3: #{hourglass_forward.3} parent=1 // loop_header
      %s10 = sphi 0, %s14
      %p11 = scmp.ge.s32.totalorder %s10, 10
      %s17 = sphi 0, %s43
      %s18 = sphi 0, %s39
      %s19 = sphi 0, %s35
      %s20 = sphi 0, %s31
      %s21 = sphi 0, %s17
      %s22 = sphi 0, %s18
      %s23 = sphi 0, %s19
      %s24 = sphi 0, %s20
      %s25 = sphi 0, %s21
      %s26 = sphi 0, %s22
      %s27 = sphi 0, %s23
      %s28 = sphi 0, %s24
      %s50 = sphi 0, %s52
      %s53 = sphi 0, %s50
      %s54 = sphi 0, %s53
      %s70 = sphi 0, %s54
      %s80 = sphi 0, %s82
      %s83 = sphi 0, %s80
      %s84 = sphi 0, %s83
      %s100 = sphi 0, %s84
      %s106 = sphi 0, %s108
      %s109 = sphi 0, %s106
      %s110 = sphi 0, %s109
      %s126 = sphi 0, %s110
      %s132 = sphi 0, %s134
      %s135 = sphi 0, %s132
      %s136 = sphi 0, %s135
      %s152 = sphi 0, %s136
      %s162 = sphi 0, %s164
      %s165 = sphi 0, %s162
      %s166 = sphi 0, %s165
      %s182 = sphi 0, %s166
    $region4: #{hourglass_forward.3} parent=1 // loop_header_branch
      %13 = sbr.rel (%p11) target = $region8
    $region5: #{hourglass_forward.3} parent=1 // loop_body
      %s15 = ssub.s32 %s10, 1
      %s16 = ssub.s32 %s10, 2
      %s29 = sadd.s32 1, %s20
      %p30 = scmp.ge.s32.totalorder %s29, 2
      %s31 = scalar_select %p30, 0, %s29
      %s32 = sadd.s32 1, %s19
      %s33 = scalar_select %p30, %s32, %s19
      %p34 = scmp.ge.s32.totalorder %s33, 1
      %s35 = scalar_select %p34, 0, %s33
      %s36 = sadd.s32 1, %s18
      %s37 = scalar_select %p34, %s36, %s18
      %p38 = scmp.ge.s32.totalorder %s37, 1
      %s39 = scalar_select %p38, 0, %s37
      %s40 = sadd.s32 1, %s17
      %s41 = scalar_select %p38, %s40, %s17
      %p42 = scmp.ge.s32.totalorder %s41, 4
      %s43 = scalar_select %p42, 0, %s41
      %s44 = ssub.s32 %s17, %s43
      %s45 = ssub.s32 %s18, %s39
      %s46 = sor.u32 %s44, %s45
      %s47 = ssub.s32 %s20, %s31
      %s48 = sor.u32 %s46, %s47
      %p49 = scmp.eq.s32.totalorder %s48, 0
      %s51 = sadd.s32 %s50, 1
      %s52 = scalar_select %p49, %s50, %s51
      %p55 = pneg %p49
      %p56 = scmp.eq.s32.totalorder %s10, 7
      %p57 = por %p55, %p56
      %p58 = scmp.ne.s32.totalorder %s50, %s53
      %p59 = scmp.eq.s32.totalorder %s10, 0
      %p60 = por %p58, %p59
      %p61 = scmp.ne.s32.totalorder %s50, %s53
      %p62 = scmp.eq.s32.totalorder %s15, 7
      %p63 = por %p61, %p62
      %p64 = scmp.ne.s32.totalorder %s53, %s54
      %p65 = scmp.eq.s32.totalorder %s15, 0
      %p66 = por %p64, %p65
      %p67 = scmp.ne.s32.totalorder %s53, %s54
      %p68 = scmp.eq.s32.totalorder %s16, 7
      %p69 = por %p67, %p68
      %p71 = scmp.ne.s32.totalorder %s54, %s70
      %p72 = scmp.eq.s32.totalorder %s16, 0
      %p73 = por %p71, %p72
      %s74 = ssub.s32 %s17, %s43
      %s75 = ssub.s32 %s20, %s31
      %s76 = sor.u32 %s74, %s75
      %s77 = ssub.s32 %s19, %s35
      %s78 = sor.u32 %s76, %s77
      %p79 = scmp.eq.s32.totalorder %s78, 0
      %s81 = sadd.s32 %s80, 1
      %s82 = scalar_select %p79, %s80, %s81
      %p85 = pneg %p79
      %p86 = scmp.eq.s32.totalorder %s10, 7
      %p87 = por %p85, %p86
      %p88 = scmp.ne.s32.totalorder %s80, %s83
      %p89 = scmp.eq.s32.totalorder %s10, 0
      %p90 = por %p88, %p89
      %p91 = scmp.ne.s32.totalorder %s80, %s83
      %p92 = scmp.eq.s32.totalorder %s15, 7
      %p93 = por %p91, %p92
      %p94 = scmp.ne.s32.totalorder %s83, %s84
      %p95 = scmp.eq.s32.totalorder %s15, 0
      %p96 = por %p94, %p95
      %p97 = scmp.ne.s32.totalorder %s83, %s84
      %p98 = scmp.eq.s32.totalorder %s16, 7
      %p99 = por %p97, %p98
      %p101 = scmp.ne.s32.totalorder %s84, %s100
      %p102 = scmp.eq.s32.totalorder %s16, 0
      %p103 = por %p101, %p102
      %s104 = ssub.s32 %s19, %s35
      %p105 = scmp.eq.s32.totalorder %s104, 0
      %s107 = sadd.s32 %s106, 1
      %s108 = scalar_select %p105, %s106, %s107
      %p111 = pneg %p105
      %p112 = scmp.eq.s32.totalorder %s10, 7
      %p113 = por %p111, %p112
      %p114 = scmp.ne.s32.totalorder %s106, %s109
      %p115 = scmp.eq.s32.totalorder %s10, 0
      %p116 = por %p114, %p115
      %p117 = scmp.ne.s32.totalorder %s106, %s109
      %p118 = scmp.eq.s32.totalorder %s15, 7
      %p119 = por %p117, %p118
      %p120 = scmp.ne.s32.totalorder %s109, %s110
      %p121 = scmp.eq.s32.totalorder %s15, 0
      %p122 = por %p120, %p121
      %p123 = scmp.ne.s32.totalorder %s109, %s110
      %p124 = scmp.eq.s32.totalorder %s16, 7
      %p125 = por %p123, %p124
      %p127 = scmp.ne.s32.totalorder %s110, %s126
      %p128 = scmp.eq.s32.totalorder %s16, 0
      %p129 = por %p127, %p128
      %s130 = ssub.s32 %s19, %s35
      %p131 = scmp.eq.s32.totalorder %s130, 0
      %s133 = sadd.s32 %s132, 1
      %s134 = scalar_select %p131, %s132, %s133
      %p137 = pneg %p131
      %p138 = scmp.eq.s32.totalorder %s10, 7
      %p139 = por %p137, %p138
      %p140 = scmp.ne.s32.totalorder %s132, %s135
      %p141 = scmp.eq.s32.totalorder %s10, 0
      %p142 = por %p140, %p141
      %p143 = scmp.ne.s32.totalorder %s132, %s135
      %p144 = scmp.eq.s32.totalorder %s15, 7
      %p145 = por %p143, %p144
      %p146 = scmp.ne.s32.totalorder %s135, %s136
      %p147 = scmp.eq.s32.totalorder %s15, 0
      %p148 = por %p146, %p147
      %p149 = scmp.ne.s32.totalorder %s135, %s136
      %p150 = scmp.eq.s32.totalorder %s16, 7
      %p151 = por %p149, %p150
      %p153 = scmp.ne.s32.totalorder %s136, %s152
      %p154 = scmp.eq.s32.totalorder %s16, 0
      %p155 = por %p153, %p154
      %s156 = ssub.s32 %s17, %s43
      %s157 = ssub.s32 %s18, %s39
      %s158 = sor.u32 %s156, %s157
      %s159 = ssub.s32 %s19, %s35
      %s160 = sor.u32 %s158, %s159
      %p161 = scmp.eq.s32.totalorder %s160, 0
      %s163 = sadd.s32 %s162, 1
      %s164 = scalar_select %p161, %s162, %s163
      %p167 = pneg %p161
      %p168 = scmp.eq.s32.totalorder %s10, 7
      %p169 = por %p167, %p168
      %p170 = scmp.ne.s32.totalorder %s162, %s165
      %p171 = scmp.eq.s32.totalorder %s10, 0
      %p172 = por %p170, %p171
      %p173 = scmp.ne.s32.totalorder %s162, %s165
      %p174 = scmp.eq.s32.totalorder %s15, 7
      %p175 = por %p173, %p174
      %p176 = scmp.ne.s32.totalorder %s165, %s166
      %p177 = scmp.eq.s32.totalorder %s15, 0
      %p178 = por %p176, %p177
      %p179 = scmp.ne.s32.totalorder %s165, %s166
      %p180 = scmp.eq.s32.totalorder %s16, 7
      %p181 = por %p179, %p180
      %p183 = scmp.ne.s32.totalorder %s166, %s182
      %p184 = scmp.eq.s32.totalorder %s16, 0
      %p185 = por %p183, %p184
      %p186 = scmp.le.s32.totalorder 1, %s10
      %p187 = scmp.lt.s32.totalorder %s10, 9
      %p188 = pnand %p186, %p187
      %p189 = pneg %p188
      // Predicated region
      $region9: #{hourglass_forward.3} parent=5 // pred_check
        _
      $region10: #{hourglass_forward.3} parent=5 // pred_check_branch
        %191 = sbr.rel (%p188) target = $region12
      $region11: #{hourglass_forward.3} parent=5 // pred_region
        %s192 = ssub.s32 %s10, 1
        // Predicated region
        $region13: #{hourglass_forward.3} parent=11 // pred_check
          %p193 = pneg %p122
        $region14: #{hourglass_forward.3} parent=11 // pred_check_branch
          %195 = sbr.rel (%p193) target = $region16
        $region15: #{hourglass_forward.3} parent=11 // pred_region
          %s196 = smul.u32 2, %s23
          %p197 = scmp.lt.s32.totalorder %s196, 1
          %s198 = scalar_select %p197, %s196, 1
          %s199 = scalar_lea.vmem %s2, %s198
          %s200 = smul.u32 2, %s23
        $region16: #{hourglass_forward.3} parent=11 // pred_fallthru
          _
        // Predicated region
        $region17: #{hourglass_forward.3} parent=11 // pred_check
          %p201 = pneg %p148
        $region18: #{hourglass_forward.3} parent=11 // pred_check_branch
          %203 = sbr.rel (%p201) target = $region20
        $region19: #{hourglass_forward.3} parent=11 // pred_region
          %s204 = smul.u32 2, %s23
          %p205 = scmp.lt.s32.totalorder %s204, 1
          %s206 = scalar_select %p205, %s204, 1
          %s207 = scalar_lea.vmem %s3, %s206
          %s208 = smul.u32 2, %s23
        $region20: #{hourglass_forward.3} parent=11 // pred_fallthru
          _
      $region12: #{hourglass_forward.3} parent=5 // pred_fallthru
        _
      %p209 = scmp.lt.s32.totalorder %s10, 8
      // Predicated region
      $region21: #{hourglass_forward.3} parent=5 // pred_check
        %p210 = pneg %p209
      $region22: #{hourglass_forward.3} parent=5 // pred_check_branch
        %212 = sbr.rel (%p210) target = $region24
      $region23: #{hourglass_forward.3} parent=5 // pred_region
        // Predicated region
        $region25: #{hourglass_forward.3} parent=23 // pred_check
          %p213 = pneg %p60
        $region26: #{hourglass_forward.3} parent=23 // pred_check_branch
          %215 = sbr.rel (%p213) target = $region28
        $region27: #{hourglass_forward.3} parent=23 // pred_region
          %s216 = sand.u32 %s50, 1
          %s217 = sand.u32 %s50, 1
          %s218 = smul.addr %s217, 320
          %s219 = scalar_lea.vmem [#allocation3], %s218
          %s220 = smul.u32 4, %s18
          %s221 = smul.u32 20, %s20
          %s222 = smul.addr %s220, 40
          %s223 = sadd.s32 %s221, %s222
          %s224 = smul.addr %s17, 160
          %s225 = sadd.s32 %s223, %s224
          %s226 = smul.addr %s225, 4
          %s227 = scalar_lea.vmem %s0, %s226
          // Predicated region
          $region29: #{hourglass_forward.3} parent=27 // pred_check
            _
          $region30: #{hourglass_forward.3} parent=27 // pred_check_branch
            %229 = sbr.rel (0) target = $region32
          $region31: #{hourglass_forward.3} parent=27 // pred_region
            // Predicated region
            $region33: #{hourglass_forward.3} parent=31 // pred_check
              _
            $region34: #{hourglass_forward.3} parent=31 // pred_check_branch
              %231 = sbr.rel (0) target = $region36
            $region35: #{hourglass_forward.3} parent=31 // pred_region
              loop: start=0, step=1, limit=1
              $region37: #{hourglass_forward.3} parent=35 // loop_pre_header
                _
              $region38: #{hourglass_forward.3} parent=35 // loop_header
                %s233 = sphi 0, %s237
                %p234 = scmp.ge.s32.totalorder %s233, 1
                %s238 = sphi %s227, %s227
                %s239 = sphi %s219, %s219
              $region39: #{hourglass_forward.3} parent=35 // loop_header_branch
                %236 = sbr.rel (%p234) target = $region43
              $region40: #{hourglass_forward.3} parent=35 // loop_body
                %v240 = vld [vmem:[%s238] sm:$0xff]
                %241 = vst [vmem:[%s239] sm:$0xff] %v240
                %v242 = vld [vmem:[%s238 + $0x8] sm:$0xff]
                %243 = vst [vmem:[%s239 + $0x8] sm:$0xff] %v242
                %v244 = vld [vmem:[%s238 + $0x10] sm:$0xff]
                %245 = vst [vmem:[%s239 + $0x10] sm:$0xff] %v244
                %v246 = vld [vmem:[%s238 + $0x18] sm:$0xff]
                %247 = vst [vmem:[%s239 + $0x18] sm:$0xff] %v246
                %v248 = vld [vmem:[%s238 + $0x20] sm:$0xff]
                %249 = vst [vmem:[%s239 + $0x20] sm:$0xff] %v248
                %v250 = vld [vmem:[%s238 + $0x28] sm:$0xff]
                %251 = vst [vmem:[%s239 + $0x28] sm:$0xff] %v250
                %v252 = vld [vmem:[%s238 + $0x30] sm:$0xff]
                %253 = vst [vmem:[%s239 + $0x30] sm:$0xff] %v252
                %v254 = vld [vmem:[%s238 + $0x38] sm:$0xff]
                %255 = vst [vmem:[%s239 + $0x38] sm:$0xff] %v254
                %v256 = vld [vmem:[%s238 + $0x40] sm:$0xff]
                %257 = vst [vmem:[%s239 + $0x40] sm:$0xff] %v256
                %v258 = vld [vmem:[%s238 + $0x48] sm:$0xff]
                %259 = vst [vmem:[%s239 + $0x48] sm:$0xff] %v258
                %v260 = vld [vmem:[%s238 + $0xa0] sm:$0xff]
                %261 = vst [vmem:[%s239 + $0x50] sm:$0xff] %v260
                %v262 = vld [vmem:[%s238 + $0xa8] sm:$0xff]
                %263 = vst [vmem:[%s239 + $0x58] sm:$0xff] %v262
                %v264 = vld [vmem:[%s238 + $0xb0] sm:$0xff]
                %265 = vst [vmem:[%s239 + $0x60] sm:$0xff] %v264
                %v266 = vld [vmem:[%s238 + $0xb8] sm:$0xff]
                %267 = vst [vmem:[%s239 + $0x68] sm:$0xff] %v266
                %v268 = vld [vmem:[%s238 + $0xc0] sm:$0xff]
                %269 = vst [vmem:[%s239 + $0x70] sm:$0xff] %v268
                %v270 = vld [vmem:[%s238 + $0xc8] sm:$0xff]
                %271 = vst [vmem:[%s239 + $0x78] sm:$0xff] %v270
                %v272 = vld [vmem:[%s238 + $0xd0] sm:$0xff]
                %273 = vst [vmem:[%s239 + $0x80] sm:$0xff] %v272
                %v274 = vld [vmem:[%s238 + $0xd8] sm:$0xff]
                %275 = vst [vmem:[%s239 + $0x88] sm:$0xff] %v274
                %v276 = vld [vmem:[%s238 + $0xe0] sm:$0xff]
                %277 = vst [vmem:[%s239 + $0x90] sm:$0xff] %v276
                %v278 = vld [vmem:[%s238 + $0xe8] sm:$0xff]
                %279 = vst [vmem:[%s239 + $0x98] sm:$0xff] %v278
                %v280 = vld [vmem:[%s238 + $0x140] sm:$0xff]
                %281 = vst [vmem:[%s239 + $0xa0] sm:$0xff] %v280
                %v282 = vld [vmem:[%s238 + $0x148] sm:$0xff]
                %283 = vst [vmem:[%s239 + $0xa8] sm:$0xff] %v282
                %v284 = vld [vmem:[%s238 + $0x150] sm:$0xff]
                %285 = vst [vmem:[%s239 + $0xb0] sm:$0xff] %v284
                %v286 = vld [vmem:[%s238 + $0x158] sm:$0xff]
                %287 = vst [vmem:[%s239 + $0xb8] sm:$0xff] %v286
                %v288 = vld [vmem:[%s238 + $0x160] sm:$0xff]
                %289 = vst [vmem:[%s239 + $0xc0] sm:$0xff] %v288
                %v290 = vld [vmem:[%s238 + $0x168] sm:$0xff]
                %291 = vst [vmem:[%s239 + $0xc8] sm:$0xff] %v290
                %v292 = vld [vmem:[%s238 + $0x170] sm:$0xff]
                %293 = vst [vmem:[%s239 + $0xd0] sm:$0xff] %v292
                %v294 = vld [vmem:[%s238 + $0x178] sm:$0xff]
                %295 = vst [vmem:[%s239 + $0xd8] sm:$0xff] %v294
                %v296 = vld [vmem:[%s238 + $0x180] sm:$0xff]
                %297 = vst [vmem:[%s239 + $0xe0] sm:$0xff] %v296
                %v298 = vld [vmem:[%s238 + $0x188] sm:$0xff]
                %299 = vst [vmem:[%s239 + $0xe8] sm:$0xff] %v298
                %v300 = vld [vmem:[%s238 + $0x1e0] sm:$0xff]
                %301 = vst [vmem:[%s239 + $0xf0] sm:$0xff] %v300
                %v302 = vld [vmem:[%s238 + $0x1e8] sm:$0xff]
                %303 = vst [vmem:[%s239 + $0xf8] sm:$0xff] %v302
                %v304 = vld [vmem:[%s238 + $0x1f0] sm:$0xff]
                %305 = vst [vmem:[%s239 + $0x100] sm:$0xff] %v304
                %v306 = vld [vmem:[%s238 + $0x1f8] sm:$0xff]
                %307 = vst [vmem:[%s239 + $0x108] sm:$0xff] %v306
                %v308 = vld [vmem:[%s238 + $0x200] sm:$0xff]
                %309 = vst [vmem:[%s239 + $0x110] sm:$0xff] %v308
                %v310 = vld [vmem:[%s238 + $0x208] sm:$0xff]
                %311 = vst [vmem:[%s239 + $0x118] sm:$0xff] %v310
                %v312 = vld [vmem:[%s238 + $0x210] sm:$0xff]
                %313 = vst [vmem:[%s239 + $0x120] sm:$0xff] %v312
                %v314 = vld [vmem:[%s238 + $0x218] sm:$0xff]
                %315 = vst [vmem:[%s239 + $0x128] sm:$0xff] %v314
                %v316 = vld [vmem:[%s238 + $0x220] sm:$0xff]
                %317 = vst [vmem:[%s239 + $0x130] sm:$0xff] %v316
                %v318 = vld [vmem:[%s238 + $0x228] sm:$0xff]
                %319 = vst [vmem:[%s239 + $0x138] sm:$0xff] %v318
              $region41: #{hourglass_forward.3} parent=35 // loop_footer
                %s237 = sadd.s32 1, %s233
              $region42: #{hourglass_forward.3} parent=35 // loop_footer_branch
                %232 = sbr.rel target = $region38
              $region43: #{hourglass_forward.3} parent=35 // loop_exit
                _
            $region36: #{hourglass_forward.3} parent=31 // pred_fallthru
              _
            // Predicated region
            $region44: #{hourglass_forward.3} parent=31 // pred_check
              _
            $region45: #{hourglass_forward.3} parent=31 // pred_check_branch
              %321 = sbr.rel target = $region47
            $region46: #{hourglass_forward.3} parent=31 // pred_region
              _
            $region47: #{hourglass_forward.3} parent=31 // pred_fallthru
              _
          $region32: #{hourglass_forward.3} parent=27 // pred_fallthru
            _
          %322 = vnop
        $region28: #{hourglass_forward.3} parent=23 // pred_fallthru
          _
        // Predicated region
        $region48: #{hourglass_forward.3} parent=23 // pred_check
          %p323 = pneg %p90
        $region49: #{hourglass_forward.3} parent=23 // pred_check_branch
          %325 = sbr.rel (%p323) target = $region51
        $region50: #{hourglass_forward.3} parent=23 // pred_region
          %s326 = smul.u32 320, %s20
          %s327 = smul.u32 2, %s19
          %p328 = scmp.lt.s32.totalorder %s17, 3
          %s329 = scalar_select %p328, %s17, 3
          %p330 = scmp.lt.s32.totalorder %s326, 639
          %s331 = scalar_select %p330, %s326, 639
          %p332 = scmp.lt.s32.totalorder %s327, 1
          %s333 = scalar_select %p332, %s327, 1
          %s334 = smul.addr %s331, 2
          %s335 = sadd.s32 %s333, %s334
          %s336 = smul.addr %s329, 1280
          %s337 = sadd.s32 %s335, %s336
          %s338 = smul.addr %s337, 4
          %s339 = scalar_lea.vmem %s1, %s338
          %s340 = smul.u32 320, %s20
          %s341 = smul.u32 2, %s19
        $region51: #{hourglass_forward.3} parent=23 // pred_fallthru
          _
      $region24: #{hourglass_forward.3} parent=5 // pred_fallthru
        _
      %p342 = scmp.le.s32.totalorder 1, %s10
      %p343 = scmp.lt.s32.totalorder %s10, 9
      %p344 = pnand %p342, %p343
      %p345 = pneg %p344
      // Predicated region
      $region52: #{hourglass_forward.3} parent=5 // pred_check
        _
      $region53: #{hourglass_forward.3} parent=5 // pred_check_branch
        %347 = sbr.rel (%p344) target = $region55
      $region54: #{hourglass_forward.3} parent=5 // pred_region
        %s348 = ssub.s32 %s10, 1
        %s349 = sand.u32 %s53, 1
        %s350 = sand.u32 %s53, 1
        %s351 = smul.addr %s350, 320
        %s352 = scalar_lea.vmem [#allocation3], %s351
        // Predicated region
        $region56: #{hourglass_forward.3} parent=54 // pred_check
          %p353 = pneg %p66
        $region57: #{hourglass_forward.3} parent=54 // pred_check_branch
          %355 = sbr.rel (%p353) target = $region59
        $region58: #{hourglass_forward.3} parent=54 // pred_region
          _
        $region59: #{hourglass_forward.3} parent=54 // pred_fallthru
          _
        %s356 = sand.u32 %s53, 1
        %s357 = sand.u32 %s53, 1
        %s358 = smul.addr %s357, 320
        %s359 = scalar_lea.vmem [#allocation3], %s358
        %p360 = pneg %p66
        %p361 = pneg %p63
        %s362 = smul.u32 320, %s24
        %s363 = smul.u32 2, %s23
        %p364 = scmp.lt.s32.totalorder %s21, 3
        %s365 = scalar_select %p364, %s21, 3
        %p366 = scmp.lt.s32.totalorder %s362, 639
        %s367 = scalar_select %p366, %s362, 639
        %p368 = scmp.lt.s32.totalorder %s363, 1
        %s369 = scalar_select %p368, %s363, 1
        %s370 = smul.addr %s367, 2
        %s371 = sadd.s32 %s369, %s370
        %s372 = smul.addr %s365, 1280
        %s373 = sadd.s32 %s371, %s372
        %s374 = smul.addr %s373, 4
        %s375 = scalar_lea.vmem %s1, %s374
        %p376 = pneg %p96
        %p377 = pneg %p93
        %s378 = smul.u32 2, %s23
        %p379 = scmp.lt.s32.totalorder %s378, 1
        %s380 = scalar_select %p379, %s378, 1
        %s381 = scalar_lea.vmem %s2, %s380
        %p382 = pneg %p122
        %p383 = pneg %p119
        %s384 = smul.u32 2, %s23
        %p385 = scmp.lt.s32.totalorder %s384, 1
        %s386 = scalar_select %p385, %s384, 1
        %s387 = scalar_lea.vmem %s3, %s386
        %p388 = pneg %p148
        %p389 = pneg %p145
        %p390 = pneg %p178
        %p391 = pneg %p175
        %s392 = smul.u32 4, %s22
        %s393 = smul.u32 2, %s23
        %p394 = scmp.lt.s32.totalorder %s21, 3
        %s395 = scalar_select %p394, %s21, 3
        %p396 = scmp.lt.s32.totalorder %s392, 3
        %s397 = scalar_select %p396, %s392, 3
        %p398 = scmp.lt.s32.totalorder %s393, 1
        %s399 = scalar_select %p398, %s393, 1
        %s400 = smul.addr %s397, 2
        %s401 = sadd.s32 %s399, %s400
        %s402 = smul.addr %s395, 8
        %s403 = sadd.s32 %s401, %s402
        %s404 = smul.addr %s403, 4
        %s405 = scalar_lea.vmem %s4, %s404
        %s406 = smul.u32 4, %s22
        %s407 = smul.u32 20, %s24
        %s408 = smul.u32 320, %s24
        %s409 = smul.u32 2, %s23
        %p410 = scmp.lt.s32.totalorder %s21, 3
        %s411 = scalar_select %p410, %s21, 3
        %p412 = scmp.lt.s32.totalorder %s408, 639
        %s413 = scalar_select %p412, %s408, 639
        %p414 = scmp.lt.s32.totalorder %s409, 1
        %s415 = scalar_select %p414, %s409, 1
        %s416 = smul.addr %s413, 2
        %s417 = sadd.s32 %s415, %s416
        %s418 = smul.addr %s411, 1280
        %s419 = sadd.s32 %s417, %s418
        %s420 = smul.addr %s419, 4
        %s421 = scalar_lea.vmem %s1, %s420
        %s422 = smul.u32 320, %s24
        %s423 = smul.u32 2, %s23
        %s424 = smul.u32 2, %s23
        %p425 = scmp.lt.s32.totalorder %s424, 1
        %s426 = scalar_select %p425, %s424, 1
        %s427 = scalar_lea.vmem %s2, %s426
        %s428 = smul.u32 2, %s23
        %s429 = smul.u32 2, %s23
        %p430 = scmp.lt.s32.totalorder %s429, 1
        %s431 = scalar_select %p430, %s429, 1
        %s432 = scalar_lea.vmem %s3, %s431
        %s433 = smul.u32 2, %s23
        %s434 = smul.u32 4, %s22
        %s435 = smul.u32 2, %s23
        %p436 = scmp.lt.s32.totalorder %s21, 3
        %s437 = scalar_select %p436, %s21, 3
        %p438 = scmp.lt.s32.totalorder %s434, 3
        %s439 = scalar_select %p438, %s434, 3
        %p440 = scmp.lt.s32.totalorder %s435, 1
        %s441 = scalar_select %p440, %s435, 1
        %s442 = smul.addr %s439, 2
        %s443 = sadd.s32 %s441, %s442
        %s444 = smul.addr %s437, 8
        %s445 = sadd.s32 %s443, %s444
        %s446 = smul.addr %s445, 4
        %s447 = scalar_lea.vmem %s4, %s446
        %s448 = smul.u32 4, %s22
        %s449 = smul.u32 2, %s23
        %p450 = scmp.eq.s32.totalorder %s24, 0
        // Predicated region
        $region60: #{hourglass_forward.3} parent=54 // pred_check
          %p451 = pneg %p450
        $region61: #{hourglass_forward.3} parent=54 // pred_check_branch
          %453 = sbr.rel (%p451) target = $region63
        $region62: #{hourglass_forward.3} parent=54 // pred_region
          %454 = vst [vmem:[#allocation2] sm:$0xff] 0.0
          %455 = vst [vmem:[#allocation2 + $0x8] sm:$0xff] 0.0
          %456 = vst [vmem:[#allocation2 + $0x10] sm:$0xff] 0.0
          %457 = vst [vmem:[#allocation2 + $0x18] sm:$0xff] 0.0
          %458 = vst [vmem:[#allocation2 + $0x20] sm:$0xff] 0.0
          %459 = vst [vmem:[#allocation2 + $0x28] sm:$0xff] 0.0
          %460 = vst [vmem:[#allocation2 + $0x30] sm:$0xff] 0.0
          %461 = vst [vmem:[#allocation2 + $0x38] sm:$0xff] 0.0
        $region63: #{hourglass_forward.3} parent=54 // pred_fallthru
          _
        %v462 = vld [vmem:[#allocation2] sm:$0xff]
        %v463 = vld [vmem:[#allocation2 + $0x8] sm:$0xff]
        %v464 = vld [vmem:[#allocation2 + $0x10] sm:$0xff]
        %v465 = vld [vmem:[#allocation2 + $0x18] sm:$0xff]
        %v466 = vld [vmem:[#allocation2 + $0x20] sm:$0xff]
        %v467 = vld [vmem:[#allocation2 + $0x28] sm:$0xff]
        %v468 = vld [vmem:[#allocation2 + $0x30] sm:$0xff]
        %v469 = vld [vmem:[#allocation2 + $0x38] sm:$0xff]
        %v470 = vld [vmem:[%s352] sm:$0xff]
        %v471 = vld [vmem:[%s352 + $0x8] sm:$0xff]
        %v472 = vld [vmem:[%s352 + $0x10] sm:$0xff]
        %v473 = vld [vmem:[%s352 + $0x18] sm:$0xff]
        %v474 = vld [vmem:[%s352 + $0x20] sm:$0xff]
        %v475 = vld [vmem:[%s352 + $0x28] sm:$0xff]
        %v476 = vld [vmem:[%s352 + $0x30] sm:$0xff]
        %v477 = vld [vmem:[%s352 + $0x38] sm:$0xff]
        %v478 = vld [vmem:[%s352 + $0x40] sm:$0xff]
        %v479 = vld [vmem:[%s352 + $0x48] sm:$0xff]
        %v480 = vld [vmem:[%s352 + $0x50] sm:$0xff]
        %v481 = vld [vmem:[%s352 + $0x58] sm:$0xff]
        %v482 = vld [vmem:[%s352 + $0x60] sm:$0xff]
        %v483 = vld [vmem:[%s352 + $0x68] sm:$0xff]
        %v484 = vld [vmem:[%s352 + $0x70] sm:$0xff]
        %v485 = vld [vmem:[%s352 + $0x78] sm:$0xff]
        %v486 = vld [vmem:[%s352 + $0x80] sm:$0xff]
        %v487 = vld [vmem:[%s352 + $0x88] sm:$0xff]
        %v488 = vld [vmem:[%s352 + $0x90] sm:$0xff]
        %v489 = vld [vmem:[%s352 + $0x98] sm:$0xff]
        %v490 = vld [vmem:[%s352 + $0xa0] sm:$0xff]
        %v491 = vld [vmem:[%s352 + $0xa8] sm:$0xff]
        %v492 = vld [vmem:[%s352 + $0xb0] sm:$0xff]
        %v493 = vld [vmem:[%s352 + $0xb8] sm:$0xff]
        %v494 = vld [vmem:[%s352 + $0xc0] sm:$0xff]
        %v495 = vld [vmem:[%s352 + $0xc8] sm:$0xff]
        %v496 = vld [vmem:[%s352 + $0xd0] sm:$0xff]
        %v497 = vld [vmem:[%s352 + $0xd8] sm:$0xff]
        %v498 = vld [vmem:[%s352 + $0xe0] sm:$0xff]
        %v499 = vld [vmem:[%s352 + $0xe8] sm:$0xff]
        %v500 = vld [vmem:[%s352 + $0xf0] sm:$0xff]
        %v501 = vld [vmem:[%s352 + $0xf8] sm:$0xff]
        %v502 = vld [vmem:[%s352 + $0x100] sm:$0xff]
        %v503 = vld [vmem:[%s352 + $0x108] sm:$0xff]
        %v504 = vld [vmem:[%s352 + $0x110] sm:$0xff]
        %v505 = vld [vmem:[%s352 + $0x118] sm:$0xff]
        %v506 = vld [vmem:[%s352 + $0x120] sm:$0xff]
        %v507 = vld [vmem:[%s352 + $0x128] sm:$0xff]
        %v508 = vld [vmem:[%s352 + $0x130] sm:$0xff]
        %v509 = vld [vmem:[%s352 + $0x138] sm:$0xff]
        %v510 = vld [vmem:[%s421] sm:$0xff]
        %v511 = vld [vmem:[%s421 + $0x8] sm:$0xff]
        %v512 = vld [vmem:[%s421 + $0x10] sm:$0xff]
        %v513 = vld [vmem:[%s421 + $0x18] sm:$0xff]
        %v514 = vld [vmem:[%s421 + $0x20] sm:$0xff]
        %v515 = vld [vmem:[%s421 + $0x28] sm:$0xff]
        %v516 = vld [vmem:[%s421 + $0x30] sm:$0xff]
        %v517 = vld [vmem:[%s421 + $0x38] sm:$0xff]
        %v518 = vld [vmem:[%s421 + $0x40] sm:$0xff]
        %v519 = vld [vmem:[%s421 + $0x48] sm:$0xff]
        %v520 = vld [vmem:[%s421 + $0x50] sm:$0xff]
        %v521 = vld [vmem:[%s421 + $0x58] sm:$0xff]
        %v522 = vld [vmem:[%s421 + $0x60] sm:$0xff]
        %v523 = vld [vmem:[%s421 + $0x68] sm:$0xff]
        %v524 = vld [vmem:[%s421 + $0x70] sm:$0xff]
        %v525 = vld [vmem:[%s421 + $0x78] sm:$0xff]
        %v526 = vld [vmem:[%s421 + $0x80] sm:$0xff]
        %v527 = vld [vmem:[%s421 + $0x88] sm:$0xff]
        %v528 = vld [vmem:[%s421 + $0x90] sm:$0xff]
        %v529 = vld [vmem:[%s421 + $0x98] sm:$0xff]
        %v530 = vld [vmem:[%s421 + $0xa0] sm:$0xff]
        %v531 = vld [vmem:[%s421 + $0xa8] sm:$0xff]
        %v532 = vld [vmem:[%s421 + $0xb0] sm:$0xff]
        %v533 = vld [vmem:[%s421 + $0xb8] sm:$0xff]
        %v534 = vld [vmem:[%s421 + $0xc0] sm:$0xff]
        %v535 = vld [vmem:[%s421 + $0xc8] sm:$0xff]
        %v536 = vld [vmem:[%s421 + $0xd0] sm:$0xff]
        %v537 = vld [vmem:[%s421 + $0xd8] sm:$0xff]
        %v538 = vld [vmem:[%s421 + $0xe0] sm:$0xff]
        %v539 = vld [vmem:[%s421 + $0xe8] sm:$0xff]
        %v540 = vld [vmem:[%s421 + $0xf0] sm:$0xff]
        %v541 = vld [vmem:[%s421 + $0xf8] sm:$0xff]
        %v542 = vld [vmem:[%s421 + $0x100] sm:$0xff]
        %v543 = vld [vmem:[%s421 + $0x108] sm:$0xff]
        %v544 = vld [vmem:[%s421 + $0x110] sm:$0xff]
        %v545 = vld [vmem:[%s421 + $0x118] sm:$0xff]
        %v546 = vld [vmem:[%s421 + $0x120] sm:$0xff]
        %v547 = vld [vmem:[%s421 + $0x128] sm:$0xff]
        %v548 = vld [vmem:[%s421 + $0x130] sm:$0xff]
        %v549 = vld [vmem:[%s421 + $0x138] sm:$0xff]
        %v550 = vld [vmem:[%s421 + $0x140] sm:$0xff]
        %v551 = vld [vmem:[%s421 + $0x148] sm:$0xff]
        %v552 = vld [vmem:[%s421 + $0x150] sm:$0xff]
        %v553 = vld [vmem:[%s421 + $0x158] sm:$0xff]
        %v554 = vld [vmem:[%s421 + $0x160] sm:$0xff]
        %v555 = vld [vmem:[%s421 + $0x168] sm:$0xff]
        %v556 = vld [vmem:[%s421 + $0x170] sm:$0xff]
        %v557 = vld [vmem:[%s421 + $0x178] sm:$0xff]
        %v558 = vld [vmem:[%s421 + $0x180] sm:$0xff]
        %v559 = vld [vmem:[%s421 + $0x188] sm:$0xff]
        %v560 = vld [vmem:[%s421 + $0x190] sm:$0xff]
        %v561 = vld [vmem:[%s421 + $0x198] sm:$0xff]
        %v562 = vld [vmem:[%s421 + $0x1a0] sm:$0xff]
        %v563 = vld [vmem:[%s421 + $0x1a8] sm:$0xff]
        %v564 = vld [vmem:[%s421 + $0x1b0] sm:$0xff]
        %v565 = vld [vmem:[%s421 + $0x1b8] sm:$0xff]
        %v566 = vld [vmem:[%s421 + $0x1c0] sm:$0xff]
        %v567 = vld [vmem:[%s421 + $0x1c8] sm:$0xff]
        %v568 = vld [vmem:[%s421 + $0x1d0] sm:$0xff]
        %v569 = vld [vmem:[%s421 + $0x1d8] sm:$0xff]
        %v570 = vld [vmem:[%s421 + $0x1e0] sm:$0xff]
        %v571 = vld [vmem:[%s421 + $0x1e8] sm:$0xff]
        %v572 = vld [vmem:[%s421 + $0x1f0] sm:$0xff]
        %v573 = vld [vmem:[%s421 + $0x1f8] sm:$0xff]
        %v574 = vld [vmem:[%s421 + $0x200] sm:$0xff]
        %v575 = vld [vmem:[%s421 + $0x208] sm:$0xff]
        %v576 = vld [vmem:[%s421 + $0x210] sm:$0xff]
        %v577 = vld [vmem:[%s421 + $0x218] sm:$0xff]
        %v578 = vld [vmem:[%s421 + $0x220] sm:$0xff]
        %v579 = vld [vmem:[%s421 + $0x228] sm:$0xff]
        %v580 = vld [vmem:[%s421 + $0x230] sm:$0xff]
        %v581 = vld [vmem:[%s421 + $0x238] sm:$0xff]
        %v582 = vld [vmem:[%s421 + $0x240] sm:$0xff]
        %v583 = vld [vmem:[%s421 + $0x248] sm:$0xff]
        %v584 = vld [vmem:[%s421 + $0x250] sm:$0xff]
        %v585 = vld [vmem:[%s421 + $0x258] sm:$0xff]
        %v586 = vld [vmem:[%s421 + $0x260] sm:$0xff]
        %v587 = vld [vmem:[%s421 + $0x268] sm:$0xff]
        %v588 = vld [vmem:[%s421 + $0x270] sm:$0xff]
        %v589 = vld [vmem:[%s421 + $0x278] sm:$0xff]
        %v590 = vld [vmem:[%s421 + $0x280] sm:$0xff]
        %v591 = vld [vmem:[%s421 + $0x288] sm:$0xff]
        %v592 = vld [vmem:[%s421 + $0x290] sm:$0xff]
        %v593 = vld [vmem:[%s421 + $0x298] sm:$0xff]
        %v594 = vld [vmem:[%s421 + $0x2a0] sm:$0xff]
        %v595 = vld [vmem:[%s421 + $0x2a8] sm:$0xff]
        %v596 = vld [vmem:[%s421 + $0x2b0] sm:$0xff]
        %v597 = vld [vmem:[%s421 + $0x2b8] sm:$0xff]
        %v598 = vld [vmem:[%s421 + $0x2c0] sm:$0xff]
        %v599 = vld [vmem:[%s421 + $0x2c8] sm:$0xff]
        %v600 = vld [vmem:[%s421 + $0x2d0] sm:$0xff]
        %v601 = vld [vmem:[%s421 + $0x2d8] sm:$0xff]
        %v602 = vld [vmem:[%s421 + $0x2e0] sm:$0xff]
        %v603 = vld [vmem:[%s421 + $0x2e8] sm:$0xff]
        %v604 = vld [vmem:[%s421 + $0x2f0] sm:$0xff]
        %v605 = vld [vmem:[%s421 + $0x2f8] sm:$0xff]
        %v606 = vld [vmem:[%s421 + $0x300] sm:$0xff]
        %v607 = vld [vmem:[%s421 + $0x308] sm:$0xff]
        %v608 = vld [vmem:[%s421 + $0x310] sm:$0xff]
        %v609 = vld [vmem:[%s421 + $0x318] sm:$0xff]
        %v610 = vld [vmem:[%s421 + $0x320] sm:$0xff]
        %v611 = vld [vmem:[%s421 + $0x328] sm:$0xff]
        %v612 = vld [vmem:[%s421 + $0x330] sm:$0xff]
        %v613 = vld [vmem:[%s421 + $0x338] sm:$0xff]
        %v614 = vld [vmem:[%s421 + $0x340] sm:$0xff]
        %v615 = vld [vmem:[%s421 + $0x348] sm:$0xff]
        %v616 = vld [vmem:[%s421 + $0x350] sm:$0xff]
        %v617 = vld [vmem:[%s421 + $0x358] sm:$0xff]
        %v618 = vld [vmem:[%s421 + $0x360] sm:$0xff]
        %v619 = vld [vmem:[%s421 + $0x368] sm:$0xff]
        %v620 = vld [vmem:[%s421 + $0x370] sm:$0xff]
        %v621 = vld [vmem:[%s421 + $0x378] sm:$0xff]
        %v622 = vld [vmem:[%s421 + $0x380] sm:$0xff]
        %v623 = vld [vmem:[%s421 + $0x388] sm:$0xff]
        %v624 = vld [vmem:[%s421 + $0x390] sm:$0xff]
        %v625 = vld [vmem:[%s421 + $0x398] sm:$0xff]
        %v626 = vld [vmem:[%s421 + $0x3a0] sm:$0xff]
        %v627 = vld [vmem:[%s421 + $0x3a8] sm:$0xff]
        %v628 = vld [vmem:[%s421 + $0x3b0] sm:$0xff]
        %v629 = vld [vmem:[%s421 + $0x3b8] sm:$0xff]
        %v630 = vld [vmem:[%s421 + $0x3c0] sm:$0xff]
        %v631 = vld [vmem:[%s421 + $0x3c8] sm:$0xff]
        %v632 = vld [vmem:[%s421 + $0x3d0] sm:$0xff]
        %v633 = vld [vmem:[%s421 + $0x3d8] sm:$0xff]
        %v634 = vld [vmem:[%s421 + $0x3e0] sm:$0xff]
        %v635 = vld [vmem:[%s421 + $0x3e8] sm:$0xff]
        %v636 = vld [vmem:[%s421 + $0x3f0] sm:$0xff]
        %v637 = vld [vmem:[%s421 + $0x3f8] sm:$0xff]
        %v638 = vld [vmem:[%s421 + $0x400] sm:$0xff]
        %v639 = vld [vmem:[%s421 + $0x408] sm:$0xff]
        %v640 = vld [vmem:[%s421 + $0x410] sm:$0xff]
        %v641 = vld [vmem:[%s421 + $0x418] sm:$0xff]
        %v642 = vld [vmem:[%s421 + $0x420] sm:$0xff]
        %v643 = vld [vmem:[%s421 + $0x428] sm:$0xff]
        %v644 = vld [vmem:[%s421 + $0x430] sm:$0xff]
        %v645 = vld [vmem:[%s421 + $0x438] sm:$0xff]
        %v646 = vld [vmem:[%s421 + $0x440] sm:$0xff]
        %v647 = vld [vmem:[%s421 + $0x448] sm:$0xff]
        %v648 = vld [vmem:[%s421 + $0x450] sm:$0xff]
        %v649 = vld [vmem:[%s421 + $0x458] sm:$0xff]
        %v650 = vld [vmem:[%s421 + $0x460] sm:$0xff]
        %v651 = vld [vmem:[%s421 + $0x468] sm:$0xff]
        %v652 = vld [vmem:[%s421 + $0x470] sm:$0xff]
        %v653 = vld [vmem:[%s421 + $0x478] sm:$0xff]
        %v654 = vld [vmem:[%s421 + $0x480] sm:$0xff]
        %v655 = vld [vmem:[%s421 + $0x488] sm:$0xff]
        %v656 = vld [vmem:[%s421 + $0x490] sm:$0xff]
        %v657 = vld [vmem:[%s421 + $0x498] sm:$0xff]
        %v658 = vld [vmem:[%s421 + $0x4a0] sm:$0xff]
        %v659 = vld [vmem:[%s421 + $0x4a8] sm:$0xff]
        %v660 = vld [vmem:[%s421 + $0x4b0] sm:$0xff]
        %v661 = vld [vmem:[%s421 + $0x4b8] sm:$0xff]
        %v662 = vld [vmem:[%s421 + $0x4c0] sm:$0xff]
        %v663 = vld [vmem:[%s421 + $0x4c8] sm:$0xff]
        %v664 = vld [vmem:[%s421 + $0x4d0] sm:$0xff]
        %v665 = vld [vmem:[%s421 + $0x4d8] sm:$0xff]
        %v666 = vld [vmem:[%s421 + $0x4e0] sm:$0xff]
        %v667 = vld [vmem:[%s421 + $0x4e8] sm:$0xff]
        %v668 = vld [vmem:[%s421 + $0x4f0] sm:$0xff]
        %v669 = vld [vmem:[%s421 + $0x4f8] sm:$0xff]
        %v670 = vld [vmem:[%s421 + $0x500] sm:$0xff]
        %v671 = vld [vmem:[%s421 + $0x508] sm:$0xff]
        %v672 = vld [vmem:[%s421 + $0x510] sm:$0xff]
        %v673 = vld [vmem:[%s421 + $0x518] sm:$0xff]
        %v674 = vld [vmem:[%s421 + $0x520] sm:$0xff]
        %v675 = vld [vmem:[%s421 + $0x528] sm:$0xff]
        %v676 = vld [vmem:[%s421 + $0x530] sm:$0xff]
        %v677 = vld [vmem:[%s421 + $0x538] sm:$0xff]
        %v678 = vld [vmem:[%s421 + $0x540] sm:$0xff]
        %v679 = vld [vmem:[%s421 + $0x548] sm:$0xff]
        %v680 = vld [vmem:[%s421 + $0x550] sm:$0xff]
        %v681 = vld [vmem:[%s421 + $0x558] sm:$0xff]
        %v682 = vld [vmem:[%s421 + $0x560] sm:$0xff]
        %v683 = vld [vmem:[%s421 + $0x568] sm:$0xff]
        %v684 = vld [vmem:[%s421 + $0x570] sm:$0xff]
        %v685 = vld [vmem:[%s421 + $0x578] sm:$0xff]
        %v686 = vld [vmem:[%s421 + $0x580] sm:$0xff]
        %v687 = vld [vmem:[%s421 + $0x588] sm:$0xff]
        %v688 = vld [vmem:[%s421 + $0x590] sm:$0xff]
        %v689 = vld [vmem:[%s421 + $0x598] sm:$0xff]
        %v690 = vld [vmem:[%s421 + $0x5a0] sm:$0xff]
        %v691 = vld [vmem:[%s421 + $0x5a8] sm:$0xff]
        %v692 = vld [vmem:[%s421 + $0x5b0] sm:$0xff]
        %v693 = vld [vmem:[%s421 + $0x5b8] sm:$0xff]
        %v694 = vld [vmem:[%s421 + $0x5c0] sm:$0xff]
        %v695 = vld [vmem:[%s421 + $0x5c8] sm:$0xff]
        %v696 = vld [vmem:[%s421 + $0x5d0] sm:$0xff]
        %v697 = vld [vmem:[%s421 + $0x5d8] sm:$0xff]
        %v698 = vld [vmem:[%s421 + $0x5e0] sm:$0xff]
        %v699 = vld [vmem:[%s421 + $0x5e8] sm:$0xff]
        %v700 = vld [vmem:[%s421 + $0x5f0] sm:$0xff]
        %v701 = vld [vmem:[%s421 + $0x5f8] sm:$0xff]
        %v702 = vld [vmem:[%s421 + $0x600] sm:$0xff]
        %v703 = vld [vmem:[%s421 + $0x608] sm:$0xff]
        %v704 = vld [vmem:[%s421 + $0x610] sm:$0xff]
        %v705 = vld [vmem:[%s421 + $0x618] sm:$0xff]
        %v706 = vld [vmem:[%s421 + $0x620] sm:$0xff]
        %v707 = vld [vmem:[%s421 + $0x628] sm:$0xff]
        %v708 = vld [vmem:[%s421 + $0x630] sm:$0xff]
        %v709 = vld [vmem:[%s421 + $0x638] sm:$0xff]
        %v710 = vld [vmem:[%s421 + $0x640] sm:$0xff]
        %v711 = vld [vmem:[%s421 + $0x648] sm:$0xff]
        %v712 = vld [vmem:[%s421 + $0x650] sm:$0xff]
        %v713 = vld [vmem:[%s421 + $0x658] sm:$0xff]
        %v714 = vld [vmem:[%s421 + $0x660] sm:$0xff]
        %v715 = vld [vmem:[%s421 + $0x668] sm:$0xff]
        %v716 = vld [vmem:[%s421 + $0x670] sm:$0xff]
        %v717 = vld [vmem:[%s421 + $0x678] sm:$0xff]
        %v718 = vld [vmem:[%s421 + $0x680] sm:$0xff]
        %v719 = vld [vmem:[%s421 + $0x688] sm:$0xff]
        %v720 = vld [vmem:[%s421 + $0x690] sm:$0xff]
        %v721 = vld [vmem:[%s421 + $0x698] sm:$0xff]
        %v722 = vld [vmem:[%s421 + $0x6a0] sm:$0xff]
        %v723 = vld [vmem:[%s421 + $0x6a8] sm:$0xff]
        %v724 = vld [vmem:[%s421 + $0x6b0] sm:$0xff]
        %v725 = vld [vmem:[%s421 + $0x6b8] sm:$0xff]
        %v726 = vld [vmem:[%s421 + $0x6c0] sm:$0xff]
        %v727 = vld [vmem:[%s421 + $0x6c8] sm:$0xff]
        %v728 = vld [vmem:[%s421 + $0x6d0] sm:$0xff]
        %v729 = vld [vmem:[%s421 + $0x6d8] sm:$0xff]
        %v730 = vld [vmem:[%s421 + $0x6e0] sm:$0xff]
        %v731 = vld [vmem:[%s421 + $0x6e8] sm:$0xff]
        %v732 = vld [vmem:[%s421 + $0x6f0] sm:$0xff]
        %v733 = vld [vmem:[%s421 + $0x6f8] sm:$0xff]
        %v734 = vld [vmem:[%s421 + $0x700] sm:$0xff]
        %v735 = vld [vmem:[%s421 + $0x708] sm:$0xff]
        %v736 = vld [vmem:[%s421 + $0x710] sm:$0xff]
        %v737 = vld [vmem:[%s421 + $0x718] sm:$0xff]
        %v738 = vld [vmem:[%s421 + $0x720] sm:$0xff]
        %v739 = vld [vmem:[%s421 + $0x728] sm:$0xff]
        %v740 = vld [vmem:[%s421 + $0x730] sm:$0xff]
        %v741 = vld [vmem:[%s421 + $0x738] sm:$0xff]
        %v742 = vld [vmem:[%s421 + $0x740] sm:$0xff]
        %v743 = vld [vmem:[%s421 + $0x748] sm:$0xff]
        %v744 = vld [vmem:[%s421 + $0x750] sm:$0xff]
        %v745 = vld [vmem:[%s421 + $0x758] sm:$0xff]
        %v746 = vld [vmem:[%s421 + $0x760] sm:$0xff]
        %v747 = vld [vmem:[%s421 + $0x768] sm:$0xff]
        %v748 = vld [vmem:[%s421 + $0x770] sm:$0xff]
        %v749 = vld [vmem:[%s421 + $0x778] sm:$0xff]
        %v750 = vld [vmem:[%s421 + $0x780] sm:$0xff]
        %v751 = vld [vmem:[%s421 + $0x788] sm:$0xff]
        %v752 = vld [vmem:[%s421 + $0x790] sm:$0xff]
        %v753 = vld [vmem:[%s421 + $0x798] sm:$0xff]
        %v754 = vld [vmem:[%s421 + $0x7a0] sm:$0xff]
        %v755 = vld [vmem:[%s421 + $0x7a8] sm:$0xff]
        %v756 = vld [vmem:[%s421 + $0x7b0] sm:$0xff]
        %v757 = vld [vmem:[%s421 + $0x7b8] sm:$0xff]
        %v758 = vld [vmem:[%s421 + $0x7c0] sm:$0xff]
        %v759 = vld [vmem:[%s421 + $0x7c8] sm:$0xff]
        %v760 = vld [vmem:[%s421 + $0x7d0] sm:$0xff]
        %v761 = vld [vmem:[%s421 + $0x7d8] sm:$0xff]
        %v762 = vld [vmem:[%s421 + $0x7e0] sm:$0xff]
        %v763 = vld [vmem:[%s421 + $0x7e8] sm:$0xff]
        %v764 = vld [vmem:[%s421 + $0x7f0] sm:$0xff]
        %v765 = vld [vmem:[%s421 + $0x7f8] sm:$0xff]
        %v766 = vld [vmem:[%s421 + $0x800] sm:$0xff]
        %v767 = vld [vmem:[%s421 + $0x808] sm:$0xff]
        %v768 = vld [vmem:[%s421 + $0x810] sm:$0xff]
        %v769 = vld [vmem:[%s421 + $0x818] sm:$0xff]
        %v770 = vld [vmem:[%s421 + $0x820] sm:$0xff]
        %v771 = vld [vmem:[%s421 + $0x828] sm:$0xff]
        %v772 = vld [vmem:[%s421 + $0x830] sm:$0xff]
        %v773 = vld [vmem:[%s421 + $0x838] sm:$0xff]
        %v774 = vld [vmem:[%s421 + $0x840] sm:$0xff]
        %v775 = vld [vmem:[%s421 + $0x848] sm:$0xff]
        %v776 = vld [vmem:[%s421 + $0x850] sm:$0xff]
        %v777 = vld [vmem:[%s421 + $0x858] sm:$0xff]
        %v778 = vld [vmem:[%s421 + $0x860] sm:$0xff]
        %v779 = vld [vmem:[%s421 + $0x868] sm:$0xff]
        %v780 = vld [vmem:[%s421 + $0x870] sm:$0xff]
        %v781 = vld [vmem:[%s421 + $0x878] sm:$0xff]
        %v782 = vld [vmem:[%s421 + $0x880] sm:$0xff]
        %v783 = vld [vmem:[%s421 + $0x888] sm:$0xff]
        %v784 = vld [vmem:[%s421 + $0x890] sm:$0xff]
        %v785 = vld [vmem:[%s421 + $0x898] sm:$0xff]
        %v786 = vld [vmem:[%s421 + $0x8a0] sm:$0xff]
        %v787 = vld [vmem:[%s421 + $0x8a8] sm:$0xff]
        %v788 = vld [vmem:[%s421 + $0x8b0] sm:$0xff]
        %v789 = vld [vmem:[%s421 + $0x8b8] sm:$0xff]
        %v790 = vld [vmem:[%s421 + $0x8c0] sm:$0xff]
        %v791 = vld [vmem:[%s421 + $0x8c8] sm:$0xff]
        %v792 = vld [vmem:[%s421 + $0x8d0] sm:$0xff]
        %v793 = vld [vmem:[%s421 + $0x8d8] sm:$0xff]
        %v794 = vld [vmem:[%s421 + $0x8e0] sm:$0xff]
        %v795 = vld [vmem:[%s421 + $0x8e8] sm:$0xff]
        %v796 = vld [vmem:[%s421 + $0x8f0] sm:$0xff]
        %v797 = vld [vmem:[%s421 + $0x8f8] sm:$0xff]
        %v798 = vld [vmem:[%s421 + $0x900] sm:$0xff]
        %v799 = vld [vmem:[%s421 + $0x908] sm:$0xff]
        %v800 = vld [vmem:[%s421 + $0x910] sm:$0xff]
        %v801 = vld [vmem:[%s421 + $0x918] sm:$0xff]
        %v802 = vld [vmem:[%s421 + $0x920] sm:$0xff]
        %v803 = vld [vmem:[%s421 + $0x928] sm:$0xff]
        %v804 = vld [vmem:[%s421 + $0x930] sm:$0xff]
        %v805 = vld [vmem:[%s421 + $0x938] sm:$0xff]
        %v806 = vld [vmem:[%s421 + $0x940] sm:$0xff]
        %v807 = vld [vmem:[%s421 + $0x948] sm:$0xff]
        %v808 = vld [vmem:[%s421 + $0x950] sm:$0xff]
        %v809 = vld [vmem:[%s421 + $0x958] sm:$0xff]
        %v810 = vld [vmem:[%s421 + $0x960] sm:$0xff]
        %v811 = vld [vmem:[%s421 + $0x968] sm:$0xff]
        %v812 = vld [vmem:[%s421 + $0x970] sm:$0xff]
        %v813 = vld [vmem:[%s421 + $0x978] sm:$0xff]
        %v814 = vld [vmem:[%s421 + $0x980] sm:$0xff]
        %v815 = vld [vmem:[%s421 + $0x988] sm:$0xff]
        %v816 = vld [vmem:[%s421 + $0x990] sm:$0xff]
        %v817 = vld [vmem:[%s421 + $0x998] sm:$0xff]
        %v818 = vld [vmem:[%s421 + $0x9a0] sm:$0xff]
        %v819 = vld [vmem:[%s421 + $0x9a8] sm:$0xff]
        %v820 = vld [vmem:[%s421 + $0x9b0] sm:$0xff]
        %v821 = vld [vmem:[%s421 + $0x9b8] sm:$0xff]
        %v822 = vld [vmem:[%s421 + $0x9c0] sm:$0xff]
        %v823 = vld [vmem:[%s421 + $0x9c8] sm:$0xff]
        %v824 = vld [vmem:[%s421 + $0x9d0] sm:$0xff]
        %v825 = vld [vmem:[%s421 + $0x9d8] sm:$0xff]
        %v826 = vld [vmem:[%s421 + $0x9e0] sm:$0xff]
        %v827 = vld [vmem:[%s421 + $0x9e8] sm:$0xff]
        %v828 = vld [vmem:[%s421 + $0x9f0] sm:$0xff]
        %v829 = vld [vmem:[%s421 + $0x9f8] sm:$0xff]
        %v870 = vunpack.c.l.b16 %v470
        %v871 = vunpack.c.h.b16 %v470
        %v872 = vunpack.c.l.b16 %v471
        %v873 = vunpack.c.h.b16 %v471
        %v874 = vunpack.c.l.b16 %v472
        %v875 = vunpack.c.h.b16 %v472
        %v876 = vunpack.c.l.b16 %v473
        %v877 = vunpack.c.h.b16 %v473
        %v878 = vunpack.c.l.b16 %v474
        %v879 = vunpack.c.h.b16 %v474
        %v880 = vunpack.c.l.b16 %v475
        %v881 = vunpack.c.h.b16 %v475
        %v882 = vunpack.c.l.b16 %v476
        %v883 = vunpack.c.h.b16 %v476
        %v884 = vunpack.c.l.b16 %v477
        %v885 = vunpack.c.h.b16 %v477
        %v886 = vunpack.c.l.b16 %v478
        %v887 = vunpack.c.h.b16 %v478
        %v888 = vunpack.c.l.b16 %v479
        %v889 = vunpack.c.h.b16 %v479
        %v890 = vunpack.c.l.b16 %v480
        %v891 = vunpack.c.h.b16 %v480
        %v892 = vunpack.c.l.b16 %v481
        %v893 = vunpack.c.h.b16 %v481
        %v894 = vunpack.c.l.b16 %v482
        %v895 = vunpack.c.h.b16 %v482
        %v896 = vunpack.c.l.b16 %v483
        %v897 = vunpack.c.h.b16 %v483
        %v898 = vunpack.c.l.b16 %v484
        %v899 = vunpack.c.h.b16 %v484
        %v900 = vunpack.c.l.b16 %v485
        %v901 = vunpack.c.h.b16 %v485
        %v902 = vunpack.c.l.b16 %v486
        %v903 = vunpack.c.h.b16 %v486
        %v904 = vunpack.c.l.b16 %v487
        %v905 = vunpack.c.h.b16 %v487
        %v906 = vunpack.c.l.b16 %v488
        %v907 = vunpack.c.h.b16 %v488
        %v908 = vunpack.c.l.b16 %v489
        %v909 = vunpack.c.h.b16 %v489
        %v910 = vunpack.c.l.b16 %v490
        %v911 = vunpack.c.h.b16 %v490
        %v912 = vunpack.c.l.b16 %v491
        %v913 = vunpack.c.h.b16 %v491
        %v914 = vunpack.c.l.b16 %v492
        %v915 = vunpack.c.h.b16 %v492
        %v916 = vunpack.c.l.b16 %v493
        %v917 = vunpack.c.h.b16 %v493
        %v918 = vunpack.c.l.b16 %v494
        %v919 = vunpack.c.h.b16 %v494
        %v920 = vunpack.c.l.b16 %v495
        %v921 = vunpack.c.h.b16 %v495
        %v922 = vunpack.c.l.b16 %v496
        %v923 = vunpack.c.h.b16 %v496
        %v924 = vunpack.c.l.b16 %v497
        %v925 = vunpack.c.h.b16 %v497
        %v926 = vunpack.c.l.b16 %v498
        %v927 = vunpack.c.h.b16 %v498
        %v928 = vunpack.c.l.b16 %v499
        %v929 = vunpack.c.h.b16 %v499
        %v930 = vunpack.c.l.b16 %v500
        %v931 = vunpack.c.h.b16 %v500
        %v932 = vunpack.c.l.b16 %v501
        %v933 = vunpack.c.h.b16 %v501
        %v934 = vunpack.c.l.b16 %v502
        %v935 = vunpack.c.h.b16 %v502
        %v936 = vunpack.c.l.b16 %v503
        %v937 = vunpack.c.h.b16 %v503
        %v938 = vunpack.c.l.b16 %v504
        %v939 = vunpack.c.h.b16 %v504
        %v940 = vunpack.c.l.b16 %v505
        %v941 = vunpack.c.h.b16 %v505
        %v942 = vunpack.c.l.b16 %v506
        %v943 = vunpack.c.h.b16 %v506
        %v944 = vunpack.c.l.b16 %v507
        %v945 = vunpack.c.h.b16 %v507
        %v946 = vunpack.c.l.b16 %v508
        %v947 = vunpack.c.h.b16 %v508
        %v948 = vunpack.c.l.b16 %v509
        %v949 = vunpack.c.h.b16 %v509
        %v950 = vpack.c.b16 %v890, %v870
        %v951 = vpack.c.b16 %v891, %v871
        %v952 = vpack.c.b16 %v892, %v872
        %v953 = vpack.c.b16 %v893, %v873
        %v954 = vpack.c.b16 %v894, %v874
        %v955 = vpack.c.b16 %v895, %v875
        %v956 = vpack.c.b16 %v896, %v876
        %v957 = vpack.c.b16 %v897, %v877
        %v958 = vpack.c.b16 %v898, %v878
        %v959 = vpack.c.b16 %v899, %v879
        %v960 = vpack.c.b16 %v900, %v880
        %v961 = vpack.c.b16 %v901, %v881
        %v962 = vpack.c.b16 %v902, %v882
        %v963 = vpack.c.b16 %v903, %v883
        %v964 = vpack.c.b16 %v904, %v884
        %v965 = vpack.c.b16 %v905, %v885
        %v966 = vpack.c.b16 %v906, %v886
        %v967 = vpack.c.b16 %v907, %v887
        %v968 = vpack.c.b16 %v908, %v888
        %v969 = vpack.c.b16 %v909, %v889
        %v970 = vpack.c.b16 %v930, %v910
        %v971 = vpack.c.b16 %v931, %v911
        %v972 = vpack.c.b16 %v932, %v912
        %v973 = vpack.c.b16 %v933, %v913
        %v974 = vpack.c.b16 %v934, %v914
        %v975 = vpack.c.b16 %v935, %v915
        %v976 = vpack.c.b16 %v936, %v916
        %v977 = vpack.c.b16 %v937, %v917
        %v978 = vpack.c.b16 %v938, %v918
        %v979 = vpack.c.b16 %v939, %v919
        %v980 = vpack.c.b16 %v940, %v920
        %v981 = vpack.c.b16 %v941, %v921
        %v982 = vpack.c.b16 %v942, %v922
        %v983 = vpack.c.b16 %v943, %v923
        %v984 = vpack.c.b16 %v944, %v924
        %v985 = vpack.c.b16 %v945, %v925
        %v986 = vpack.c.b16 %v946, %v926
        %v987 = vpack.c.b16 %v947, %v927
        %v988 = vpack.c.b16 %v948, %v928
        %v989 = vpack.c.b16 %v949, %v929
        %v1350 = vunpack.c.l.b16 %v510
        %v1351 = vunpack.c.h.b16 %v510
        %v1352 = vunpack.c.l.b16 %v511
        %v1353 = vunpack.c.h.b16 %v511
        %v1354 = vunpack.c.l.b16 %v512
        %v1355 = vunpack.c.h.b16 %v512
        %v1356 = vunpack.c.l.b16 %v513
        %v1357 = vunpack.c.h.b16 %v513
        %v1358 = vunpack.c.l.b16 %v514
        %v1359 = vunpack.c.h.b16 %v514
        %v1360 = vunpack.c.l.b16 %v515
        %v1361 = vunpack.c.h.b16 %v515
        %v1362 = vunpack.c.l.b16 %v516
        %v1363 = vunpack.c.h.b16 %v516
        %v1364 = vunpack.c.l.b16 %v517
        %v1365 = vunpack.c.h.b16 %v517
        %v1366 = vunpack.c.l.b16 %v518
        %v1367 = vunpack.c.h.b16 %v518
        %v1368 = vunpack.c.l.b16 %v519
        %v1369 = vunpack.c.h.b16 %v519
        %v1370 = vunpack.c.l.b16 %v520
        %v1371 = vunpack.c.h.b16 %v520
        %v1372 = vunpack.c.l.b16 %v521
        %v1373 = vunpack.c.h.b16 %v521
        %v1374 = vunpack.c.l.b16 %v522
        %v1375 = vunpack.c.h.b16 %v522
        %v1376 = vunpack.c.l.b16 %v523
        %v1377 = vunpack.c.h.b16 %v523
        %v1378 = vunpack.c.l.b16 %v524
        %v1379 = vunpack.c.h.b16 %v524
        %v1380 = vunpack.c.l.b16 %v525
        %v1381 = vunpack.c.h.b16 %v525
        %v1382 = vunpack.c.l.b16 %v526
        %v1383 = vunpack.c.h.b16 %v526
        %v1384 = vunpack.c.l.b16 %v527
        %v1385 = vunpack.c.h.b16 %v527
        %v1386 = vunpack.c.l.b16 %v528
        %v1387 = vunpack.c.h.b16 %v528
        %v1388 = vunpack.c.l.b16 %v529
        %v1389 = vunpack.c.h.b16 %v529
        %v1390 = vunpack.c.l.b16 %v530
        %v1391 = vunpack.c.h.b16 %v530
        %v1392 = vunpack.c.l.b16 %v531
        %v1393 = vunpack.c.h.b16 %v531
        %v1394 = vunpack.c.l.b16 %v532
        %v1395 = vunpack.c.h.b16 %v532
        %v1396 = vunpack.c.l.b16 %v533
        %v1397 = vunpack.c.h.b16 %v533
        %v1398 = vunpack.c.l.b16 %v534
        %v1399 = vunpack.c.h.b16 %v534
        %v1400 = vunpack.c.l.b16 %v535
        %v1401 = vunpack.c.h.b16 %v535
        %v1402 = vunpack.c.l.b16 %v536
        %v1403 = vunpack.c.h.b16 %v536
        %v1404 = vunpack.c.l.b16 %v537
        %v1405 = vunpack.c.h.b16 %v537
        %v1406 = vunpack.c.l.b16 %v538
        %v1407 = vunpack.c.h.b16 %v538
        %v1408 = vunpack.c.l.b16 %v539
        %v1409 = vunpack.c.h.b16 %v539
        %v1410 = vunpack.c.l.b16 %v540
        %v1411 = vunpack.c.h.b16 %v540
        %v1412 = vunpack.c.l.b16 %v541
        %v1413 = vunpack.c.h.b16 %v541
        %v1414 = vunpack.c.l.b16 %v542
        %v1415 = vunpack.c.h.b16 %v542
        %v1416 = vunpack.c.l.b16 %v543
        %v1417 = vunpack.c.h.b16 %v543
        %v1418 = vunpack.c.l.b16 %v544
        %v1419 = vunpack.c.h.b16 %v544
        %v1420 = vunpack.c.l.b16 %v545
        %v1421 = vunpack.c.h.b16 %v545
        %v1422 = vunpack.c.l.b16 %v546
        %v1423 = vunpack.c.h.b16 %v546
        %v1424 = vunpack.c.l.b16 %v547
        %v1425 = vunpack.c.h.b16 %v547
        %v1426 = vunpack.c.l.b16 %v548
        %v1427 = vunpack.c.h.b16 %v548
        %v1428 = vunpack.c.l.b16 %v549
        %v1429 = vunpack.c.h.b16 %v549
        %v1430 = vunpack.c.l.b16 %v550
        %v1431 = vunpack.c.h.b16 %v550
        %v1432 = vunpack.c.l.b16 %v551
        %v1433 = vunpack.c.h.b16 %v551
        %v1434 = vunpack.c.l.b16 %v552
        %v1435 = vunpack.c.h.b16 %v552
        %v1436 = vunpack.c.l.b16 %v553
        %v1437 = vunpack.c.h.b16 %v553
        %v1438 = vunpack.c.l.b16 %v554
        %v1439 = vunpack.c.h.b16 %v554
        %v1440 = vunpack.c.l.b16 %v555
        %v1441 = vunpack.c.h.b16 %v555
        %v1442 = vunpack.c.l.b16 %v556
        %v1443 = vunpack.c.h.b16 %v556
        %v1444 = vunpack.c.l.b16 %v557
        %v1445 = vunpack.c.h.b16 %v557
        %v1446 = vunpack.c.l.b16 %v558
        %v1447 = vunpack.c.h.b16 %v558
        %v1448 = vunpack.c.l.b16 %v559
        %v1449 = vunpack.c.h.b16 %v559
        %v1450 = vunpack.c.l.b16 %v560
        %v1451 = vunpack.c.h.b16 %v560
        %v1452 = vunpack.c.l.b16 %v561
        %v1453 = vunpack.c.h.b16 %v561
        %v1454 = vunpack.c.l.b16 %v562
        %v1455 = vunpack.c.h.b16 %v562
        %v1456 = vunpack.c.l.b16 %v563
        %v1457 = vunpack.c.h.b16 %v563
        %v1458 = vunpack.c.l.b16 %v564
        %v1459 = vunpack.c.h.b16 %v564
        %v1460 = vunpack.c.l.b16 %v565
        %v1461 = vunpack.c.h.b16 %v565
        %v1462 = vunpack.c.l.b16 %v566
        %v1463 = vunpack.c.h.b16 %v566
        %v1464 = vunpack.c.l.b16 %v567
        %v1465 = vunpack.c.h.b16 %v567
        %v1466 = vunpack.c.l.b16 %v568
        %v1467 = vunpack.c.h.b16 %v568
        %v1468 = vunpack.c.l.b16 %v569
        %v1469 = vunpack.c.h.b16 %v569
        %v1470 = vunpack.c.l.b16 %v570
        %v1471 = vunpack.c.h.b16 %v570
        %v1472 = vunpack.c.l.b16 %v571
        %v1473 = vunpack.c.h.b16 %v571
        %v1474 = vunpack.c.l.b16 %v572
        %v1475 = vunpack.c.h.b16 %v572
        %v1476 = vunpack.c.l.b16 %v573
        %v1477 = vunpack.c.h.b16 %v573
        %v1478 = vunpack.c.l.b16 %v574
        %v1479 = vunpack.c.h.b16 %v574
        %v1480 = vunpack.c.l.b16 %v575
        %v1481 = vunpack.c.h.b16 %v575
        %v1482 = vunpack.c.l.b16 %v576
        %v1483 = vunpack.c.h.b16 %v576
        %v1484 = vunpack.c.l.b16 %v577
        %v1485 = vunpack.c.h.b16 %v577
        %v1486 = vunpack.c.l.b16 %v578
        %v1487 = vunpack.c.h.b16 %v578
        %v1488 = vunpack.c.l.b16 %v579
        %v1489 = vunpack.c.h.b16 %v579
        %v1490 = vunpack.c.l.b16 %v580
        %v1491 = vunpack.c.h.b16 %v580
        %v1492 = vunpack.c.l.b16 %v581
        %v1493 = vunpack.c.h.b16 %v581
        %v1494 = vunpack.c.l.b16 %v582
        %v1495 = vunpack.c.h.b16 %v582
        %v1496 = vunpack.c.l.b16 %v583
        %v1497 = vunpack.c.h.b16 %v583
        %v1498 = vunpack.c.l.b16 %v584
        %v1499 = vunpack.c.h.b16 %v584
        %v1500 = vunpack.c.l.b16 %v585
        %v1501 = vunpack.c.h.b16 %v585
        %v1502 = vunpack.c.l.b16 %v586
        %v1503 = vunpack.c.h.b16 %v586
        %v1504 = vunpack.c.l.b16 %v587
        %v1505 = vunpack.c.h.b16 %v587
        %v1506 = vunpack.c.l.b16 %v588
        %v1507 = vunpack.c.h.b16 %v588
        %v1508 = vunpack.c.l.b16 %v589
        %v1509 = vunpack.c.h.b16 %v589
        %v1510 = vunpack.c.l.b16 %v590
        %v1511 = vunpack.c.h.b16 %v590
        %v1512 = vunpack.c.l.b16 %v591
        %v1513 = vunpack.c.h.b16 %v591
        %v1514 = vunpack.c.l.b16 %v592
        %v1515 = vunpack.c.h.b16 %v592
        %v1516 = vunpack.c.l.b16 %v593
        %v1517 = vunpack.c.h.b16 %v593
        %v1518 = vunpack.c.l.b16 %v594
        %v1519 = vunpack.c.h.b16 %v594
        %v1520 = vunpack.c.l.b16 %v595
        %v1521 = vunpack.c.h.b16 %v595
        %v1522 = vunpack.c.l.b16 %v596
        %v1523 = vunpack.c.h.b16 %v596
        %v1524 = vunpack.c.l.b16 %v597
        %v1525 = vunpack.c.h.b16 %v597
        %v1526 = vunpack.c.l.b16 %v598
        %v1527 = vunpack.c.h.b16 %v598
        %v1528 = vunpack.c.l.b16 %v599
        %v1529 = vunpack.c.h.b16 %v599
        %v1530 = vunpack.c.l.b16 %v600
        %v1531 = vunpack.c.h.b16 %v600
        %v1532 = vunpack.c.l.b16 %v601
        %v1533 = vunpack.c.h.b16 %v601
        %v1534 = vunpack.c.l.b16 %v602
        %v1535 = vunpack.c.h.b16 %v602
        %v1536 = vunpack.c.l.b16 %v603
        %v1537 = vunpack.c.h.b16 %v603
        %v1538 = vunpack.c.l.b16 %v604
        %v1539 = vunpack.c.h.b16 %v604
        %v1540 = vunpack.c.l.b16 %v605
        %v1541 = vunpack.c.h.b16 %v605
        %v1542 = vunpack.c.l.b16 %v606
        %v1543 = vunpack.c.h.b16 %v606
        %v1544 = vunpack.c.l.b16 %v607
        %v1545 = vunpack.c.h.b16 %v607
        %v1546 = vunpack.c.l.b16 %v608
        %v1547 = vunpack.c.h.b16 %v608
        %v1548 = vunpack.c.l.b16 %v609
        %v1549 = vunpack.c.h.b16 %v609
        %v1550 = vunpack.c.l.b16 %v610
        %v1551 = vunpack.c.h.b16 %v610
        %v1552 = vunpack.c.l.b16 %v611
        %v1553 = vunpack.c.h.b16 %v611
        %v1554 = vunpack.c.l.b16 %v612
        %v1555 = vunpack.c.h.b16 %v612
        %v1556 = vunpack.c.l.b16 %v613
        %v1557 = vunpack.c.h.b16 %v613
        %v1558 = vunpack.c.l.b16 %v614
        %v1559 = vunpack.c.h.b16 %v614
        %v1560 = vunpack.c.l.b16 %v615
        %v1561 = vunpack.c.h.b16 %v615
        %v1562 = vunpack.c.l.b16 %v616
        %v1563 = vunpack.c.h.b16 %v616
        %v1564 = vunpack.c.l.b16 %v617
        %v1565 = vunpack.c.h.b16 %v617
        %v1566 = vunpack.c.l.b16 %v618
        %v1567 = vunpack.c.h.b16 %v618
        %v1568 = vunpack.c.l.b16 %v619
        %v1569 = vunpack.c.h.b16 %v619
        %v1570 = vunpack.c.l.b16 %v620
        %v1571 = vunpack.c.h.b16 %v620
        %v1572 = vunpack.c.l.b16 %v621
        %v1573 = vunpack.c.h.b16 %v621
        %v1574 = vunpack.c.l.b16 %v622
        %v1575 = vunpack.c.h.b16 %v622
        %v1576 = vunpack.c.l.b16 %v623
        %v1577 = vunpack.c.h.b16 %v623
        %v1578 = vunpack.c.l.b16 %v624
        %v1579 = vunpack.c.h.b16 %v624
        %v1580 = vunpack.c.l.b16 %v625
        %v1581 = vunpack.c.h.b16 %v625
        %v1582 = vunpack.c.l.b16 %v626
        %v1583 = vunpack.c.h.b16 %v626
        %v1584 = vunpack.c.l.b16 %v627
        %v1585 = vunpack.c.h.b16 %v627
        %v1586 = vunpack.c.l.b16 %v628
        %v1587 = vunpack.c.h.b16 %v628
        %v1588 = vunpack.c.l.b16 %v629
        %v1589 = vunpack.c.h.b16 %v629
        %v1590 = vunpack.c.l.b16 %v630
        %v1591 = vunpack.c.h.b16 %v630
        %v1592 = vunpack.c.l.b16 %v631
        %v1593 = vunpack.c.h.b16 %v631
        %v1594 = vunpack.c.l.b16 %v632
        %v1595 = vunpack.c.h.b16 %v632
        %v1596 = vunpack.c.l.b16 %v633
        %v1597 = vunpack.c.h.b16 %v633
        %v1598 = vunpack.c.l.b16 %v634
        %v1599 = vunpack.c.h.b16 %v634
        %v1600 = vunpack.c.l.b16 %v635
        %v1601 = vunpack.c.h.b16 %v635
        %v1602 = vunpack.c.l.b16 %v636
        %v1603 = vunpack.c.h.b16 %v636
        %v1604 = vunpack.c.l.b16 %v637
        %v1605 = vunpack.c.h.b16 %v637
        %v1606 = vunpack.c.l.b16 %v638
        %v1607 = vunpack.c.h.b16 %v638
        %v1608 = vunpack.c.l.b16 %v639
        %v1609 = vunpack.c.h.b16 %v639
        %v1610 = vunpack.c.l.b16 %v640
        %v1611 = vunpack.c.h.b16 %v640
        %v1612 = vunpack.c.l.b16 %v641
        %v1613 = vunpack.c.h.b16 %v641
        %v1614 = vunpack.c.l.b16 %v642
        %v1615 = vunpack.c.h.b16 %v642
        %v1616 = vunpack.c.l.b16 %v643
        %v1617 = vunpack.c.h.b16 %v643
        %v1618 = vunpack.c.l.b16 %v644
        %v1619 = vunpack.c.h.b16 %v644
        %v1620 = vunpack.c.l.b16 %v645
        %v1621 = vunpack.c.h.b16 %v645
        %v1622 = vunpack.c.l.b16 %v646
        %v1623 = vunpack.c.h.b16 %v646
        %v1624 = vunpack.c.l.b16 %v647
        %v1625 = vunpack.c.h.b16 %v647
        %v1626 = vunpack.c.l.b16 %v648
        %v1627 = vunpack.c.h.b16 %v648
        %v1628 = vunpack.c.l.b16 %v649
        %v1629 = vunpack.c.h.b16 %v649
        %v1630 = vunpack.c.l.b16 %v650
        %v1631 = vunpack.c.h.b16 %v650
        %v1632 = vunpack.c.l.b16 %v651
        %v1633 = vunpack.c.h.b16 %v651
        %v1634 = vunpack.c.l.b16 %v652
        %v1635 = vunpack.c.h.b16 %v652
        %v1636 = vunpack.c.l.b16 %v653
        %v1637 = vunpack.c.h.b16 %v653
        %v1638 = vunpack.c.l.b16 %v654
        %v1639 = vunpack.c.h.b16 %v654
        %v1640 = vunpack.c.l.b16 %v655
        %v1641 = vunpack.c.h.b16 %v655
        %v1642 = vunpack.c.l.b16 %v656
        %v1643 = vunpack.c.h.b16 %v656
        %v1644 = vunpack.c.l.b16 %v657
        %v1645 = vunpack.c.h.b16 %v657
        %v1646 = vunpack.c.l.b16 %v658
        %v1647 = vunpack.c.h.b16 %v658
        %v1648 = vunpack.c.l.b16 %v659
        %v1649 = vunpack.c.h.b16 %v659
        %v1650 = vunpack.c.l.b16 %v660
        %v1651 = vunpack.c.h.b16 %v660
        %v1652 = vunpack.c.l.b16 %v661
        %v1653 = vunpack.c.h.b16 %v661
        %v1654 = vunpack.c.l.b16 %v662
        %v1655 = vunpack.c.h.b16 %v662
        %v1656 = vunpack.c.l.b16 %v663
        %v1657 = vunpack.c.h.b16 %v663
        %v1658 = vunpack.c.l.b16 %v664
        %v1659 = vunpack.c.h.b16 %v664
        %v1660 = vunpack.c.l.b16 %v665
        %v1661 = vunpack.c.h.b16 %v665
        %v1662 = vunpack.c.l.b16 %v666
        %v1663 = vunpack.c.h.b16 %v666
        %v1664 = vunpack.c.l.b16 %v667
        %v1665 = vunpack.c.h.b16 %v667
        %v1666 = vunpack.c.l.b16 %v668
        %v1667 = vunpack.c.h.b16 %v668
        %v1668 = vunpack.c.l.b16 %v669
        %v1669 = vunpack.c.h.b16 %v669
        %v1670 = vunpack.c.l.b16 %v670
        %v1671 = vunpack.c.h.b16 %v670
        %v1672 = vunpack.c.l.b16 %v671
        %v1673 = vunpack.c.h.b16 %v671
        %v1674 = vunpack.c.l.b16 %v672
        %v1675 = vunpack.c.h.b16 %v672
        %v1676 = vunpack.c.l.b16 %v673
        %v1677 = vunpack.c.h.b16 %v673
        %v1678 = vunpack.c.l.b16 %v674
        %v1679 = vunpack.c.h.b16 %v674
        %v1680 = vunpack.c.l.b16 %v675
        %v1681 = vunpack.c.h.b16 %v675
        %v1682 = vunpack.c.l.b16 %v676
        %v1683 = vunpack.c.h.b16 %v676
        %v1684 = vunpack.c.l.b16 %v677
        %v1685 = vunpack.c.h.b16 %v677
        %v1686 = vunpack.c.l.b16 %v678
        %v1687 = vunpack.c.h.b16 %v678
        %v1688 = vunpack.c.l.b16 %v679
        %v1689 = vunpack.c.h.b16 %v679
        %v1690 = vunpack.c.l.b16 %v680
        %v1691 = vunpack.c.h.b16 %v680
        %v1692 = vunpack.c.l.b16 %v681
        %v1693 = vunpack.c.h.b16 %v681
        %v1694 = vunpack.c.l.b16 %v682
        %v1695 = vunpack.c.h.b16 %v682
        %v1696 = vunpack.c.l.b16 %v683
        %v1697 = vunpack.c.h.b16 %v683
        %v1698 = vunpack.c.l.b16 %v684
        %v1699 = vunpack.c.h.b16 %v684
        %v1700 = vunpack.c.l.b16 %v685
        %v1701 = vunpack.c.h.b16 %v685
        %v1702 = vunpack.c.l.b16 %v686
        %v1703 = vunpack.c.h.b16 %v686
        %v1704 = vunpack.c.l.b16 %v687
        %v1705 = vunpack.c.h.b16 %v687
        %v1706 = vunpack.c.l.b16 %v688
        %v1707 = vunpack.c.h.b16 %v688
        %v1708 = vunpack.c.l.b16 %v689
        %v1709 = vunpack.c.h.b16 %v689
        %v1710 = vunpack.c.l.b16 %v690
        %v1711 = vunpack.c.h.b16 %v690
        %v1712 = vunpack.c.l.b16 %v691
        %v1713 = vunpack.c.h.b16 %v691
        %v1714 = vunpack.c.l.b16 %v692
        %v1715 = vunpack.c.h.b16 %v692
        %v1716 = vunpack.c.l.b16 %v693
        %v1717 = vunpack.c.h.b16 %v693
        %v1718 = vunpack.c.l.b16 %v694
        %v1719 = vunpack.c.h.b16 %v694
        %v1720 = vunpack.c.l.b16 %v695
        %v1721 = vunpack.c.h.b16 %v695
        %v1722 = vunpack.c.l.b16 %v696
        %v1723 = vunpack.c.h.b16 %v696
        %v1724 = vunpack.c.l.b16 %v697
        %v1725 = vunpack.c.h.b16 %v697
        %v1726 = vunpack.c.l.b16 %v698
        %v1727 = vunpack.c.h.b16 %v698
        %v1728 = vunpack.c.l.b16 %v699
        %v1729 = vunpack.c.h.b16 %v699
        %v1730 = vunpack.c.l.b16 %v700
        %v1731 = vunpack.c.h.b16 %v700
        %v1732 = vunpack.c.l.b16 %v701
        %v1733 = vunpack.c.h.b16 %v701
        %v1734 = vunpack.c.l.b16 %v702
        %v1735 = vunpack.c.h.b16 %v702
        %v1736 = vunpack.c.l.b16 %v703
        %v1737 = vunpack.c.h.b16 %v703
        %v1738 = vunpack.c.l.b16 %v704
        %v1739 = vunpack.c.h.b16 %v704
        %v1740 = vunpack.c.l.b16 %v705
        %v1741 = vunpack.c.h.b16 %v705
        %v1742 = vunpack.c.l.b16 %v706
        %v1743 = vunpack.c.h.b16 %v706
        %v1744 = vunpack.c.l.b16 %v707
        %v1745 = vunpack.c.h.b16 %v707
        %v1746 = vunpack.c.l.b16 %v708
        %v1747 = vunpack.c.h.b16 %v708
        %v1748 = vunpack.c.l.b16 %v709
        %v1749 = vunpack.c.h.b16 %v709
        %v1750 = vunpack.c.l.b16 %v710
        %v1751 = vunpack.c.h.b16 %v710
        %v1752 = vunpack.c.l.b16 %v711
        %v1753 = vunpack.c.h.b16 %v711
        %v1754 = vunpack.c.l.b16 %v712
        %v1755 = vunpack.c.h.b16 %v712
        %v1756 = vunpack.c.l.b16 %v713
        %v1757 = vunpack.c.h.b16 %v713
        %v1758 = vunpack.c.l.b16 %v714
        %v1759 = vunpack.c.h.b16 %v714
        %v1760 = vunpack.c.l.b16 %v715
        %v1761 = vunpack.c.h.b16 %v715
        %v1762 = vunpack.c.l.b16 %v716
        %v1763 = vunpack.c.h.b16 %v716
        %v1764 = vunpack.c.l.b16 %v717
        %v1765 = vunpack.c.h.b16 %v717
        %v1766 = vunpack.c.l.b16 %v718
        %v1767 = vunpack.c.h.b16 %v718
        %v1768 = vunpack.c.l.b16 %v719
        %v1769 = vunpack.c.h.b16 %v719
        %v1770 = vunpack.c.l.b16 %v720
        %v1771 = vunpack.c.h.b16 %v720
        %v1772 = vunpack.c.l.b16 %v721
        %v1773 = vunpack.c.h.b16 %v721
        %v1774 = vunpack.c.l.b16 %v722
        %v1775 = vunpack.c.h.b16 %v722
        %v1776 = vunpack.c.l.b16 %v723
        %v1777 = vunpack.c.h.b16 %v723
        %v1778 = vunpack.c.l.b16 %v724
        %v1779 = vunpack.c.h.b16 %v724
        %v1780 = vunpack.c.l.b16 %v725
        %v1781 = vunpack.c.h.b16 %v725
        %v1782 = vunpack.c.l.b16 %v726
        %v1783 = vunpack.c.h.b16 %v726
        %v1784 = vunpack.c.l.b16 %v727
        %v1785 = vunpack.c.h.b16 %v727
        %v1786 = vunpack.c.l.b16 %v728
        %v1787 = vunpack.c.h.b16 %v728
        %v1788 = vunpack.c.l.b16 %v729
        %v1789 = vunpack.c.h.b16 %v729
        %v1790 = vunpack.c.l.b16 %v730
        %v1791 = vunpack.c.h.b16 %v730
        %v1792 = vunpack.c.l.b16 %v731
        %v1793 = vunpack.c.h.b16 %v731
        %v1794 = vunpack.c.l.b16 %v732
        %v1795 = vunpack.c.h.b16 %v732
        %v1796 = vunpack.c.l.b16 %v733
        %v1797 = vunpack.c.h.b16 %v733
        %v1798 = vunpack.c.l.b16 %v734
        %v1799 = vunpack.c.h.b16 %v734
        %v1800 = vunpack.c.l.b16 %v735
        %v1801 = vunpack.c.h.b16 %v735
        %v1802 = vunpack.c.l.b16 %v736
        %v1803 = vunpack.c.h.b16 %v736
        %v1804 = vunpack.c.l.b16 %v737
        %v1805 = vunpack.c.h.b16 %v737
        %v1806 = vunpack.c.l.b16 %v738
        %v1807 = vunpack.c.h.b16 %v738
        %v1808 = vunpack.c.l.b16 %v739
        %v1809 = vunpack.c.h.b16 %v739
        %v1810 = vunpack.c.l.b16 %v740
        %v1811 = vunpack.c.h.b16 %v740
        %v1812 = vunpack.c.l.b16 %v741
        %v1813 = vunpack.c.h.b16 %v741
        %v1814 = vunpack.c.l.b16 %v742
        %v1815 = vunpack.c.h.b16 %v742
        %v1816 = vunpack.c.l.b16 %v743
        %v1817 = vunpack.c.h.b16 %v743
        %v1818 = vunpack.c.l.b16 %v744
        %v1819 = vunpack.c.h.b16 %v744
        %v1820 = vunpack.c.l.b16 %v745
        %v1821 = vunpack.c.h.b16 %v745
        %v1822 = vunpack.c.l.b16 %v746
        %v1823 = vunpack.c.h.b16 %v746
        %v1824 = vunpack.c.l.b16 %v747
        %v1825 = vunpack.c.h.b16 %v747
        %v1826 = vunpack.c.l.b16 %v748
        %v1827 = vunpack.c.h.b16 %v748
        %v1828 = vunpack.c.l.b16 %v749
        %v1829 = vunpack.c.h.b16 %v749
        %v1830 = vunpack.c.l.b16 %v750
        %v1831 = vunpack.c.h.b16 %v750
        %v1832 = vunpack.c.l.b16 %v751
        %v1833 = vunpack.c.h.b16 %v751
        %v1834 = vunpack.c.l.b16 %v752
        %v1835 = vunpack.c.h.b16 %v752
        %v1836 = vunpack.c.l.b16 %v753
        %v1837 = vunpack.c.h.b16 %v753
        %v1838 = vunpack.c.l.b16 %v754
        %v1839 = vunpack.c.h.b16 %v754
        %v1840 = vunpack.c.l.b16 %v755
        %v1841 = vunpack.c.h.b16 %v755
        %v1842 = vunpack.c.l.b16 %v756
        %v1843 = vunpack.c.h.b16 %v756
        %v1844 = vunpack.c.l.b16 %v757
        %v1845 = vunpack.c.h.b16 %v757
        %v1846 = vunpack.c.l.b16 %v758
        %v1847 = vunpack.c.h.b16 %v758
        %v1848 = vunpack.c.l.b16 %v759
        %v1849 = vunpack.c.h.b16 %v759
        %v1850 = vunpack.c.l.b16 %v760
        %v1851 = vunpack.c.h.b16 %v760
        %v1852 = vunpack.c.l.b16 %v761
        %v1853 = vunpack.c.h.b16 %v761
        %v1854 = vunpack.c.l.b16 %v762
        %v1855 = vunpack.c.h.b16 %v762
        %v1856 = vunpack.c.l.b16 %v763
        %v1857 = vunpack.c.h.b16 %v763
        %v1858 = vunpack.c.l.b16 %v764
        %v1859 = vunpack.c.h.b16 %v764
        %v1860 = vunpack.c.l.b16 %v765
        %v1861 = vunpack.c.h.b16 %v765
        %v1862 = vunpack.c.l.b16 %v766
        %v1863 = vunpack.c.h.b16 %v766
        %v1864 = vunpack.c.l.b16 %v767
        %v1865 = vunpack.c.h.b16 %v767
        %v1866 = vunpack.c.l.b16 %v768
        %v1867 = vunpack.c.h.b16 %v768
        %v1868 = vunpack.c.l.b16 %v769
        %v1869 = vunpack.c.h.b16 %v769
        %v1870 = vunpack.c.l.b16 %v770
        %v1871 = vunpack.c.h.b16 %v770
        %v1872 = vunpack.c.l.b16 %v771
        %v1873 = vunpack.c.h.b16 %v771
        %v1874 = vunpack.c.l.b16 %v772
        %v1875 = vunpack.c.h.b16 %v772
        %v1876 = vunpack.c.l.b16 %v773
        %v1877 = vunpack.c.h.b16 %v773
        %v1878 = vunpack.c.l.b16 %v774
        %v1879 = vunpack.c.h.b16 %v774
        %v1880 = vunpack.c.l.b16 %v775
        %v1881 = vunpack.c.h.b16 %v775
        %v1882 = vunpack.c.l.b16 %v776
        %v1883 = vunpack.c.h.b16 %v776
        %v1884 = vunpack.c.l.b16 %v777
        %v1885 = vunpack.c.h.b16 %v777
        %v1886 = vunpack.c.l.b16 %v778
        %v1887 = vunpack.c.h.b16 %v778
        %v1888 = vunpack.c.l.b16 %v779
        %v1889 = vunpack.c.h.b16 %v779
        %v1890 = vunpack.c.l.b16 %v780
        %v1891 = vunpack.c.h.b16 %v780
        %v1892 = vunpack.c.l.b16 %v781
        %v1893 = vunpack.c.h.b16 %v781
        %v1894 = vunpack.c.l.b16 %v782
        %v1895 = vunpack.c.h.b16 %v782
        %v1896 = vunpack.c.l.b16 %v783
        %v1897 = vunpack.c.h.b16 %v783
        %v1898 = vunpack.c.l.b16 %v784
        %v1899 = vunpack.c.h.b16 %v784
        %v1900 = vunpack.c.l.b16 %v785
        %v1901 = vunpack.c.h.b16 %v785
        %v1902 = vunpack.c.l.b16 %v786
        %v1903 = vunpack.c.h.b16 %v786
        %v1904 = vunpack.c.l.b16 %v787
        %v1905 = vunpack.c.h.b16 %v787
        %v1906 = vunpack.c.l.b16 %v788
        %v1907 = vunpack.c.h.b16 %v788
        %v1908 = vunpack.c.l.b16 %v789
        %v1909 = vunpack.c.h.b16 %v789
        %v1910 = vunpack.c.l.b16 %v790
        %v1911 = vunpack.c.h.b16 %v790
        %v1912 = vunpack.c.l.b16 %v791
        %v1913 = vunpack.c.h.b16 %v791
        %v1914 = vunpack.c.l.b16 %v792
        %v1915 = vunpack.c.h.b16 %v792
        %v1916 = vunpack.c.l.b16 %v793
        %v1917 = vunpack.c.h.b16 %v793
        %v1918 = vunpack.c.l.b16 %v794
        %v1919 = vunpack.c.h.b16 %v794
        %v1920 = vunpack.c.l.b16 %v795
        %v1921 = vunpack.c.h.b16 %v795
        %v1922 = vunpack.c.l.b16 %v796
        %v1923 = vunpack.c.h.b16 %v796
        %v1924 = vunpack.c.l.b16 %v797
        %v1925 = vunpack.c.h.b16 %v797
        %v1926 = vunpack.c.l.b16 %v798
        %v1927 = vunpack.c.h.b16 %v798
        %v1928 = vunpack.c.l.b16 %v799
        %v1929 = vunpack.c.h.b16 %v799
        %v1930 = vunpack.c.l.b16 %v800
        %v1931 = vunpack.c.h.b16 %v800
        %v1932 = vunpack.c.l.b16 %v801
        %v1933 = vunpack.c.h.b16 %v801
        %v1934 = vunpack.c.l.b16 %v802
        %v1935 = vunpack.c.h.b16 %v802
        %v1936 = vunpack.c.l.b16 %v803
        %v1937 = vunpack.c.h.b16 %v803
        %v1938 = vunpack.c.l.b16 %v804
        %v1939 = vunpack.c.h.b16 %v804
        %v1940 = vunpack.c.l.b16 %v805
        %v1941 = vunpack.c.h.b16 %v805
        %v1942 = vunpack.c.l.b16 %v806
        %v1943 = vunpack.c.h.b16 %v806
        %v1944 = vunpack.c.l.b16 %v807
        %v1945 = vunpack.c.h.b16 %v807
        %v1946 = vunpack.c.l.b16 %v808
        %v1947 = vunpack.c.h.b16 %v808
        %v1948 = vunpack.c.l.b16 %v809
        %v1949 = vunpack.c.h.b16 %v809
        %v1950 = vunpack.c.l.b16 %v810
        %v1951 = vunpack.c.h.b16 %v810
        %v1952 = vunpack.c.l.b16 %v811
        %v1953 = vunpack.c.h.b16 %v811
        %v1954 = vunpack.c.l.b16 %v812
        %v1955 = vunpack.c.h.b16 %v812
        %v1956 = vunpack.c.l.b16 %v813
        %v1957 = vunpack.c.h.b16 %v813
        %v1958 = vunpack.c.l.b16 %v814
        %v1959 = vunpack.c.h.b16 %v814
        %v1960 = vunpack.c.l.b16 %v815
        %v1961 = vunpack.c.h.b16 %v815
        %v1962 = vunpack.c.l.b16 %v816
        %v1963 = vunpack.c.h.b16 %v816
        %v1964 = vunpack.c.l.b16 %v817
        %v1965 = vunpack.c.h.b16 %v817
        %v1966 = vunpack.c.l.b16 %v818
        %v1967 = vunpack.c.h.b16 %v818
        %v1968 = vunpack.c.l.b16 %v819
        %v1969 = vunpack.c.h.b16 %v819
        %v1970 = vunpack.c.l.b16 %v820
        %v1971 = vunpack.c.h.b16 %v820
        %v1972 = vunpack.c.l.b16 %v821
        %v1973 = vunpack.c.h.b16 %v821
        %v1974 = vunpack.c.l.b16 %v822
        %v1975 = vunpack.c.h.b16 %v822
        %v1976 = vunpack.c.l.b16 %v823
        %v1977 = vunpack.c.h.b16 %v823
        %v1978 = vunpack.c.l.b16 %v824
        %v1979 = vunpack.c.h.b16 %v824
        %v1980 = vunpack.c.l.b16 %v825
        %v1981 = vunpack.c.h.b16 %v825
        %v1982 = vunpack.c.l.b16 %v826
        %v1983 = vunpack.c.h.b16 %v826
        %v1984 = vunpack.c.l.b16 %v827
        %v1985 = vunpack.c.h.b16 %v827
        %v1986 = vunpack.c.l.b16 %v828
        %v1987 = vunpack.c.h.b16 %v828
        %v1988 = vunpack.c.l.b16 %v829
        %v1989 = vunpack.c.h.b16 %v829
        %v1990 = vpack.c.b16 %v1352, %v1350
        %v1991 = vpack.c.b16 %v1353, %v1351
        %v1992 = vpack.c.b16 %v1356, %v1354
        %v1993 = vpack.c.b16 %v1357, %v1355
        %v1994 = vpack.c.b16 %v1360, %v1358
        %v1995 = vpack.c.b16 %v1361, %v1359
        %v1996 = vpack.c.b16 %v1364, %v1362
        %v1997 = vpack.c.b16 %v1365, %v1363
        %v1998 = vpack.c.b16 %v1368, %v1366
        %v1999 = vpack.c.b16 %v1369, %v1367
        %v2000 = vpack.c.b16 %v1372, %v1370
        %v2001 = vpack.c.b16 %v1373, %v1371
        %v2002 = vpack.c.b16 %v1376, %v1374
        %v2003 = vpack.c.b16 %v1377, %v1375
        %v2004 = vpack.c.b16 %v1380, %v1378
        %v2005 = vpack.c.b16 %v1381, %v1379
        %v2006 = vpack.c.b16 %v1384, %v1382
        %v2007 = vpack.c.b16 %v1385, %v1383
        %v2008 = vpack.c.b16 %v1388, %v1386
        %v2009 = vpack.c.b16 %v1389, %v1387
        %v2010 = vpack.c.b16 %v1392, %v1390
        %v2011 = vpack.c.b16 %v1393, %v1391
        %v2012 = vpack.c.b16 %v1396, %v1394
        %v2013 = vpack.c.b16 %v1397, %v1395
        %v2014 = vpack.c.b16 %v1400, %v1398
        %v2015 = vpack.c.b16 %v1401, %v1399
        %v2016 = vpack.c.b16 %v1404, %v1402
        %v2017 = vpack.c.b16 %v1405, %v1403
        %v2018 = vpack.c.b16 %v1408, %v1406
        %v2019 = vpack.c.b16 %v1409, %v1407
        %v2020 = vpack.c.b16 %v1412, %v1410
        %v2021 = vpack.c.b16 %v1413, %v1411
        %v2022 = vpack.c.b16 %v1416, %v1414
        %v2023 = vpack.c.b16 %v1417, %v1415
        %v2024 = vpack.c.b16 %v1420, %v1418
        %v2025 = vpack.c.b16 %v1421, %v1419
        %v2026 = vpack.c.b16 %v1424, %v1422
        %v2027 = vpack.c.b16 %v1425, %v1423
        %v2028 = vpack.c.b16 %v1428, %v1426
        %v2029 = vpack.c.b16 %v1429, %v1427
        %v2030 = vpack.c.b16 %v1432, %v1430
        %v2031 = vpack.c.b16 %v1433, %v1431
        %v2032 = vpack.c.b16 %v1436, %v1434
        %v2033 = vpack.c.b16 %v1437, %v1435
        %v2034 = vpack.c.b16 %v1440, %v1438
        %v2035 = vpack.c.b16 %v1441, %v1439
        %v2036 = vpack.c.b16 %v1444, %v1442
        %v2037 = vpack.c.b16 %v1445, %v1443
        %v2038 = vpack.c.b16 %v1448, %v1446
        %v2039 = vpack.c.b16 %v1449, %v1447
        %v2040 = vpack.c.b16 %v1452, %v1450
        %v2041 = vpack.c.b16 %v1453, %v1451
        %v2042 = vpack.c.b16 %v1456, %v1454
        %v2043 = vpack.c.b16 %v1457, %v1455
        %v2044 = vpack.c.b16 %v1460, %v1458
        %v2045 = vpack.c.b16 %v1461, %v1459
        %v2046 = vpack.c.b16 %v1464, %v1462
        %v2047 = vpack.c.b16 %v1465, %v1463
        %v2048 = vpack.c.b16 %v1468, %v1466
        %v2049 = vpack.c.b16 %v1469, %v1467
        %v2050 = vpack.c.b16 %v1472, %v1470
        %v2051 = vpack.c.b16 %v1473, %v1471
        %v2052 = vpack.c.b16 %v1476, %v1474
        %v2053 = vpack.c.b16 %v1477, %v1475
        %v2054 = vpack.c.b16 %v1480, %v1478
        %v2055 = vpack.c.b16 %v1481, %v1479
        %v2056 = vpack.c.b16 %v1484, %v1482
        %v2057 = vpack.c.b16 %v1485, %v1483
        %v2058 = vpack.c.b16 %v1488, %v1486
        %v2059 = vpack.c.b16 %v1489, %v1487
        %v2060 = vpack.c.b16 %v1492, %v1490
        %v2061 = vpack.c.b16 %v1493, %v1491
        %v2062 = vpack.c.b16 %v1496, %v1494
        %v2063 = vpack.c.b16 %v1497, %v1495
        %v2064 = vpack.c.b16 %v1500, %v1498
        %v2065 = vpack.c.b16 %v1501, %v1499
        %v2066 = vpack.c.b16 %v1504, %v1502
        %v2067 = vpack.c.b16 %v1505, %v1503
        %v2068 = vpack.c.b16 %v1508, %v1506
        %v2069 = vpack.c.b16 %v1509, %v1507
        %v2070 = vpack.c.b16 %v1512, %v1510
        %v2071 = vpack.c.b16 %v1513, %v1511
        %v2072 = vpack.c.b16 %v1516, %v1514
        %v2073 = vpack.c.b16 %v1517, %v1515
        %v2074 = vpack.c.b16 %v1520, %v1518
        %v2075 = vpack.c.b16 %v1521, %v1519
        %v2076 = vpack.c.b16 %v1524, %v1522
        %v2077 = vpack.c.b16 %v1525, %v1523
        %v2078 = vpack.c.b16 %v1528, %v1526
        %v2079 = vpack.c.b16 %v1529, %v1527
        %v2080 = vpack.c.b16 %v1532, %v1530
        %v2081 = vpack.c.b16 %v1533, %v1531
        %v2082 = vpack.c.b16 %v1536, %v1534
        %v2083 = vpack.c.b16 %v1537, %v1535
        %v2084 = vpack.c.b16 %v1540, %v1538
        %v2085 = vpack.c.b16 %v1541, %v1539
        %v2086 = vpack.c.b16 %v1544, %v1542
        %v2087 = vpack.c.b16 %v1545, %v1543
        %v2088 = vpack.c.b16 %v1548, %v1546
        %v2089 = vpack.c.b16 %v1549, %v1547
        %v2090 = vpack.c.b16 %v1552, %v1550
        %v2091 = vpack.c.b16 %v1553, %v1551
        %v2092 = vpack.c.b16 %v1556, %v1554
        %v2093 = vpack.c.b16 %v1557, %v1555
        %v2094 = vpack.c.b16 %v1560, %v1558
        %v2095 = vpack.c.b16 %v1561, %v1559
        %v2096 = vpack.c.b16 %v1564, %v1562
        %v2097 = vpack.c.b16 %v1565, %v1563
        %v2098 = vpack.c.b16 %v1568, %v1566
        %v2099 = vpack.c.b16 %v1569, %v1567
        %v2100 = vpack.c.b16 %v1572, %v1570
        %v2101 = vpack.c.b16 %v1573, %v1571
        %v2102 = vpack.c.b16 %v1576, %v1574
        %v2103 = vpack.c.b16 %v1577, %v1575
        %v2104 = vpack.c.b16 %v1580, %v1578
        %v2105 = vpack.c.b16 %v1581, %v1579
        %v2106 = vpack.c.b16 %v1584, %v1582
        %v2107 = vpack.c.b16 %v1585, %v1583
        %v2108 = vpack.c.b16 %v1588, %v1586
        %v2109 = vpack.c.b16 %v1589, %v1587
        %v2110 = vpack.c.b16 %v1592, %v1590
        %v2111 = vpack.c.b16 %v1593, %v1591
        %v2112 = vpack.c.b16 %v1596, %v1594
        %v2113 = vpack.c.b16 %v1597, %v1595
        %v2114 = vpack.c.b16 %v1600, %v1598
        %v2115 = vpack.c.b16 %v1601, %v1599
        %v2116 = vpack.c.b16 %v1604, %v1602
        %v2117 = vpack.c.b16 %v1605, %v1603
        %v2118 = vpack.c.b16 %v1608, %v1606
        %v2119 = vpack.c.b16 %v1609, %v1607
        %v2120 = vpack.c.b16 %v1612, %v1610
        %v2121 = vpack.c.b16 %v1613, %v1611
        %v2122 = vpack.c.b16 %v1616, %v1614
        %v2123 = vpack.c.b16 %v1617, %v1615
        %v2124 = vpack.c.b16 %v1620, %v1618
        %v2125 = vpack.c.b16 %v1621, %v1619
        %v2126 = vpack.c.b16 %v1624, %v1622
        %v2127 = vpack.c.b16 %v1625, %v1623
        %v2128 = vpack.c.b16 %v1628, %v1626
        %v2129 = vpack.c.b16 %v1629, %v1627
        %v2130 = vpack.c.b16 %v1632, %v1630
        %v2131 = vpack.c.b16 %v1633, %v1631
        %v2132 = vpack.c.b16 %v1636, %v1634
        %v2133 = vpack.c.b16 %v1637, %v1635
        %v2134 = vpack.c.b16 %v1640, %v1638
        %v2135 = vpack.c.b16 %v1641, %v1639
        %v2136 = vpack.c.b16 %v1644, %v1642
        %v2137 = vpack.c.b16 %v1645, %v1643
        %v2138 = vpack.c.b16 %v1648, %v1646
        %v2139 = vpack.c.b16 %v1649, %v1647
        %v2140 = vpack.c.b16 %v1652, %v1650
        %v2141 = vpack.c.b16 %v1653, %v1651
        %v2142 = vpack.c.b16 %v1656, %v1654
        %v2143 = vpack.c.b16 %v1657, %v1655
        %v2144 = vpack.c.b16 %v1660, %v1658
        %v2145 = vpack.c.b16 %v1661, %v1659
        %v2146 = vpack.c.b16 %v1664, %v1662
        %v2147 = vpack.c.b16 %v1665, %v1663
        %v2148 = vpack.c.b16 %v1668, %v1666
        %v2149 = vpack.c.b16 %v1669, %v1667
        %v2150 = vpack.c.b16 %v1672, %v1670
        %v2151 = vpack.c.b16 %v1673, %v1671
        %v2152 = vpack.c.b16 %v1676, %v1674
        %v2153 = vpack.c.b16 %v1677, %v1675
        %v2154 = vpack.c.b16 %v1680, %v1678
        %v2155 = vpack.c.b16 %v1681, %v1679
        %v2156 = vpack.c.b16 %v1684, %v1682
        %v2157 = vpack.c.b16 %v1685, %v1683
        %v2158 = vpack.c.b16 %v1688, %v1686
        %v2159 = vpack.c.b16 %v1689, %v1687
        %v2160 = vpack.c.b16 %v1692, %v1690
        %v2161 = vpack.c.b16 %v1693, %v1691
        %v2162 = vpack.c.b16 %v1696, %v1694
        %v2163 = vpack.c.b16 %v1697, %v1695
        %v2164 = vpack.c.b16 %v1700, %v1698
        %v2165 = vpack.c.b16 %v1701, %v1699
        %v2166 = vpack.c.b16 %v1704, %v1702
        %v2167 = vpack.c.b16 %v1705, %v1703
        %v2168 = vpack.c.b16 %v1708, %v1706
        %v2169 = vpack.c.b16 %v1709, %v1707
        %v2170 = vpack.c.b16 %v1712, %v1710
        %v2171 = vpack.c.b16 %v1713, %v1711
        %v2172 = vpack.c.b16 %v1716, %v1714
        %v2173 = vpack.c.b16 %v1717, %v1715
        %v2174 = vpack.c.b16 %v1720, %v1718
        %v2175 = vpack.c.b16 %v1721, %v1719
        %v2176 = vpack.c.b16 %v1724, %v1722
        %v2177 = vpack.c.b16 %v1725, %v1723
        %v2178 = vpack.c.b16 %v1728, %v1726
        %v2179 = vpack.c.b16 %v1729, %v1727
        %v2180 = vpack.c.b16 %v1732, %v1730
        %v2181 = vpack.c.b16 %v1733, %v1731
        %v2182 = vpack.c.b16 %v1736, %v1734
        %v2183 = vpack.c.b16 %v1737, %v1735
        %v2184 = vpack.c.b16 %v1740, %v1738
        %v2185 = vpack.c.b16 %v1741, %v1739
        %v2186 = vpack.c.b16 %v1744, %v1742
        %v2187 = vpack.c.b16 %v1745, %v1743
        %v2188 = vpack.c.b16 %v1748, %v1746
        %v2189 = vpack.c.b16 %v1749, %v1747
        %v2190 = vpack.c.b16 %v1752, %v1750
        %v2191 = vpack.c.b16 %v1753, %v1751
        %v2192 = vpack.c.b16 %v1756, %v1754
        %v2193 = vpack.c.b16 %v1757, %v1755
        %v2194 = vpack.c.b16 %v1760, %v1758
        %v2195 = vpack.c.b16 %v1761, %v1759
        %v2196 = vpack.c.b16 %v1764, %v1762
        %v2197 = vpack.c.b16 %v1765, %v1763
        %v2198 = vpack.c.b16 %v1768, %v1766
        %v2199 = vpack.c.b16 %v1769, %v1767
        %v2200 = vpack.c.b16 %v1772, %v1770
        %v2201 = vpack.c.b16 %v1773, %v1771
        %v2202 = vpack.c.b16 %v1776, %v1774
        %v2203 = vpack.c.b16 %v1777, %v1775
        %v2204 = vpack.c.b16 %v1780, %v1778
        %v2205 = vpack.c.b16 %v1781, %v1779
        %v2206 = vpack.c.b16 %v1784, %v1782
        %v2207 = vpack.c.b16 %v1785, %v1783
        %v2208 = vpack.c.b16 %v1788, %v1786
        %v2209 = vpack.c.b16 %v1789, %v1787
        %v2210 = vpack.c.b16 %v1792, %v1790
        %v2211 = vpack.c.b16 %v1793, %v1791
        %v2212 = vpack.c.b16 %v1796, %v1794
        %v2213 = vpack.c.b16 %v1797, %v1795
        %v2214 = vpack.c.b16 %v1800, %v1798
        %v2215 = vpack.c.b16 %v1801, %v1799
        %v2216 = vpack.c.b16 %v1804, %v1802
        %v2217 = vpack.c.b16 %v1805, %v1803
        %v2218 = vpack.c.b16 %v1808, %v1806
        %v2219 = vpack.c.b16 %v1809, %v1807
        %v2220 = vpack.c.b16 %v1812, %v1810
        %v2221 = vpack.c.b16 %v1813, %v1811
        %v2222 = vpack.c.b16 %v1816, %v1814
        %v2223 = vpack.c.b16 %v1817, %v1815
        %v2224 = vpack.c.b16 %v1820, %v1818
        %v2225 = vpack.c.b16 %v1821, %v1819
        %v2226 = vpack.c.b16 %v1824, %v1822
        %v2227 = vpack.c.b16 %v1825, %v1823
        %v2228 = vpack.c.b16 %v1828, %v1826
        %v2229 = vpack.c.b16 %v1829, %v1827
        %v2230 = vpack.c.b16 %v1832, %v1830
        %v2231 = vpack.c.b16 %v1833, %v1831
        %v2232 = vpack.c.b16 %v1836, %v1834
        %v2233 = vpack.c.b16 %v1837, %v1835
        %v2234 = vpack.c.b16 %v1840, %v1838
        %v2235 = vpack.c.b16 %v1841, %v1839
        %v2236 = vpack.c.b16 %v1844, %v1842
        %v2237 = vpack.c.b16 %v1845, %v1843
        %v2238 = vpack.c.b16 %v1848, %v1846
        %v2239 = vpack.c.b16 %v1849, %v1847
        %v2240 = vpack.c.b16 %v1852, %v1850
        %v2241 = vpack.c.b16 %v1853, %v1851
        %v2242 = vpack.c.b16 %v1856, %v1854
        %v2243 = vpack.c.b16 %v1857, %v1855
        %v2244 = vpack.c.b16 %v1860, %v1858
        %v2245 = vpack.c.b16 %v1861, %v1859
        %v2246 = vpack.c.b16 %v1864, %v1862
        %v2247 = vpack.c.b16 %v1865, %v1863
        %v2248 = vpack.c.b16 %v1868, %v1866
        %v2249 = vpack.c.b16 %v1869, %v1867
        %v2250 = vpack.c.b16 %v1872, %v1870
        %v2251 = vpack.c.b16 %v1873, %v1871
        %v2252 = vpack.c.b16 %v1876, %v1874
        %v2253 = vpack.c.b16 %v1877, %v1875
        %v2254 = vpack.c.b16 %v1880, %v1878
        %v2255 = vpack.c.b16 %v1881, %v1879
        %v2256 = vpack.c.b16 %v1884, %v1882
        %v2257 = vpack.c.b16 %v1885, %v1883
        %v2258 = vpack.c.b16 %v1888, %v1886
        %v2259 = vpack.c.b16 %v1889, %v1887
        %v2260 = vpack.c.b16 %v1892, %v1890
        %v2261 = vpack.c.b16 %v1893, %v1891
        %v2262 = vpack.c.b16 %v1896, %v1894
        %v2263 = vpack.c.b16 %v1897, %v1895
        %v2264 = vpack.c.b16 %v1900, %v1898
        %v2265 = vpack.c.b16 %v1901, %v1899
        %v2266 = vpack.c.b16 %v1904, %v1902
        %v2267 = vpack.c.b16 %v1905, %v1903
        %v2268 = vpack.c.b16 %v1908, %v1906
        %v2269 = vpack.c.b16 %v1909, %v1907
        %v2270 = vpack.c.b16 %v1912, %v1910
        %v2271 = vpack.c.b16 %v1913, %v1911
        %v2272 = vpack.c.b16 %v1916, %v1914
        %v2273 = vpack.c.b16 %v1917, %v1915
        %v2274 = vpack.c.b16 %v1920, %v1918
        %v2275 = vpack.c.b16 %v1921, %v1919
        %v2276 = vpack.c.b16 %v1924, %v1922
        %v2277 = vpack.c.b16 %v1925, %v1923
        %v2278 = vpack.c.b16 %v1928, %v1926
        %v2279 = vpack.c.b16 %v1929, %v1927
        %v2280 = vpack.c.b16 %v1932, %v1930
        %v2281 = vpack.c.b16 %v1933, %v1931
        %v2282 = vpack.c.b16 %v1936, %v1934
        %v2283 = vpack.c.b16 %v1937, %v1935
        %v2284 = vpack.c.b16 %v1940, %v1938
        %v2285 = vpack.c.b16 %v1941, %v1939
        %v2286 = vpack.c.b16 %v1944, %v1942
        %v2287 = vpack.c.b16 %v1945, %v1943
        %v2288 = vpack.c.b16 %v1948, %v1946
        %v2289 = vpack.c.b16 %v1949, %v1947
        %v2290 = vpack.c.b16 %v1952, %v1950
        %v2291 = vpack.c.b16 %v1953, %v1951
        %v2292 = vpack.c.b16 %v1956, %v1954
        %v2293 = vpack.c.b16 %v1957, %v1955
        %v2294 = vpack.c.b16 %v1960, %v1958
        %v2295 = vpack.c.b16 %v1961, %v1959
        %v2296 = vpack.c.b16 %v1964, %v1962
        %v2297 = vpack.c.b16 %v1965, %v1963
        %v2298 = vpack.c.b16 %v1968, %v1966
        %v2299 = vpack.c.b16 %v1969, %v1967
        %v2300 = vpack.c.b16 %v1972, %v1970
        %v2301 = vpack.c.b16 %v1973, %v1971
        %v2302 = vpack.c.b16 %v1976, %v1974
        %v2303 = vpack.c.b16 %v1977, %v1975
        %v2304 = vpack.c.b16 %v1980, %v1978
        %v2305 = vpack.c.b16 %v1981, %v1979
        %v2306 = vpack.c.b16 %v1984, %v1982
        %v2307 = vpack.c.b16 %v1985, %v1983
        %v2308 = vpack.c.b16 %v1988, %v1986
        %v2309 = vpack.c.b16 %v1989, %v1987
        %2630 = vmatpush.bf16.msra.mxu0 %v2004
        %2631 = vmatpush.bf16.msra.mxu0 %v2002
        %2632 = vmatpush.bf16.msra.mxu0 %v2000
        %2633 = vmatpush.bf16.msra.mxu0 %v1998
        %2634 = vmatpush.bf16.msra.mxu0 %v1996
        %2635 = vmatpush.bf16.msra.mxu0 %v1994
        %2636 = vmatpush.bf16.msra.mxu0 %v1992
        %2637 = vmatpush.bf16.msra.mxu0 %v1990
        %2638 = vmatmul.bf16.gmra.mxu0 %v950
        %v2639 = vpop.f32.mrf.mxu0
        %v2640 = vadd.f32 0.0, %v2639
        %v2641 = vpop.f32.mrf.mxu0
        %v2642 = vadd.f32 0.0, %v2641
        %2643 = vmatmul.bf16.gmra.mxu0 %v970
        %v2644 = vpop.f32.mrf.mxu0
        %v2645 = vadd.f32 0.0, %v2644
        %v2646 = vpop.f32.mrf.mxu0
        %v2647 = vadd.f32 0.0, %v2646
        %2648 = vdwg.mxu0
        %2649 = vmatpush.bf16.msra.mxu0 %v2020
        %2650 = vmatpush.bf16.msra.mxu0 %v2018
        %2651 = vmatpush.bf16.msra.mxu0 %v2016
        %2652 = vmatpush.bf16.msra.mxu0 %v2014
        %2653 = vmatpush.bf16.msra.mxu0 %v2012
        %2654 = vmatpush.bf16.msra.mxu0 %v2010
        %2655 = vmatpush.bf16.msra.mxu0 %v2008
        %2656 = vmatpush.bf16.msra.mxu0 %v2006
        %2657 = vmatmul.bf16.gmra.mxu0 %v951
        %v2658 = vpop.f32.mrf.mxu0
        %v2659 = vadd.f32 %v2640, %v2658
        %v2660 = vpop.f32.mrf.mxu0
        %v2661 = vadd.f32 %v2642, %v2660
        %2662 = vmatmul.bf16.gmra.mxu0 %v971
        %v2663 = vpop.f32.mrf.mxu0
        %v2664 = vadd.f32 %v2645, %v2663
        %v2665 = vpop.f32.mrf.mxu0
        %v2666 = vadd.f32 %v2647, %v2665
        %2667 = vdwg.mxu0
        %2668 = vmatpush.bf16.msra.mxu0 %v2036
        %2669 = vmatpush.bf16.msra.mxu0 %v2034
        %2670 = vmatpush.bf16.msra.mxu0 %v2032
        %2671 = vmatpush.bf16.msra.mxu0 %v2030
        %2672 = vmatpush.bf16.msra.mxu0 %v2028
        %2673 = vmatpush.bf16.msra.mxu0 %v2026
        %2674 = vmatpush.bf16.msra.mxu0 %v2024
        %2675 = vmatpush.bf16.msra.mxu0 %v2022
        %2676 = vmatmul.bf16.gmra.mxu0 %v952
        %v2677 = vpop.f32.mrf.mxu0
        %v2678 = vadd.f32 %v2659, %v2677
        %v2679 = vpop.f32.mrf.mxu0
        %v2680 = vadd.f32 %v2661, %v2679
        %2681 = vmatmul.bf16.gmra.mxu0 %v972
        %v2682 = vpop.f32.mrf.mxu0
        %v2683 = vadd.f32 %v2664, %v2682
        %v2684 = vpop.f32.mrf.mxu0
        %v2685 = vadd.f32 %v2666, %v2684
        %2686 = vdwg.mxu0
        %2687 = vmatpush.bf16.msra.mxu0 %v2052
        %2688 = vmatpush.bf16.msra.mxu0 %v2050
        %2689 = vmatpush.bf16.msra.mxu0 %v2048
        %2690 = vmatpush.bf16.msra.mxu0 %v2046
        %2691 = vmatpush.bf16.msra.mxu0 %v2044
        %2692 = vmatpush.bf16.msra.mxu0 %v2042
        %2693 = vmatpush.bf16.msra.mxu0 %v2040
        %2694 = vmatpush.bf16.msra.mxu0 %v2038
        %2695 = vmatmul.bf16.gmra.mxu0 %v953
        %v2696 = vpop.f32.mrf.mxu0
        %v2697 = vadd.f32 %v2678, %v2696
        %v2698 = vpop.f32.mrf.mxu0
        %v2699 = vadd.f32 %v2680, %v2698
        %2700 = vmatmul.bf16.gmra.mxu0 %v973
        %v2701 = vpop.f32.mrf.mxu0
        %v2702 = vadd.f32 %v2683, %v2701
        %v2703 = vpop.f32.mrf.mxu0
        %v2704 = vadd.f32 %v2685, %v2703
        %2705 = vdwg.mxu0
        %2706 = vmatpush.bf16.msra.mxu0 %v2068
        %2707 = vmatpush.bf16.msra.mxu0 %v2066
        %2708 = vmatpush.bf16.msra.mxu0 %v2064
        %2709 = vmatpush.bf16.msra.mxu0 %v2062
        %2710 = vmatpush.bf16.msra.mxu0 %v2060
        %2711 = vmatpush.bf16.msra.mxu0 %v2058
        %2712 = vmatpush.bf16.msra.mxu0 %v2056
        %2713 = vmatpush.bf16.msra.mxu0 %v2054
        %2714 = vmatmul.bf16.gmra.mxu0 %v954
        %v2715 = vpop.f32.mrf.mxu0
        %v2716 = vadd.f32 %v2697, %v2715
        %v2717 = vpop.f32.mrf.mxu0
        %v2718 = vadd.f32 %v2699, %v2717
        %2719 = vmatmul.bf16.gmra.mxu0 %v974
        %v2720 = vpop.f32.mrf.mxu0
        %v2721 = vadd.f32 %v2702, %v2720
        %v2722 = vpop.f32.mrf.mxu0
        %v2723 = vadd.f32 %v2704, %v2722
        %2724 = vdwg.mxu0
        %2725 = vmatpush.bf16.msra.mxu0 %v2084
        %2726 = vmatpush.bf16.msra.mxu0 %v2082
        %2727 = vmatpush.bf16.msra.mxu0 %v2080
        %2728 = vmatpush.bf16.msra.mxu0 %v2078
        %2729 = vmatpush.bf16.msra.mxu0 %v2076
        %2730 = vmatpush.bf16.msra.mxu0 %v2074
        %2731 = vmatpush.bf16.msra.mxu0 %v2072
        %2732 = vmatpush.bf16.msra.mxu0 %v2070
        %2733 = vmatmul.bf16.gmra.mxu0 %v955
        %v2734 = vpop.f32.mrf.mxu0
        %v2735 = vadd.f32 %v2716, %v2734
        %v2736 = vpop.f32.mrf.mxu0
        %v2737 = vadd.f32 %v2718, %v2736
        %2738 = vmatmul.bf16.gmra.mxu0 %v975
        %v2739 = vpop.f32.mrf.mxu0
        %v2740 = vadd.f32 %v2721, %v2739
        %v2741 = vpop.f32.mrf.mxu0
        %v2742 = vadd.f32 %v2723, %v2741
        %2743 = vdwg.mxu0
        %2744 = vmatpush.bf16.msra.mxu0 %v2100
        %2745 = vmatpush.bf16.msra.mxu0 %v2098
        %2746 = vmatpush.bf16.msra.mxu0 %v2096
        %2747 = vmatpush.bf16.msra.mxu0 %v2094
        %2748 = vmatpush.bf16.msra.mxu0 %v2092
        %2749 = vmatpush.bf16.msra.mxu0 %v2090
        %2750 = vmatpush.bf16.msra.mxu0 %v2088
        %2751 = vmatpush.bf16.msra.mxu0 %v2086
        %2752 = vmatmul.bf16.gmra.mxu0 %v956
        %v2753 = vpop.f32.mrf.mxu0
        %v2754 = vadd.f32 %v2735, %v2753
        %v2755 = vpop.f32.mrf.mxu0
        %v2756 = vadd.f32 %v2737, %v2755
        %2757 = vmatmul.bf16.gmra.mxu0 %v976
        %v2758 = vpop.f32.mrf.mxu0
        %v2759 = vadd.f32 %v2740, %v2758
        %v2760 = vpop.f32.mrf.mxu0
        %v2761 = vadd.f32 %v2742, %v2760
        %2762 = vdwg.mxu0
        %2763 = vmatpush.bf16.msra.mxu0 %v2116
        %2764 = vmatpush.bf16.msra.mxu0 %v2114
        %2765 = vmatpush.bf16.msra.mxu0 %v2112
        %2766 = vmatpush.bf16.msra.mxu0 %v2110
        %2767 = vmatpush.bf16.msra.mxu0 %v2108
        %2768 = vmatpush.bf16.msra.mxu0 %v2106
        %2769 = vmatpush.bf16.msra.mxu0 %v2104
        %2770 = vmatpush.bf16.msra.mxu0 %v2102
        %2771 = vmatmul.bf16.gmra.mxu0 %v957
        %v2772 = vpop.f32.mrf.mxu0
        %v2773 = vadd.f32 %v2754, %v2772
        %v2774 = vpop.f32.mrf.mxu0
        %v2775 = vadd.f32 %v2756, %v2774
        %2776 = vmatmul.bf16.gmra.mxu0 %v977
        %v2777 = vpop.f32.mrf.mxu0
        %v2778 = vadd.f32 %v2759, %v2777
        %v2779 = vpop.f32.mrf.mxu0
        %v2780 = vadd.f32 %v2761, %v2779
        %2781 = vdwg.mxu0
        %2782 = vmatpush.bf16.msra.mxu0 %v2132
        %2783 = vmatpush.bf16.msra.mxu0 %v2130
        %2784 = vmatpush.bf16.msra.mxu0 %v2128
        %2785 = vmatpush.bf16.msra.mxu0 %v2126
        %2786 = vmatpush.bf16.msra.mxu0 %v2124
        %2787 = vmatpush.bf16.msra.mxu0 %v2122
        %2788 = vmatpush.bf16.msra.mxu0 %v2120
        %2789 = vmatpush.bf16.msra.mxu0 %v2118
        %2790 = vmatmul.bf16.gmra.mxu0 %v958
        %v2791 = vpop.f32.mrf.mxu0
        %v2792 = vadd.f32 %v2773, %v2791
        %v2793 = vpop.f32.mrf.mxu0
        %v2794 = vadd.f32 %v2775, %v2793
        %2795 = vmatmul.bf16.gmra.mxu0 %v978
        %v2796 = vpop.f32.mrf.mxu0
        %v2797 = vadd.f32 %v2778, %v2796
        %v2798 = vpop.f32.mrf.mxu0
        %v2799 = vadd.f32 %v2780, %v2798
        %2800 = vdwg.mxu0
        %2801 = vmatpush.bf16.msra.mxu0 %v2148
        %2802 = vmatpush.bf16.msra.mxu0 %v2146
        %2803 = vmatpush.bf16.msra.mxu0 %v2144
        %2804 = vmatpush.bf16.msra.mxu0 %v2142
        %2805 = vmatpush.bf16.msra.mxu0 %v2140
        %2806 = vmatpush.bf16.msra.mxu0 %v2138
        %2807 = vmatpush.bf16.msra.mxu0 %v2136
        %2808 = vmatpush.bf16.msra.mxu0 %v2134
        %2809 = vmatmul.bf16.gmra.mxu0 %v959
        %v2810 = vpop.f32.mrf.mxu0
        %v2811 = vadd.f32 %v2792, %v2810
        %v2812 = vpop.f32.mrf.mxu0
        %v2813 = vadd.f32 %v2794, %v2812
        %2814 = vmatmul.bf16.gmra.mxu0 %v979
        %v2815 = vpop.f32.mrf.mxu0
        %v2816 = vadd.f32 %v2797, %v2815
        %v2817 = vpop.f32.mrf.mxu0
        %v2818 = vadd.f32 %v2799, %v2817
        %2819 = vdwg.mxu0
        %2820 = vmatpush.bf16.msra.mxu0 %v2164
        %2821 = vmatpush.bf16.msra.mxu0 %v2162
        %2822 = vmatpush.bf16.msra.mxu0 %v2160
        %2823 = vmatpush.bf16.msra.mxu0 %v2158
        %2824 = vmatpush.bf16.msra.mxu0 %v2156
        %2825 = vmatpush.bf16.msra.mxu0 %v2154
        %2826 = vmatpush.bf16.msra.mxu0 %v2152
        %2827 = vmatpush.bf16.msra.mxu0 %v2150
        %2828 = vmatmul.bf16.gmra.mxu0 %v960
        %v2829 = vpop.f32.mrf.mxu0
        %v2830 = vadd.f32 %v2811, %v2829
        %v2831 = vpop.f32.mrf.mxu0
        %v2832 = vadd.f32 %v2813, %v2831
        %2833 = vmatmul.bf16.gmra.mxu0 %v980
        %v2834 = vpop.f32.mrf.mxu0
        %v2835 = vadd.f32 %v2816, %v2834
        %v2836 = vpop.f32.mrf.mxu0
        %v2837 = vadd.f32 %v2818, %v2836
        %2838 = vdwg.mxu0
        %2839 = vmatpush.bf16.msra.mxu0 %v2180
        %2840 = vmatpush.bf16.msra.mxu0 %v2178
        %2841 = vmatpush.bf16.msra.mxu0 %v2176
        %2842 = vmatpush.bf16.msra.mxu0 %v2174
        %2843 = vmatpush.bf16.msra.mxu0 %v2172
        %2844 = vmatpush.bf16.msra.mxu0 %v2170
        %2845 = vmatpush.bf16.msra.mxu0 %v2168
        %2846 = vmatpush.bf16.msra.mxu0 %v2166
        %2847 = vmatmul.bf16.gmra.mxu0 %v961
        %v2848 = vpop.f32.mrf.mxu0
        %v2849 = vadd.f32 %v2830, %v2848
        %v2850 = vpop.f32.mrf.mxu0
        %v2851 = vadd.f32 %v2832, %v2850
        %2852 = vmatmul.bf16.gmra.mxu0 %v981
        %v2853 = vpop.f32.mrf.mxu0
        %v2854 = vadd.f32 %v2835, %v2853
        %v2855 = vpop.f32.mrf.mxu0
        %v2856 = vadd.f32 %v2837, %v2855
        %2857 = vdwg.mxu0
        %2858 = vmatpush.bf16.msra.mxu0 %v2196
        %2859 = vmatpush.bf16.msra.mxu0 %v2194
        %2860 = vmatpush.bf16.msra.mxu0 %v2192
        %2861 = vmatpush.bf16.msra.mxu0 %v2190
        %2862 = vmatpush.bf16.msra.mxu0 %v2188
        %2863 = vmatpush.bf16.msra.mxu0 %v2186
        %2864 = vmatpush.bf16.msra.mxu0 %v2184
        %2865 = vmatpush.bf16.msra.mxu0 %v2182
        %2866 = vmatmul.bf16.gmra.mxu0 %v962
        %v2867 = vpop.f32.mrf.mxu0
        %v2868 = vadd.f32 %v2849, %v2867
        %v2869 = vpop.f32.mrf.mxu0
        %v2870 = vadd.f32 %v2851, %v2869
        %2871 = vmatmul.bf16.gmra.mxu0 %v982
        %v2872 = vpop.f32.mrf.mxu0
        %v2873 = vadd.f32 %v2854, %v2872
        %v2874 = vpop.f32.mrf.mxu0
        %v2875 = vadd.f32 %v2856, %v2874
        %2876 = vdwg.mxu0
        %2877 = vmatpush.bf16.msra.mxu0 %v2212
        %2878 = vmatpush.bf16.msra.mxu0 %v2210
        %2879 = vmatpush.bf16.msra.mxu0 %v2208
        %2880 = vmatpush.bf16.msra.mxu0 %v2206
        %2881 = vmatpush.bf16.msra.mxu0 %v2204
        %2882 = vmatpush.bf16.msra.mxu0 %v2202
        %2883 = vmatpush.bf16.msra.mxu0 %v2200
        %2884 = vmatpush.bf16.msra.mxu0 %v2198
        %2885 = vmatmul.bf16.gmra.mxu0 %v963
        %v2886 = vpop.f32.mrf.mxu0
        %v2887 = vadd.f32 %v2868, %v2886
        %v2888 = vpop.f32.mrf.mxu0
        %v2889 = vadd.f32 %v2870, %v2888
        %2890 = vmatmul.bf16.gmra.mxu0 %v983
        %v2891 = vpop.f32.mrf.mxu0
        %v2892 = vadd.f32 %v2873, %v2891
        %v2893 = vpop.f32.mrf.mxu0
        %v2894 = vadd.f32 %v2875, %v2893
        %2895 = vdwg.mxu0
        %2896 = vmatpush.bf16.msra.mxu0 %v2228
        %2897 = vmatpush.bf16.msra.mxu0 %v2226
        %2898 = vmatpush.bf16.msra.mxu0 %v2224
        %2899 = vmatpush.bf16.msra.mxu0 %v2222
        %2900 = vmatpush.bf16.msra.mxu0 %v2220
        %2901 = vmatpush.bf16.msra.mxu0 %v2218
        %2902 = vmatpush.bf16.msra.mxu0 %v2216
        %2903 = vmatpush.bf16.msra.mxu0 %v2214
        %2904 = vmatmul.bf16.gmra.mxu0 %v964
        %v2905 = vpop.f32.mrf.mxu0
        %v2906 = vadd.f32 %v2887, %v2905
        %v2907 = vpop.f32.mrf.mxu0
        %v2908 = vadd.f32 %v2889, %v2907
        %2909 = vmatmul.bf16.gmra.mxu0 %v984
        %v2910 = vpop.f32.mrf.mxu0
        %v2911 = vadd.f32 %v2892, %v2910
        %v2912 = vpop.f32.mrf.mxu0
        %v2913 = vadd.f32 %v2894, %v2912
        %2914 = vdwg.mxu0
        %2915 = vmatpush.bf16.msra.mxu0 %v2244
        %2916 = vmatpush.bf16.msra.mxu0 %v2242
        %2917 = vmatpush.bf16.msra.mxu0 %v2240
        %2918 = vmatpush.bf16.msra.mxu0 %v2238
        %2919 = vmatpush.bf16.msra.mxu0 %v2236
        %2920 = vmatpush.bf16.msra.mxu0 %v2234
        %2921 = vmatpush.bf16.msra.mxu0 %v2232
        %2922 = vmatpush.bf16.msra.mxu0 %v2230
        %2923 = vmatmul.bf16.gmra.mxu0 %v965
        %v2924 = vpop.f32.mrf.mxu0
        %v2925 = vadd.f32 %v2906, %v2924
        %v2926 = vpop.f32.mrf.mxu0
        %v2927 = vadd.f32 %v2908, %v2926
        %2928 = vmatmul.bf16.gmra.mxu0 %v985
        %v2929 = vpop.f32.mrf.mxu0
        %v2930 = vadd.f32 %v2911, %v2929
        %v2931 = vpop.f32.mrf.mxu0
        %v2932 = vadd.f32 %v2913, %v2931
        %2933 = vdwg.mxu0
        %2934 = vmatpush.bf16.msra.mxu0 %v2260
        %2935 = vmatpush.bf16.msra.mxu0 %v2258
        %2936 = vmatpush.bf16.msra.mxu0 %v2256
        %2937 = vmatpush.bf16.msra.mxu0 %v2254
        %2938 = vmatpush.bf16.msra.mxu0 %v2252
        %2939 = vmatpush.bf16.msra.mxu0 %v2250
        %2940 = vmatpush.bf16.msra.mxu0 %v2248
        %2941 = vmatpush.bf16.msra.mxu0 %v2246
        %2942 = vmatmul.bf16.gmra.mxu0 %v966
        %v2943 = vpop.f32.mrf.mxu0
        %v2944 = vadd.f32 %v2925, %v2943
        %v2945 = vpop.f32.mrf.mxu0
        %v2946 = vadd.f32 %v2927, %v2945
        %2947 = vmatmul.bf16.gmra.mxu0 %v986
        %v2948 = vpop.f32.mrf.mxu0
        %v2949 = vadd.f32 %v2930, %v2948
        %v2950 = vpop.f32.mrf.mxu0
        %v2951 = vadd.f32 %v2932, %v2950
        %2952 = vdwg.mxu0
        %2953 = vmatpush.bf16.msra.mxu0 %v2276
        %2954 = vmatpush.bf16.msra.mxu0 %v2274
        %2955 = vmatpush.bf16.msra.mxu0 %v2272
        %2956 = vmatpush.bf16.msra.mxu0 %v2270
        %2957 = vmatpush.bf16.msra.mxu0 %v2268
        %2958 = vmatpush.bf16.msra.mxu0 %v2266
        %2959 = vmatpush.bf16.msra.mxu0 %v2264
        %2960 = vmatpush.bf16.msra.mxu0 %v2262
        %2961 = vmatmul.bf16.gmra.mxu0 %v967
        %v2962 = vpop.f32.mrf.mxu0
        %v2963 = vadd.f32 %v2944, %v2962
        %v2964 = vpop.f32.mrf.mxu0
        %v2965 = vadd.f32 %v2946, %v2964
        %2966 = vmatmul.bf16.gmra.mxu0 %v987
        %v2967 = vpop.f32.mrf.mxu0
        %v2968 = vadd.f32 %v2949, %v2967
        %v2969 = vpop.f32.mrf.mxu0
        %v2970 = vadd.f32 %v2951, %v2969
        %2971 = vdwg.mxu0
        %2972 = vmatpush.bf16.msra.mxu0 %v2292
        %2973 = vmatpush.bf16.msra.mxu0 %v2290
        %2974 = vmatpush.bf16.msra.mxu0 %v2288
        %2975 = vmatpush.bf16.msra.mxu0 %v2286
        %2976 = vmatpush.bf16.msra.mxu0 %v2284
        %2977 = vmatpush.bf16.msra.mxu0 %v2282
        %2978 = vmatpush.bf16.msra.mxu0 %v2280
        %2979 = vmatpush.bf16.msra.mxu0 %v2278
        %2980 = vmatmul.bf16.gmra.mxu0 %v968
        %v2981 = vpop.f32.mrf.mxu0
        %v2982 = vadd.f32 %v2963, %v2981
        %v2983 = vpop.f32.mrf.mxu0
        %v2984 = vadd.f32 %v2965, %v2983
        %2985 = vmatmul.bf16.gmra.mxu0 %v988
        %v2986 = vpop.f32.mrf.mxu0
        %v2987 = vadd.f32 %v2968, %v2986
        %v2988 = vpop.f32.mrf.mxu0
        %v2989 = vadd.f32 %v2970, %v2988
        %2990 = vdwg.mxu0
        %2991 = vmatpush.bf16.msra.mxu0 %v2308
        %2992 = vmatpush.bf16.msra.mxu0 %v2306
        %2993 = vmatpush.bf16.msra.mxu0 %v2304
        %2994 = vmatpush.bf16.msra.mxu0 %v2302
        %2995 = vmatpush.bf16.msra.mxu0 %v2300
        %2996 = vmatpush.bf16.msra.mxu0 %v2298
        %2997 = vmatpush.bf16.msra.mxu0 %v2296
        %2998 = vmatpush.bf16.msra.mxu0 %v2294
        %2999 = vmatmul.bf16.gmra.mxu0 %v969
        %v3000 = vpop.f32.mrf.mxu0
        %v3001 = vadd.f32 %v2982, %v3000
        %v3002 = vpop.f32.mrf.mxu0
        %v3003 = vadd.f32 %v2984, %v3002
        %3004 = vmatmul.bf16.gmra.mxu0 %v989
        %v3005 = vpop.f32.mrf.mxu0
        %v3006 = vadd.f32 %v2987, %v3005
        %v3007 = vpop.f32.mrf.mxu0
        %v3008 = vadd.f32 %v2989, %v3007
        %3009 = vdwg.mxu0
        %3010 = vmatpush.bf16.msra.mxu0 %v2005
        %3011 = vmatpush.bf16.msra.mxu0 %v2003
        %3012 = vmatpush.bf16.msra.mxu0 %v2001
        %3013 = vmatpush.bf16.msra.mxu0 %v1999
        %3014 = vmatpush.bf16.msra.mxu0 %v1997
        %3015 = vmatpush.bf16.msra.mxu0 %v1995
        %3016 = vmatpush.bf16.msra.mxu0 %v1993
        %3017 = vmatpush.bf16.msra.mxu0 %v1991
        %3018 = vmatmul.bf16.gmra.mxu0 %v950
        %v3019 = vpop.f32.mrf.mxu0
        %v3020 = vadd.f32 0.0, %v3019
        %v3021 = vpop.f32.mrf.mxu0
        %v3022 = vadd.f32 0.0, %v3021
        %3023 = vmatmul.bf16.gmra.mxu0 %v970
        %v3024 = vpop.f32.mrf.mxu0
        %v3025 = vadd.f32 0.0, %v3024
        %v3026 = vpop.f32.mrf.mxu0
        %v3027 = vadd.f32 0.0, %v3026
        %3028 = vdwg.mxu0
        %3029 = vmatpush.bf16.msra.mxu0 %v2021
        %3030 = vmatpush.bf16.msra.mxu0 %v2019
        %3031 = vmatpush.bf16.msra.mxu0 %v2017
        %3032 = vmatpush.bf16.msra.mxu0 %v2015
        %3033 = vmatpush.bf16.msra.mxu0 %v2013
        %3034 = vmatpush.bf16.msra.mxu0 %v2011
        %3035 = vmatpush.bf16.msra.mxu0 %v2009
        %3036 = vmatpush.bf16.msra.mxu0 %v2007
        %3037 = vmatmul.bf16.gmra.mxu0 %v951
        %v3038 = vpop.f32.mrf.mxu0
        %v3039 = vadd.f32 %v3020, %v3038
        %v3040 = vpop.f32.mrf.mxu0
        %v3041 = vadd.f32 %v3022, %v3040
        %3042 = vmatmul.bf16.gmra.mxu0 %v971
        %v3043 = vpop.f32.mrf.mxu0
        %v3044 = vadd.f32 %v3025, %v3043
        %v3045 = vpop.f32.mrf.mxu0
        %v3046 = vadd.f32 %v3027, %v3045
        %3047 = vdwg.mxu0
        %3048 = vmatpush.bf16.msra.mxu0 %v2037
        %3049 = vmatpush.bf16.msra.mxu0 %v2035
        %3050 = vmatpush.bf16.msra.mxu0 %v2033
        %3051 = vmatpush.bf16.msra.mxu0 %v2031
        %3052 = vmatpush.bf16.msra.mxu0 %v2029
        %3053 = vmatpush.bf16.msra.mxu0 %v2027
        %3054 = vmatpush.bf16.msra.mxu0 %v2025
        %3055 = vmatpush.bf16.msra.mxu0 %v2023
        %3056 = vmatmul.bf16.gmra.mxu0 %v952
        %v3057 = vpop.f32.mrf.mxu0
        %v3058 = vadd.f32 %v3039, %v3057
        %v3059 = vpop.f32.mrf.mxu0
        %v3060 = vadd.f32 %v3041, %v3059
        %3061 = vmatmul.bf16.gmra.mxu0 %v972
        %v3062 = vpop.f32.mrf.mxu0
        %v3063 = vadd.f32 %v3044, %v3062
        %v3064 = vpop.f32.mrf.mxu0
        %v3065 = vadd.f32 %v3046, %v3064
        %3066 = vdwg.mxu0
        %3067 = vmatpush.bf16.msra.mxu0 %v2053
        %3068 = vmatpush.bf16.msra.mxu0 %v2051
        %3069 = vmatpush.bf16.msra.mxu0 %v2049
        %3070 = vmatpush.bf16.msra.mxu0 %v2047
        %3071 = vmatpush.bf16.msra.mxu0 %v2045
        %3072 = vmatpush.bf16.msra.mxu0 %v2043
        %3073 = vmatpush.bf16.msra.mxu0 %v2041
        %3074 = vmatpush.bf16.msra.mxu0 %v2039
        %3075 = vmatmul.bf16.gmra.mxu0 %v953
        %v3076 = vpop.f32.mrf.mxu0
        %v3077 = vadd.f32 %v3058, %v3076
        %v3078 = vpop.f32.mrf.mxu0
        %v3079 = vadd.f32 %v3060, %v3078
        %3080 = vmatmul.bf16.gmra.mxu0 %v973
        %v3081 = vpop.f32.mrf.mxu0
        %v3082 = vadd.f32 %v3063, %v3081
        %v3083 = vpop.f32.mrf.mxu0
        %v3084 = vadd.f32 %v3065, %v3083
        %3085 = vdwg.mxu0
        %3086 = vmatpush.bf16.msra.mxu0 %v2069
        %3087 = vmatpush.bf16.msra.mxu0 %v2067
        %3088 = vmatpush.bf16.msra.mxu0 %v2065
        %3089 = vmatpush.bf16.msra.mxu0 %v2063
        %3090 = vmatpush.bf16.msra.mxu0 %v2061
        %3091 = vmatpush.bf16.msra.mxu0 %v2059
        %3092 = vmatpush.bf16.msra.mxu0 %v2057
        %3093 = vmatpush.bf16.msra.mxu0 %v2055
        %3094 = vmatmul.bf16.gmra.mxu0 %v954
        %v3095 = vpop.f32.mrf.mxu0
        %v3096 = vadd.f32 %v3077, %v3095
        %v3097 = vpop.f32.mrf.mxu0
        %v3098 = vadd.f32 %v3079, %v3097
        %3099 = vmatmul.bf16.gmra.mxu0 %v974
        %v3100 = vpop.f32.mrf.mxu0
        %v3101 = vadd.f32 %v3082, %v3100
        %v3102 = vpop.f32.mrf.mxu0
        %v3103 = vadd.f32 %v3084, %v3102
        %3104 = vdwg.mxu0
        %3105 = vmatpush.bf16.msra.mxu0 %v2085
        %3106 = vmatpush.bf16.msra.mxu0 %v2083
        %3107 = vmatpush.bf16.msra.mxu0 %v2081
        %3108 = vmatpush.bf16.msra.mxu0 %v2079
        %3109 = vmatpush.bf16.msra.mxu0 %v2077
        %3110 = vmatpush.bf16.msra.mxu0 %v2075
        %3111 = vmatpush.bf16.msra.mxu0 %v2073
        %3112 = vmatpush.bf16.msra.mxu0 %v2071
        %3113 = vmatmul.bf16.gmra.mxu0 %v955
        %v3114 = vpop.f32.mrf.mxu0
        %v3115 = vadd.f32 %v3096, %v3114
        %v3116 = vpop.f32.mrf.mxu0
        %v3117 = vadd.f32 %v3098, %v3116
        %3118 = vmatmul.bf16.gmra.mxu0 %v975
        %v3119 = vpop.f32.mrf.mxu0
        %v3120 = vadd.f32 %v3101, %v3119
        %v3121 = vpop.f32.mrf.mxu0
        %v3122 = vadd.f32 %v3103, %v3121
        %3123 = vdwg.mxu0
        %3124 = vmatpush.bf16.msra.mxu0 %v2101
        %3125 = vmatpush.bf16.msra.mxu0 %v2099
        %3126 = vmatpush.bf16.msra.mxu0 %v2097
        %3127 = vmatpush.bf16.msra.mxu0 %v2095
        %3128 = vmatpush.bf16.msra.mxu0 %v2093
        %3129 = vmatpush.bf16.msra.mxu0 %v2091
        %3130 = vmatpush.bf16.msra.mxu0 %v2089
        %3131 = vmatpush.bf16.msra.mxu0 %v2087
        %3132 = vmatmul.bf16.gmra.mxu0 %v956
        %v3133 = vpop.f32.mrf.mxu0
        %v3134 = vadd.f32 %v3115, %v3133
        %v3135 = vpop.f32.mrf.mxu0
        %v3136 = vadd.f32 %v3117, %v3135
        %3137 = vmatmul.bf16.gmra.mxu0 %v976
        %v3138 = vpop.f32.mrf.mxu0
        %v3139 = vadd.f32 %v3120, %v3138
        %v3140 = vpop.f32.mrf.mxu0
        %v3141 = vadd.f32 %v3122, %v3140
        %3142 = vdwg.mxu0
        %3143 = vmatpush.bf16.msra.mxu0 %v2117
        %3144 = vmatpush.bf16.msra.mxu0 %v2115
        %3145 = vmatpush.bf16.msra.mxu0 %v2113
        %3146 = vmatpush.bf16.msra.mxu0 %v2111
        %3147 = vmatpush.bf16.msra.mxu0 %v2109
        %3148 = vmatpush.bf16.msra.mxu0 %v2107
        %3149 = vmatpush.bf16.msra.mxu0 %v2105
        %3150 = vmatpush.bf16.msra.mxu0 %v2103
        %3151 = vmatmul.bf16.gmra.mxu0 %v957
        %v3152 = vpop.f32.mrf.mxu0
        %v3153 = vadd.f32 %v3134, %v3152
        %v3154 = vpop.f32.mrf.mxu0
        %v3155 = vadd.f32 %v3136, %v3154
        %3156 = vmatmul.bf16.gmra.mxu0 %v977
        %v3157 = vpop.f32.mrf.mxu0
        %v3158 = vadd.f32 %v3139, %v3157
        %v3159 = vpop.f32.mrf.mxu0
        %v3160 = vadd.f32 %v3141, %v3159
        %3161 = vdwg.mxu0
        %3162 = vmatpush.bf16.msra.mxu0 %v2133
        %3163 = vmatpush.bf16.msra.mxu0 %v2131
        %3164 = vmatpush.bf16.msra.mxu0 %v2129
        %3165 = vmatpush.bf16.msra.mxu0 %v2127
        %3166 = vmatpush.bf16.msra.mxu0 %v2125
        %3167 = vmatpush.bf16.msra.mxu0 %v2123
        %3168 = vmatpush.bf16.msra.mxu0 %v2121
        %3169 = vmatpush.bf16.msra.mxu0 %v2119
        %3170 = vmatmul.bf16.gmra.mxu0 %v958
        %v3171 = vpop.f32.mrf.mxu0
        %v3172 = vadd.f32 %v3153, %v3171
        %v3173 = vpop.f32.mrf.mxu0
        %v3174 = vadd.f32 %v3155, %v3173
        %3175 = vmatmul.bf16.gmra.mxu0 %v978
        %v3176 = vpop.f32.mrf.mxu0
        %v3177 = vadd.f32 %v3158, %v3176
        %v3178 = vpop.f32.mrf.mxu0
        %v3179 = vadd.f32 %v3160, %v3178
        %3180 = vdwg.mxu0
        %3181 = vmatpush.bf16.msra.mxu0 %v2149
        %3182 = vmatpush.bf16.msra.mxu0 %v2147
        %3183 = vmatpush.bf16.msra.mxu0 %v2145
        %3184 = vmatpush.bf16.msra.mxu0 %v2143
        %3185 = vmatpush.bf16.msra.mxu0 %v2141
        %3186 = vmatpush.bf16.msra.mxu0 %v2139
        %3187 = vmatpush.bf16.msra.mxu0 %v2137
        %3188 = vmatpush.bf16.msra.mxu0 %v2135
        %3189 = vmatmul.bf16.gmra.mxu0 %v959
        %v3190 = vpop.f32.mrf.mxu0
        %v3191 = vadd.f32 %v3172, %v3190
        %v3192 = vpop.f32.mrf.mxu0
        %v3193 = vadd.f32 %v3174, %v3192
        %3194 = vmatmul.bf16.gmra.mxu0 %v979
        %v3195 = vpop.f32.mrf.mxu0
        %v3196 = vadd.f32 %v3177, %v3195
        %v3197 = vpop.f32.mrf.mxu0
        %v3198 = vadd.f32 %v3179, %v3197
        %3199 = vdwg.mxu0
        %3200 = vmatpush.bf16.msra.mxu0 %v2165
        %3201 = vmatpush.bf16.msra.mxu0 %v2163
        %3202 = vmatpush.bf16.msra.mxu0 %v2161
        %3203 = vmatpush.bf16.msra.mxu0 %v2159
        %3204 = vmatpush.bf16.msra.mxu0 %v2157
        %3205 = vmatpush.bf16.msra.mxu0 %v2155
        %3206 = vmatpush.bf16.msra.mxu0 %v2153
        %3207 = vmatpush.bf16.msra.mxu0 %v2151
        %3208 = vmatmul.bf16.gmra.mxu0 %v960
        %v3209 = vpop.f32.mrf.mxu0
        %v3210 = vadd.f32 %v3191, %v3209
        %v3211 = vpop.f32.mrf.mxu0
        %v3212 = vadd.f32 %v3193, %v3211
        %3213 = vmatmul.bf16.gmra.mxu0 %v980
        %v3214 = vpop.f32.mrf.mxu0
        %v3215 = vadd.f32 %v3196, %v3214
        %v3216 = vpop.f32.mrf.mxu0
        %v3217 = vadd.f32 %v3198, %v3216
        %3218 = vdwg.mxu0
        %3219 = vmatpush.bf16.msra.mxu0 %v2181
        %3220 = vmatpush.bf16.msra.mxu0 %v2179
        %3221 = vmatpush.bf16.msra.mxu0 %v2177
        %3222 = vmatpush.bf16.msra.mxu0 %v2175
        %3223 = vmatpush.bf16.msra.mxu0 %v2173
        %3224 = vmatpush.bf16.msra.mxu0 %v2171
        %3225 = vmatpush.bf16.msra.mxu0 %v2169
        %3226 = vmatpush.bf16.msra.mxu0 %v2167
        %3227 = vmatmul.bf16.gmra.mxu0 %v961
        %v3228 = vpop.f32.mrf.mxu0
        %v3229 = vadd.f32 %v3210, %v3228
        %v3230 = vpop.f32.mrf.mxu0
        %v3231 = vadd.f32 %v3212, %v3230
        %3232 = vmatmul.bf16.gmra.mxu0 %v981
        %v3233 = vpop.f32.mrf.mxu0
        %v3234 = vadd.f32 %v3215, %v3233
        %v3235 = vpop.f32.mrf.mxu0
        %v3236 = vadd.f32 %v3217, %v3235
        %3237 = vdwg.mxu0
        %3238 = vmatpush.bf16.msra.mxu0 %v2197
        %3239 = vmatpush.bf16.msra.mxu0 %v2195
        %3240 = vmatpush.bf16.msra.mxu0 %v2193
        %3241 = vmatpush.bf16.msra.mxu0 %v2191
        %3242 = vmatpush.bf16.msra.mxu0 %v2189
        %3243 = vmatpush.bf16.msra.mxu0 %v2187
        %3244 = vmatpush.bf16.msra.mxu0 %v2185
        %3245 = vmatpush.bf16.msra.mxu0 %v2183
        %3246 = vmatmul.bf16.gmra.mxu0 %v962
        %v3247 = vpop.f32.mrf.mxu0
        %v3248 = vadd.f32 %v3229, %v3247
        %v3249 = vpop.f32.mrf.mxu0
        %v3250 = vadd.f32 %v3231, %v3249
        %3251 = vmatmul.bf16.gmra.mxu0 %v982
        %v3252 = vpop.f32.mrf.mxu0
        %v3253 = vadd.f32 %v3234, %v3252
        %v3254 = vpop.f32.mrf.mxu0
        %v3255 = vadd.f32 %v3236, %v3254
        %3256 = vdwg.mxu0
        %3257 = vmatpush.bf16.msra.mxu0 %v2213
        %3258 = vmatpush.bf16.msra.mxu0 %v2211
        %3259 = vmatpush.bf16.msra.mxu0 %v2209
        %3260 = vmatpush.bf16.msra.mxu0 %v2207
        %3261 = vmatpush.bf16.msra.mxu0 %v2205
        %3262 = vmatpush.bf16.msra.mxu0 %v2203
        %3263 = vmatpush.bf16.msra.mxu0 %v2201
        %3264 = vmatpush.bf16.msra.mxu0 %v2199
        %3265 = vmatmul.bf16.gmra.mxu0 %v963
        %v3266 = vpop.f32.mrf.mxu0
        %v3267 = vadd.f32 %v3248, %v3266
        %v3268 = vpop.f32.mrf.mxu0
        %v3269 = vadd.f32 %v3250, %v3268
        %3270 = vmatmul.bf16.gmra.mxu0 %v983
        %v3271 = vpop.f32.mrf.mxu0
        %v3272 = vadd.f32 %v3253, %v3271
        %v3273 = vpop.f32.mrf.mxu0
        %v3274 = vadd.f32 %v3255, %v3273
        %3275 = vdwg.mxu0
        %3276 = vmatpush.bf16.msra.mxu0 %v2229
        %3277 = vmatpush.bf16.msra.mxu0 %v2227
        %3278 = vmatpush.bf16.msra.mxu0 %v2225
        %3279 = vmatpush.bf16.msra.mxu0 %v2223
        %3280 = vmatpush.bf16.msra.mxu0 %v2221
        %3281 = vmatpush.bf16.msra.mxu0 %v2219
        %3282 = vmatpush.bf16.msra.mxu0 %v2217
        %3283 = vmatpush.bf16.msra.mxu0 %v2215
        %3284 = vmatmul.bf16.gmra.mxu0 %v964
        %v3285 = vpop.f32.mrf.mxu0
        %v3286 = vadd.f32 %v3267, %v3285
        %v3287 = vpop.f32.mrf.mxu0
        %v3288 = vadd.f32 %v3269, %v3287
        %3289 = vmatmul.bf16.gmra.mxu0 %v984
        %v3290 = vpop.f32.mrf.mxu0
        %v3291 = vadd.f32 %v3272, %v3290
        %v3292 = vpop.f32.mrf.mxu0
        %v3293 = vadd.f32 %v3274, %v3292
        %3294 = vdwg.mxu0
        %3295 = vmatpush.bf16.msra.mxu0 %v2245
        %3296 = vmatpush.bf16.msra.mxu0 %v2243
        %3297 = vmatpush.bf16.msra.mxu0 %v2241
        %3298 = vmatpush.bf16.msra.mxu0 %v2239
        %3299 = vmatpush.bf16.msra.mxu0 %v2237
        %3300 = vmatpush.bf16.msra.mxu0 %v2235
        %3301 = vmatpush.bf16.msra.mxu0 %v2233
        %3302 = vmatpush.bf16.msra.mxu0 %v2231
        %3303 = vmatmul.bf16.gmra.mxu0 %v965
        %v3304 = vpop.f32.mrf.mxu0
        %v3305 = vadd.f32 %v3286, %v3304
        %v3306 = vpop.f32.mrf.mxu0
        %v3307 = vadd.f32 %v3288, %v3306
        %3308 = vmatmul.bf16.gmra.mxu0 %v985
        %v3309 = vpop.f32.mrf.mxu0
        %v3310 = vadd.f32 %v3291, %v3309
        %v3311 = vpop.f32.mrf.mxu0
        %v3312 = vadd.f32 %v3293, %v3311
        %3313 = vdwg.mxu0
        %3314 = vmatpush.bf16.msra.mxu0 %v2261
        %3315 = vmatpush.bf16.msra.mxu0 %v2259
        %3316 = vmatpush.bf16.msra.mxu0 %v2257
        %3317 = vmatpush.bf16.msra.mxu0 %v2255
        %3318 = vmatpush.bf16.msra.mxu0 %v2253
        %3319 = vmatpush.bf16.msra.mxu0 %v2251
        %3320 = vmatpush.bf16.msra.mxu0 %v2249
        %3321 = vmatpush.bf16.msra.mxu0 %v2247
        %3322 = vmatmul.bf16.gmra.mxu0 %v966
        %v3323 = vpop.f32.mrf.mxu0
        %v3324 = vadd.f32 %v3305, %v3323
        %v3325 = vpop.f32.mrf.mxu0
        %v3326 = vadd.f32 %v3307, %v3325
        %3327 = vmatmul.bf16.gmra.mxu0 %v986
        %v3328 = vpop.f32.mrf.mxu0
        %v3329 = vadd.f32 %v3310, %v3328
        %v3330 = vpop.f32.mrf.mxu0
        %v3331 = vadd.f32 %v3312, %v3330
        %3332 = vdwg.mxu0
        %3333 = vmatpush.bf16.msra.mxu0 %v2277
        %3334 = vmatpush.bf16.msra.mxu0 %v2275
        %3335 = vmatpush.bf16.msra.mxu0 %v2273
        %3336 = vmatpush.bf16.msra.mxu0 %v2271
        %3337 = vmatpush.bf16.msra.mxu0 %v2269
        %3338 = vmatpush.bf16.msra.mxu0 %v2267
        %3339 = vmatpush.bf16.msra.mxu0 %v2265
        %3340 = vmatpush.bf16.msra.mxu0 %v2263
        %3341 = vmatmul.bf16.gmra.mxu0 %v967
        %v3342 = vpop.f32.mrf.mxu0
        %v3343 = vadd.f32 %v3324, %v3342
        %v3344 = vpop.f32.mrf.mxu0
        %v3345 = vadd.f32 %v3326, %v3344
        %3346 = vmatmul.bf16.gmra.mxu0 %v987
        %v3347 = vpop.f32.mrf.mxu0
        %v3348 = vadd.f32 %v3329, %v3347
        %v3349 = vpop.f32.mrf.mxu0
        %v3350 = vadd.f32 %v3331, %v3349
        %3351 = vdwg.mxu0
        %3352 = vmatpush.bf16.msra.mxu0 %v2293
        %3353 = vmatpush.bf16.msra.mxu0 %v2291
        %3354 = vmatpush.bf16.msra.mxu0 %v2289
        %3355 = vmatpush.bf16.msra.mxu0 %v2287
        %3356 = vmatpush.bf16.msra.mxu0 %v2285
        %3357 = vmatpush.bf16.msra.mxu0 %v2283
        %3358 = vmatpush.bf16.msra.mxu0 %v2281
        %3359 = vmatpush.bf16.msra.mxu0 %v2279
        %3360 = vmatmul.bf16.gmra.mxu0 %v968
        %v3361 = vpop.f32.mrf.mxu0
        %v3362 = vadd.f32 %v3343, %v3361
        %v3363 = vpop.f32.mrf.mxu0
        %v3364 = vadd.f32 %v3345, %v3363
        %3365 = vmatmul.bf16.gmra.mxu0 %v988
        %v3366 = vpop.f32.mrf.mxu0
        %v3367 = vadd.f32 %v3348, %v3366
        %v3368 = vpop.f32.mrf.mxu0
        %v3369 = vadd.f32 %v3350, %v3368
        %3370 = vdwg.mxu0
        %3371 = vmatpush.bf16.msra.mxu0 %v2309
        %3372 = vmatpush.bf16.msra.mxu0 %v2307
        %3373 = vmatpush.bf16.msra.mxu0 %v2305
        %3374 = vmatpush.bf16.msra.mxu0 %v2303
        %3375 = vmatpush.bf16.msra.mxu0 %v2301
        %3376 = vmatpush.bf16.msra.mxu0 %v2299
        %3377 = vmatpush.bf16.msra.mxu0 %v2297
        %3378 = vmatpush.bf16.msra.mxu0 %v2295
        %3379 = vmatmul.bf16.gmra.mxu0 %v969
        %v3380 = vpop.f32.mrf.mxu0
        %v3381 = vadd.f32 %v3362, %v3380
        %v3382 = vpop.f32.mrf.mxu0
        %v3383 = vadd.f32 %v3364, %v3382
        %3384 = vmatmul.bf16.gmra.mxu0 %v989
        %v3385 = vpop.f32.mrf.mxu0
        %v3386 = vadd.f32 %v3367, %v3385
        %v3387 = vpop.f32.mrf.mxu0
        %v3388 = vadd.f32 %v3369, %v3387
        %3389 = vdwg.mxu0
        %v3390 = vadd.f32 %v462, %v3001
        %v3391 = vadd.f32 %v463, %v3381
        %v3392 = vadd.f32 %v464, %v3003
        %v3393 = vadd.f32 %v465, %v3383
        %v3394 = vadd.f32 %v466, %v3006
        %v3395 = vadd.f32 %v467, %v3386
        %v3396 = vadd.f32 %v468, %v3008
        %v3397 = vadd.f32 %v469, %v3388
        %3398 = vst [vmem:[#allocation2] sm:$0xff] %v3390
        %3399 = vst [vmem:[#allocation2 + $0x8] sm:$0xff] %v3391
        %3400 = vst [vmem:[#allocation2 + $0x10] sm:$0xff] %v3392
        %3401 = vst [vmem:[#allocation2 + $0x18] sm:$0xff] %v3393
        %3402 = vst [vmem:[#allocation2 + $0x20] sm:$0xff] %v3394
        %3403 = vst [vmem:[#allocation2 + $0x28] sm:$0xff] %v3395
        %3404 = vst [vmem:[#allocation2 + $0x30] sm:$0xff] %v3396
        %3405 = vst [vmem:[#allocation2 + $0x38] sm:$0xff] %v3397
        %p3406 = scmp.eq.s32.totalorder %s24, 1
        // Predicated region
        $region64: #{hourglass_forward.3} parent=54 // pred_check
          %p3407 = pneg %p3406
        $region65: #{hourglass_forward.3} parent=54 // pred_check_branch
          %3409 = sbr.rel (%p3407) target = $region67
        $region66: #{hourglass_forward.3} parent=54 // pred_region
          %v3410 = vld [vmem:[#allocation2] sm:$0xff]
          %v3411 = vld [vmem:[#allocation2 + $0x8] sm:$0xff]
          %v3412 = vld [vmem:[#allocation2 + $0x10] sm:$0xff]
          %v3413 = vld [vmem:[#allocation2 + $0x18] sm:$0xff]
          %v3414 = vld [vmem:[#allocation2 + $0x20] sm:$0xff]
          %v3415 = vld [vmem:[#allocation2 + $0x28] sm:$0xff]
          %v3416 = vld [vmem:[#allocation2 + $0x30] sm:$0xff]
          %v3417 = vld [vmem:[#allocation2 + $0x38] sm:$0xff]
          %v3418 = vld [vmem:[%s427] sm:$0x3]
          %v3420 = vperm.slane %v3418, 0
          %v3421 = vperm.slane %v3418, 1
          %v3424 = vmul.f32 %v3410, %v3420
          %v3425 = vmul.f32 %v3411, %v3421
          %v3426 = vmul.f32 %v3412, %v3420
          %v3427 = vmul.f32 %v3413, %v3421
          %v3428 = vmul.f32 %v3414, %v3420
          %v3429 = vmul.f32 %v3415, %v3421
          %v3430 = vmul.f32 %v3416, %v3420
          %v3431 = vmul.f32 %v3417, %v3421
          %v3432 = vld [vmem:[%s432] sm:$0x3]
          %v3434 = vperm.slane %v3432, 0
          %v3435 = vperm.slane %v3432, 1
          %v3438 = vadd.f32 %v3424, %v3434
          %v3439 = vadd.f32 %v3425, %v3435
          %v3440 = vadd.f32 %v3426, %v3434
          %v3441 = vadd.f32 %v3427, %v3435
          %v3442 = vadd.f32 %v3428, %v3434
          %v3443 = vadd.f32 %v3429, %v3435
          %v3444 = vadd.f32 %v3430, %v3434
          %v3445 = vadd.f32 %v3431, %v3435
          %v3446 = vmax.f32 %v3438, 0.0
          %v3447 = vmax.f32 %v3439, 0.0
          %v3448 = vmax.f32 %v3440, 0.0
          %v3449 = vmax.f32 %v3441, 0.0
          %v3450 = vmax.f32 %v3442, 0.0
          %v3451 = vmax.f32 %v3443, 0.0
          %v3452 = vmax.f32 %v3444, 0.0
          %v3453 = vmax.f32 %v3445, 0.0
          %v3454 = vpack.c.bf16 %v3447, %v3446
          %v3455 = vpack.c.bf16 %v3449, %v3448
          %v3456 = vpack.c.bf16 %v3451, %v3450
          %v3457 = vpack.c.bf16 %v3453, %v3452
          %3458 = vst [vmem:[%s447] sm:$0xff] %v3454
          %3459 = vst [vmem:[%s447 + $0x8] sm:$0xff] %v3455
          %3460 = vst [vmem:[%s447 + $0x10] sm:$0xff] %v3456
          %3461 = vst [vmem:[%s447 + $0x18] sm:$0xff] %v3457
        $region67: #{hourglass_forward.3} parent=54 // pred_fallthru
          _
        %s3462 = smul.u32 4, %s22
        %s3463 = smul.u32 2, %s23
        %p3464 = scmp.lt.s32.totalorder %s21, 3
        %s3465 = scalar_select %p3464, %s21, 3
        %p3466 = scmp.lt.s32.totalorder %s3462, 3
        %s3467 = scalar_select %p3466, %s3462, 3
        %p3468 = scmp.lt.s32.totalorder %s3463, 1
        %s3469 = scalar_select %p3468, %s3463, 1
        %s3470 = smul.addr %s3467, 2
        %s3471 = sadd.s32 %s3469, %s3470
        %s3472 = smul.addr %s3465, 8
        %s3473 = sadd.s32 %s3471, %s3472
        %s3474 = smul.addr %s3473, 4
        %s3475 = scalar_lea.vmem %s4, %s3474
        // Predicated region
        $region68: #{hourglass_forward.3} parent=54 // pred_check
          %p3476 = pneg %p175
        $region69: #{hourglass_forward.3} parent=54 // pred_check_branch
          %3478 = sbr.rel (%p3476) target = $region71
        $region70: #{hourglass_forward.3} parent=54 // pred_region
          %s3479 = smul.u32 4, %s22
          %s3480 = smul.u32 2, %s23
        $region71: #{hourglass_forward.3} parent=54 // pred_fallthru
          _
      $region55: #{hourglass_forward.3} parent=5 // pred_fallthru
        _
      %p3481 = scmp.le.s32.totalorder 2, %s10
      // Predicated region
      $region72: #{hourglass_forward.3} parent=5 // pred_check
        %p3482 = pneg %p3481
      $region73: #{hourglass_forward.3} parent=5 // pred_check_branch
        %3484 = sbr.rel (%p3482) target = $region75
      $region74: #{hourglass_forward.3} parent=5 // pred_region
        %s3485 = ssub.s32 %s10, 2
        // Predicated region
        $region76: #{hourglass_forward.3} parent=74 // pred_check
          %p3486 = pneg %p181
        $region77: #{hourglass_forward.3} parent=74 // pred_check_branch
          %3488 = sbr.rel (%p3486) target = $region79
        $region78: #{hourglass_forward.3} parent=74 // pred_region
          %s3489 = smul.u32 4, %s26
          %s3490 = smul.u32 2, %s27
          %p3491 = scmp.lt.s32.totalorder %s25, 3
          %s3492 = scalar_select %p3491, %s25, 3
          %p3493 = scmp.lt.s32.totalorder %s3489, 3
          %s3494 = scalar_select %p3493, %s3489, 3
          %p3495 = scmp.lt.s32.totalorder %s3490, 1
          %s3496 = scalar_select %p3495, %s3490, 1
          %s3497 = smul.addr %s3494, 2
          %s3498 = sadd.s32 %s3496, %s3497
          %s3499 = smul.addr %s3492, 8
          %s3500 = sadd.s32 %s3498, %s3499
          %s3501 = smul.addr %s3500, 4
          %s3502 = scalar_lea.vmem %s4, %s3501
        $region79: #{hourglass_forward.3} parent=74 // pred_fallthru
          _
      $region75: #{hourglass_forward.3} parent=5 // pred_fallthru
        _
    $region6: #{hourglass_forward.3} parent=1 // loop_footer
      %s14 = sadd.s32 1, %s10
    $region7: #{hourglass_forward.3} parent=1 // loop_footer_branch
      %9 = sbr.rel target = $region3
    $region8: #{hourglass_forward.3} parent=1 // loop_exit
      _

// kernel: hourglass_forward.4
$region0: #{hourglass_forward.4}
  #allocation0 [shape = 'u32[]', space=smem, size = 0x4, offset = 0x4, fixed_abs, tag = 'smem constant byte address 0x4 - core index']
  #allocation1 [shape = 'u32[72,128]{1,0:T(1,128)}', space=vmem, size = 0x9000, scoped, tag = 'internal scratch']
  #allocation2 [shape = 'f32[128,256]{1,0:T(8,128)}', space=vmem, size = 0x20000, scoped, tag = 'scratch operand']
  %s0 = inlined_call_operand.vmem [shape: bf16[4,128,1024], index: 0, kind: input, shape index: {}]
  %s1 = inlined_call_operand.vmem [shape: bf16[4,1024,256], index: 1, kind: input, shape index: {}]
  %s2 = inlined_call_operand.vmem [shape: f32[1,256], index: 2, kind: input, shape index: {}]
  %s3 = inlined_call_operand.vmem [shape: f32[1,256], index: 3, kind: input, shape index: {}]
  %s4 = inlined_call_operand.vmem [shape: bf16[4,128,256], index: 4, kind: output, shape index: {}]
  %s5 = sld [smem:[#allocation0]]
  $region57: #{hourglass_forward.4} parent=0
    _
  %s7 = ssub.s32 1, %s5
  %s8 = scalar_select 0, %s7, %s5
  loop: start=0, step=1, limit=6
  $region2: #{hourglass_forward.4} parent=0 // loop_pre_header
    _
  $region3: #{hourglass_forward.4} parent=0 // loop_header
    %s10 = sphi 0, %s14
    %p11 = scmp.ge.s32.totalorder %s10, 6
    %s17 = sphi 0, %s43
    %s18 = sphi 0, %s39
    %s19 = sphi 0, %s35
    %s20 = sphi 0, %s31
    %s21 = sphi 0, %s17
    %s22 = sphi 0, %s18
    %s23 = sphi 0, %s19
    %s24 = sphi 0, %s20
    %s25 = sphi 0, %s21
    %s26 = sphi 0, %s22
    %s27 = sphi 0, %s23
    %s28 = sphi 0, %s24
    %s50 = sphi 0, %s52
    %s53 = sphi 0, %s50
    %s54 = sphi 0, %s53
    %s70 = sphi 0, %s54
    %s80 = sphi 0, %s82
    %s83 = sphi 0, %s80
    %s84 = sphi 0, %s83
    %s100 = sphi 0, %s84
    %s106 = sphi 0, %s108
    %s109 = sphi 0, %s106
    %s110 = sphi 0, %s109
    %s126 = sphi 0, %s110
    %s132 = sphi 0, %s134
    %s135 = sphi 0, %s132
    %s136 = sphi 0, %s135
    %s152 = sphi 0, %s136
    %s162 = sphi 0, %s164
    %s165 = sphi 0, %s162
    %s166 = sphi 0, %s165
    %s182 = sphi 0, %s166
  $region4: #{hourglass_forward.4} parent=0 // loop_header_branch
    %13 = sbr.rel (%p11) target = $region8
  $region5: #{hourglass_forward.4} parent=0 // loop_body
    %s15 = ssub.s32 %s10, 1
    %s16 = ssub.s32 %s10, 2
    %s29 = sadd.s32 1, %s20
    %p30 = scmp.ge.s32.totalorder %s29, 1
    %s31 = scalar_select %p30, 0, %s29
    %s32 = sadd.s32 1, %s19
    %s33 = scalar_select %p30, %s32, %s19
    %p34 = scmp.ge.s32.totalorder %s33, 1
    %s35 = scalar_select %p34, 0, %s33
    %s36 = sadd.s32 1, %s18
    %s37 = scalar_select %p34, %s36, %s18
    %p38 = scmp.ge.s32.totalorder %s37, 1
    %s39 = scalar_select %p38, 0, %s37
    %s40 = sadd.s32 1, %s17
    %s41 = scalar_select %p38, %s40, %s17
    %p42 = scmp.ge.s32.totalorder %s41, 4
    %s43 = scalar_select %p42, 0, %s41
    %s44 = ssub.s32 %s17, %s43
    %s45 = ssub.s32 %s18, %s39
    %s46 = sor.u32 %s44, %s45
    %s47 = ssub.s32 %s20, %s31
    %s48 = sor.u32 %s46, %s47
    %p49 = scmp.eq.s32.totalorder %s48, 0
    %s51 = sadd.s32 %s50, 1
    %s52 = scalar_select %p49, %s50, %s51
    %p55 = pneg %p49
    %p56 = scmp.eq.s32.totalorder %s10, 3
    %p57 = por %p55, %p56
    %p58 = scmp.ne.s32.totalorder %s50, %s53
    %p59 = scmp.eq.s32.totalorder %s10, 0
    %p60 = por %p58, %p59
    %p61 = scmp.ne.s32.totalorder %s50, %s53
    %p62 = scmp.eq.s32.totalorder %s15, 3
    %p63 = por %p61, %p62
    %p64 = scmp.ne.s32.totalorder %s53, %s54
    %p65 = scmp.eq.s32.totalorder %s15, 0
    %p66 = por %p64, %p65
    %p67 = scmp.ne.s32.totalorder %s53, %s54
    %p68 = scmp.eq.s32.totalorder %s16, 3
    %p69 = por %p67, %p68
    %p71 = scmp.ne.s32.totalorder %s54, %s70
    %p72 = scmp.eq.s32.totalorder %s16, 0
    %p73 = por %p71, %p72
    %s74 = ssub.s32 %s17, %s43
    %s75 = ssub.s32 %s20, %s31
    %s76 = sor.u32 %s74, %s75
    %s77 = ssub.s32 %s19, %s35
    %s78 = sor.u32 %s76, %s77
    %p79 = scmp.eq.s32.totalorder %s78, 0
    %s81 = sadd.s32 %s80, 1
    %s82 = scalar_select %p79, %s80, %s81
    %p85 = pneg %p79
    %p86 = scmp.eq.s32.totalorder %s10, 3
    %p87 = por %p85, %p86
    %p88 = scmp.ne.s32.totalorder %s80, %s83
    %p89 = scmp.eq.s32.totalorder %s10, 0
    %p90 = por %p88, %p89
    %p91 = scmp.ne.s32.totalorder %s80, %s83
    %p92 = scmp.eq.s32.totalorder %s15, 3
    %p93 = por %p91, %p92
    %p94 = scmp.ne.s32.totalorder %s83, %s84
    %p95 = scmp.eq.s32.totalorder %s15, 0
    %p96 = por %p94, %p95
    %p97 = scmp.ne.s32.totalorder %s83, %s84
    %p98 = scmp.eq.s32.totalorder %s16, 3
    %p99 = por %p97, %p98
    %p101 = scmp.ne.s32.totalorder %s84, %s100
    %p102 = scmp.eq.s32.totalorder %s16, 0
    %p103 = por %p101, %p102
    %s104 = ssub.s32 %s19, %s35
    %p105 = scmp.eq.s32.totalorder %s104, 0
    %s107 = sadd.s32 %s106, 1
    %s108 = scalar_select %p105, %s106, %s107
    %p111 = pneg %p105
    %p112 = scmp.eq.s32.totalorder %s10, 3
    %p113 = por %p111, %p112
    %p114 = scmp.ne.s32.totalorder %s106, %s109
    %p115 = scmp.eq.s32.totalorder %s10, 0
    %p116 = por %p114, %p115
    %p117 = scmp.ne.s32.totalorder %s106, %s109
    %p118 = scmp.eq.s32.totalorder %s15, 3
    %p119 = por %p117, %p118
    %p120 = scmp.ne.s32.totalorder %s109, %s110
    %p121 = scmp.eq.s32.totalorder %s15, 0
    %p122 = por %p120, %p121
    %p123 = scmp.ne.s32.totalorder %s109, %s110
    %p124 = scmp.eq.s32.totalorder %s16, 3
    %p125 = por %p123, %p124
    %p127 = scmp.ne.s32.totalorder %s110, %s126
    %p128 = scmp.eq.s32.totalorder %s16, 0
    %p129 = por %p127, %p128
    %s130 = ssub.s32 %s19, %s35
    %p131 = scmp.eq.s32.totalorder %s130, 0
    %s133 = sadd.s32 %s132, 1
    %s134 = scalar_select %p131, %s132, %s133
    %p137 = pneg %p131
    %p138 = scmp.eq.s32.totalorder %s10, 3
    %p139 = por %p137, %p138
    %p140 = scmp.ne.s32.totalorder %s132, %s135
    %p141 = scmp.eq.s32.totalorder %s10, 0
    %p142 = por %p140, %p141
    %p143 = scmp.ne.s32.totalorder %s132, %s135
    %p144 = scmp.eq.s32.totalorder %s15, 3
    %p145 = por %p143, %p144
    %p146 = scmp.ne.s32.totalorder %s135, %s136
    %p147 = scmp.eq.s32.totalorder %s15, 0
    %p148 = por %p146, %p147
    %p149 = scmp.ne.s32.totalorder %s135, %s136
    %p150 = scmp.eq.s32.totalorder %s16, 3
    %p151 = por %p149, %p150
    %p153 = scmp.ne.s32.totalorder %s136, %s152
    %p154 = scmp.eq.s32.totalorder %s16, 0
    %p155 = por %p153, %p154
    %s156 = ssub.s32 %s17, %s43
    %s157 = ssub.s32 %s18, %s39
    %s158 = sor.u32 %s156, %s157
    %s159 = ssub.s32 %s19, %s35
    %s160 = sor.u32 %s158, %s159
    %p161 = scmp.eq.s32.totalorder %s160, 0
    %s163 = sadd.s32 %s162, 1
    %s164 = scalar_select %p161, %s162, %s163
    %p167 = pneg %p161
    %p168 = scmp.eq.s32.totalorder %s10, 3
    %p169 = por %p167, %p168
    %p170 = scmp.ne.s32.totalorder %s162, %s165
    %p171 = scmp.eq.s32.totalorder %s10, 0
    %p172 = por %p170, %p171
    %p173 = scmp.ne.s32.totalorder %s162, %s165
    %p174 = scmp.eq.s32.totalorder %s15, 3
    %p175 = por %p173, %p174
    %p176 = scmp.ne.s32.totalorder %s165, %s166
    %p177 = scmp.eq.s32.totalorder %s15, 0
    %p178 = por %p176, %p177
    %p179 = scmp.ne.s32.totalorder %s165, %s166
    %p180 = scmp.eq.s32.totalorder %s16, 3
    %p181 = por %p179, %p180
    %p183 = scmp.ne.s32.totalorder %s166, %s182
    %p184 = scmp.eq.s32.totalorder %s16, 0
    %p185 = por %p183, %p184
    %p186 = scmp.le.s32.totalorder 1, %s10
    %p187 = scmp.lt.s32.totalorder %s10, 5
    %p188 = pnand %p186, %p187
    %p189 = pneg %p188
    // Predicated region
    $region9: #{hourglass_forward.4} parent=5 // pred_check
      _
    $region10: #{hourglass_forward.4} parent=5 // pred_check_branch
      %191 = sbr.rel (%p188) target = $region12
    $region11: #{hourglass_forward.4} parent=5 // pred_region
      %s192 = ssub.s32 %s10, 1
      // Predicated region
      $region13: #{hourglass_forward.4} parent=11 // pred_check
        %p193 = pneg %p122
      $region14: #{hourglass_forward.4} parent=11 // pred_check_branch
        %195 = sbr.rel (%p193) target = $region16
      $region15: #{hourglass_forward.4} parent=11 // pred_region
        %s196 = smul.u32 2, %s23
        %p197 = scmp.lt.s32.totalorder %s196, 1
        %s198 = scalar_select %p197, %s196, 1
        %s199 = scalar_lea.vmem %s2, %s198
        %s200 = smul.u32 2, %s23
      $region16: #{hourglass_forward.4} parent=11 // pred_fallthru
        _
      // Predicated region
      $region17: #{hourglass_forward.4} parent=11 // pred_check
        %p201 = pneg %p148
      $region18: #{hourglass_forward.4} parent=11 // pred_check_branch
        %203 = sbr.rel (%p201) target = $region20
      $region19: #{hourglass_forward.4} parent=11 // pred_region
        %s204 = smul.u32 2, %s23
        %p205 = scmp.lt.s32.totalorder %s204, 1
        %s206 = scalar_select %p205, %s204, 1
        %s207 = scalar_lea.vmem %s3, %s206
        %s208 = smul.u32 2, %s23
      $region20: #{hourglass_forward.4} parent=11 // pred_fallthru
        _
    $region12: #{hourglass_forward.4} parent=5 // pred_fallthru
      _
    %p209 = scmp.lt.s32.totalorder %s10, 4
    // Predicated region
    $region21: #{hourglass_forward.4} parent=5 // pred_check
      %p210 = pneg %p209
    $region22: #{hourglass_forward.4} parent=5 // pred_check_branch
      %212 = sbr.rel (%p210) target = $region24
    $region23: #{hourglass_forward.4} parent=5 // pred_region
      // Predicated region
      $region25: #{hourglass_forward.4} parent=23 // pred_check
        %p213 = pneg %p60
      $region26: #{hourglass_forward.4} parent=23 // pred_check_branch
        %215 = sbr.rel (%p213) target = $region28
      $region27: #{hourglass_forward.4} parent=23 // pred_region
        %s216 = smul.u32 16, %s18
        %s217 = smul.u32 8, %s20
        %p218 = scmp.lt.s32.totalorder %s17, 3
        %s219 = scalar_select %p218, %s17, 3
        %p220 = scmp.lt.s32.totalorder %s216, 15
        %s221 = scalar_select %p220, %s216, 15
        %p222 = scmp.lt.s32.totalorder %s217, 7
        %s223 = scalar_select %p222, %s217, 7
        %s224 = smul.addr %s221, 8
        %s225 = sadd.s32 %s223, %s224
        %s226 = smul.addr %s219, 128
        %s227 = sadd.s32 %s225, %s226
        %s228 = smul.addr %s227, 4
        %s229 = scalar_lea.vmem %s0, %s228
        %s230 = smul.u32 16, %s18
        %s231 = smul.u32 8, %s20
      $region28: #{hourglass_forward.4} parent=23 // pred_fallthru
        _
      // Predicated region
      $region29: #{hourglass_forward.4} parent=23 // pred_check
        %p232 = pneg %p90
      $region30: #{hourglass_forward.4} parent=23 // pred_check_branch
        %234 = sbr.rel (%p232) target = $region32
      $region31: #{hourglass_forward.4} parent=23 // pred_region
        %s235 = smul.u32 128, %s20
        %s236 = smul.u32 2, %s19
        %p237 = scmp.lt.s32.totalorder %s17, 3
        %s238 = scalar_select %p237, %s17, 3
        %p239 = scmp.lt.s32.totalorder %s235, 127
        %s240 = scalar_select %p239, %s235, 127
        %p241 = scmp.lt.s32.totalorder %s236, 1
        %s242 = scalar_select %p241, %s236, 1
        %s243 = smul.addr %s240, 2
        %s244 = sadd.s32 %s242, %s243
        %s245 = smul.addr %s238, 256
        %s246 = sadd.s32 %s244, %s245
        %s247 = smul.addr %s246, 4
        %s248 = scalar_lea.vmem %s1, %s247
        %s249 = smul.u32 128, %s20
        %s250 = smul.u32 2, %s19
      $region32: #{hourglass_forward.4} parent=23 // pred_fallthru
        _
    $region24: #{hourglass_forward.4} parent=5 // pred_fallthru
      _
    %p251 = scmp.le.s32.totalorder 1, %s10
    %p252 = scmp.lt.s32.totalorder %s10, 5
    %p253 = pnand %p251, %p252
    %p254 = pneg %p253
    // Predicated region
    $region33: #{hourglass_forward.4} parent=5 // pred_check
      _
    $region34: #{hourglass_forward.4} parent=5 // pred_check_branch
      %256 = sbr.rel (%p253) target = $region36
    $region35: #{hourglass_forward.4} parent=5 // pred_region
      %s257 = ssub.s32 %s10, 1
      %s258 = smul.u32 16, %s22
      %s259 = smul.u32 8, %s24
      %p260 = scmp.lt.s32.totalorder %s21, 3
      %s261 = scalar_select %p260, %s21, 3
      %p262 = scmp.lt.s32.totalorder %s258, 15
      %s263 = scalar_select %p262, %s258, 15
      %p264 = scmp.lt.s32.totalorder %s259, 7
      %s265 = scalar_select %p264, %s259, 7
      %s266 = smul.addr %s263, 8
      %s267 = sadd.s32 %s265, %s266
      %s268 = smul.addr %s261, 128
      %s269 = sadd.s32 %s267, %s268
      %s270 = smul.addr %s269, 4
      %s271 = scalar_lea.vmem %s0, %s270
      %p272 = pneg %p66
      %p273 = pneg %p63
      %s274 = smul.u32 128, %s24
      %s275 = smul.u32 2, %s23
      %p276 = scmp.lt.s32.totalorder %s21, 3
      %s277 = scalar_select %p276, %s21, 3
      %p278 = scmp.lt.s32.totalorder %s274, 127
      %s279 = scalar_select %p278, %s274, 127
      %p280 = scmp.lt.s32.totalorder %s275, 1
      %s281 = scalar_select %p280, %s275, 1
      %s282 = smul.addr %s279, 2
      %s283 = sadd.s32 %s281, %s282
      %s284 = smul.addr %s277, 256
      %s285 = sadd.s32 %s283, %s284
      %s286 = smul.addr %s285, 4
      %s287 = scalar_lea.vmem %s1, %s286
      %p288 = pneg %p96
      %p289 = pneg %p93
      %s290 = smul.u32 2, %s23
      %p291 = scmp.lt.s32.totalorder %s290, 1
      %s292 = scalar_select %p291, %s290, 1
      %s293 = scalar_lea.vmem %s2, %s292
      %p294 = pneg %p122
      %p295 = pneg %p119
      %s296 = smul.u32 2, %s23
      %p297 = scmp.lt.s32.totalorder %s296, 1
      %s298 = scalar_select %p297, %s296, 1
      %s299 = scalar_lea.vmem %s3, %s298
      %p300 = pneg %p148
      %p301 = pneg %p145
      %p302 = pneg %p178
      %p303 = pneg %p175
      %s304 = smul.u32 16, %s22
      %s305 = smul.u32 2, %s23
      %p306 = scmp.lt.s32.totalorder %s21, 3
      %s307 = scalar_select %p306, %s21, 3
      %p308 = scmp.lt.s32.totalorder %s304, 15
      %s309 = scalar_select %p308, %s304, 15
      %p310 = scmp.lt.s32.totalorder %s305, 1
      %s311 = scalar_select %p310, %s305, 1
      %s312 = smul.addr %s309, 2
      %s313 = sadd.s32 %s311, %s312
      %s314 = smul.addr %s307, 32
      %s315 = sadd.s32 %s313, %s314
      %s316 = smul.addr %s315, 4
      %s317 = scalar_lea.vmem %s4, %s316
      %s318 = smul.u32 16, %s22
      %s319 = smul.u32 8, %s24
      %p320 = scmp.lt.s32.totalorder %s21, 3
      %s321 = scalar_select %p320, %s21, 3
      %p322 = scmp.lt.s32.totalorder %s318, 15
      %s323 = scalar_select %p322, %s318, 15
      %p324 = scmp.lt.s32.totalorder %s319, 7
      %s325 = scalar_select %p324, %s319, 7
      %s326 = smul.addr %s323, 8
      %s327 = sadd.s32 %s325, %s326
      %s328 = smul.addr %s321, 128
      %s329 = sadd.s32 %s327, %s328
      %s330 = smul.addr %s329, 4
      %s331 = scalar_lea.vmem %s0, %s330
      %s332 = smul.u32 16, %s22
      %s333 = smul.u32 8, %s24
      %s334 = smul.u32 128, %s24
      %s335 = smul.u32 2, %s23
      %p336 = scmp.lt.s32.totalorder %s21, 3
      %s337 = scalar_select %p336, %s21, 3
      %p338 = scmp.lt.s32.totalorder %s334, 127
      %s339 = scalar_select %p338, %s334, 127
      %p340 = scmp.lt.s32.totalorder %s335, 1
      %s341 = scalar_select %p340, %s335, 1
      %s342 = smul.addr %s339, 2
      %s343 = sadd.s32 %s341, %s342
      %s344 = smul.addr %s337, 256
      %s345 = sadd.s32 %s343, %s344
      %s346 = smul.addr %s345, 4
      %s347 = scalar_lea.vmem %s1, %s346
      %s348 = smul.u32 128, %s24
      %s349 = smul.u32 2, %s23
      %s350 = smul.u32 2, %s23
      %p351 = scmp.lt.s32.totalorder %s350, 1
      %s352 = scalar_select %p351, %s350, 1
      %s353 = scalar_lea.vmem %s2, %s352
      %s354 = smul.u32 2, %s23
      %s355 = smul.u32 2, %s23
      %p356 = scmp.lt.s32.totalorder %s355, 1
      %s357 = scalar_select %p356, %s355, 1
      %s358 = scalar_lea.vmem %s3, %s357
      %s359 = smul.u32 2, %s23
      %s360 = smul.u32 16, %s22
      %s361 = smul.u32 2, %s23
      %p362 = scmp.lt.s32.totalorder %s21, 3
      %s363 = scalar_select %p362, %s21, 3
      %p364 = scmp.lt.s32.totalorder %s360, 15
      %s365 = scalar_select %p364, %s360, 15
      %p366 = scmp.lt.s32.totalorder %s361, 1
      %s367 = scalar_select %p366, %s361, 1
      %s368 = smul.addr %s365, 2
      %s369 = sadd.s32 %s367, %s368
      %s370 = smul.addr %s363, 32
      %s371 = sadd.s32 %s369, %s370
      %s372 = smul.addr %s371, 4
      %s373 = scalar_lea.vmem %s4, %s372
      %s374 = smul.u32 16, %s22
      %s375 = smul.u32 2, %s23
      %p376 = scmp.eq.s32.totalorder %s24, 0
      // Predicated region
      $region37: #{hourglass_forward.4} parent=35 // pred_check
        %p377 = pneg %p376
      $region38: #{hourglass_forward.4} parent=35 // pred_check_branch
        %379 = sbr.rel (%p377) target = $region40
      $region39: #{hourglass_forward.4} parent=35 // pred_region
        %380 = vst [vmem:[#allocation2] sm:$0xff] 0.0
        %381 = vst [vmem:[#allocation2 + $0x8] sm:$0xff] 0.0
        %382 = vst [vmem:[#allocation2 + $0x10] sm:$0xff] 0.0
        %383 = vst [vmem:[#allocation2 + $0x18] sm:$0xff] 0.0
        %384 = vst [vmem:[#allocation2 + $0x20] sm:$0xff] 0.0
        %385 = vst [vmem:[#allocation2 + $0x28] sm:$0xff] 0.0
        %386 = vst [vmem:[#allocation2 + $0x30] sm:$0xff] 0.0
        %387 = vst [vmem:[#allocation2 + $0x38] sm:$0xff] 0.0
        %388 = vst [vmem:[#allocation2 + $0x40] sm:$0xff] 0.0
        %389 = vst [vmem:[#allocation2 + $0x48] sm:$0xff] 0.0
        %390 = vst [vmem:[#allocation2 + $0x50] sm:$0xff] 0.0
        %391 = vst [vmem:[#allocation2 + $0x58] sm:$0xff] 0.0
        %392 = vst [vmem:[#allocation2 + $0x60] sm:$0xff] 0.0
        %393 = vst [vmem:[#allocation2 + $0x68] sm:$0xff] 0.0
        %394 = vst [vmem:[#allocation2 + $0x70] sm:$0xff] 0.0
        %395 = vst [vmem:[#allocation2 + $0x78] sm:$0xff] 0.0
        %396 = vst [vmem:[#allocation2 + $0x80] sm:$0xff] 0.0
        %397 = vst [vmem:[#allocation2 + $0x88] sm:$0xff] 0.0
        %398 = vst [vmem:[#allocation2 + $0x90] sm:$0xff] 0.0
        %399 = vst [vmem:[#allocation2 + $0x98] sm:$0xff] 0.0
        %400 = vst [vmem:[#allocation2 + $0xa0] sm:$0xff] 0.0
        %401 = vst [vmem:[#allocation2 + $0xa8] sm:$0xff] 0.0
        %402 = vst [vmem:[#allocation2 + $0xb0] sm:$0xff] 0.0
        %403 = vst [vmem:[#allocation2 + $0xb8] sm:$0xff] 0.0
        %404 = vst [vmem:[#allocation2 + $0xc0] sm:$0xff] 0.0
        %405 = vst [vmem:[#allocation2 + $0xc8] sm:$0xff] 0.0
        %406 = vst [vmem:[#allocation2 + $0xd0] sm:$0xff] 0.0
        %407 = vst [vmem:[#allocation2 + $0xd8] sm:$0xff] 0.0
        %408 = vst [vmem:[#allocation2 + $0xe0] sm:$0xff] 0.0
        %409 = vst [vmem:[#allocation2 + $0xe8] sm:$0xff] 0.0
        %410 = vst [vmem:[#allocation2 + $0xf0] sm:$0xff] 0.0
        %411 = vst [vmem:[#allocation2 + $0xf8] sm:$0xff] 0.0
      $region40: #{hourglass_forward.4} parent=35 // pred_fallthru
        _
      %v412 = vld [vmem:[#allocation2] sm:$0xff]
      %v413 = vld [vmem:[#allocation2 + $0x8] sm:$0xff]
      %v414 = vld [vmem:[#allocation2 + $0x10] sm:$0xff]
      %v415 = vld [vmem:[#allocation2 + $0x18] sm:$0xff]
      %v416 = vld [vmem:[#allocation2 + $0x20] sm:$0xff]
      %v417 = vld [vmem:[#allocation2 + $0x28] sm:$0xff]
      %v418 = vld [vmem:[#allocation2 + $0x30] sm:$0xff]
      %v419 = vld [vmem:[#allocation2 + $0x38] sm:$0xff]
      %v420 = vld [vmem:[#allocation2 + $0x40] sm:$0xff]
      %v421 = vld [vmem:[#allocation2 + $0x48] sm:$0xff]
      %v422 = vld [vmem:[#allocation2 + $0x50] sm:$0xff]
      %v423 = vld [vmem:[#allocation2 + $0x58] sm:$0xff]
      %v424 = vld [vmem:[#allocation2 + $0x60] sm:$0xff]
      %v425 = vld [vmem:[#allocation2 + $0x68] sm:$0xff]
      %v426 = vld [vmem:[#allocation2 + $0x70] sm:$0xff]
      %v427 = vld [vmem:[#allocation2 + $0x78] sm:$0xff]
      %v428 = vld [vmem:[#allocation2 + $0x80] sm:$0xff]
      %v429 = vld [vmem:[#allocation2 + $0x88] sm:$0xff]
      %v430 = vld [vmem:[#allocation2 + $0x90] sm:$0xff]
      %v431 = vld [vmem:[#allocation2 + $0x98] sm:$0xff]
      %v432 = vld [vmem:[#allocation2 + $0xa0] sm:$0xff]
      %v433 = vld [vmem:[#allocation2 + $0xa8] sm:$0xff]
      %v434 = vld [vmem:[#allocation2 + $0xb0] sm:$0xff]
      %v435 = vld [vmem:[#allocation2 + $0xb8] sm:$0xff]
      %v436 = vld [vmem:[#allocation2 + $0xc0] sm:$0xff]
      %v437 = vld [vmem:[#allocation2 + $0xc8] sm:$0xff]
      %v438 = vld [vmem:[#allocation2 + $0xd0] sm:$0xff]
      %v439 = vld [vmem:[#allocation2 + $0xd8] sm:$0xff]
      %v440 = vld [vmem:[#allocation2 + $0xe0] sm:$0xff]
      %v441 = vld [vmem:[#allocation2 + $0xe8] sm:$0xff]
      %v442 = vld [vmem:[#allocation2 + $0xf0] sm:$0xff]
      %v443 = vld [vmem:[#allocation2 + $0xf8] sm:$0xff]
      %v444 = vld [vmem:[%s331] sm:$0xff]
      %v445 = vld [vmem:[%s331 + $0x8] sm:$0xff]
      %v446 = vld [vmem:[%s331 + $0x10] sm:$0xff]
      %v447 = vld [vmem:[%s331 + $0x18] sm:$0xff]
      %v448 = vld [vmem:[%s331 + $0x20] sm:$0xff]
      %v449 = vld [vmem:[%s331 + $0x28] sm:$0xff]
      %v450 = vld [vmem:[%s331 + $0x30] sm:$0xff]
      %v451 = vld [vmem:[%s331 + $0x38] sm:$0xff]
      %v452 = vld [vmem:[%s331 + $0x40] sm:$0xff]
      %v453 = vld [vmem:[%s331 + $0x48] sm:$0xff]
      %v454 = vld [vmem:[%s331 + $0x50] sm:$0xff]
      %v455 = vld [vmem:[%s331 + $0x58] sm:$0xff]
      %v456 = vld [vmem:[%s331 + $0x60] sm:$0xff]
      %v457 = vld [vmem:[%s331 + $0x68] sm:$0xff]
      %v458 = vld [vmem:[%s331 + $0x70] sm:$0xff]
      %v459 = vld [vmem:[%s331 + $0x78] sm:$0xff]
      %v460 = vld [vmem:[%s331 + $0x80] sm:$0xff]
      %v461 = vld [vmem:[%s331 + $0x88] sm:$0xff]
      %v462 = vld [vmem:[%s331 + $0x90] sm:$0xff]
      %v463 = vld [vmem:[%s331 + $0x98] sm:$0xff]
      %v464 = vld [vmem:[%s331 + $0xa0] sm:$0xff]
      %v465 = vld [vmem:[%s331 + $0xa8] sm:$0xff]
      %v466 = vld [vmem:[%s331 + $0xb0] sm:$0xff]
      %v467 = vld [vmem:[%s331 + $0xb8] sm:$0xff]
      %v468 = vld [vmem:[%s331 + $0xc0] sm:$0xff]
      %v469 = vld [vmem:[%s331 + $0xc8] sm:$0xff]
      %v470 = vld [vmem:[%s331 + $0xd0] sm:$0xff]
      %v471 = vld [vmem:[%s331 + $0xd8] sm:$0xff]
      %v472 = vld [vmem:[%s331 + $0xe0] sm:$0xff]
      %v473 = vld [vmem:[%s331 + $0xe8] sm:$0xff]
      %v474 = vld [vmem:[%s331 + $0xf0] sm:$0xff]
      %v475 = vld [vmem:[%s331 + $0xf8] sm:$0xff]
      %v476 = vld [vmem:[%s331 + $0x100] sm:$0xff]
      %v477 = vld [vmem:[%s331 + $0x108] sm:$0xff]
      %v478 = vld [vmem:[%s331 + $0x110] sm:$0xff]
      %v479 = vld [vmem:[%s331 + $0x118] sm:$0xff]
      %v480 = vld [vmem:[%s331 + $0x120] sm:$0xff]
      %v481 = vld [vmem:[%s331 + $0x128] sm:$0xff]
      %v482 = vld [vmem:[%s331 + $0x130] sm:$0xff]
      %v483 = vld [vmem:[%s331 + $0x138] sm:$0xff]
      %v484 = vld [vmem:[%s331 + $0x140] sm:$0xff]
      %v485 = vld [vmem:[%s331 + $0x148] sm:$0xff]
      %v486 = vld [vmem:[%s331 + $0x150] sm:$0xff]
      %v487 = vld [vmem:[%s331 + $0x158] sm:$0xff]
      %v488 = vld [vmem:[%s331 + $0x160] sm:$0xff]
      %v489 = vld [vmem:[%s331 + $0x168] sm:$0xff]
      %v490 = vld [vmem:[%s331 + $0x170] sm:$0xff]
      %v491 = vld [vmem:[%s331 + $0x178] sm:$0xff]
      %v492 = vld [vmem:[%s331 + $0x180] sm:$0xff]
      %v493 = vld [vmem:[%s331 + $0x188] sm:$0xff]
      %v494 = vld [vmem:[%s331 + $0x190] sm:$0xff]
      %v495 = vld [vmem:[%s331 + $0x198] sm:$0xff]
      %v496 = vld [vmem:[%s331 + $0x1a0] sm:$0xff]
      %v497 = vld [vmem:[%s331 + $0x1a8] sm:$0xff]
      %v498 = vld [vmem:[%s331 + $0x1b0] sm:$0xff]
      %v499 = vld [vmem:[%s331 + $0x1b8] sm:$0xff]
      %v500 = vld [vmem:[%s331 + $0x1c0] sm:$0xff]
      %v501 = vld [vmem:[%s331 + $0x1c8] sm:$0xff]
      %v502 = vld [vmem:[%s331 + $0x1d0] sm:$0xff]
      %v503 = vld [vmem:[%s331 + $0x1d8] sm:$0xff]
      %v504 = vld [vmem:[%s331 + $0x1e0] sm:$0xff]
      %v505 = vld [vmem:[%s331 + $0x1e8] sm:$0xff]
      %v506 = vld [vmem:[%s331 + $0x1f0] sm:$0xff]
      %v507 = vld [vmem:[%s331 + $0x1f8] sm:$0xff]
      %v508 = vld [vmem:[%s347] sm:$0xff]
      %v509 = vld [vmem:[%s347 + $0x8] sm:$0xff]
      %v510 = vld [vmem:[%s347 + $0x10] sm:$0xff]
      %v511 = vld [vmem:[%s347 + $0x18] sm:$0xff]
      %v512 = vld [vmem:[%s347 + $0x20] sm:$0xff]
      %v513 = vld [vmem:[%s347 + $0x28] sm:$0xff]
      %v514 = vld [vmem:[%s347 + $0x30] sm:$0xff]
      %v515 = vld [vmem:[%s347 + $0x38] sm:$0xff]
      %v516 = vld [vmem:[%s347 + $0x40] sm:$0xff]
      %v517 = vld [vmem:[%s347 + $0x48] sm:$0xff]
      %v518 = vld [vmem:[%s347 + $0x50] sm:$0xff]
      %v519 = vld [vmem:[%s347 + $0x58] sm:$0xff]
      %v520 = vld [vmem:[%s347 + $0x60] sm:$0xff]
      %v521 = vld [vmem:[%s347 + $0x68] sm:$0xff]
      %v522 = vld [vmem:[%s347 + $0x70] sm:$0xff]
      %v523 = vld [vmem:[%s347 + $0x78] sm:$0xff]
      %v524 = vld [vmem:[%s347 + $0x80] sm:$0xff]
      %v525 = vld [vmem:[%s347 + $0x88] sm:$0xff]
      %v526 = vld [vmem:[%s347 + $0x90] sm:$0xff]
      %v527 = vld [vmem:[%s347 + $0x98] sm:$0xff]
      %v528 = vld [vmem:[%s347 + $0xa0] sm:$0xff]
      %v529 = vld [vmem:[%s347 + $0xa8] sm:$0xff]
      %v530 = vld [vmem:[%s347 + $0xb0] sm:$0xff]
      %v531 = vld [vmem:[%s347 + $0xb8] sm:$0xff]
      %v532 = vld [vmem:[%s347 + $0xc0] sm:$0xff]
      %v533 = vld [vmem:[%s347 + $0xc8] sm:$0xff]
      %v534 = vld [vmem:[%s347 + $0xd0] sm:$0xff]
      %v535 = vld [vmem:[%s347 + $0xd8] sm:$0xff]
      %v536 = vld [vmem:[%s347 + $0xe0] sm:$0xff]
      %v537 = vld [vmem:[%s347 + $0xe8] sm:$0xff]
      %v538 = vld [vmem:[%s347 + $0xf0] sm:$0xff]
      %v539 = vld [vmem:[%s347 + $0xf8] sm:$0xff]
      %v540 = vld [vmem:[%s347 + $0x100] sm:$0xff]
      %v541 = vld [vmem:[%s347 + $0x108] sm:$0xff]
      %v542 = vld [vmem:[%s347 + $0x110] sm:$0xff]
      %v543 = vld [vmem:[%s347 + $0x118] sm:$0xff]
      %v544 = vld [vmem:[%s347 + $0x120] sm:$0xff]
      %v545 = vld [vmem:[%s347 + $0x128] sm:$0xff]
      %v546 = vld [vmem:[%s347 + $0x130] sm:$0xff]
      %v547 = vld [vmem:[%s347 + $0x138] sm:$0xff]
      %v548 = vld [vmem:[%s347 + $0x140] sm:$0xff]
      %v549 = vld [vmem:[%s347 + $0x148] sm:$0xff]
      %v550 = vld [vmem:[%s347 + $0x150] sm:$0xff]
      %v551 = vld [vmem:[%s347 + $0x158] sm:$0xff]
      %v552 = vld [vmem:[%s347 + $0x160] sm:$0xff]
      %v553 = vld [vmem:[%s347 + $0x168] sm:$0xff]
      %v554 = vld [vmem:[%s347 + $0x170] sm:$0xff]
      %v555 = vld [vmem:[%s347 + $0x178] sm:$0xff]
      %v556 = vld [vmem:[%s347 + $0x180] sm:$0xff]
      %v557 = vld [vmem:[%s347 + $0x188] sm:$0xff]
      %v558 = vld [vmem:[%s347 + $0x190] sm:$0xff]
      %v559 = vld [vmem:[%s347 + $0x198] sm:$0xff]
      %v560 = vld [vmem:[%s347 + $0x1a0] sm:$0xff]
      %v561 = vld [vmem:[%s347 + $0x1a8] sm:$0xff]
      %v562 = vld [vmem:[%s347 + $0x1b0] sm:$0xff]
      %v563 = vld [vmem:[%s347 + $0x1b8] sm:$0xff]
      %v564 = vld [vmem:[%s347 + $0x1c0] sm:$0xff]
      %v565 = vld [vmem:[%s347 + $0x1c8] sm:$0xff]
      %v566 = vld [vmem:[%s347 + $0x1d0] sm:$0xff]
      %v567 = vld [vmem:[%s347 + $0x1d8] sm:$0xff]
      %v568 = vld [vmem:[%s347 + $0x1e0] sm:$0xff]
      %v569 = vld [vmem:[%s347 + $0x1e8] sm:$0xff]
      %v570 = vld [vmem:[%s347 + $0x1f0] sm:$0xff]
      %v571 = vld [vmem:[%s347 + $0x1f8] sm:$0xff]
      %v572 = vld [vmem:[%s347 + $0x200] sm:$0xff]
      %v573 = vld [vmem:[%s347 + $0x208] sm:$0xff]
      %v574 = vld [vmem:[%s347 + $0x210] sm:$0xff]
      %v575 = vld [vmem:[%s347 + $0x218] sm:$0xff]
      %v576 = vld [vmem:[%s347 + $0x220] sm:$0xff]
      %v577 = vld [vmem:[%s347 + $0x228] sm:$0xff]
      %v578 = vld [vmem:[%s347 + $0x230] sm:$0xff]
      %v579 = vld [vmem:[%s347 + $0x238] sm:$0xff]
      %v580 = vld [vmem:[%s347 + $0x240] sm:$0xff]
      %v581 = vld [vmem:[%s347 + $0x248] sm:$0xff]
      %v582 = vld [vmem:[%s347 + $0x250] sm:$0xff]
      %v583 = vld [vmem:[%s347 + $0x258] sm:$0xff]
      %v584 = vld [vmem:[%s347 + $0x260] sm:$0xff]
      %v585 = vld [vmem:[%s347 + $0x268] sm:$0xff]
      %v586 = vld [vmem:[%s347 + $0x270] sm:$0xff]
      %v587 = vld [vmem:[%s347 + $0x278] sm:$0xff]
      %v588 = vld [vmem:[%s347 + $0x280] sm:$0xff]
      %v589 = vld [vmem:[%s347 + $0x288] sm:$0xff]
      %v590 = vld [vmem:[%s347 + $0x290] sm:$0xff]
      %v591 = vld [vmem:[%s347 + $0x298] sm:$0xff]
      %v592 = vld [vmem:[%s347 + $0x2a0] sm:$0xff]
      %v593 = vld [vmem:[%s347 + $0x2a8] sm:$0xff]
      %v594 = vld [vmem:[%s347 + $0x2b0] sm:$0xff]
      %v595 = vld [vmem:[%s347 + $0x2b8] sm:$0xff]
      %v596 = vld [vmem:[%s347 + $0x2c0] sm:$0xff]
      %v597 = vld [vmem:[%s347 + $0x2c8] sm:$0xff]
      %v598 = vld [vmem:[%s347 + $0x2d0] sm:$0xff]
      %v599 = vld [vmem:[%s347 + $0x2d8] sm:$0xff]
      %v600 = vld [vmem:[%s347 + $0x2e0] sm:$0xff]
      %v601 = vld [vmem:[%s347 + $0x2e8] sm:$0xff]
      %v602 = vld [vmem:[%s347 + $0x2f0] sm:$0xff]
      %v603 = vld [vmem:[%s347 + $0x2f8] sm:$0xff]
      %v604 = vld [vmem:[%s347 + $0x300] sm:$0xff]
      %v605 = vld [vmem:[%s347 + $0x308] sm:$0xff]
      %v606 = vld [vmem:[%s347 + $0x310] sm:$0xff]
      %v607 = vld [vmem:[%s347 + $0x318] sm:$0xff]
      %v608 = vld [vmem:[%s347 + $0x320] sm:$0xff]
      %v609 = vld [vmem:[%s347 + $0x328] sm:$0xff]
      %v610 = vld [vmem:[%s347 + $0x330] sm:$0xff]
      %v611 = vld [vmem:[%s347 + $0x338] sm:$0xff]
      %v612 = vld [vmem:[%s347 + $0x340] sm:$0xff]
      %v613 = vld [vmem:[%s347 + $0x348] sm:$0xff]
      %v614 = vld [vmem:[%s347 + $0x350] sm:$0xff]
      %v615 = vld [vmem:[%s347 + $0x358] sm:$0xff]
      %v616 = vld [vmem:[%s347 + $0x360] sm:$0xff]
      %v617 = vld [vmem:[%s347 + $0x368] sm:$0xff]
      %v618 = vld [vmem:[%s347 + $0x370] sm:$0xff]
      %v619 = vld [vmem:[%s347 + $0x378] sm:$0xff]
      %v620 = vld [vmem:[%s347 + $0x380] sm:$0xff]
      %v621 = vld [vmem:[%s347 + $0x388] sm:$0xff]
      %v622 = vld [vmem:[%s347 + $0x390] sm:$0xff]
      %v623 = vld [vmem:[%s347 + $0x398] sm:$0xff]
      %v624 = vld [vmem:[%s347 + $0x3a0] sm:$0xff]
      %v625 = vld [vmem:[%s347 + $0x3a8] sm:$0xff]
      %v626 = vld [vmem:[%s347 + $0x3b0] sm:$0xff]
      %v627 = vld [vmem:[%s347 + $0x3b8] sm:$0xff]
      %v628 = vld [vmem:[%s347 + $0x3c0] sm:$0xff]
      %v629 = vld [vmem:[%s347 + $0x3c8] sm:$0xff]
      %v630 = vld [vmem:[%s347 + $0x3d0] sm:$0xff]
      %v631 = vld [vmem:[%s347 + $0x3d8] sm:$0xff]
      %v632 = vld [vmem:[%s347 + $0x3e0] sm:$0xff]
      %v633 = vld [vmem:[%s347 + $0x3e8] sm:$0xff]
      %v634 = vld [vmem:[%s347 + $0x3f0] sm:$0xff]
      %v635 = vld [vmem:[%s347 + $0x3f8] sm:$0xff]
      %v700 = vunpack.c.l.b16 %v444
      %v701 = vunpack.c.h.b16 %v444
      %v702 = vunpack.c.l.b16 %v445
      %v703 = vunpack.c.h.b16 %v445
      %v704 = vunpack.c.l.b16 %v446
      %v705 = vunpack.c.h.b16 %v446
      %v706 = vunpack.c.l.b16 %v447
      %v707 = vunpack.c.h.b16 %v447
      %v708 = vunpack.c.l.b16 %v448
      %v709 = vunpack.c.h.b16 %v448
      %v710 = vunpack.c.l.b16 %v449
      %v711 = vunpack.c.h.b16 %v449
      %v712 = vunpack.c.l.b16 %v450
      %v713 = vunpack.c.h.b16 %v450
      %v714 = vunpack.c.l.b16 %v451
      %v715 = vunpack.c.h.b16 %v451
      %v716 = vunpack.c.l.b16 %v452
      %v717 = vunpack.c.h.b16 %v452
      %v718 = vunpack.c.l.b16 %v453
      %v719 = vunpack.c.h.b16 %v453
      %v720 = vunpack.c.l.b16 %v454
      %v721 = vunpack.c.h.b16 %v454
      %v722 = vunpack.c.l.b16 %v455
      %v723 = vunpack.c.h.b16 %v455
      %v724 = vunpack.c.l.b16 %v456
      %v725 = vunpack.c.h.b16 %v456
      %v726 = vunpack.c.l.b16 %v457
      %v727 = vunpack.c.h.b16 %v457
      %v728 = vunpack.c.l.b16 %v458
      %v729 = vunpack.c.h.b16 %v458
      %v730 = vunpack.c.l.b16 %v459
      %v731 = vunpack.c.h.b16 %v459
      %v732 = vunpack.c.l.b16 %v460
      %v733 = vunpack.c.h.b16 %v460
      %v734 = vunpack.c.l.b16 %v461
      %v735 = vunpack.c.h.b16 %v461
      %v736 = vunpack.c.l.b16 %v462
      %v737 = vunpack.c.h.b16 %v462
      %v738 = vunpack.c.l.b16 %v463
      %v739 = vunpack.c.h.b16 %v463
      %v740 = vunpack.c.l.b16 %v464
      %v741 = vunpack.c.h.b16 %v464
      %v742 = vunpack.c.l.b16 %v465
      %v743 = vunpack.c.h.b16 %v465
      %v744 = vunpack.c.l.b16 %v466
      %v745 = vunpack.c.h.b16 %v466
      %v746 = vunpack.c.l.b16 %v467
      %v747 = vunpack.c.h.b16 %v467
      %v748 = vunpack.c.l.b16 %v468
      %v749 = vunpack.c.h.b16 %v468
      %v750 = vunpack.c.l.b16 %v469
      %v751 = vunpack.c.h.b16 %v469
      %v752 = vunpack.c.l.b16 %v470
      %v753 = vunpack.c.h.b16 %v470
      %v754 = vunpack.c.l.b16 %v471
      %v755 = vunpack.c.h.b16 %v471
      %v756 = vunpack.c.l.b16 %v472
      %v757 = vunpack.c.h.b16 %v472
      %v758 = vunpack.c.l.b16 %v473
      %v759 = vunpack.c.h.b16 %v473
      %v760 = vunpack.c.l.b16 %v474
      %v761 = vunpack.c.h.b16 %v474
      %v762 = vunpack.c.l.b16 %v475
      %v763 = vunpack.c.h.b16 %v475
      %v764 = vunpack.c.l.b16 %v476
      %v765 = vunpack.c.h.b16 %v476
      %v766 = vunpack.c.l.b16 %v477
      %v767 = vunpack.c.h.b16 %v477
      %v768 = vunpack.c.l.b16 %v478
      %v769 = vunpack.c.h.b16 %v478
      %v770 = vunpack.c.l.b16 %v479
      %v771 = vunpack.c.h.b16 %v479
      %v772 = vunpack.c.l.b16 %v480
      %v773 = vunpack.c.h.b16 %v480
      %v774 = vunpack.c.l.b16 %v481
      %v775 = vunpack.c.h.b16 %v481
      %v776 = vunpack.c.l.b16 %v482
      %v777 = vunpack.c.h.b16 %v482
      %v778 = vunpack.c.l.b16 %v483
      %v779 = vunpack.c.h.b16 %v483
      %v780 = vunpack.c.l.b16 %v484
      %v781 = vunpack.c.h.b16 %v484
      %v782 = vunpack.c.l.b16 %v485
      %v783 = vunpack.c.h.b16 %v485
      %v784 = vunpack.c.l.b16 %v486
      %v785 = vunpack.c.h.b16 %v486
      %v786 = vunpack.c.l.b16 %v487
      %v787 = vunpack.c.h.b16 %v487
      %v788 = vunpack.c.l.b16 %v488
      %v789 = vunpack.c.h.b16 %v488
      %v790 = vunpack.c.l.b16 %v489
      %v791 = vunpack.c.h.b16 %v489
      %v792 = vunpack.c.l.b16 %v490
      %v793 = vunpack.c.h.b16 %v490
      %v794 = vunpack.c.l.b16 %v491
      %v795 = vunpack.c.h.b16 %v491
      %v796 = vunpack.c.l.b16 %v492
      %v797 = vunpack.c.h.b16 %v492
      %v798 = vunpack.c.l.b16 %v493
      %v799 = vunpack.c.h.b16 %v493
      %v800 = vunpack.c.l.b16 %v494
      %v801 = vunpack.c.h.b16 %v494
      %v802 = vunpack.c.l.b16 %v495
      %v803 = vunpack.c.h.b16 %v495
      %v804 = vunpack.c.l.b16 %v496
      %v805 = vunpack.c.h.b16 %v496
      %v806 = vunpack.c.l.b16 %v497
      %v807 = vunpack.c.h.b16 %v497
      %v808 = vunpack.c.l.b16 %v498
      %v809 = vunpack.c.h.b16 %v498
      %v810 = vunpack.c.l.b16 %v499
      %v811 = vunpack.c.h.b16 %v499
      %v812 = vunpack.c.l.b16 %v500
      %v813 = vunpack.c.h.b16 %v500
      %v814 = vunpack.c.l.b16 %v501
      %v815 = vunpack.c.h.b16 %v501
      %v816 = vunpack.c.l.b16 %v502
      %v817 = vunpack.c.h.b16 %v502
      %v818 = vunpack.c.l.b16 %v503
      %v819 = vunpack.c.h.b16 %v503
      %v820 = vunpack.c.l.b16 %v504
      %v821 = vunpack.c.h.b16 %v504
      %v822 = vunpack.c.l.b16 %v505
      %v823 = vunpack.c.h.b16 %v505
      %v824 = vunpack.c.l.b16 %v506
      %v825 = vunpack.c.h.b16 %v506
      %v826 = vunpack.c.l.b16 %v507
      %v827 = vunpack.c.h.b16 %v507
      %v828 = vpack.c.b16 %v708, %v700
      %v829 = vpack.c.b16 %v709, %v701
      %v830 = vpack.c.b16 %v710, %v702
      %v831 = vpack.c.b16 %v711, %v703
      %v832 = vpack.c.b16 %v712, %v704
      %v833 = vpack.c.b16 %v713, %v705
      %v834 = vpack.c.b16 %v714, %v706
      %v835 = vpack.c.b16 %v715, %v707
      %v836 = vpack.c.b16 %v724, %v716
      %v837 = vpack.c.b16 %v725, %v717
      %v838 = vpack.c.b16 %v726, %v718
      %v839 = vpack.c.b16 %v727, %v719
      %v840 = vpack.c.b16 %v728, %v720
      %v841 = vpack.c.b16 %v729, %v721
      %v842 = vpack.c.b16 %v730, %v722
      %v843 = vpack.c.b16 %v731, %v723
      %v844 = vpack.c.b16 %v740, %v732
      %v845 = vpack.c.b16 %v741, %v733
      %v846 = vpack.c.b16 %v742, %v734
      %v847 = vpack.c.b16 %v743, %v735
      %v848 = vpack.c.b16 %v744, %v736
      %v849 = vpack.c.b16 %v745, %v737
      %v850 = vpack.c.b16 %v746, %v738
      %v851 = vpack.c.b16 %v747, %v739
      %v852 = vpack.c.b16 %v756, %v748
      %v853 = vpack.c.b16 %v757, %v749
      %v854 = vpack.c.b16 %v758, %v750
      %v855 = vpack.c.b16 %v759, %v751
      %v856 = vpack.c.b16 %v760, %v752
      %v857 = vpack.c.b16 %v761, %v753
      %v858 = vpack.c.b16 %v762, %v754
      %v859 = vpack.c.b16 %v763, %v755
      %v860 = vpack.c.b16 %v772, %v764
      %v861 = vpack.c.b16 %v773, %v765
      %v862 = vpack.c.b16 %v774, %v766
      %v863 = vpack.c.b16 %v775, %v767
      %v864 = vpack.c.b16 %v776, %v768
      %v865 = vpack.c.b16 %v777, %v769
      %v866 = vpack.c.b16 %v778, %v770
      %v867 = vpack.c.b16 %v779, %v771
      %v868 = vpack.c.b16 %v788, %v780
      %v869 = vpack.c.b16 %v789, %v781
      %v870 = vpack.c.b16 %v790, %v782
      %v871 = vpack.c.b16 %v791, %v783
      %v872 = vpack.c.b16 %v792, %v784
      %v873 = vpack.c.b16 %v793, %v785
      %v874 = vpack.c.b16 %v794, %v786
      %v875 = vpack.c.b16 %v795, %v787
      %v876 = vpack.c.b16 %v804, %v796
      %v877 = vpack.c.b16 %v805, %v797
      %v878 = vpack.c.b16 %v806, %v798
      %v879 = vpack.c.b16 %v807, %v799
      %v880 = vpack.c.b16 %v808, %v800
      %v881 = vpack.c.b16 %v809, %v801
      %v882 = vpack.c.b16 %v810, %v802
      %v883 = vpack.c.b16 %v811, %v803
      %v884 = vpack.c.b16 %v820, %v812
      %v885 = vpack.c.b16 %v821, %v813
      %v886 = vpack.c.b16 %v822, %v814
      %v887 = vpack.c.b16 %v823, %v815
      %v888 = vpack.c.b16 %v824, %v816
      %v889 = vpack.c.b16 %v825, %v817
      %v890 = vpack.c.b16 %v826, %v818
      %v891 = vpack.c.b16 %v827, %v819
      %v1084 = vunpack.c.l.b16 %v508
      %v1085 = vunpack.c.h.b16 %v508
      %v1086 = vunpack.c.l.b16 %v509
      %v1087 = vunpack.c.h.b16 %v509
      %v1088 = vunpack.c.l.b16 %v510
      %v1089 = vunpack.c.h.b16 %v510
      %v1090 = vunpack.c.l.b16 %v511
      %v1091 = vunpack.c.h.b16 %v511
      %v1092 = vunpack.c.l.b16 %v512
      %v1093 = vunpack.c.h.b16 %v512
      %v1094 = vunpack.c.l.b16 %v513
      %v1095 = vunpack.c.h.b16 %v513
      %v1096 = vunpack.c.l.b16 %v514
      %v1097 = vunpack.c.h.b16 %v514
      %v1098 = vunpack.c.l.b16 %v515
      %v1099 = vunpack.c.h.b16 %v515
      %v1100 = vunpack.c.l.b16 %v516
      %v1101 = vunpack.c.h.b16 %v516
      %v1102 = vunpack.c.l.b16 %v517
      %v1103 = vunpack.c.h.b16 %v517
      %v1104 = vunpack.c.l.b16 %v518
      %v1105 = vunpack.c.h.b16 %v518
      %v1106 = vunpack.c.l.b16 %v519
      %v1107 = vunpack.c.h.b16 %v519
      %v1108 = vunpack.c.l.b16 %v520
      %v1109 = vunpack.c.h.b16 %v520
      %v1110 = vunpack.c.l.b16 %v521
      %v1111 = vunpack.c.h.b16 %v521
      %v1112 = vunpack.c.l.b16 %v522
      %v1113 = vunpack.c.h.b16 %v522
      %v1114 = vunpack.c.l.b16 %v523
      %v1115 = vunpack.c.h.b16 %v523
      %v1116 = vunpack.c.l.b16 %v524
      %v1117 = vunpack.c.h.b16 %v524
      %v1118 = vunpack.c.l.b16 %v525
      %v1119 = vunpack.c.h.b16 %v525
      %v1120 = vunpack.c.l.b16 %v526
      %v1121 = vunpack.c.h.b16 %v526
      %v1122 = vunpack.c.l.b16 %v527
      %v1123 = vunpack.c.h.b16 %v527
      %v1124 = vunpack.c.l.b16 %v528
      %v1125 = vunpack.c.h.b16 %v528
      %v1126 = vunpack.c.l.b16 %v529
      %v1127 = vunpack.c.h.b16 %v529
      %v1128 = vunpack.c.l.b16 %v530
      %v1129 = vunpack.c.h.b16 %v530
      %v1130 = vunpack.c.l.b16 %v531
      %v1131 = vunpack.c.h.b16 %v531
      %v1132 = vunpack.c.l.b16 %v532
      %v1133 = vunpack.c.h.b16 %v532
      %v1134 = vunpack.c.l.b16 %v533
      %v1135 = vunpack.c.h.b16 %v533
      %v1136 = vunpack.c.l.b16 %v534
      %v1137 = vunpack.c.h.b16 %v534
      %v1138 = vunpack.c.l.b16 %v535
      %v1139 = vunpack.c.h.b16 %v535
      %v1140 = vunpack.c.l.b16 %v536
      %v1141 = vunpack.c.h.b16 %v536
      %v1142 = vunpack.c.l.b16 %v537
      %v1143 = vunpack.c.h.b16 %v537
      %v1144 = vunpack.c.l.b16 %v538
      %v1145 = vunpack.c.h.b16 %v538
      %v1146 = vunpack.c.l.b16 %v539
      %v1147 = vunpack.c.h.b16 %v539
      %v1148 = vunpack.c.l.b16 %v540
      %v1149 = vunpack.c.h.b16 %v540
      %v1150 = vunpack.c.l.b16 %v541
      %v1151 = vunpack.c.h.b16 %v541
      %v1152 = vunpack.c.l.b16 %v542
      %v1153 = vunpack.c.h.b16 %v542
      %v1154 = vunpack.c.l.b16 %v543
      %v1155 = vunpack.c.h.b16 %v543
      %v1156 = vunpack.c.l.b16 %v544
      %v1157 = vunpack.c.h.b16 %v544
      %v1158 = vunpack.c.l.b16 %v545
      %v1159 = vunpack.c.h.b16 %v545
      %v1160 = vunpack.c.l.b16 %v546
      %v1161 = vunpack.c.h.b16 %v546
      %v1162 = vunpack.c.l.b16 %v547
      %v1163 = vunpack.c.h.b16 %v547
      %v1164 = vunpack.c.l.b16 %v548
      %v1165 = vunpack.c.h.b16 %v548
      %v1166 = vunpack.c.l.b16 %v549
      %v1167 = vunpack.c.h.b16 %v549
      %v1168 = vunpack.c.l.b16 %v550
      %v1169 = vunpack.c.h.b16 %v550
      %v1170 = vunpack.c.l.b16 %v551
      %v1171 = vunpack.c.h.b16 %v551
      %v1172 = vunpack.c.l.b16 %v552
      %v1173 = vunpack.c.h.b16 %v552
      %v1174 = vunpack.c.l.b16 %v553
      %v1175 = vunpack.c.h.b16 %v553
      %v1176 = vunpack.c.l.b16 %v554
      %v1177 = vunpack.c.h.b16 %v554
      %v1178 = vunpack.c.l.b16 %v555
      %v1179 = vunpack.c.h.b16 %v555
      %v1180 = vunpack.c.l.b16 %v556
      %v1181 = vunpack.c.h.b16 %v556
      %v1182 = vunpack.c.l.b16 %v557
      %v1183 = vunpack.c.h.b16 %v557
      %v1184 = vunpack.c.l.b16 %v558
      %v1185 = vunpack.c.h.b16 %v558
      %v1186 = vunpack.c.l.b16 %v559
      %v1187 = vunpack.c.h.b16 %v559
      %v1188 = vunpack.c.l.b16 %v560
      %v1189 = vunpack.c.h.b16 %v560
      %v1190 = vunpack.c.l.b16 %v561
      %v1191 = vunpack.c.h.b16 %v561
      %v1192 = vunpack.c.l.b16 %v562
      %v1193 = vunpack.c.h.b16 %v562
      %v1194 = vunpack.c.l.b16 %v563
      %v1195 = vunpack.c.h.b16 %v563
      %v1196 = vunpack.c.l.b16 %v564
      %v1197 = vunpack.c.h.b16 %v564
      %v1198 = vunpack.c.l.b16 %v565
      %v1199 = vunpack.c.h.b16 %v565
      %v1200 = vunpack.c.l.b16 %v566
      %v1201 = vunpack.c.h.b16 %v566
      %v1202 = vunpack.c.l.b16 %v567
      %v1203 = vunpack.c.h.b16 %v567
      %v1204 = vunpack.c.l.b16 %v568
      %v1205 = vunpack.c.h.b16 %v568
      %v1206 = vunpack.c.l.b16 %v569
      %v1207 = vunpack.c.h.b16 %v569
      %v1208 = vunpack.c.l.b16 %v570
      %v1209 = vunpack.c.h.b16 %v570
      %v1210 = vunpack.c.l.b16 %v571
      %v1211 = vunpack.c.h.b16 %v571
      %v1212 = vunpack.c.l.b16 %v572
      %v1213 = vunpack.c.h.b16 %v572
      %v1214 = vunpack.c.l.b16 %v573
      %v1215 = vunpack.c.h.b16 %v573
      %v1216 = vunpack.c.l.b16 %v574
      %v1217 = vunpack.c.h.b16 %v574
      %v1218 = vunpack.c.l.b16 %v575
      %v1219 = vunpack.c.h.b16 %v575
      %v1220 = vunpack.c.l.b16 %v576
      %v1221 = vunpack.c.h.b16 %v576
      %v1222 = vunpack.c.l.b16 %v577
      %v1223 = vunpack.c.h.b16 %v577
      %v1224 = vunpack.c.l.b16 %v578
      %v1225 = vunpack.c.h.b16 %v578
      %v1226 = vunpack.c.l.b16 %v579
      %v1227 = vunpack.c.h.b16 %v579
      %v1228 = vunpack.c.l.b16 %v580
      %v1229 = vunpack.c.h.b16 %v580
      %v1230 = vunpack.c.l.b16 %v581
      %v1231 = vunpack.c.h.b16 %v581
      %v1232 = vunpack.c.l.b16 %v582
      %v1233 = vunpack.c.h.b16 %v582
      %v1234 = vunpack.c.l.b16 %v583
      %v1235 = vunpack.c.h.b16 %v583
      %v1236 = vunpack.c.l.b16 %v584
      %v1237 = vunpack.c.h.b16 %v584
      %v1238 = vunpack.c.l.b16 %v585
      %v1239 = vunpack.c.h.b16 %v585
      %v1240 = vunpack.c.l.b16 %v586
      %v1241 = vunpack.c.h.b16 %v586
      %v1242 = vunpack.c.l.b16 %v587
      %v1243 = vunpack.c.h.b16 %v587
      %v1244 = vunpack.c.l.b16 %v588
      %v1245 = vunpack.c.h.b16 %v588
      %v1246 = vunpack.c.l.b16 %v589
      %v1247 = vunpack.c.h.b16 %v589
      %v1248 = vunpack.c.l.b16 %v590
      %v1249 = vunpack.c.h.b16 %v590
      %v1250 = vunpack.c.l.b16 %v591
      %v1251 = vunpack.c.h.b16 %v591
      %v1252 = vunpack.c.l.b16 %v592
      %v1253 = vunpack.c.h.b16 %v592
      %v1254 = vunpack.c.l.b16 %v593
      %v1255 = vunpack.c.h.b16 %v593
      %v1256 = vunpack.c.l.b16 %v594
      %v1257 = vunpack.c.h.b16 %v594
      %v1258 = vunpack.c.l.b16 %v595
      %v1259 = vunpack.c.h.b16 %v595
      %v1260 = vunpack.c.l.b16 %v596
      %v1261 = vunpack.c.h.b16 %v596
      %v1262 = vunpack.c.l.b16 %v597
      %v1263 = vunpack.c.h.b16 %v597
      %v1264 = vunpack.c.l.b16 %v598
      %v1265 = vunpack.c.h.b16 %v598
      %v1266 = vunpack.c.l.b16 %v599
      %v1267 = vunpack.c.h.b16 %v599
      %v1268 = vunpack.c.l.b16 %v600
      %v1269 = vunpack.c.h.b16 %v600
      %v1270 = vunpack.c.l.b16 %v601
      %v1271 = vunpack.c.h.b16 %v601
      %v1272 = vunpack.c.l.b16 %v602
      %v1273 = vunpack.c.h.b16 %v602
      %v1274 = vunpack.c.l.b16 %v603
      %v1275 = vunpack.c.h.b16 %v603
      %v1276 = vunpack.c.l.b16 %v604
      %v1277 = vunpack.c.h.b16 %v604
      %v1278 = vunpack.c.l.b16 %v605
      %v1279 = vunpack.c.h.b16 %v605
      %v1280 = vunpack.c.l.b16 %v606
      %v1281 = vunpack.c.h.b16 %v606
      %v1282 = vunpack.c.l.b16 %v607
      %v1283 = vunpack.c.h.b16 %v607
      %v1284 = vunpack.c.l.b16 %v608
      %v1285 = vunpack.c.h.b16 %v608
      %v1286 = vunpack.c.l.b16 %v609
      %v1287 = vunpack.c.h.b16 %v609
      %v1288 = vunpack.c.l.b16 %v610
      %v1289 = vunpack.c.h.b16 %v610
      %v1290 = vunpack.c.l.b16 %v611
      %v1291 = vunpack.c.h.b16 %v611
      %v1292 = vunpack.c.l.b16 %v612
      %v1293 = vunpack.c.h.b16 %v612
      %v1294 = vunpack.c.l.b16 %v613
      %v1295 = vunpack.c.h.b16 %v613
      %v1296 = vunpack.c.l.b16 %v614
      %v1297 = vunpack.c.h.b16 %v614
      %v1298 = vunpack.c.l.b16 %v615
      %v1299 = vunpack.c.h.b16 %v615
      %v1300 = vunpack.c.l.b16 %v616
      %v1301 = vunpack.c.h.b16 %v616
      %v1302 = vunpack.c.l.b16 %v617
      %v1303 = vunpack.c.h.b16 %v617
      %v1304 = vunpack.c.l.b16 %v618
      %v1305 = vunpack.c.h.b16 %v618
      %v1306 = vunpack.c.l.b16 %v619
      %v1307 = vunpack.c.h.b16 %v619
      %v1308 = vunpack.c.l.b16 %v620
      %v1309 = vunpack.c.h.b16 %v620
      %v1310 = vunpack.c.l.b16 %v621
      %v1311 = vunpack.c.h.b16 %v621
      %v1312 = vunpack.c.l.b16 %v622
      %v1313 = vunpack.c.h.b16 %v622
      %v1314 = vunpack.c.l.b16 %v623
      %v1315 = vunpack.c.h.b16 %v623
      %v1316 = vunpack.c.l.b16 %v624
      %v1317 = vunpack.c.h.b16 %v624
      %v1318 = vunpack.c.l.b16 %v625
      %v1319 = vunpack.c.h.b16 %v625
      %v1320 = vunpack.c.l.b16 %v626
      %v1321 = vunpack.c.h.b16 %v626
      %v1322 = vunpack.c.l.b16 %v627
      %v1323 = vunpack.c.h.b16 %v627
      %v1324 = vunpack.c.l.b16 %v628
      %v1325 = vunpack.c.h.b16 %v628
      %v1326 = vunpack.c.l.b16 %v629
      %v1327 = vunpack.c.h.b16 %v629
      %v1328 = vunpack.c.l.b16 %v630
      %v1329 = vunpack.c.h.b16 %v630
      %v1330 = vunpack.c.l.b16 %v631
      %v1331 = vunpack.c.h.b16 %v631
      %v1332 = vunpack.c.l.b16 %v632
      %v1333 = vunpack.c.h.b16 %v632
      %v1334 = vunpack.c.l.b16 %v633
      %v1335 = vunpack.c.h.b16 %v633
      %v1336 = vunpack.c.l.b16 %v634
      %v1337 = vunpack.c.h.b16 %v634
      %v1338 = vunpack.c.l.b16 %v635
      %v1339 = vunpack.c.h.b16 %v635
      %v1340 = vpack.c.b16 %v1086, %v1084
      %v1341 = vpack.c.b16 %v1087, %v1085
      %v1342 = vpack.c.b16 %v1090, %v1088
      %v1343 = vpack.c.b16 %v1091, %v1089
      %v1344 = vpack.c.b16 %v1094, %v1092
      %v1345 = vpack.c.b16 %v1095, %v1093
      %v1346 = vpack.c.b16 %v1098, %v1096
      %v1347 = vpack.c.b16 %v1099, %v1097
      %v1348 = vpack.c.b16 %v1102, %v1100
      %v1349 = vpack.c.b16 %v1103, %v1101
      %v1350 = vpack.c.b16 %v1106, %v1104
      %v1351 = vpack.c.b16 %v1107, %v1105
      %v1352 = vpack.c.b16 %v1110, %v1108
      %v1353 = vpack.c.b16 %v1111, %v1109
      %v1354 = vpack.c.b16 %v1114, %v1112
      %v1355 = vpack.c.b16 %v1115, %v1113
      %v1356 = vpack.c.b16 %v1118, %v1116
      %v1357 = vpack.c.b16 %v1119, %v1117
      %v1358 = vpack.c.b16 %v1122, %v1120
      %v1359 = vpack.c.b16 %v1123, %v1121
      %v1360 = vpack.c.b16 %v1126, %v1124
      %v1361 = vpack.c.b16 %v1127, %v1125
      %v1362 = vpack.c.b16 %v1130, %v1128
      %v1363 = vpack.c.b16 %v1131, %v1129
      %v1364 = vpack.c.b16 %v1134, %v1132
      %v1365 = vpack.c.b16 %v1135, %v1133
      %v1366 = vpack.c.b16 %v1138, %v1136
      %v1367 = vpack.c.b16 %v1139, %v1137
      %v1368 = vpack.c.b16 %v1142, %v1140
      %v1369 = vpack.c.b16 %v1143, %v1141
      %v1370 = vpack.c.b16 %v1146, %v1144
      %v1371 = vpack.c.b16 %v1147, %v1145
      %v1372 = vpack.c.b16 %v1150, %v1148
      %v1373 = vpack.c.b16 %v1151, %v1149
      %v1374 = vpack.c.b16 %v1154, %v1152
      %v1375 = vpack.c.b16 %v1155, %v1153
      %v1376 = vpack.c.b16 %v1158, %v1156
      %v1377 = vpack.c.b16 %v1159, %v1157
      %v1378 = vpack.c.b16 %v1162, %v1160
      %v1379 = vpack.c.b16 %v1163, %v1161
      %v1380 = vpack.c.b16 %v1166, %v1164
      %v1381 = vpack.c.b16 %v1167, %v1165
      %v1382 = vpack.c.b16 %v1170, %v1168
      %v1383 = vpack.c.b16 %v1171, %v1169
      %v1384 = vpack.c.b16 %v1174, %v1172
      %v1385 = vpack.c.b16 %v1175, %v1173
      %v1386 = vpack.c.b16 %v1178, %v1176
      %v1387 = vpack.c.b16 %v1179, %v1177
      %v1388 = vpack.c.b16 %v1182, %v1180
      %v1389 = vpack.c.b16 %v1183, %v1181
      %v1390 = vpack.c.b16 %v1186, %v1184
      %v1391 = vpack.c.b16 %v1187, %v1185
      %v1392 = vpack.c.b16 %v1190, %v1188
      %v1393 = vpack.c.b16 %v1191, %v1189
      %v1394 = vpack.c.b16 %v1194, %v1192
      %v1395 = vpack.c.b16 %v1195, %v1193
      %v1396 = vpack.c.b16 %v1198, %v1196
      %v1397 = vpack.c.b16 %v1199, %v1197
      %v1398 = vpack.c.b16 %v1202, %v1200
      %v1399 = vpack.c.b16 %v1203, %v1201
      %v1400 = vpack.c.b16 %v1206, %v1204
      %v1401 = vpack.c.b16 %v1207, %v1205
      %v1402 = vpack.c.b16 %v1210, %v1208
      %v1403 = vpack.c.b16 %v1211, %v1209
      %v1404 = vpack.c.b16 %v1214, %v1212
      %v1405 = vpack.c.b16 %v1215, %v1213
      %v1406 = vpack.c.b16 %v1218, %v1216
      %v1407 = vpack.c.b16 %v1219, %v1217
      %v1408 = vpack.c.b16 %v1222, %v1220
      %v1409 = vpack.c.b16 %v1223, %v1221
      %v1410 = vpack.c.b16 %v1226, %v1224
      %v1411 = vpack.c.b16 %v1227, %v1225
      %v1412 = vpack.c.b16 %v1230, %v1228
      %v1413 = vpack.c.b16 %v1231, %v1229
      %v1414 = vpack.c.b16 %v1234, %v1232
      %v1415 = vpack.c.b16 %v1235, %v1233
      %v1416 = vpack.c.b16 %v1238, %v1236
      %v1417 = vpack.c.b16 %v1239, %v1237
      %v1418 = vpack.c.b16 %v1242, %v1240
      %v1419 = vpack.c.b16 %v1243, %v1241
      %v1420 = vpack.c.b16 %v1246, %v1244
      %v1421 = vpack.c.b16 %v1247, %v1245
      %v1422 = vpack.c.b16 %v1250, %v1248
      %v1423 = vpack.c.b16 %v1251, %v1249
      %v1424 = vpack.c.b16 %v1254, %v1252
      %v1425 = vpack.c.b16 %v1255, %v1253
      %v1426 = vpack.c.b16 %v1258, %v1256
      %v1427 = vpack.c.b16 %v1259, %v1257
      %v1428 = vpack.c.b16 %v1262, %v1260
      %v1429 = vpack.c.b16 %v1263, %v1261
      %v1430 = vpack.c.b16 %v1266, %v1264
      %v1431 = vpack.c.b16 %v1267, %v1265
      %v1432 = vpack.c.b16 %v1270, %v1268
      %v1433 = vpack.c.b16 %v1271, %v1269
      %v1434 = vpack.c.b16 %v1274, %v1272
      %v1435 = vpack.c.b16 %v1275, %v1273
      %v1436 = vpack.c.b16 %v1278, %v1276
      %v1437 = vpack.c.b16 %v1279, %v1277
      %v1438 = vpack.c.b16 %v1282, %v1280
      %v1439 = vpack.c.b16 %v1283, %v1281
      %v1440 = vpack.c.b16 %v1286, %v1284
      %v1441 = vpack.c.b16 %v1287, %v1285
      %v1442 = vpack.c.b16 %v1290, %v1288
      %v1443 = vpack.c.b16 %v1291, %v1289
      %v1444 = vpack.c.b16 %v1294, %v1292
      %v1445 = vpack.c.b16 %v1295, %v1293
      %v1446 = vpack.c.b16 %v1298, %v1296
      %v1447 = vpack.c.b16 %v1299, %v1297
      %v1448 = vpack.c.b16 %v1302, %v1300
      %v1449 = vpack.c.b16 %v1303, %v1301
      %v1450 = vpack.c.b16 %v1306, %v1304
      %v1451 = vpack.c.b16 %v1307, %v1305
      %v1452 = vpack.c.b16 %v1310, %v1308
      %v1453 = vpack.c.b16 %v1311, %v1309
      %v1454 = vpack.c.b16 %v1314, %v1312
      %v1455 = vpack.c.b16 %v1315, %v1313
      %v1456 = vpack.c.b16 %v1318, %v1316
      %v1457 = vpack.c.b16 %v1319, %v1317
      %v1458 = vpack.c.b16 %v1322, %v1320
      %v1459 = vpack.c.b16 %v1323, %v1321
      %v1460 = vpack.c.b16 %v1326, %v1324
      %v1461 = vpack.c.b16 %v1327, %v1325
      %v1462 = vpack.c.b16 %v1330, %v1328
      %v1463 = vpack.c.b16 %v1331, %v1329
      %v1464 = vpack.c.b16 %v1334, %v1332
      %v1465 = vpack.c.b16 %v1335, %v1333
      %v1466 = vpack.c.b16 %v1338, %v1336
      %v1467 = vpack.c.b16 %v1339, %v1337
      %1596 = vmatpush.bf16.msra.mxu0 %v1354
      %1597 = vmatpush.bf16.msra.mxu0 %v1352
      %1598 = vmatpush.bf16.msra.mxu0 %v1350
      %1599 = vmatpush.bf16.msra.mxu0 %v1348
      %1600 = vmatpush.bf16.msra.mxu0 %v1346
      %1601 = vmatpush.bf16.msra.mxu0 %v1344
      %1602 = vmatpush.bf16.msra.mxu0 %v1342
      %1603 = vmatpush.bf16.msra.mxu0 %v1340
      %1604 = vmatmul.bf16.gmra.mxu0 %v828
      %v1605 = vpop.f32.mrf.mxu0
      %v1606 = vadd.f32 0.0, %v1605
      %v1607 = vpop.f32.mrf.mxu0
      %v1608 = vadd.f32 0.0, %v1607
      %1609 = vmatmul.bf16.gmra.mxu0 %v836
      %v1610 = vpop.f32.mrf.mxu0
      %v1611 = vadd.f32 0.0, %v1610
      %v1612 = vpop.f32.mrf.mxu0
      %v1613 = vadd.f32 0.0, %v1612
      %1614 = vmatmul.bf16.gmra.mxu0 %v844
      %v1615 = vpop.f32.mrf.mxu0
      %v1616 = vadd.f32 0.0, %v1615
      %v1617 = vpop.f32.mrf.mxu0
      %v1618 = vadd.f32 0.0, %v1617
      %1619 = vmatmul.bf16.gmra.mxu0 %v852
      %v1620 = vpop.f32.mrf.mxu0
      %v1621 = vadd.f32 0.0, %v1620
      %v1622 = vpop.f32.mrf.mxu0
      %v1623 = vadd.f32 0.0, %v1622
      %1624 = vmatmul.bf16.gmra.mxu0 %v860
      %v1625 = vpop.f32.mrf.mxu0
      %v1626 = vadd.f32 0.0, %v1625
      %v1627 = vpop.f32.mrf.mxu0
      %v1628 = vadd.f32 0.0, %v1627
      %1629 = vmatmul.bf16.gmra.mxu0 %v868
      %v1630 = vpop.f32.mrf.mxu0
      %v1631 = vadd.f32 0.0, %v1630
      %v1632 = vpop.f32.mrf.mxu0
      %v1633 = vadd.f32 0.0, %v1632
      %1634 = vmatmul.bf16.gmra.mxu0 %v876
      %v1635 = vpop.f32.mrf.mxu0
      %v1636 = vadd.f32 0.0, %v1635
      %v1637 = vpop.f32.mrf.mxu0
      %v1638 = vadd.f32 0.0, %v1637
      %1639 = vmatmul.bf16.gmra.mxu0 %v884
      %v1640 = vpop.f32.mrf.mxu0
      %v1641 = vadd.f32 0.0, %v1640
      %v1642 = vpop.f32.mrf.mxu0
      %v1643 = vadd.f32 0.0, %v1642
      %1644 = vdwg.mxu0
      %1645 = vmatpush.bf16.msra.mxu0 %v1370
      %1646 = vmatpush.bf16.msra.mxu0 %v1368
      %1647 = vmatpush.bf16.msra.mxu0 %v1366
      %1648 = vmatpush.bf16.msra.mxu0 %v1364
      %1649 = vmatpush.bf16.msra.mxu0 %v1362
      %1650 = vmatpush.bf16.msra.mxu0 %v1360
      %1651 = vmatpush.bf16.msra.mxu0 %v1358
      %1652 = vmatpush.bf16.msra.mxu0 %v1356
      %1653 = vmatmul.bf16.gmra.mxu0 %v829
      %v1654 = vpop.f32.mrf.mxu0
      %v1655 = vadd.f32 %v1606, %v1654
      %v1656 = vpop.f32.mrf.mxu0
      %v1657 = vadd.f32 %v1608, %v1656
      %1658 = vmatmul.bf16.gmra.mxu0 %v837
      %v1659 = vpop.f32.mrf.mxu0
      %v1660 = vadd.f32 %v1611, %v1659
      %v1661 = vpop.f32.mrf.mxu0
      %v1662 = vadd.f32 %v1613, %v1661
      %1663 = vmatmul.bf16.gmra.mxu0 %v845
      %v1664 = vpop.f32.mrf.mxu0
      %v1665 = vadd.f32 %v1616, %v1664
      %v1666 = vpop.f32.mrf.mxu0
      %v1667 = vadd.f32 %v1618, %v1666
      %1668 = vmatmul.bf16.gmra.mxu0 %v853
      %v1669 = vpop.f32.mrf.mxu0
      %v1670 = vadd.f32 %v1621, %v1669
      %v1671 = vpop.f32.mrf.mxu0
      %v1672 = vadd.f32 %v1623, %v1671
      %1673 = vmatmul.bf16.gmra.mxu0 %v861
      %v1674 = vpop.f32.mrf.mxu0
      %v1675 = vadd.f32 %v1626, %v1674
      %v1676 = vpop.f32.mrf.mxu0
      %v1677 = vadd.f32 %v1628, %v1676
      %1678 = vmatmul.bf16.gmra.mxu0 %v869
      %v1679 = vpop.f32.mrf.mxu0
      %v1680 = vadd.f32 %v1631, %v1679
      %v1681 = vpop.f32.mrf.mxu0
      %v1682 = vadd.f32 %v1633, %v1681
      %1683 = vmatmul.bf16.gmra.mxu0 %v877
      %v1684 = vpop.f32.mrf.mxu0
      %v1685 = vadd.f32 %v1636, %v1684
      %v1686 = vpop.f32.mrf.mxu0
      %v1687 = vadd.f32 %v1638, %v1686
      %1688 = vmatmul.bf16.gmra.mxu0 %v885
      %v1689 = vpop.f32.mrf.mxu0
      %v1690 = vadd.f32 %v1641, %v1689
      %v1691 = vpop.f32.mrf.mxu0
      %v1692 = vadd.f32 %v1643, %v1691
      %1693 = vdwg.mxu0
      %1694 = vmatpush.bf16.msra.mxu0 %v1386
      %1695 = vmatpush.bf16.msra.mxu0 %v1384
      %1696 = vmatpush.bf16.msra.mxu0 %v1382
      %1697 = vmatpush.bf16.msra.mxu0 %v1380
      %1698 = vmatpush.bf16.msra.mxu0 %v1378
      %1699 = vmatpush.bf16.msra.mxu0 %v1376
      %1700 = vmatpush.bf16.msra.mxu0 %v1374
      %1701 = vmatpush.bf16.msra.mxu0 %v1372
      %1702 = vmatmul.bf16.gmra.mxu0 %v830
      %v1703 = vpop.f32.mrf.mxu0
      %v1704 = vadd.f32 %v1655, %v1703
      %v1705 = vpop.f32.mrf.mxu0
      %v1706 = vadd.f32 %v1657, %v1705
      %1707 = vmatmul.bf16.gmra.mxu0 %v838
      %v1708 = vpop.f32.mrf.mxu0
      %v1709 = vadd.f32 %v1660, %v1708
      %v1710 = vpop.f32.mrf.mxu0
      %v1711 = vadd.f32 %v1662, %v1710
      %1712 = vmatmul.bf16.gmra.mxu0 %v846
      %v1713 = vpop.f32.mrf.mxu0
      %v1714 = vadd.f32 %v1665, %v1713
      %v1715 = vpop.f32.mrf.mxu0
      %v1716 = vadd.f32 %v1667, %v1715
      %1717 = vmatmul.bf16.gmra.mxu0 %v854
      %v1718 = vpop.f32.mrf.mxu0
      %v1719 = vadd.f32 %v1670, %v1718
      %v1720 = vpop.f32.mrf.mxu0
      %v1721 = vadd.f32 %v1672, %v1720
      %1722 = vmatmul.bf16.gmra.mxu0 %v862
      %v1723 = vpop.f32.mrf.mxu0
      %v1724 = vadd.f32 %v1675, %v1723
      %v1725 = vpop.f32.mrf.mxu0
      %v1726 = vadd.f32 %v1677, %v1725
      %1727 = vmatmul.bf16.gmra.mxu0 %v870
      %v1728 = vpop.f32.mrf.mxu0
      %v1729 = vadd.f32 %v1680, %v1728
      %v1730 = vpop.f32.mrf.mxu0
      %v1731 = vadd.f32 %v1682, %v1730
      %1732 = vmatmul.bf16.gmra.mxu0 %v878
      %v1733 = vpop.f32.mrf.mxu0
      %v1734 = vadd.f32 %v1685, %v1733
      %v1735 = vpop.f32.mrf.mxu0
      %v1736 = vadd.f32 %v1687, %v1735
      %1737 = vmatmul.bf16.gmra.mxu0 %v886
      %v1738 = vpop.f32.mrf.mxu0
      %v1739 = vadd.f32 %v1690, %v1738
      %v1740 = vpop.f32.mrf.mxu0
      %v1741 = vadd.f32 %v1692, %v1740
      %1742 = vdwg.mxu0
      %1743 = vmatpush.bf16.msra.mxu0 %v1402
      %1744 = vmatpush.bf16.msra.mxu0 %v1400
      %1745 = vmatpush.bf16.msra.mxu0 %v1398
      %1746 = vmatpush.bf16.msra.mxu0 %v1396
      %1747 = vmatpush.bf16.msra.mxu0 %v1394
      %1748 = vmatpush.bf16.msra.mxu0 %v1392
      %1749 = vmatpush.bf16.msra.mxu0 %v1390
      %1750 = vmatpush.bf16.msra.mxu0 %v1388
      %1751 = vmatmul.bf16.gmra.mxu0 %v831
      %v1752 = vpop.f32.mrf.mxu0
      %v1753 = vadd.f32 %v1704, %v1752
      %v1754 = vpop.f32.mrf.mxu0
      %v1755 = vadd.f32 %v1706, %v1754
      %1756 = vmatmul.bf16.gmra.mxu0 %v839
      %v1757 = vpop.f32.mrf.mxu0
      %v1758 = vadd.f32 %v1709, %v1757
      %v1759 = vpop.f32.mrf.mxu0
      %v1760 = vadd.f32 %v1711, %v1759
      %1761 = vmatmul.bf16.gmra.mxu0 %v847
      %v1762 = vpop.f32.mrf.mxu0
      %v1763 = vadd.f32 %v1714, %v1762
      %v1764 = vpop.f32.mrf.mxu0
      %v1765 = vadd.f32 %v1716, %v1764
      %1766 = vmatmul.bf16.gmra.mxu0 %v855
      %v1767 = vpop.f32.mrf.mxu0
      %v1768 = vadd.f32 %v1719, %v1767
      %v1769 = vpop.f32.mrf.mxu0
      %v1770 = vadd.f32 %v1721, %v1769
      %1771 = vmatmul.bf16.gmra.mxu0 %v863
      %v1772 = vpop.f32.mrf.mxu0
      %v1773 = vadd.f32 %v1724, %v1772
      %v1774 = vpop.f32.mrf.mxu0
      %v1775 = vadd.f32 %v1726, %v1774
      %1776 = vmatmul.bf16.gmra.mxu0 %v871
      %v1777 = vpop.f32.mrf.mxu0
      %v1778 = vadd.f32 %v1729, %v1777
      %v1779 = vpop.f32.mrf.mxu0
      %v1780 = vadd.f32 %v1731, %v1779
      %1781 = vmatmul.bf16.gmra.mxu0 %v879
      %v1782 = vpop.f32.mrf.mxu0
      %v1783 = vadd.f32 %v1734, %v1782
      %v1784 = vpop.f32.mrf.mxu0
      %v1785 = vadd.f32 %v1736, %v1784
      %1786 = vmatmul.bf16.gmra.mxu0 %v887
      %v1787 = vpop.f32.mrf.mxu0
      %v1788 = vadd.f32 %v1739, %v1787
      %v1789 = vpop.f32.mrf.mxu0
      %v1790 = vadd.f32 %v1741, %v1789
      %1791 = vdwg.mxu0
      %1792 = vmatpush.bf16.msra.mxu0 %v1418
      %1793 = vmatpush.bf16.msra.mxu0 %v1416
      %1794 = vmatpush.bf16.msra.mxu0 %v1414
      %1795 = vmatpush.bf16.msra.mxu0 %v1412
      %1796 = vmatpush.bf16.msra.mxu0 %v1410
      %1797 = vmatpush.bf16.msra.mxu0 %v1408
      %1798 = vmatpush.bf16.msra.mxu0 %v1406
      %1799 = vmatpush.bf16.msra.mxu0 %v1404
      %1800 = vmatmul.bf16.gmra.mxu0 %v832
      %v1801 = vpop.f32.mrf.mxu0
      %v1802 = vadd.f32 %v1753, %v1801
      %v1803 = vpop.f32.mrf.mxu0
      %v1804 = vadd.f32 %v1755, %v1803
      %1805 = vmatmul.bf16.gmra.mxu0 %v840
      %v1806 = vpop.f32.mrf.mxu0
      %v1807 = vadd.f32 %v1758, %v1806
      %v1808 = vpop.f32.mrf.mxu0
      %v1809 = vadd.f32 %v1760, %v1808
      %1810 = vmatmul.bf16.gmra.mxu0 %v848
      %v1811 = vpop.f32.mrf.mxu0
      %v1812 = vadd.f32 %v1763, %v1811
      %v1813 = vpop.f32.mrf.mxu0
      %v1814 = vadd.f32 %v1765, %v1813
      %1815 = vmatmul.bf16.gmra.mxu0 %v856
      %v1816 = vpop.f32.mrf.mxu0
      %v1817 = vadd.f32 %v1768, %v1816
      %v1818 = vpop.f32.mrf.mxu0
      %v1819 = vadd.f32 %v1770, %v1818
      %1820 = vmatmul.bf16.gmra.mxu0 %v864
      %v1821 = vpop.f32.mrf.mxu0
      %v1822 = vadd.f32 %v1773, %v1821
      %v1823 = vpop.f32.mrf.mxu0
      %v1824 = vadd.f32 %v1775, %v1823
      %1825 = vmatmul.bf16.gmra.mxu0 %v872
      %v1826 = vpop.f32.mrf.mxu0
      %v1827 = vadd.f32 %v1778, %v1826
      %v1828 = vpop.f32.mrf.mxu0
      %v1829 = vadd.f32 %v1780, %v1828
      %1830 = vmatmul.bf16.gmra.mxu0 %v880
      %v1831 = vpop.f32.mrf.mxu0
      %v1832 = vadd.f32 %v1783, %v1831
      %v1833 = vpop.f32.mrf.mxu0
      %v1834 = vadd.f32 %v1785, %v1833
      %1835 = vmatmul.bf16.gmra.mxu0 %v888
      %v1836 = vpop.f32.mrf.mxu0
      %v1837 = vadd.f32 %v1788, %v1836
      %v1838 = vpop.f32.mrf.mxu0
      %v1839 = vadd.f32 %v1790, %v1838
      %1840 = vdwg.mxu0
      %1841 = vmatpush.bf16.msra.mxu0 %v1434
      %1842 = vmatpush.bf16.msra.mxu0 %v1432
      %1843 = vmatpush.bf16.msra.mxu0 %v1430
      %1844 = vmatpush.bf16.msra.mxu0 %v1428
      %1845 = vmatpush.bf16.msra.mxu0 %v1426
      %1846 = vmatpush.bf16.msra.mxu0 %v1424
      %1847 = vmatpush.bf16.msra.mxu0 %v1422
      %1848 = vmatpush.bf16.msra.mxu0 %v1420
      %1849 = vmatmul.bf16.gmra.mxu0 %v833
      %v1850 = vpop.f32.mrf.mxu0
      %v1851 = vadd.f32 %v1802, %v1850
      %v1852 = vpop.f32.mrf.mxu0
      %v1853 = vadd.f32 %v1804, %v1852
      %1854 = vmatmul.bf16.gmra.mxu0 %v841
      %v1855 = vpop.f32.mrf.mxu0
      %v1856 = vadd.f32 %v1807, %v1855
      %v1857 = vpop.f32.mrf.mxu0
      %v1858 = vadd.f32 %v1809, %v1857
      %1859 = vmatmul.bf16.gmra.mxu0 %v849
      %v1860 = vpop.f32.mrf.mxu0
      %v1861 = vadd.f32 %v1812, %v1860
      %v1862 = vpop.f32.mrf.mxu0
      %v1863 = vadd.f32 %v1814, %v1862
      %1864 = vmatmul.bf16.gmra.mxu0 %v857
      %v1865 = vpop.f32.mrf.mxu0
      %v1866 = vadd.f32 %v1817, %v1865
      %v1867 = vpop.f32.mrf.mxu0
      %v1868 = vadd.f32 %v1819, %v1867
      %1869 = vmatmul.bf16.gmra.mxu0 %v865
      %v1870 = vpop.f32.mrf.mxu0
      %v1871 = vadd.f32 %v1822, %v1870
      %v1872 = vpop.f32.mrf.mxu0
      %v1873 = vadd.f32 %v1824, %v1872
      %1874 = vmatmul.bf16.gmra.mxu0 %v873
      %v1875 = vpop.f32.mrf.mxu0
      %v1876 = vadd.f32 %v1827, %v1875
      %v1877 = vpop.f32.mrf.mxu0
      %v1878 = vadd.f32 %v1829, %v1877
      %1879 = vmatmul.bf16.gmra.mxu0 %v881
      %v1880 = vpop.f32.mrf.mxu0
      %v1881 = vadd.f32 %v1832, %v1880
      %v1882 = vpop.f32.mrf.mxu0
      %v1883 = vadd.f32 %v1834, %v1882
      %1884 = vmatmul.bf16.gmra.mxu0 %v889
      %v1885 = vpop.f32.mrf.mxu0
      %v1886 = vadd.f32 %v1837, %v1885
      %v1887 = vpop.f32.mrf.mxu0
      %v1888 = vadd.f32 %v1839, %v1887
      %1889 = vdwg.mxu0
      %1890 = vmatpush.bf16.msra.mxu0 %v1450
      %1891 = vmatpush.bf16.msra.mxu0 %v1448
      %1892 = vmatpush.bf16.msra.mxu0 %v1446
      %1893 = vmatpush.bf16.msra.mxu0 %v1444
      %1894 = vmatpush.bf16.msra.mxu0 %v1442
      %1895 = vmatpush.bf16.msra.mxu0 %v1440
      %1896 = vmatpush.bf16.msra.mxu0 %v1438
      %1897 = vmatpush.bf16.msra.mxu0 %v1436
      %1898 = vmatmul.bf16.gmra.mxu0 %v834
      %v1899 = vpop.f32.mrf.mxu0
      %v1900 = vadd.f32 %v1851, %v1899
      %v1901 = vpop.f32.mrf.mxu0
      %v1902 = vadd.f32 %v1853, %v1901
      %1903 = vmatmul.bf16.gmra.mxu0 %v842
      %v1904 = vpop.f32.mrf.mxu0
      %v1905 = vadd.f32 %v1856, %v1904
      %v1906 = vpop.f32.mrf.mxu0
      %v1907 = vadd.f32 %v1858, %v1906
      %1908 = vmatmul.bf16.gmra.mxu0 %v850
      %v1909 = vpop.f32.mrf.mxu0
      %v1910 = vadd.f32 %v1861, %v1909
      %v1911 = vpop.f32.mrf.mxu0
      %v1912 = vadd.f32 %v1863, %v1911
      %1913 = vmatmul.bf16.gmra.mxu0 %v858
      %v1914 = vpop.f32.mrf.mxu0
      %v1915 = vadd.f32 %v1866, %v1914
      %v1916 = vpop.f32.mrf.mxu0
      %v1917 = vadd.f32 %v1868, %v1916
      %1918 = vmatmul.bf16.gmra.mxu0 %v866
      %v1919 = vpop.f32.mrf.mxu0
      %v1920 = vadd.f32 %v1871, %v1919
      %v1921 = vpop.f32.mrf.mxu0
      %v1922 = vadd.f32 %v1873, %v1921
      %1923 = vmatmul.bf16.gmra.mxu0 %v874
      %v1924 = vpop.f32.mrf.mxu0
      %v1925 = vadd.f32 %v1876, %v1924
      %v1926 = vpop.f32.mrf.mxu0
      %v1927 = vadd.f32 %v1878, %v1926
      %1928 = vmatmul.bf16.gmra.mxu0 %v882
      %v1929 = vpop.f32.mrf.mxu0
      %v1930 = vadd.f32 %v1881, %v1929
      %v1931 = vpop.f32.mrf.mxu0
      %v1932 = vadd.f32 %v1883, %v1931
      %1933 = vmatmul.bf16.gmra.mxu0 %v890
      %v1934 = vpop.f32.mrf.mxu0
      %v1935 = vadd.f32 %v1886, %v1934
      %v1936 = vpop.f32.mrf.mxu0
      %v1937 = vadd.f32 %v1888, %v1936
      %1938 = vdwg.mxu0
      %1939 = vmatpush.bf16.msra.mxu0 %v1466
      %1940 = vmatpush.bf16.msra.mxu0 %v1464
      %1941 = vmatpush.bf16.msra.mxu0 %v1462
      %1942 = vmatpush.bf16.msra.mxu0 %v1460
      %1943 = vmatpush.bf16.msra.mxu0 %v1458
      %1944 = vmatpush.bf16.msra.mxu0 %v1456
      %1945 = vmatpush.bf16.msra.mxu0 %v1454
      %1946 = vmatpush.bf16.msra.mxu0 %v1452
      %1947 = vmatmul.bf16.gmra.mxu0 %v835
      %v1948 = vpop.f32.mrf.mxu0
      %v1949 = vadd.f32 %v1900, %v1948
      %v1950 = vpop.f32.mrf.mxu0
      %v1951 = vadd.f32 %v1902, %v1950
      %1952 = vmatmul.bf16.gmra.mxu0 %v843
      %v1953 = vpop.f32.mrf.mxu0
      %v1954 = vadd.f32 %v1905, %v1953
      %v1955 = vpop.f32.mrf.mxu0
      %v1956 = vadd.f32 %v1907, %v1955
      %1957 = vmatmul.bf16.gmra.mxu0 %v851
      %v1958 = vpop.f32.mrf.mxu0
      %v1959 = vadd.f32 %v1910, %v1958
      %v1960 = vpop.f32.mrf.mxu0
      %v1961 = vadd.f32 %v1912, %v1960
      %1962 = vmatmul.bf16.gmra.mxu0 %v859
      %v1963 = vpop.f32.mrf.mxu0
      %v1964 = vadd.f32 %v1915, %v1963
      %v1965 = vpop.f32.mrf.mxu0
      %v1966 = vadd.f32 %v1917, %v1965
      %1967 = vmatmul.bf16.gmra.mxu0 %v867
      %v1968 = vpop.f32.mrf.mxu0
      %v1969 = vadd.f32 %v1920, %v1968
      %v1970 = vpop.f32.mrf.mxu0
      %v1971 = vadd.f32 %v1922, %v1970
      %1972 = vmatmul.bf16.gmra.mxu0 %v875
      %v1973 = vpop.f32.mrf.mxu0
      %v1974 = vadd.f32 %v1925, %v1973
      %v1975 = vpop.f32.mrf.mxu0
      %v1976 = vadd.f32 %v1927, %v1975
      %1977 = vmatmul.bf16.gmra.mxu0 %v883
      %v1978 = vpop.f32.mrf.mxu0
      %v1979 = vadd.f32 %v1930, %v1978
      %v1980 = vpop.f32.mrf.mxu0
      %v1981 = vadd.f32 %v1932, %v1980
      %1982 = vmatmul.bf16.gmra.mxu0 %v891
      %v1983 = vpop.f32.mrf.mxu0
      %v1984 = vadd.f32 %v1935, %v1983
      %v1985 = vpop.f32.mrf.mxu0
      %v1986 = vadd.f32 %v1937, %v1985
      %1987 = vdwg.mxu0
      %1988 = vmatpush.bf16.msra.mxu0 %v1355
      %1989 = vmatpush.bf16.msra.mxu0 %v1353
      %1990 = vmatpush.bf16.msra.mxu0 %v1351
      %1991 = vmatpush.bf16.msra.mxu0 %v1349
      %1992 = vmatpush.bf16.msra.mxu0 %v1347
      %1993 = vmatpush.bf16.msra.mxu0 %v1345
      %1994 = vmatpush.bf16.msra.mxu0 %v1343
      %1995 = vmatpush.bf16.msra.mxu0 %v1341
      %1996 = vmatmul.bf16.gmra.mxu0 %v828
      %v1997 = vpop.f32.mrf.mxu0
      %v1998 = vadd.f32 0.0, %v1997
      %v1999 = vpop.f32.mrf.mxu0
      %v2000 = vadd.f32 0.0, %v1999
      %2001 = vmatmul.bf16.gmra.mxu0 %v836
      %v2002 = vpop.f32.mrf.mxu0
      %v2003 = vadd.f32 0.0, %v2002
      %v2004 = vpop.f32.mrf.mxu0
      %v2005 = vadd.f32 0.0, %v2004
      %2006 = vmatmul.bf16.gmra.mxu0 %v844
      %v2007 = vpop.f32.mrf.mxu0
      %v2008 = vadd.f32 0.0, %v2007
      %v2009 = vpop.f32.mrf.mxu0
      %v2010 = vadd.f32 0.0, %v2009
      %2011 = vmatmul.bf16.gmra.mxu0 %v852
      %v2012 = vpop.f32.mrf.mxu0
      %v2013 = vadd.f32 0.0, %v2012
      %v2014 = vpop.f32.mrf.mxu0
      %v2015 = vadd.f32 0.0, %v2014
      %2016 = vmatmul.bf16.gmra.mxu0 %v860
      %v2017 = vpop.f32.mrf.mxu0
      %v2018 = vadd.f32 0.0, %v2017
      %v2019 = vpop.f32.mrf.mxu0
      %v2020 = vadd.f32 0.0, %v2019
      %2021 = vmatmul.bf16.gmra.mxu0 %v868
      %v2022 = vpop.f32.mrf.mxu0
      %v2023 = vadd.f32 0.0, %v2022
      %v2024 = vpop.f32.mrf.mxu0
      %v2025 = vadd.f32 0.0, %v2024
      %2026 = vmatmul.bf16.gmra.mxu0 %v876
      %v2027 = vpop.f32.mrf.mxu0
      %v2028 = vadd.f32 0.0, %v2027
      %v2029 = vpop.f32.mrf.mxu0
      %v2030 = vadd.f32 0.0, %v2029
      %2031 = vmatmul.bf16.gmra.mxu0 %v884
      %v2032 = vpop.f32.mrf.mxu0
      %v2033 = vadd.f32 0.0, %v2032
      %v2034 = vpop.f32.mrf.mxu0
      %v2035 = vadd.f32 0.0, %v2034
      %2036 = vdwg.mxu0
      %2037 = vmatpush.bf16.msra.mxu0 %v1371
      %2038 = vmatpush.bf16.msra.mxu0 %v1369
      %2039 = vmatpush.bf16.msra.mxu0 %v1367
      %2040 = vmatpush.bf16.msra.mxu0 %v1365
      %2041 = vmatpush.bf16.msra.mxu0 %v1363
      %2042 = vmatpush.bf16.msra.mxu0 %v1361
      %2043 = vmatpush.bf16.msra.mxu0 %v1359
      %2044 = vmatpush.bf16.msra.mxu0 %v1357
      %2045 = vmatmul.bf16.gmra.mxu0 %v829
      %v2046 = vpop.f32.mrf.mxu0
      %v2047 = vadd.f32 %v1998, %v2046
      %v2048 = vpop.f32.mrf.mxu0
      %v2049 = vadd.f32 %v2000, %v2048
      %2050 = vmatmul.bf16.gmra.mxu0 %v837
      %v2051 = vpop.f32.mrf.mxu0
      %v2052 = vadd.f32 %v2003, %v2051
      %v2053 = vpop.f32.mrf.mxu0
      %v2054 = vadd.f32 %v2005, %v2053
      %2055 = vmatmul.bf16.gmra.mxu0 %v845
      %v2056 = vpop.f32.mrf.mxu0
      %v2057 = vadd.f32 %v2008, %v2056
      %v2058 = vpop.f32.mrf.mxu0
      %v2059 = vadd.f32 %v2010, %v2058
      %2060 = vmatmul.bf16.gmra.mxu0 %v853
      %v2061 = vpop.f32.mrf.mxu0
      %v2062 = vadd.f32 %v2013, %v2061
      %v2063 = vpop.f32.mrf.mxu0
      %v2064 = vadd.f32 %v2015, %v2063
      %2065 = vmatmul.bf16.gmra.mxu0 %v861
      %v2066 = vpop.f32.mrf.mxu0
      %v2067 = vadd.f32 %v2018, %v2066
      %v2068 = vpop.f32.mrf.mxu0
      %v2069 = vadd.f32 %v2020, %v2068
      %2070 = vmatmul.bf16.gmra.mxu0 %v869
      %v2071 = vpop.f32.mrf.mxu0
      %v2072 = vadd.f32 %v2023, %v2071
      %v2073 = vpop.f32.mrf.mxu0
      %v2074 = vadd.f32 %v2025, %v2073
      %2075 = vmatmul.bf16.gmra.mxu0 %v877
      %v2076 = vpop.f32.mrf.mxu0
      %v2077 = vadd.f32 %v2028, %v2076
      %v2078 = vpop.f32.mrf.mxu0
      %v2079 = vadd.f32 %v2030, %v2078
      %2080 = vmatmul.bf16.gmra.mxu0 %v885
      %v2081 = vpop.f32.mrf.mxu0
      %v2082 = vadd.f32 %v2033, %v2081
      %v2083 = vpop.f32.mrf.mxu0
      %v2084 = vadd.f32 %v2035, %v2083
      %2085 = vdwg.mxu0
      %2086 = vmatpush.bf16.msra.mxu0 %v1387
      %2087 = vmatpush.bf16.msra.mxu0 %v1385
      %2088 = vmatpush.bf16.msra.mxu0 %v1383
      %2089 = vmatpush.bf16.msra.mxu0 %v1381
      %2090 = vmatpush.bf16.msra.mxu0 %v1379
      %2091 = vmatpush.bf16.msra.mxu0 %v1377
      %2092 = vmatpush.bf16.msra.mxu0 %v1375
      %2093 = vmatpush.bf16.msra.mxu0 %v1373
      %2094 = vmatmul.bf16.gmra.mxu0 %v830
      %v2095 = vpop.f32.mrf.mxu0
      %v2096 = vadd.f32 %v2047, %v2095
      %v2097 = vpop.f32.mrf.mxu0
      %v2098 = vadd.f32 %v2049, %v2097
      %2099 = vmatmul.bf16.gmra.mxu0 %v838
      %v2100 = vpop.f32.mrf.mxu0
      %v2101 = vadd.f32 %v2052, %v2100
      %v2102 = vpop.f32.mrf.mxu0
      %v2103 = vadd.f32 %v2054, %v2102
      %2104 = vmatmul.bf16.gmra.mxu0 %v846
      %v2105 = vpop.f32.mrf.mxu0
      %v2106 = vadd.f32 %v2057, %v2105
      %v2107 = vpop.f32.mrf.mxu0
      %v2108 = vadd.f32 %v2059, %v2107
      %2109 = vmatmul.bf16.gmra.mxu0 %v854
      %v2110 = vpop.f32.mrf.mxu0
      %v2111 = vadd.f32 %v2062, %v2110
      %v2112 = vpop.f32.mrf.mxu0
      %v2113 = vadd.f32 %v2064, %v2112
      %2114 = vmatmul.bf16.gmra.mxu0 %v862
      %v2115 = vpop.f32.mrf.mxu0
      %v2116 = vadd.f32 %v2067, %v2115
      %v2117 = vpop.f32.mrf.mxu0
      %v2118 = vadd.f32 %v2069, %v2117
      %2119 = vmatmul.bf16.gmra.mxu0 %v870
      %v2120 = vpop.f32.mrf.mxu0
      %v2121 = vadd.f32 %v2072, %v2120
      %v2122 = vpop.f32.mrf.mxu0
      %v2123 = vadd.f32 %v2074, %v2122
      %2124 = vmatmul.bf16.gmra.mxu0 %v878
      %v2125 = vpop.f32.mrf.mxu0
      %v2126 = vadd.f32 %v2077, %v2125
      %v2127 = vpop.f32.mrf.mxu0
      %v2128 = vadd.f32 %v2079, %v2127
      %2129 = vmatmul.bf16.gmra.mxu0 %v886
      %v2130 = vpop.f32.mrf.mxu0
      %v2131 = vadd.f32 %v2082, %v2130
      %v2132 = vpop.f32.mrf.mxu0
      %v2133 = vadd.f32 %v2084, %v2132
      %2134 = vdwg.mxu0
      %2135 = vmatpush.bf16.msra.mxu0 %v1403
      %2136 = vmatpush.bf16.msra.mxu0 %v1401
      %2137 = vmatpush.bf16.msra.mxu0 %v1399
      %2138 = vmatpush.bf16.msra.mxu0 %v1397
      %2139 = vmatpush.bf16.msra.mxu0 %v1395
      %2140 = vmatpush.bf16.msra.mxu0 %v1393
      %2141 = vmatpush.bf16.msra.mxu0 %v1391
      %2142 = vmatpush.bf16.msra.mxu0 %v1389
      %2143 = vmatmul.bf16.gmra.mxu0 %v831
      %v2144 = vpop.f32.mrf.mxu0
      %v2145 = vadd.f32 %v2096, %v2144
      %v2146 = vpop.f32.mrf.mxu0
      %v2147 = vadd.f32 %v2098, %v2146
      %2148 = vmatmul.bf16.gmra.mxu0 %v839
      %v2149 = vpop.f32.mrf.mxu0
      %v2150 = vadd.f32 %v2101, %v2149
      %v2151 = vpop.f32.mrf.mxu0
      %v2152 = vadd.f32 %v2103, %v2151
      %2153 = vmatmul.bf16.gmra.mxu0 %v847
      %v2154 = vpop.f32.mrf.mxu0
      %v2155 = vadd.f32 %v2106, %v2154
      %v2156 = vpop.f32.mrf.mxu0
      %v2157 = vadd.f32 %v2108, %v2156
      %2158 = vmatmul.bf16.gmra.mxu0 %v855
      %v2159 = vpop.f32.mrf.mxu0
      %v2160 = vadd.f32 %v2111, %v2159
      %v2161 = vpop.f32.mrf.mxu0
      %v2162 = vadd.f32 %v2113, %v2161
      %2163 = vmatmul.bf16.gmra.mxu0 %v863
      %v2164 = vpop.f32.mrf.mxu0
      %v2165 = vadd.f32 %v2116, %v2164
      %v2166 = vpop.f32.mrf.mxu0
      %v2167 = vadd.f32 %v2118, %v2166
      %2168 = vmatmul.bf16.gmra.mxu0 %v871
      %v2169 = vpop.f32.mrf.mxu0
      %v2170 = vadd.f32 %v2121, %v2169
      %v2171 = vpop.f32.mrf.mxu0
      %v2172 = vadd.f32 %v2123, %v2171
      %2173 = vmatmul.bf16.gmra.mxu0 %v879
      %v2174 = vpop.f32.mrf.mxu0
      %v2175 = vadd.f32 %v2126, %v2174
      %v2176 = vpop.f32.mrf.mxu0
      %v2177 = vadd.f32 %v2128, %v2176
      %2178 = vmatmul.bf16.gmra.mxu0 %v887
      %v2179 = vpop.f32.mrf.mxu0
      %v2180 = vadd.f32 %v2131, %v2179
      %v2181 = vpop.f32.mrf.mxu0
      %v2182 = vadd.f32 %v2133, %v2181
      %2183 = vdwg.mxu0
      %2184 = vmatpush.bf16.msra.mxu0 %v1419
      %2185 = vmatpush.bf16.msra.mxu0 %v1417
      %2186 = vmatpush.bf16.msra.mxu0 %v1415
      %2187 = vmatpush.bf16.msra.mxu0 %v1413
      %2188 = vmatpush.bf16.msra.mxu0 %v1411
      %2189 = vmatpush.bf16.msra.mxu0 %v1409
      %2190 = vmatpush.bf16.msra.mxu0 %v1407
      %2191 = vmatpush.bf16.msra.mxu0 %v1405
      %2192 = vmatmul.bf16.gmra.mxu0 %v832
      %v2193 = vpop.f32.mrf.mxu0
      %v2194 = vadd.f32 %v2145, %v2193
      %v2195 = vpop.f32.mrf.mxu0
      %v2196 = vadd.f32 %v2147, %v2195
      %2197 = vmatmul.bf16.gmra.mxu0 %v840
      %v2198 = vpop.f32.mrf.mxu0
      %v2199 = vadd.f32 %v2150, %v2198
      %v2200 = vpop.f32.mrf.mxu0
      %v2201 = vadd.f32 %v2152, %v2200
      %2202 = vmatmul.bf16.gmra.mxu0 %v848
      %v2203 = vpop.f32.mrf.mxu0
      %v2204 = vadd.f32 %v2155, %v2203
      %v2205 = vpop.f32.mrf.mxu0
      %v2206 = vadd.f32 %v2157, %v2205
      %2207 = vmatmul.bf16.gmra.mxu0 %v856
      %v2208 = vpop.f32.mrf.mxu0
      %v2209 = vadd.f32 %v2160, %v2208
      %v2210 = vpop.f32.mrf.mxu0
      %v2211 = vadd.f32 %v2162, %v2210
      %2212 = vmatmul.bf16.gmra.mxu0 %v864
      %v2213 = vpop.f32.mrf.mxu0
      %v2214 = vadd.f32 %v2165, %v2213
      %v2215 = vpop.f32.mrf.mxu0
      %v2216 = vadd.f32 %v2167, %v2215
      %2217 = vmatmul.bf16.gmra.mxu0 %v872
      %v2218 = vpop.f32.mrf.mxu0
      %v2219 = vadd.f32 %v2170, %v2218
      %v2220 = vpop.f32.mrf.mxu0
      %v2221 = vadd.f32 %v2172, %v2220
      %2222 = vmatmul.bf16.gmra.mxu0 %v880
      %v2223 = vpop.f32.mrf.mxu0
      %v2224 = vadd.f32 %v2175, %v2223
      %v2225 = vpop.f32.mrf.mxu0
      %v2226 = vadd.f32 %v2177, %v2225
      %2227 = vmatmul.bf16.gmra.mxu0 %v888
      %v2228 = vpop.f32.mrf.mxu0
      %v2229 = vadd.f32 %v2180, %v2228
      %v2230 = vpop.f32.mrf.mxu0
      %v2231 = vadd.f32 %v2182, %v2230
      %2232 = vdwg.mxu0
      %2233 = vmatpush.bf16.msra.mxu0 %v1435
      %2234 = vmatpush.bf16.msra.mxu0 %v1433
      %2235 = vmatpush.bf16.msra.mxu0 %v1431
      %2236 = vmatpush.bf16.msra.mxu0 %v1429
      %2237 = vmatpush.bf16.msra.mxu0 %v1427
      %2238 = vmatpush.bf16.msra.mxu0 %v1425
      %2239 = vmatpush.bf16.msra.mxu0 %v1423
      %2240 = vmatpush.bf16.msra.mxu0 %v1421
      %2241 = vmatmul.bf16.gmra.mxu0 %v833
      %v2242 = vpop.f32.mrf.mxu0
      %v2243 = vadd.f32 %v2194, %v2242
      %v2244 = vpop.f32.mrf.mxu0
      %v2245 = vadd.f32 %v2196, %v2244
      %2246 = vmatmul.bf16.gmra.mxu0 %v841
      %v2247 = vpop.f32.mrf.mxu0
      %v2248 = vadd.f32 %v2199, %v2247
      %v2249 = vpop.f32.mrf.mxu0
      %v2250 = vadd.f32 %v2201, %v2249
      %2251 = vmatmul.bf16.gmra.mxu0 %v849
      %v2252 = vpop.f32.mrf.mxu0
      %v2253 = vadd.f32 %v2204, %v2252
      %v2254 = vpop.f32.mrf.mxu0
      %v2255 = vadd.f32 %v2206, %v2254
      %2256 = vmatmul.bf16.gmra.mxu0 %v857
      %v2257 = vpop.f32.mrf.mxu0
      %v2258 = vadd.f32 %v2209, %v2257
      %v2259 = vpop.f32.mrf.mxu0
      %v2260 = vadd.f32 %v2211, %v2259
      %2261 = vmatmul.bf16.gmra.mxu0 %v865
      %v2262 = vpop.f32.mrf.mxu0
      %v2263 = vadd.f32 %v2214, %v2262
      %v2264 = vpop.f32.mrf.mxu0
      %v2265 = vadd.f32 %v2216, %v2264
      %2266 = vmatmul.bf16.gmra.mxu0 %v873
      %v2267 = vpop.f32.mrf.mxu0
      %v2268 = vadd.f32 %v2219, %v2267
      %v2269 = vpop.f32.mrf.mxu0
      %v2270 = vadd.f32 %v2221, %v2269
      %2271 = vmatmul.bf16.gmra.mxu0 %v881
      %v2272 = vpop.f32.mrf.mxu0
      %v2273 = vadd.f32 %v2224, %v2272
      %v2274 = vpop.f32.mrf.mxu0
      %v2275 = vadd.f32 %v2226, %v2274
      %2276 = vmatmul.bf16.gmra.mxu0 %v889
      %v2277 = vpop.f32.mrf.mxu0
      %v2278 = vadd.f32 %v2229, %v2277
      %v2279 = vpop.f32.mrf.mxu0
      %v2280 = vadd.f32 %v2231, %v2279
      %2281 = vdwg.mxu0
      %2282 = vmatpush.bf16.msra.mxu0 %v1451
      %2283 = vmatpush.bf16.msra.mxu0 %v1449
      %2284 = vmatpush.bf16.msra.mxu0 %v1447
      %2285 = vmatpush.bf16.msra.mxu0 %v1445
      %2286 = vmatpush.bf16.msra.mxu0 %v1443
      %2287 = vmatpush.bf16.msra.mxu0 %v1441
      %2288 = vmatpush.bf16.msra.mxu0 %v1439
      %2289 = vmatpush.bf16.msra.mxu0 %v1437
      %2290 = vmatmul.bf16.gmra.mxu0 %v834
      %v2291 = vpop.f32.mrf.mxu0
      %v2292 = vadd.f32 %v2243, %v2291
      %v2293 = vpop.f32.mrf.mxu0
      %v2294 = vadd.f32 %v2245, %v2293
      %2295 = vmatmul.bf16.gmra.mxu0 %v842
      %v2296 = vpop.f32.mrf.mxu0
      %v2297 = vadd.f32 %v2248, %v2296
      %v2298 = vpop.f32.mrf.mxu0
      %v2299 = vadd.f32 %v2250, %v2298
      %2300 = vmatmul.bf16.gmra.mxu0 %v850
      %v2301 = vpop.f32.mrf.mxu0
      %v2302 = vadd.f32 %v2253, %v2301
      %v2303 = vpop.f32.mrf.mxu0
      %v2304 = vadd.f32 %v2255, %v2303
      %2305 = vmatmul.bf16.gmra.mxu0 %v858
      %v2306 = vpop.f32.mrf.mxu0
      %v2307 = vadd.f32 %v2258, %v2306
      %v2308 = vpop.f32.mrf.mxu0
      %v2309 = vadd.f32 %v2260, %v2308
      %2310 = vmatmul.bf16.gmra.mxu0 %v866
      %v2311 = vpop.f32.mrf.mxu0
      %v2312 = vadd.f32 %v2263, %v2311
      %v2313 = vpop.f32.mrf.mxu0
      %v2314 = vadd.f32 %v2265, %v2313
      %2315 = vmatmul.bf16.gmra.mxu0 %v874
      %v2316 = vpop.f32.mrf.mxu0
      %v2317 = vadd.f32 %v2268, %v2316
      %v2318 = vpop.f32.mrf.mxu0
      %v2319 = vadd.f32 %v2270, %v2318
      %2320 = vmatmul.bf16.gmra.mxu0 %v882
      %v2321 = vpop.f32.mrf.mxu0
      %v2322 = vadd.f32 %v2273, %v2321
      %v2323 = vpop.f32.mrf.mxu0
      %v2324 = vadd.f32 %v2275, %v2323
      %2325 = vmatmul.bf16.gmra.mxu0 %v890
      %v2326 = vpop.f32.mrf.mxu0
      %v2327 = vadd.f32 %v2278, %v2326
      %v2328 = vpop.f32.mrf.mxu0
      %v2329 = vadd.f32 %v2280, %v2328
      %2330 = vdwg.mxu0
      %2331 = vmatpush.bf16.msra.mxu0 %v1467
      %2332 = vmatpush.bf16.msra.mxu0 %v1465
      %2333 = vmatpush.bf16.msra.mxu0 %v1463
      %2334 = vmatpush.bf16.msra.mxu0 %v1461
      %2335 = vmatpush.bf16.msra.mxu0 %v1459
      %2336 = vmatpush.bf16.msra.mxu0 %v1457
      %2337 = vmatpush.bf16.msra.mxu0 %v1455
      %2338 = vmatpush.bf16.msra.mxu0 %v1453
      %2339 = vmatmul.bf16.gmra.mxu0 %v835
      %v2340 = vpop.f32.mrf.mxu0
      %v2341 = vadd.f32 %v2292, %v2340
      %v2342 = vpop.f32.mrf.mxu0
      %v2343 = vadd.f32 %v2294, %v2342
      %2344 = vmatmul.bf16.gmra.mxu0 %v843
      %v2345 = vpop.f32.mrf.mxu0
      %v2346 = vadd.f32 %v2297, %v2345
      %v2347 = vpop.f32.mrf.mxu0
      %v2348 = vadd.f32 %v2299, %v2347
      %2349 = vmatmul.bf16.gmra.mxu0 %v851
      %v2350 = vpop.f32.mrf.mxu0
      %v2351 = vadd.f32 %v2302, %v2350
      %v2352 = vpop.f32.mrf.mxu0
      %v2353 = vadd.f32 %v2304, %v2352
      %2354 = vmatmul.bf16.gmra.mxu0 %v859
      %v2355 = vpop.f32.mrf.mxu0
      %v2356 = vadd.f32 %v2307, %v2355
      %v2357 = vpop.f32.mrf.mxu0
      %v2358 = vadd.f32 %v2309, %v2357
      %2359 = vmatmul.bf16.gmra.mxu0 %v867
      %v2360 = vpop.f32.mrf.mxu0
      %v2361 = vadd.f32 %v2312, %v2360
      %v2362 = vpop.f32.mrf.mxu0
      %v2363 = vadd.f32 %v2314, %v2362
      %2364 = vmatmul.bf16.gmra.mxu0 %v875
      %v2365 = vpop.f32.mrf.mxu0
      %v2366 = vadd.f32 %v2317, %v2365
      %v2367 = vpop.f32.mrf.mxu0
      %v2368 = vadd.f32 %v2319, %v2367
      %2369 = vmatmul.bf16.gmra.mxu0 %v883
      %v2370 = vpop.f32.mrf.mxu0
      %v2371 = vadd.f32 %v2322, %v2370
      %v2372 = vpop.f32.mrf.mxu0
      %v2373 = vadd.f32 %v2324, %v2372
      %2374 = vmatmul.bf16.gmra.mxu0 %v891
      %v2375 = vpop.f32.mrf.mxu0
      %v2376 = vadd.f32 %v2327, %v2375
      %v2377 = vpop.f32.mrf.mxu0
      %v2378 = vadd.f32 %v2329, %v2377
      %2379 = vdwg.mxu0
      %v2380 = vadd.f32 %v412, %v1949
      %v2381 = vadd.f32 %v413, %v2341
      %v2382 = vadd.f32 %v414, %v1951
      %v2383 = vadd.f32 %v415, %v2343
      %v2384 = vadd.f32 %v416, %v1954
      %v2385 = vadd.f32 %v417, %v2346
      %v2386 = vadd.f32 %v418, %v1956
      %v2387 = vadd.f32 %v419, %v2348
      %v2388 = vadd.f32 %v420, %v1959
      %v2389 = vadd.f32 %v421, %v2351
      %v2390 = vadd.f32 %v422, %v1961
      %v2391 = vadd.f32 %v423, %v2353
      %v2392 = vadd.f32 %v424, %v1964
      %v2393 = vadd.f32 %v425, %v2356
      %v2394 = vadd.f32 %v426, %v1966
      %v2395 = vadd.f32 %v427, %v2358
      %v2396 = vadd.f32 %v428, %v1969
      %v2397 = vadd.f32 %v429, %v2361
      %v2398 = vadd.f32 %v430, %v1971
      %v2399 = vadd.f32 %v431, %v2363
      %v2400 = vadd.f32 %v432, %v1974
      %v2401 = vadd.f32 %v433, %v2366
      %v2402 = vadd.f32 %v434, %v1976
      %v2403 = vadd.f32 %v435, %v2368
      %v2404 = vadd.f32 %v436, %v1979
      %v2405 = vadd.f32 %v437, %v2371
      %v2406 = vadd.f32 %v438, %v1981
      %v2407 = vadd.f32 %v439, %v2373
      %v2408 = vadd.f32 %v440, %v1984
      %v2409 = vadd.f32 %v441, %v2376
      %v2410 = vadd.f32 %v442, %v1986
      %v2411 = vadd.f32 %v443, %v2378
      %2412 = vst [vmem:[#allocation2] sm:$0xff] %v2380
      %2413 = vst [vmem:[#allocation2 + $0x8] sm:$0xff] %v2381
      %2414 = vst [vmem:[#allocation2 + $0x10] sm:$0xff] %v2382
      %2415 = vst [vmem:[#allocation2 + $0x18] sm:$0xff] %v2383
      %2416 = vst [vmem:[#allocation2 + $0x20] sm:$0xff] %v2384
      %2417 = vst [vmem:[#allocation2 + $0x28] sm:$0xff] %v2385
      %2418 = vst [vmem:[#allocation2 + $0x30] sm:$0xff] %v2386
      %2419 = vst [vmem:[#allocation2 + $0x38] sm:$0xff] %v2387
      %2420 = vst [vmem:[#allocation2 + $0x40] sm:$0xff] %v2388
      %2421 = vst [vmem:[#allocation2 + $0x48] sm:$0xff] %v2389
      %2422 = vst [vmem:[#allocation2 + $0x50] sm:$0xff] %v2390
      %2423 = vst [vmem:[#allocation2 + $0x58] sm:$0xff] %v2391
      %2424 = vst [vmem:[#allocation2 + $0x60] sm:$0xff] %v2392
      %2425 = vst [vmem:[#allocation2 + $0x68] sm:$0xff] %v2393
      %2426 = vst [vmem:[#allocation2 + $0x70] sm:$0xff] %v2394
      %2427 = vst [vmem:[#allocation2 + $0x78] sm:$0xff] %v2395
      %2428 = vst [vmem:[#allocation2 + $0x80] sm:$0xff] %v2396
      %2429 = vst [vmem:[#allocation2 + $0x88] sm:$0xff] %v2397
      %2430 = vst [vmem:[#allocation2 + $0x90] sm:$0xff] %v2398
      %2431 = vst [vmem:[#allocation2 + $0x98] sm:$0xff] %v2399
      %2432 = vst [vmem:[#allocation2 + $0xa0] sm:$0xff] %v2400
      %2433 = vst [vmem:[#allocation2 + $0xa8] sm:$0xff] %v2401
      %2434 = vst [vmem:[#allocation2 + $0xb0] sm:$0xff] %v2402
      %2435 = vst [vmem:[#allocation2 + $0xb8] sm:$0xff] %v2403
      %2436 = vst [vmem:[#allocation2 + $0xc0] sm:$0xff] %v2404
      %2437 = vst [vmem:[#allocation2 + $0xc8] sm:$0xff] %v2405
      %2438 = vst [vmem:[#allocation2 + $0xd0] sm:$0xff] %v2406
      %2439 = vst [vmem:[#allocation2 + $0xd8] sm:$0xff] %v2407
      %2440 = vst [vmem:[#allocation2 + $0xe0] sm:$0xff] %v2408
      %2441 = vst [vmem:[#allocation2 + $0xe8] sm:$0xff] %v2409
      %2442 = vst [vmem:[#allocation2 + $0xf0] sm:$0xff] %v2410
      %2443 = vst [vmem:[#allocation2 + $0xf8] sm:$0xff] %v2411
      // Predicated region
      $region41: #{hourglass_forward.4} parent=35 // pred_check
        %p2444 = pneg %p376
      $region42: #{hourglass_forward.4} parent=35 // pred_check_branch
        %2446 = sbr.rel (%p2444) target = $region44
      $region43: #{hourglass_forward.4} parent=35 // pred_region
        %v2447 = vld [vmem:[#allocation2] sm:$0xff]
        %v2448 = vld [vmem:[#allocation2 + $0x8] sm:$0xff]
        %v2449 = vld [vmem:[#allocation2 + $0x10] sm:$0xff]
        %v2450 = vld [vmem:[#allocation2 + $0x18] sm:$0xff]
        %v2451 = vld [vmem:[#allocation2 + $0x20] sm:$0xff]
        %v2452 = vld [vmem:[#allocation2 + $0x28] sm:$0xff]
        %v2453 = vld [vmem:[#allocation2 + $0x30] sm:$0xff]
        %v2454 = vld [vmem:[#allocation2 + $0x38] sm:$0xff]
        %v2455 = vld [vmem:[#allocation2 + $0x40] sm:$0xff]
        %v2456 = vld [vmem:[#allocation2 + $0x48] sm:$0xff]
        %v2457 = vld [vmem:[#allocation2 + $0x50] sm:$0xff]
        %v2458 = vld [vmem:[#allocation2 + $0x58] sm:$0xff]
        %v2459 = vld [vmem:[#allocation2 + $0x60] sm:$0xff]
        %v2460 = vld [vmem:[#allocation2 + $0x68] sm:$0xff]
        %v2461 = vld [vmem:[#allocation2 + $0x70] sm:$0xff]
        %v2462 = vld [vmem:[#allocation2 + $0x78] sm:$0xff]
        %v2463 = vld [vmem:[#allocation2 + $0x80] sm:$0xff]
        %v2464 = vld [vmem:[#allocation2 + $0x88] sm:$0xff]
        %v2465 = vld [vmem:[#allocation2 + $0x90] sm:$0xff]
        %v2466 = vld [vmem:[#allocation2 + $0x98] sm:$0xff]
        %v2467 = vld [vmem:[#allocation2 + $0xa0] sm:$0xff]
        %v2468 = vld [vmem:[#allocation2 + $0xa8] sm:$0xff]
        %v2469 = vld [vmem:[#allocation2 + $0xb0] sm:$0xff]
        %v2470 = vld [vmem:[#allocation2 + $0xb8] sm:$0xff]
        %v2471 = vld [vmem:[#allocation2 + $0xc0] sm:$0xff]
        %v2472 = vld [vmem:[#allocation2 + $0xc8] sm:$0xff]
        %v2473 = vld [vmem:[#allocation2 + $0xd0] sm:$0xff]
        %v2474 = vld [vmem:[#allocation2 + $0xd8] sm:$0xff]
        %v2475 = vld [vmem:[#allocation2 + $0xe0] sm:$0xff]
        %v2476 = vld [vmem:[#allocation2 + $0xe8] sm:$0xff]
        %v2477 = vld [vmem:[#allocation2 + $0xf0] sm:$0xff]
        %v2478 = vld [vmem:[#allocation2 + $0xf8] sm:$0xff]
        %v2479 = vld [vmem:[%s353] sm:$0x3]
        %v2481 = vperm.slane %v2479, 0
        %v2482 = vperm.slane %v2479, 1
        %v2485 = vmul.f32 %v2447, %v2481
        %v2486 = vmul.f32 %v2448, %v2482
        %v2487 = vmul.f32 %v2449, %v2481
        %v2488 = vmul.f32 %v2450, %v2482
        %v2489 = vmul.f32 %v2451, %v2481
        %v2490 = vmul.f32 %v2452, %v2482
        %v2491 = vmul.f32 %v2453, %v2481
        %v2492 = vmul.f32 %v2454, %v2482
        %v2493 = vmul.f32 %v2455, %v2481
        %v2494 = vmul.f32 %v2456, %v2482
        %v2495 = vmul.f32 %v2457, %v2481
        %v2496 = vmul.f32 %v2458, %v2482
        %v2497 = vmul.f32 %v2459, %v2481
        %v2498 = vmul.f32 %v2460, %v2482
        %v2499 = vmul.f32 %v2461, %v2481
        %v2500 = vmul.f32 %v2462, %v2482
        %v2501 = vmul.f32 %v2463, %v2481
        %v2502 = vmul.f32 %v2464, %v2482
        %v2503 = vmul.f32 %v2465, %v2481
        %v2504 = vmul.f32 %v2466, %v2482
        %v2505 = vmul.f32 %v2467, %v2481
        %v2506 = vmul.f32 %v2468, %v2482
        %v2507 = vmul.f32 %v2469, %v2481
        %v2508 = vmul.f32 %v2470, %v2482
        %v2509 = vmul.f32 %v2471, %v2481
        %v2510 = vmul.f32 %v2472, %v2482
        %v2511 = vmul.f32 %v2473, %v2481
        %v2512 = vmul.f32 %v2474, %v2482
        %v2513 = vmul.f32 %v2475, %v2481
        %v2514 = vmul.f32 %v2476, %v2482
        %v2515 = vmul.f32 %v2477, %v2481
        %v2516 = vmul.f32 %v2478, %v2482
        %v2517 = vld [vmem:[%s358] sm:$0x3]
        %v2519 = vperm.slane %v2517, 0
        %v2520 = vperm.slane %v2517, 1
        %v2523 = vadd.f32 %v2485, %v2519
        %v2524 = vadd.f32 %v2486, %v2520
        %v2525 = vadd.f32 %v2487, %v2519
        %v2526 = vadd.f32 %v2488, %v2520
        %v2527 = vadd.f32 %v2489, %v2519
        %v2528 = vadd.f32 %v2490, %v2520
        %v2529 = vadd.f32 %v2491, %v2519
        %v2530 = vadd.f32 %v2492, %v2520
        %v2531 = vadd.f32 %v2493, %v2519
        %v2532 = vadd.f32 %v2494, %v2520
        %v2533 = vadd.f32 %v2495, %v2519
        %v2534 = vadd.f32 %v2496, %v2520
        %v2535 = vadd.f32 %v2497, %v2519
        %v2536 = vadd.f32 %v2498, %v2520
        %v2537 = vadd.f32 %v2499, %v2519
        %v2538 = vadd.f32 %v2500, %v2520
        %v2539 = vadd.f32 %v2501, %v2519
        %v2540 = vadd.f32 %v2502, %v2520
        %v2541 = vadd.f32 %v2503, %v2519
        %v2542 = vadd.f32 %v2504, %v2520
        %v2543 = vadd.f32 %v2505, %v2519
        %v2544 = vadd.f32 %v2506, %v2520
        %v2545 = vadd.f32 %v2507, %v2519
        %v2546 = vadd.f32 %v2508, %v2520
        %v2547 = vadd.f32 %v2509, %v2519
        %v2548 = vadd.f32 %v2510, %v2520
        %v2549 = vadd.f32 %v2511, %v2519
        %v2550 = vadd.f32 %v2512, %v2520
        %v2551 = vadd.f32 %v2513, %v2519
        %v2552 = vadd.f32 %v2514, %v2520
        %v2553 = vadd.f32 %v2515, %v2519
        %v2554 = vadd.f32 %v2516, %v2520
        %v2555 = vmax.f32 %v2523, 0.0
        %v2556 = vmax.f32 %v2524, 0.0
        %v2557 = vmax.f32 %v2525, 0.0
        %v2558 = vmax.f32 %v2526, 0.0
        %v2559 = vmax.f32 %v2527, 0.0
        %v2560 = vmax.f32 %v2528, 0.0
        %v2561 = vmax.f32 %v2529, 0.0
        %v2562 = vmax.f32 %v2530, 0.0
        %v2563 = vmax.f32 %v2531, 0.0
        %v2564 = vmax.f32 %v2532, 0.0
        %v2565 = vmax.f32 %v2533, 0.0
        %v2566 = vmax.f32 %v2534, 0.0
        %v2567 = vmax.f32 %v2535, 0.0
        %v2568 = vmax.f32 %v2536, 0.0
        %v2569 = vmax.f32 %v2537, 0.0
        %v2570 = vmax.f32 %v2538, 0.0
        %v2571 = vmax.f32 %v2539, 0.0
        %v2572 = vmax.f32 %v2540, 0.0
        %v2573 = vmax.f32 %v2541, 0.0
        %v2574 = vmax.f32 %v2542, 0.0
        %v2575 = vmax.f32 %v2543, 0.0
        %v2576 = vmax.f32 %v2544, 0.0
        %v2577 = vmax.f32 %v2545, 0.0
        %v2578 = vmax.f32 %v2546, 0.0
        %v2579 = vmax.f32 %v2547, 0.0
        %v2580 = vmax.f32 %v2548, 0.0
        %v2581 = vmax.f32 %v2549, 0.0
        %v2582 = vmax.f32 %v2550, 0.0
        %v2583 = vmax.f32 %v2551, 0.0
        %v2584 = vmax.f32 %v2552, 0.0
        %v2585 = vmax.f32 %v2553, 0.0
        %v2586 = vmax.f32 %v2554, 0.0
        %v2587 = vpack.c.bf16 %v2556, %v2555
        %v2588 = vpack.c.bf16 %v2558, %v2557
        %v2589 = vpack.c.bf16 %v2560, %v2559
        %v2590 = vpack.c.bf16 %v2562, %v2561
        %v2591 = vpack.c.bf16 %v2564, %v2563
        %v2592 = vpack.c.bf16 %v2566, %v2565
        %v2593 = vpack.c.bf16 %v2568, %v2567
        %v2594 = vpack.c.bf16 %v2570, %v2569
        %v2595 = vpack.c.bf16 %v2572, %v2571
        %v2596 = vpack.c.bf16 %v2574, %v2573
        %v2597 = vpack.c.bf16 %v2576, %v2575
        %v2598 = vpack.c.bf16 %v2578, %v2577
        %v2599 = vpack.c.bf16 %v2580, %v2579
        %v2600 = vpack.c.bf16 %v2582, %v2581
        %v2601 = vpack.c.bf16 %v2584, %v2583
        %v2602 = vpack.c.bf16 %v2586, %v2585
        %2603 = vst [vmem:[%s373] sm:$0xff] %v2587
        %2604 = vst [vmem:[%s373 + $0x8] sm:$0xff] %v2588
        %2605 = vst [vmem:[%s373 + $0x10] sm:$0xff] %v2589
        %2606 = vst [vmem:[%s373 + $0x18] sm:$0xff] %v2590
        %2607 = vst [vmem:[%s373 + $0x20] sm:$0xff] %v2591
        %2608 = vst [vmem:[%s373 + $0x28] sm:$0xff] %v2592
        %2609 = vst [vmem:[%s373 + $0x30] sm:$0xff] %v2593
        %2610 = vst [vmem:[%s373 + $0x38] sm:$0xff] %v2594
        %2611 = vst [vmem:[%s373 + $0x40] sm:$0xff] %v2595
        %2612 = vst [vmem:[%s373 + $0x48] sm:$0xff] %v2596
        %2613 = vst [vmem:[%s373 + $0x50] sm:$0xff] %v2597
        %2614 = vst [vmem:[%s373 + $0x58] sm:$0xff] %v2598
        %2615 = vst [vmem:[%s373 + $0x60] sm:$0xff] %v2599
        %2616 = vst [vmem:[%s373 + $0x68] sm:$0xff] %v2600
        %2617 = vst [vmem:[%s373 + $0x70] sm:$0xff] %v2601
        %2618 = vst [vmem:[%s373 + $0x78] sm:$0xff] %v2602
      $region44: #{hourglass_forward.4} parent=35 // pred_fallthru
        _
      %s2619 = smul.u32 16, %s22
      %s2620 = smul.u32 2, %s23
      %p2621 = scmp.lt.s32.totalorder %s21, 3
      %s2622 = scalar_select %p2621, %s21, 3
      %p2623 = scmp.lt.s32.totalorder %s2619, 15
      %s2624 = scalar_select %p2623, %s2619, 15
      %p2625 = scmp.lt.s32.totalorder %s2620, 1
      %s2626 = scalar_select %p2625, %s2620, 1
      %s2627 = smul.addr %s2624, 2
      %s2628 = sadd.s32 %s2626, %s2627
      %s2629 = smul.addr %s2622, 32
      %s2630 = sadd.s32 %s2628, %s2629
      %s2631 = smul.addr %s2630, 4
      %s2632 = scalar_lea.vmem %s4, %s2631
      // Predicated region
      $region45: #{hourglass_forward.4} parent=35 // pred_check
        %p2633 = pneg %p175
      $region46: #{hourglass_forward.4} parent=35 // pred_check_branch
        %2635 = sbr.rel (%p2633) target = $region48
      $region47: #{hourglass_forward.4} parent=35 // pred_region
        %s2636 = smul.u32 16, %s22
        %s2637 = smul.u32 2, %s23
      $region48: #{hourglass_forward.4} parent=35 // pred_fallthru
        _
    $region36: #{hourglass_forward.4} parent=5 // pred_fallthru
      _
    %p2638 = scmp.le.s32.totalorder 2, %s10
    // Predicated region
    $region49: #{hourglass_forward.4} parent=5 // pred_check
      %p2639 = pneg %p2638
    $region50: #{hourglass_forward.4} parent=5 // pred_check_branch
      %2641 = sbr.rel (%p2639) target = $region52
    $region51: #{hourglass_forward.4} parent=5 // pred_region
      %s2642 = ssub.s32 %s10, 2
      // Predicated region
      $region53: #{hourglass_forward.4} parent=51 // pred_check
        %p2643 = pneg %p181
      $region54: #{hourglass_forward.4} parent=51 // pred_check_branch
        %2645 = sbr.rel (%p2643) target = $region56
      $region55: #{hourglass_forward.4} parent=51 // pred_region
        %s2646 = smul.u32 16, %s26
        %s2647 = smul.u32 2, %s27
        %p2648 = scmp.lt.s32.totalorder %s25, 3
        %s2649 = scalar_select %p2648, %s25, 3
        %p2650 = scmp.lt.s32.totalorder %s2646, 15
        %s2651 = scalar_select %p2650, %s2646, 15
        %p2652 = scmp.lt.s32.totalorder %s2647, 1
        %s2653 = scalar_select %p2652, %s2647, 1
        %s2654 = smul.addr %s2651, 2
        %s2655 = sadd.s32 %s2653, %s2654
        %s2656 = smul.addr %s2649, 32
        %s2657 = sadd.s32 %s2655, %s2656
        %s2658 = smul.addr %s2657, 4
        %s2659 = scalar_lea.vmem %s4, %s2658
      $region56: #{hourglass_forward.4} parent=51 // pred_fallthru
        _
    $region52: #{hourglass_forward.4} parent=5 // pred_fallthru
      _
  $region6: #{hourglass_forward.4} parent=0 // loop_footer
    %s14 = sadd.s32 1, %s10
  $region7: #{hourglass_forward.4} parent=0 // loop_footer_branch
    %9 = sbr.rel target = $region3
  $region8: #{hourglass_forward.4} parent=0 // loop_exit
    _

// kernel: hourglass_forward.5
$region0: #{hourglass_forward.5}
  #allocation0 [shape = 'u32[]', space=smem, size = 0x4, offset = 0x4, fixed_abs, tag = 'smem constant byte address 0x4 - core index']
  #allocation1 [shape = 'u32[72,128]{1,0:T(1,128)}', space=vmem, size = 0x9000, scoped, tag = 'internal scratch']
  #allocation2 [shape = 'f32[256,256]{1,0:T(8,128)}', space=vmem, size = 0x40000, scoped, tag = 'scratch operand']
  %s0 = inlined_call_operand.vmem [shape: bf16[4,512,1024], index: 0, kind: input, shape index: {}]
  %s1 = inlined_call_operand.vmem [shape: bf16[4,1024,256], index: 1, kind: input, shape index: {}]
  %s2 = inlined_call_operand.vmem [shape: f32[1,256], index: 2, kind: input, shape index: {}]
  %s3 = inlined_call_operand.vmem [shape: f32[1,256], index: 3, kind: input, shape index: {}]
  %s4 = inlined_call_operand.vmem [shape: bf16[256,128], index: 4, kind: input, shape index: {}]
  %s5 = inlined_call_operand.vmem [shape: f32[1,128], index: 5, kind: input, shape index: {}]
  %s6 = inlined_call_operand.vmem [shape: f32[4,512,128], index: 6, kind: output, shape index: {}]
  %s7 = sld [smem:[#allocation0]]
  $region65: #{hourglass_forward.5} parent=0
    _
  %s9 = ssub.s32 1, %s7
  %s10 = scalar_select 0, %s9, %s7
  loop: start=0, step=1, limit=10
  $region2: #{hourglass_forward.5} parent=0 // loop_pre_header
    _
  $region3: #{hourglass_forward.5} parent=0 // loop_header
    %s12 = sphi 0, %s16
    %p13 = scmp.ge.s32.totalorder %s12, 10
    %s19 = sphi 0, %s45
    %s20 = sphi 0, %s41
    %s21 = sphi 0, %s37
    %s22 = sphi 0, %s33
    %s23 = sphi 0, %s19
    %s24 = sphi 0, %s20
    %s25 = sphi 0, %s21
    %s26 = sphi 0, %s22
    %s27 = sphi 0, %s23
    %s28 = sphi 0, %s24
    %s29 = sphi 0, %s25
    %s30 = sphi 0, %s26
    %s52 = sphi 0, %s54
    %s55 = sphi 0, %s52
    %s56 = sphi 0, %s55
    %s72 = sphi 0, %s56
    %s82 = sphi 0, %s84
    %s85 = sphi 0, %s82
    %s86 = sphi 0, %s85
    %s102 = sphi 0, %s86
    %s108 = sphi 0, %s110
    %s111 = sphi 0, %s108
    %s112 = sphi 0, %s111
    %s128 = sphi 0, %s112
    %s134 = sphi 0, %s136
    %s137 = sphi 0, %s134
    %s138 = sphi 0, %s137
    %s154 = sphi 0, %s138
    %s158 = sphi 0, %s158
    %s160 = sphi 0, %s158
    %s161 = sphi 0, %s160
    %s175 = sphi 0, %s161
    %s179 = sphi 0, %s179
    %s181 = sphi 0, %s179
    %s182 = sphi 0, %s181
    %s196 = sphi 0, %s182
    %s204 = sphi 0, %s206
    %s207 = sphi 0, %s204
    %s208 = sphi 0, %s207
    %s224 = sphi 0, %s208
  $region4: #{hourglass_forward.5} parent=0 // loop_header_branch
    %15 = sbr.rel (%p13) target = $region8
  $region5: #{hourglass_forward.5} parent=0 // loop_body
    %s17 = ssub.s32 %s12, 1
    %s18 = ssub.s32 %s12, 2
    %s31 = sadd.s32 1, %s22
    %p32 = scmp.ge.s32.totalorder %s31, 1
    %s33 = scalar_select %p32, 0, %s31
    %s34 = sadd.s32 1, %s21
    %s35 = scalar_select %p32, %s34, %s21
    %p36 = scmp.ge.s32.totalorder %s35, 1
    %s37 = scalar_select %p36, 0, %s35
    %s38 = sadd.s32 1, %s20
    %s39 = scalar_select %p36, %s38, %s20
    %p40 = scmp.ge.s32.totalorder %s39, 2
    %s41 = scalar_select %p40, 0, %s39
    %s42 = sadd.s32 1, %s19
    %s43 = scalar_select %p40, %s42, %s19
    %p44 = scmp.ge.s32.totalorder %s43, 4
    %s45 = scalar_select %p44, 0, %s43
    %s46 = ssub.s32 %s19, %s45
    %s47 = ssub.s32 %s20, %s41
    %s48 = sor.u32 %s46, %s47
    %s49 = ssub.s32 %s22, %s33
    %s50 = sor.u32 %s48, %s49
    %p51 = scmp.eq.s32.totalorder %s50, 0
    %s53 = sadd.s32 %s52, 1
    %s54 = scalar_select %p51, %s52, %s53
    %p57 = pneg %p51
    %p58 = scmp.eq.s32.totalorder %s12, 7
    %p59 = por %p57, %p58
    %p60 = scmp.ne.s32.totalorder %s52, %s55
    %p61 = scmp.eq.s32.totalorder %s12, 0
    %p62 = por %p60, %p61
    %p63 = scmp.ne.s32.totalorder %s52, %s55
    %p64 = scmp.eq.s32.totalorder %s17, 7
    %p65 = por %p63, %p64
    %p66 = scmp.ne.s32.totalorder %s55, %s56
    %p67 = scmp.eq.s32.totalorder %s17, 0
    %p68 = por %p66, %p67
    %p69 = scmp.ne.s32.totalorder %s55, %s56
    %p70 = scmp.eq.s32.totalorder %s18, 7
    %p71 = por %p69, %p70
    %p73 = scmp.ne.s32.totalorder %s56, %s72
    %p74 = scmp.eq.s32.totalorder %s18, 0
    %p75 = por %p73, %p74
    %s76 = ssub.s32 %s19, %s45
    %s77 = ssub.s32 %s22, %s33
    %s78 = sor.u32 %s76, %s77
    %s79 = ssub.s32 %s21, %s37
    %s80 = sor.u32 %s78, %s79
    %p81 = scmp.eq.s32.totalorder %s80, 0
    %s83 = sadd.s32 %s82, 1
    %s84 = scalar_select %p81, %s82, %s83
    %p87 = pneg %p81
    %p88 = scmp.eq.s32.totalorder %s12, 7
    %p89 = por %p87, %p88
    %p90 = scmp.ne.s32.totalorder %s82, %s85
    %p91 = scmp.eq.s32.totalorder %s12, 0
    %p92 = por %p90, %p91
    %p93 = scmp.ne.s32.totalorder %s82, %s85
    %p94 = scmp.eq.s32.totalorder %s17, 7
    %p95 = por %p93, %p94
    %p96 = scmp.ne.s32.totalorder %s85, %s86
    %p97 = scmp.eq.s32.totalorder %s17, 0
    %p98 = por %p96, %p97
    %p99 = scmp.ne.s32.totalorder %s85, %s86
    %p100 = scmp.eq.s32.totalorder %s18, 7
    %p101 = por %p99, %p100
    %p103 = scmp.ne.s32.totalorder %s86, %s102
    %p104 = scmp.eq.s32.totalorder %s18, 0
    %p105 = por %p103, %p104
    %s106 = ssub.s32 %s21, %s37
    %p107 = scmp.eq.s32.totalorder %s106, 0
    %s109 = sadd.s32 %s108, 1
    %s110 = scalar_select %p107, %s108, %s109
    %p113 = pneg %p107
    %p114 = scmp.eq.s32.totalorder %s12, 7
    %p115 = por %p113, %p114
    %p116 = scmp.ne.s32.totalorder %s108, %s111
    %p117 = scmp.eq.s32.totalorder %s12, 0
    %p118 = por %p116, %p117
    %p119 = scmp.ne.s32.totalorder %s108, %s111
    %p120 = scmp.eq.s32.totalorder %s17, 7
    %p121 = por %p119, %p120
    %p122 = scmp.ne.s32.totalorder %s111, %s112
    %p123 = scmp.eq.s32.totalorder %s17, 0
    %p124 = por %p122, %p123
    %p125 = scmp.ne.s32.totalorder %s111, %s112
    %p126 = scmp.eq.s32.totalorder %s18, 7
    %p127 = por %p125, %p126
    %p129 = scmp.ne.s32.totalorder %s112, %s128
    %p130 = scmp.eq.s32.totalorder %s18, 0
    %p131 = por %p129, %p130
    %s132 = ssub.s32 %s21, %s37
    %p133 = scmp.eq.s32.totalorder %s132, 0
    %s135 = sadd.s32 %s134, 1
    %s136 = scalar_select %p133, %s134, %s135
    %p139 = pneg %p133
    %p140 = scmp.eq.s32.totalorder %s12, 7
    %p141 = por %p139, %p140
    %p142 = scmp.ne.s32.totalorder %s134, %s137
    %p143 = scmp.eq.s32.totalorder %s12, 0
    %p144 = por %p142, %p143
    %p145 = scmp.ne.s32.totalorder %s134, %s137
    %p146 = scmp.eq.s32.totalorder %s17, 7
    %p147 = por %p145, %p146
    %p148 = scmp.ne.s32.totalorder %s137, %s138
    %p149 = scmp.eq.s32.totalorder %s17, 0
    %p150 = por %p148, %p149
    %p151 = scmp.ne.s32.totalorder %s137, %s138
    %p152 = scmp.eq.s32.totalorder %s18, 7
    %p153 = por %p151, %p152
    %p155 = scmp.ne.s32.totalorder %s138, %s154
    %p156 = scmp.eq.s32.totalorder %s18, 0
    %p157 = por %p155, %p156
    %s159 = sadd.s32 %s158, 1
    %p162 = scmp.eq.s32.totalorder %s12, 7
    %p163 = scmp.ne.s32.totalorder %s158, %s160
    %p164 = scmp.eq.s32.totalorder %s12, 0
    %p165 = por %p163, %p164
    %p166 = scmp.ne.s32.totalorder %s158, %s160
    %p167 = scmp.eq.s32.totalorder %s17, 7
    %p168 = por %p166, %p167
    %p169 = scmp.ne.s32.totalorder %s160, %s161
    %p170 = scmp.eq.s32.totalorder %s17, 0
    %p171 = por %p169, %p170
    %p172 = scmp.ne.s32.totalorder %s160, %s161
    %p173 = scmp.eq.s32.totalorder %s18, 7
    %p174 = por %p172, %p173
    %p176 = scmp.ne.s32.totalorder %s161, %s175
    %p177 = scmp.eq.s32.totalorder %s18, 0
    %p178 = por %p176, %p177
    %s180 = sadd.s32 %s179, 1
    %p183 = scmp.eq.s32.totalorder %s12, 7
    %p184 = scmp.ne.s32.totalorder %s179, %s181
    %p185 = scmp.eq.s32.totalorder %s12, 0
    %p186 = por %p184, %p185
    %p187 = scmp.ne.s32.totalorder %s179, %s181
    %p188 = scmp.eq.s32.totalorder %s17, 7
    %p189 = por %p187, %p188
    %p190 = scmp.ne.s32.totalorder %s181, %s182
    %p191 = scmp.eq.s32.totalorder %s17, 0
    %p192 = por %p190, %p191
    %p193 = scmp.ne.s32.totalorder %s181, %s182
    %p194 = scmp.eq.s32.totalorder %s18, 7
    %p195 = por %p193, %p194
    %p197 = scmp.ne.s32.totalorder %s182, %s196
    %p198 = scmp.eq.s32.totalorder %s18, 0
    %p199 = por %p197, %p198
    %s200 = ssub.s32 %s19, %s45
    %s201 = ssub.s32 %s20, %s41
    %s202 = sor.u32 %s200, %s201
    %p203 = scmp.eq.s32.totalorder %s202, 0
    %s205 = sadd.s32 %s204, 1
    %s206 = scalar_select %p203, %s204, %s205
    %p209 = pneg %p203
    %p210 = scmp.eq.s32.totalorder %s12, 7
    %p211 = por %p209, %p210
    %p212 = scmp.ne.s32.totalorder %s204, %s207
    %p213 = scmp.eq.s32.totalorder %s12, 0
    %p214 = por %p212, %p213
    %p215 = scmp.ne.s32.totalorder %s204, %s207
    %p216 = scmp.eq.s32.totalorder %s17, 7
    %p217 = por %p215, %p216
    %p218 = scmp.ne.s32.totalorder %s207, %s208
    %p219 = scmp.eq.s32.totalorder %s17, 0
    %p220 = por %p218, %p219
    %p221 = scmp.ne.s32.totalorder %s207, %s208
    %p222 = scmp.eq.s32.totalorder %s18, 7
    %p223 = por %p221, %p222
    %p225 = scmp.ne.s32.totalorder %s208, %s224
    %p226 = scmp.eq.s32.totalorder %s18, 0
    %p227 = por %p225, %p226
    %p228 = scmp.le.s32.totalorder 1, %s12
    %p229 = scmp.lt.s32.totalorder %s12, 9
    %p230 = pnand %p228, %p229
    %p231 = pneg %p230
    // Predicated region
    $region9: #{hourglass_forward.5} parent=5 // pred_check
      _
    $region10: #{hourglass_forward.5} parent=5 // pred_check_branch
      %233 = sbr.rel (%p230) target = $region12
    $region11: #{hourglass_forward.5} parent=5 // pred_region
      %s234 = ssub.s32 %s12, 1
      // Predicated region
      $region13: #{hourglass_forward.5} parent=11 // pred_check
        %p235 = pneg %p124
      $region14: #{hourglass_forward.5} parent=11 // pred_check_branch
        %237 = sbr.rel (%p235) target = $region16
      $region15: #{hourglass_forward.5} parent=11 // pred_region
        %s238 = smul.u32 2, %s25
        %p239 = scmp.lt.s32.totalorder %s238, 1
        %s240 = scalar_select %p239, %s238, 1
        %s241 = scalar_lea.vmem %s2, %s240
        %s242 = smul.u32 2, %s25
      $region16: #{hourglass_forward.5} parent=11 // pred_fallthru
        _
      // Predicated region
      $region17: #{hourglass_forward.5} parent=11 // pred_check
        %p243 = pneg %p150
      $region18: #{hourglass_forward.5} parent=11 // pred_check_branch
        %245 = sbr.rel (%p243) target = $region20
      $region19: #{hourglass_forward.5} parent=11 // pred_region
        %s246 = smul.u32 2, %s25
        %p247 = scmp.lt.s32.totalorder %s246, 1
        %s248 = scalar_select %p247, %s246, 1
        %s249 = scalar_lea.vmem %s3, %s248
        %s250 = smul.u32 2, %s25
      $region20: #{hourglass_forward.5} parent=11 // pred_fallthru
        _
      // Predicated region
      $region21: #{hourglass_forward.5} parent=11 // pred_check
        %p251 = pneg %p171
      $region22: #{hourglass_forward.5} parent=11 // pred_check_branch
        %253 = sbr.rel (%p251) target = $region24
      $region23: #{hourglass_forward.5} parent=11 // pred_region
        _
      $region24: #{hourglass_forward.5} parent=11 // pred_fallthru
        _
      // Predicated region
      $region25: #{hourglass_forward.5} parent=11 // pred_check
        %p254 = pneg %p192
      $region26: #{hourglass_forward.5} parent=11 // pred_check_branch
        %256 = sbr.rel (%p254) target = $region28
      $region27: #{hourglass_forward.5} parent=11 // pred_region
        _
      $region28: #{hourglass_forward.5} parent=11 // pred_fallthru
        _
    $region12: #{hourglass_forward.5} parent=5 // pred_fallthru
      _
    %p257 = scmp.lt.s32.totalorder %s12, 8
    // Predicated region
    $region29: #{hourglass_forward.5} parent=5 // pred_check
      %p258 = pneg %p257
    $region30: #{hourglass_forward.5} parent=5 // pred_check_branch
      %260 = sbr.rel (%p258) target = $region32
    $region31: #{hourglass_forward.5} parent=5 // pred_region
      // Predicated region
      $region33: #{hourglass_forward.5} parent=31 // pred_check
        %p261 = pneg %p62
      $region34: #{hourglass_forward.5} parent=31 // pred_check_branch
        %263 = sbr.rel (%p261) target = $region36
      $region35: #{hourglass_forward.5} parent=31 // pred_region
        %s264 = smul.u32 32, %s20
        %s265 = smul.u32 8, %s22
        %p266 = scmp.lt.s32.totalorder %s19, 3
        %s267 = scalar_select %p266, %s19, 3
        %p268 = scmp.lt.s32.totalorder %s264, 63
        %s269 = scalar_select %p268, %s264, 63
        %p270 = scmp.lt.s32.totalorder %s265, 7
        %s271 = scalar_select %p270, %s265, 7
        %s272 = smul.addr %s269, 8
        %s273 = sadd.s32 %s271, %s272
        %s274 = smul.addr %s267, 512
        %s275 = sadd.s32 %s273, %s274
        %s276 = smul.addr %s275, 4
        %s277 = scalar_lea.vmem %s0, %s276
        %s278 = smul.u32 32, %s20
        %s279 = smul.u32 8, %s22
      $region36: #{hourglass_forward.5} parent=31 // pred_fallthru
        _
      // Predicated region
      $region37: #{hourglass_forward.5} parent=31 // pred_check
        %p280 = pneg %p92
      $region38: #{hourglass_forward.5} parent=31 // pred_check_branch
        %282 = sbr.rel (%p280) target = $region40
      $region39: #{hourglass_forward.5} parent=31 // pred_region
        %s283 = smul.u32 128, %s22
        %s284 = smul.u32 2, %s21
        %p285 = scmp.lt.s32.totalorder %s19, 3
        %s286 = scalar_select %p285, %s19, 3
        %p287 = scmp.lt.s32.totalorder %s283, 127
        %s288 = scalar_select %p287, %s283, 127
        %p289 = scmp.lt.s32.totalorder %s284, 1
        %s290 = scalar_select %p289, %s284, 1
        %s291 = smul.addr %s288, 2
        %s292 = sadd.s32 %s290, %s291
        %s293 = smul.addr %s286, 256
        %s294 = sadd.s32 %s292, %s293
        %s295 = smul.addr %s294, 4
        %s296 = scalar_lea.vmem %s1, %s295
        %s297 = smul.u32 128, %s22
        %s298 = smul.u32 2, %s21
      $region40: #{hourglass_forward.5} parent=31 // pred_fallthru
        _
    $region32: #{hourglass_forward.5} parent=5 // pred_fallthru
      _
    %p299 = scmp.le.s32.totalorder 1, %s12
    %p300 = scmp.lt.s32.totalorder %s12, 9
    %p301 = pnand %p299, %p300
    %p302 = pneg %p301
    // Predicated region
    $region41: #{hourglass_forward.5} parent=5 // pred_check
      _
    $region42: #{hourglass_forward.5} parent=5 // pred_check_branch
      %304 = sbr.rel (%p301) target = $region44
    $region43: #{hourglass_forward.5} parent=5 // pred_region
      %s305 = ssub.s32 %s12, 1
      %s306 = smul.u32 32, %s24
      %s307 = smul.u32 8, %s26
      %p308 = scmp.lt.s32.totalorder %s23, 3
      %s309 = scalar_select %p308, %s23, 3
      %p310 = scmp.lt.s32.totalorder %s306, 63
      %s311 = scalar_select %p310, %s306, 63
      %p312 = scmp.lt.s32.totalorder %s307, 7
      %s313 = scalar_select %p312, %s307, 7
      %s314 = smul.addr %s311, 8
      %s315 = sadd.s32 %s313, %s314
      %s316 = smul.addr %s309, 512
      %s317 = sadd.s32 %s315, %s316
      %s318 = smul.addr %s317, 4
      %s319 = scalar_lea.vmem %s0, %s318
      %p320 = pneg %p68
      %p321 = pneg %p65
      %s322 = smul.u32 128, %s26
      %s323 = smul.u32 2, %s25
      %p324 = scmp.lt.s32.totalorder %s23, 3
      %s325 = scalar_select %p324, %s23, 3
      %p326 = scmp.lt.s32.totalorder %s322, 127
      %s327 = scalar_select %p326, %s322, 127
      %p328 = scmp.lt.s32.totalorder %s323, 1
      %s329 = scalar_select %p328, %s323, 1
      %s330 = smul.addr %s327, 2
      %s331 = sadd.s32 %s329, %s330
      %s332 = smul.addr %s325, 256
      %s333 = sadd.s32 %s331, %s332
      %s334 = smul.addr %s333, 4
      %s335 = scalar_lea.vmem %s1, %s334
      %p336 = pneg %p98
      %p337 = pneg %p95
      %s338 = smul.u32 2, %s25
      %p339 = scmp.lt.s32.totalorder %s338, 1
      %s340 = scalar_select %p339, %s338, 1
      %s341 = scalar_lea.vmem %s2, %s340
      %p342 = pneg %p124
      %p343 = pneg %p121
      %s344 = smul.u32 2, %s25
      %p345 = scmp.lt.s32.totalorder %s344, 1
      %s346 = scalar_select %p345, %s344, 1
      %s347 = scalar_lea.vmem %s3, %s346
      %p348 = pneg %p150
      %p349 = pneg %p147
      %p350 = pneg %p171
      %p351 = pneg %p168
      %p352 = pneg %p192
      %p353 = pneg %p189
      %p354 = pneg %p220
      %p355 = pneg %p217
      %s356 = smul.u32 32, %s24
      %p357 = scmp.lt.s32.totalorder %s23, 3
      %s358 = scalar_select %p357, %s23, 3
      %p359 = scmp.lt.s32.totalorder %s356, 63
      %s360 = scalar_select %p359, %s356, 63
      %s361 = smul.addr %s358, 64
      %s362 = sadd.s32 %s360, %s361
      %s363 = smul.addr %s362, 8
      %s364 = scalar_lea.vmem %s6, %s363
      %s365 = smul.u32 32, %s24
      %s366 = smul.u32 8, %s26
      %p367 = scmp.lt.s32.totalorder %s23, 3
      %s368 = scalar_select %p367, %s23, 3
      %p369 = scmp.lt.s32.totalorder %s365, 63
      %s370 = scalar_select %p369, %s365, 63
      %p371 = scmp.lt.s32.totalorder %s366, 7
      %s372 = scalar_select %p371, %s366, 7
      %s373 = smul.addr %s370, 8
      %s374 = sadd.s32 %s372, %s373
      %s375 = smul.addr %s368, 512
      %s376 = sadd.s32 %s374, %s375
      %s377 = smul.addr %s376, 4
      %s378 = scalar_lea.vmem %s0, %s377
      %s379 = smul.u32 32, %s24
      %s380 = smul.u32 8, %s26
      %s381 = smul.u32 128, %s26
      %s382 = smul.u32 2, %s25
      %p383 = scmp.lt.s32.totalorder %s23, 3
      %s384 = scalar_select %p383, %s23, 3
      %p385 = scmp.lt.s32.totalorder %s381, 127
      %s386 = scalar_select %p385, %s381, 127
      %p387 = scmp.lt.s32.totalorder %s382, 1
      %s388 = scalar_select %p387, %s382, 1
      %s389 = smul.addr %s386, 2
      %s390 = sadd.s32 %s388, %s389
      %s391 = smul.addr %s384, 256
      %s392 = sadd.s32 %s390, %s391
      %s393 = smul.addr %s392, 4
      %s394 = scalar_lea.vmem %s1, %s393
      %s395 = smul.u32 128, %s26
      %s396 = smul.u32 2, %s25
      %s397 = smul.u32 2, %s25
      %p398 = scmp.lt.s32.totalorder %s397, 1
      %s399 = scalar_select %p398, %s397, 1
      %s400 = scalar_lea.vmem %s2, %s399
      %s401 = smul.u32 2, %s25
      %s402 = smul.u32 2, %s25
      %p403 = scmp.lt.s32.totalorder %s402, 1
      %s404 = scalar_select %p403, %s402, 1
      %s405 = scalar_lea.vmem %s3, %s404
      %s406 = smul.u32 2, %s25
      %s407 = smul.u32 32, %s24
      %p408 = scmp.lt.s32.totalorder %s23, 3
      %s409 = scalar_select %p408, %s23, 3
      %p410 = scmp.lt.s32.totalorder %s407, 63
      %s411 = scalar_select %p410, %s407, 63
      %s412 = smul.addr %s409, 64
      %s413 = sadd.s32 %s411, %s412
      %s414 = smul.addr %s413, 8
      %s415 = scalar_lea.vmem %s6, %s414
      %s416 = smul.u32 32, %s24
      %p417 = scmp.eq.s32.totalorder %s26, 0
      // Predicated region
      $region45: #{hourglass_forward.5} parent=43 // pred_check
        %p418 = pneg %p417
      $region46: #{hourglass_forward.5} parent=43 // pred_check_branch
        %420 = sbr.rel (%p418) target = $region48
      $region47: #{hourglass_forward.5} parent=43 // pred_region
        %421 = vst [vmem:[#allocation2] sm:$0xff] 0.0
        %422 = vst [vmem:[#allocation2 + $0x8] sm:$0xff] 0.0
        %423 = vst [vmem:[#allocation2 + $0x10] sm:$0xff] 0.0
        %424 = vst [vmem:[#allocation2 + $0x18] sm:$0xff] 0.0
        %425 = vst [vmem:[#allocation2 + $0x20] sm:$0xff] 0.0
        %426 = vst [vmem:[#allocation2 + $0x28] sm:$0xff] 0.0
        %427 = vst [vmem:[#allocation2 + $0x30] sm:$0xff] 0.0
        %428 = vst [vmem:[#allocation2 + $0x38] sm:$0xff] 0.0
        %429 = vst [vmem:[#allocation2 + $0x40] sm:$0xff] 0.0
        %430 = vst [vmem:[#allocation2 + $0x48] sm:$0xff] 0.0
        %431 = vst [vmem:[#allocation2 + $0x50] sm:$0xff] 0.0
        %432 = vst [vmem:[#allocation2 + $0x58] sm:$0xff] 0.0
        %433 = vst [vmem:[#allocation2 + $0x60] sm:$0xff] 0.0
        %434 = vst [vmem:[#allocation2 + $0x68] sm:$0xff] 0.0
        %435 = vst [vmem:[#allocation2 + $0x70] sm:$0xff] 0.0
        %436 = vst [vmem:[#allocation2 + $0x78] sm:$0xff] 0.0
        %437 = vst [vmem:[#allocation2 + $0x80] sm:$0xff] 0.0
        %438 = vst [vmem:[#allocation2 + $0x88] sm:$0xff] 0.0
        %439 = vst [vmem:[#allocation2 + $0x90] sm:$0xff] 0.0
        %440 = vst [vmem:[#allocation2 + $0x98] sm:$0xff] 0.0
        %441 = vst [vmem:[#allocation2 + $0xa0] sm:$0xff] 0.0
        %442 = vst [vmem:[#allocation2 + $0xa8] sm:$0xff] 0.0
        %443 = vst [vmem:[#allocation2 + $0xb0] sm:$0xff] 0.0
        %444 = vst [vmem:[#allocation2 + $0xb8] sm:$0xff] 0.0
        %445 = vst [vmem:[#allocation2 + $0xc0] sm:$0xff] 0.0
        %446 = vst [vmem:[#allocation2 + $0xc8] sm:$0xff] 0.0
        %447 = vst [vmem:[#allocation2 + $0xd0] sm:$0xff] 0.0
        %448 = vst [vmem:[#allocation2 + $0xd8] sm:$0xff] 0.0
        %449 = vst [vmem:[#allocation2 + $0xe0] sm:$0xff] 0.0
        %450 = vst [vmem:[#allocation2 + $0xe8] sm:$0xff] 0.0
        %451 = vst [vmem:[#allocation2 + $0xf0] sm:$0xff] 0.0
        %452 = vst [vmem:[#allocation2 + $0xf8] sm:$0xff] 0.0
        %453 = vst [vmem:[#allocation2 + $0x100] sm:$0xff] 0.0
        %454 = vst [vmem:[#allocation2 + $0x108] sm:$0xff] 0.0
        %455 = vst [vmem:[#allocation2 + $0x110] sm:$0xff] 0.0
        %456 = vst [vmem:[#allocation2 + $0x118] sm:$0xff] 0.0
        %457 = vst [vmem:[#allocation2 + $0x120] sm:$0xff] 0.0
        %458 = vst [vmem:[#allocation2 + $0x128] sm:$0xff] 0.0
        %459 = vst [vmem:[#allocation2 + $0x130] sm:$0xff] 0.0
        %460 = vst [vmem:[#allocation2 + $0x138] sm:$0xff] 0.0
        %461 = vst [vmem:[#allocation2 + $0x140] sm:$0xff] 0.0
        %462 = vst [vmem:[#allocation2 + $0x148] sm:$0xff] 0.0
        %463 = vst [vmem:[#allocation2 + $0x150] sm:$0xff] 0.0
        %464 = vst [vmem:[#allocation2 + $0x158] sm:$0xff] 0.0
        %465 = vst [vmem:[#allocation2 + $0x160] sm:$0xff] 0.0
        %466 = vst [vmem:[#allocation2 + $0x168] sm:$0xff] 0.0
        %467 = vst [vmem:[#allocation2 + $0x170] sm:$0xff] 0.0
        %468 = vst [vmem:[#allocation2 + $0x178] sm:$0xff] 0.0
        %469 = vst [vmem:[#allocation2 + $0x180] sm:$0xff] 0.0
        %470 = vst [vmem:[#allocation2 + $0x188] sm:$0xff] 0.0
        %471 = vst [vmem:[#allocation2 + $0x190] sm:$0xff] 0.0
        %472 = vst [vmem:[#allocation2 + $0x198] sm:$0xff] 0.0
        %473 = vst [vmem:[#allocation2 + $0x1a0] sm:$0xff] 0.0
        %474 = vst [vmem:[#allocation2 + $0x1a8] sm:$0xff] 0.0
        %475 = vst [vmem:[#allocation2 + $0x1b0] sm:$0xff] 0.0
        %476 = vst [vmem:[#allocation2 + $0x1b8] sm:$0xff] 0.0
        %477 = vst [vmem:[#allocation2 + $0x1c0] sm:$0xff] 0.0
        %478 = vst [vmem:[#allocation2 + $0x1c8] sm:$0xff] 0.0
        %479 = vst [vmem:[#allocation2 + $0x1d0] sm:$0xff] 0.0
        %480 = vst [vmem:[#allocation2 + $0x1d8] sm:$0xff] 0.0
        %481 = vst [vmem:[#allocation2 + $0x1e0] sm:$0xff] 0.0
        %482 = vst [vmem:[#allocation2 + $0x1e8] sm:$0xff] 0.0
        %483 = vst [vmem:[#allocation2 + $0x1f0] sm:$0xff] 0.0
        %484 = vst [vmem:[#allocation2 + $0x1f8] sm:$0xff] 0.0
      $region48: #{hourglass_forward.5} parent=43 // pred_fallthru
        _
      %v485 = vld [vmem:[#allocation2] sm:$0xff]
      %v486 = vld [vmem:[#allocation2 + $0x8] sm:$0xff]
      %v487 = vld [vmem:[#allocation2 + $0x10] sm:$0xff]
      %v488 = vld [vmem:[#allocation2 + $0x18] sm:$0xff]
      %v489 = vld [vmem:[#allocation2 + $0x20] sm:$0xff]
      %v490 = vld [vmem:[#allocation2 + $0x28] sm:$0xff]
      %v491 = vld [vmem:[#allocation2 + $0x30] sm:$0xff]
      %v492 = vld [vmem:[#allocation2 + $0x38] sm:$0xff]
      %v493 = vld [vmem:[#allocation2 + $0x40] sm:$0xff]
      %v494 = vld [vmem:[#allocation2 + $0x48] sm:$0xff]
      %v495 = vld [vmem:[#allocation2 + $0x50] sm:$0xff]
      %v496 = vld [vmem:[#allocation2 + $0x58] sm:$0xff]
      %v497 = vld [vmem:[#allocation2 + $0x60] sm:$0xff]
      %v498 = vld [vmem:[#allocation2 + $0x68] sm:$0xff]
      %v499 = vld [vmem:[#allocation2 + $0x70] sm:$0xff]
      %v500 = vld [vmem:[#allocation2 + $0x78] sm:$0xff]
      %v501 = vld [vmem:[#allocation2 + $0x80] sm:$0xff]
      %v502 = vld [vmem:[#allocation2 + $0x88] sm:$0xff]
      %v503 = vld [vmem:[#allocation2 + $0x90] sm:$0xff]
      %v504 = vld [vmem:[#allocation2 + $0x98] sm:$0xff]
      %v505 = vld [vmem:[#allocation2 + $0xa0] sm:$0xff]
      %v506 = vld [vmem:[#allocation2 + $0xa8] sm:$0xff]
      %v507 = vld [vmem:[#allocation2 + $0xb0] sm:$0xff]
      %v508 = vld [vmem:[#allocation2 + $0xb8] sm:$0xff]
      %v509 = vld [vmem:[#allocation2 + $0xc0] sm:$0xff]
      %v510 = vld [vmem:[#allocation2 + $0xc8] sm:$0xff]
      %v511 = vld [vmem:[#allocation2 + $0xd0] sm:$0xff]
      %v512 = vld [vmem:[#allocation2 + $0xd8] sm:$0xff]
      %v513 = vld [vmem:[#allocation2 + $0xe0] sm:$0xff]
      %v514 = vld [vmem:[#allocation2 + $0xe8] sm:$0xff]
      %v515 = vld [vmem:[#allocation2 + $0xf0] sm:$0xff]
      %v516 = vld [vmem:[#allocation2 + $0xf8] sm:$0xff]
      %v517 = vld [vmem:[#allocation2 + $0x100] sm:$0xff]
      %v518 = vld [vmem:[#allocation2 + $0x108] sm:$0xff]
      %v519 = vld [vmem:[#allocation2 + $0x110] sm:$0xff]
      %v520 = vld [vmem:[#allocation2 + $0x118] sm:$0xff]
      %v521 = vld [vmem:[#allocation2 + $0x120] sm:$0xff]
      %v522 = vld [vmem:[#allocation2 + $0x128] sm:$0xff]
      %v523 = vld [vmem:[#allocation2 + $0x130] sm:$0xff]
      %v524 = vld [vmem:[#allocation2 + $0x138] sm:$0xff]
      %v525 = vld [vmem:[#allocation2 + $0x140] sm:$0xff]
      %v526 = vld [vmem:[#allocation2 + $0x148] sm:$0xff]
      %v527 = vld [vmem:[#allocation2 + $0x150] sm:$0xff]
      %v528 = vld [vmem:[#allocation2 + $0x158] sm:$0xff]
      %v529 = vld [vmem:[#allocation2 + $0x160] sm:$0xff]
      %v530 = vld [vmem:[#allocation2 + $0x168] sm:$0xff]
      %v531 = vld [vmem:[#allocation2 + $0x170] sm:$0xff]
      %v532 = vld [vmem:[#allocation2 + $0x178] sm:$0xff]
      %v533 = vld [vmem:[#allocation2 + $0x180] sm:$0xff]
      %v534 = vld [vmem:[#allocation2 + $0x188] sm:$0xff]
      %v535 = vld [vmem:[#allocation2 + $0x190] sm:$0xff]
      %v536 = vld [vmem:[#allocation2 + $0x198] sm:$0xff]
      %v537 = vld [vmem:[#allocation2 + $0x1a0] sm:$0xff]
      %v538 = vld [vmem:[#allocation2 + $0x1a8] sm:$0xff]
      %v539 = vld [vmem:[#allocation2 + $0x1b0] sm:$0xff]
      %v540 = vld [vmem:[#allocation2 + $0x1b8] sm:$0xff]
      %v541 = vld [vmem:[#allocation2 + $0x1c0] sm:$0xff]
      %v542 = vld [vmem:[#allocation2 + $0x1c8] sm:$0xff]
      %v543 = vld [vmem:[#allocation2 + $0x1d0] sm:$0xff]
      %v544 = vld [vmem:[#allocation2 + $0x1d8] sm:$0xff]
      %v545 = vld [vmem:[#allocation2 + $0x1e0] sm:$0xff]
      %v546 = vld [vmem:[#allocation2 + $0x1e8] sm:$0xff]
      %v547 = vld [vmem:[#allocation2 + $0x1f0] sm:$0xff]
      %v548 = vld [vmem:[#allocation2 + $0x1f8] sm:$0xff]
      %v549 = vld [vmem:[%s378] sm:$0xff]
      %v550 = vld [vmem:[%s378 + $0x8] sm:$0xff]
      %v551 = vld [vmem:[%s378 + $0x10] sm:$0xff]
      %v552 = vld [vmem:[%s378 + $0x18] sm:$0xff]
      %v553 = vld [vmem:[%s378 + $0x20] sm:$0xff]
      %v554 = vld [vmem:[%s378 + $0x28] sm:$0xff]
      %v555 = vld [vmem:[%s378 + $0x30] sm:$0xff]
      %v556 = vld [vmem:[%s378 + $0x38] sm:$0xff]
      %v557 = vld [vmem:[%s378 + $0x40] sm:$0xff]
      %v558 = vld [vmem:[%s378 + $0x48] sm:$0xff]
      %v559 = vld [vmem:[%s378 + $0x50] sm:$0xff]
      %v560 = vld [vmem:[%s378 + $0x58] sm:$0xff]
      %v561 = vld [vmem:[%s378 + $0x60] sm:$0xff]
      %v562 = vld [vmem:[%s378 + $0x68] sm:$0xff]
      %v563 = vld [vmem:[%s378 + $0x70] sm:$0xff]
      %v564 = vld [vmem:[%s378 + $0x78] sm:$0xff]
      %v565 = vld [vmem:[%s378 + $0x80] sm:$0xff]
      %v566 = vld [vmem:[%s378 + $0x88] sm:$0xff]
      %v567 = vld [vmem:[%s378 + $0x90] sm:$0xff]
      %v568 = vld [vmem:[%s378 + $0x98] sm:$0xff]
      %v569 = vld [vmem:[%s378 + $0xa0] sm:$0xff]
      %v570 = vld [vmem:[%s378 + $0xa8] sm:$0xff]
      %v571 = vld [vmem:[%s378 + $0xb0] sm:$0xff]
      %v572 = vld [vmem:[%s378 + $0xb8] sm:$0xff]
      %v573 = vld [vmem:[%s378 + $0xc0] sm:$0xff]
      %v574 = vld [vmem:[%s378 + $0xc8] sm:$0xff]
      %v575 = vld [vmem:[%s378 + $0xd0] sm:$0xff]
      %v576 = vld [vmem:[%s378 + $0xd8] sm:$0xff]
      %v577 = vld [vmem:[%s378 + $0xe0] sm:$0xff]
      %v578 = vld [vmem:[%s378 + $0xe8] sm:$0xff]
      %v579 = vld [vmem:[%s378 + $0xf0] sm:$0xff]
      %v580 = vld [vmem:[%s378 + $0xf8] sm:$0xff]
      %v581 = vld [vmem:[%s378 + $0x100] sm:$0xff]
      %v582 = vld [vmem:[%s378 + $0x108] sm:$0xff]
      %v583 = vld [vmem:[%s378 + $0x110] sm:$0xff]
      %v584 = vld [vmem:[%s378 + $0x118] sm:$0xff]
      %v585 = vld [vmem:[%s378 + $0x120] sm:$0xff]
      %v586 = vld [vmem:[%s378 + $0x128] sm:$0xff]
      %v587 = vld [vmem:[%s378 + $0x130] sm:$0xff]
      %v588 = vld [vmem:[%s378 + $0x138] sm:$0xff]
      %v589 = vld [vmem:[%s378 + $0x140] sm:$0xff]
      %v590 = vld [vmem:[%s378 + $0x148] sm:$0xff]
      %v591 = vld [vmem:[%s378 + $0x150] sm:$0xff]
      %v592 = vld [vmem:[%s378 + $0x158] sm:$0xff]
      %v593 = vld [vmem:[%s378 + $0x160] sm:$0xff]
      %v594 = vld [vmem:[%s378 + $0x168] sm:$0xff]
      %v595 = vld [vmem:[%s378 + $0x170] sm:$0xff]
      %v596 = vld [vmem:[%s378 + $0x178] sm:$0xff]
      %v597 = vld [vmem:[%s378 + $0x180] sm:$0xff]
      %v598 = vld [vmem:[%s378 + $0x188] sm:$0xff]
      %v599 = vld [vmem:[%s378 + $0x190] sm:$0xff]
      %v600 = vld [vmem:[%s378 + $0x198] sm:$0xff]
      %v601 = vld [vmem:[%s378 + $0x1a0] sm:$0xff]
      %v602 = vld [vmem:[%s378 + $0x1a8] sm:$0xff]
      %v603 = vld [vmem:[%s378 + $0x1b0] sm:$0xff]
      %v604 = vld [vmem:[%s378 + $0x1b8] sm:$0xff]
      %v605 = vld [vmem:[%s378 + $0x1c0] sm:$0xff]
      %v606 = vld [vmem:[%s378 + $0x1c8] sm:$0xff]
      %v607 = vld [vmem:[%s378 + $0x1d0] sm:$0xff]
      %v608 = vld [vmem:[%s378 + $0x1d8] sm:$0xff]
      %v609 = vld [vmem:[%s378 + $0x1e0] sm:$0xff]
      %v610 = vld [vmem:[%s378 + $0x1e8] sm:$0xff]
      %v611 = vld [vmem:[%s378 + $0x1f0] sm:$0xff]
      %v612 = vld [vmem:[%s378 + $0x1f8] sm:$0xff]
      %v613 = vld [vmem:[%s378 + $0x200] sm:$0xff]
      %v614 = vld [vmem:[%s378 + $0x208] sm:$0xff]
      %v615 = vld [vmem:[%s378 + $0x210] sm:$0xff]
      %v616 = vld [vmem:[%s378 + $0x218] sm:$0xff]
      %v617 = vld [vmem:[%s378 + $0x220] sm:$0xff]
      %v618 = vld [vmem:[%s378 + $0x228] sm:$0xff]
      %v619 = vld [vmem:[%s378 + $0x230] sm:$0xff]
      %v620 = vld [vmem:[%s378 + $0x238] sm:$0xff]
      %v621 = vld [vmem:[%s378 + $0x240] sm:$0xff]
      %v622 = vld [vmem:[%s378 + $0x248] sm:$0xff]
      %v623 = vld [vmem:[%s378 + $0x250] sm:$0xff]
      %v624 = vld [vmem:[%s378 + $0x258] sm:$0xff]
      %v625 = vld [vmem:[%s378 + $0x260] sm:$0xff]
      %v626 = vld [vmem:[%s378 + $0x268] sm:$0xff]
      %v627 = vld [vmem:[%s378 + $0x270] sm:$0xff]
      %v628 = vld [vmem:[%s378 + $0x278] sm:$0xff]
      %v629 = vld [vmem:[%s378 + $0x280] sm:$0xff]
      %v630 = vld [vmem:[%s378 + $0x288] sm:$0xff]
      %v631 = vld [vmem:[%s378 + $0x290] sm:$0xff]
      %v632 = vld [vmem:[%s378 + $0x298] sm:$0xff]
      %v633 = vld [vmem:[%s378 + $0x2a0] sm:$0xff]
      %v634 = vld [vmem:[%s378 + $0x2a8] sm:$0xff]
      %v635 = vld [vmem:[%s378 + $0x2b0] sm:$0xff]
      %v636 = vld [vmem:[%s378 + $0x2b8] sm:$0xff]
      %v637 = vld [vmem:[%s378 + $0x2c0] sm:$0xff]
      %v638 = vld [vmem:[%s378 + $0x2c8] sm:$0xff]
      %v639 = vld [vmem:[%s378 + $0x2d0] sm:$0xff]
      %v640 = vld [vmem:[%s378 + $0x2d8] sm:$0xff]
      %v641 = vld [vmem:[%s378 + $0x2e0] sm:$0xff]
      %v642 = vld [vmem:[%s378 + $0x2e8] sm:$0xff]
      %v643 = vld [vmem:[%s378 + $0x2f0] sm:$0xff]
      %v644 = vld [vmem:[%s378 + $0x2f8] sm:$0xff]
      %v645 = vld [vmem:[%s378 + $0x300] sm:$0xff]
      %v646 = vld [vmem:[%s378 + $0x308] sm:$0xff]
      %v647 = vld [vmem:[%s378 + $0x310] sm:$0xff]
      %v648 = vld [vmem:[%s378 + $0x318] sm:$0xff]
      %v649 = vld [vmem:[%s378 + $0x320] sm:$0xff]
      %v650 = vld [vmem:[%s378 + $0x328] sm:$0xff]
      %v651 = vld [vmem:[%s378 + $0x330] sm:$0xff]
      %v652 = vld [vmem:[%s378 + $0x338] sm:$0xff]
      %v653 = vld [vmem:[%s378 + $0x340] sm:$0xff]
      %v654 = vld [vmem:[%s378 + $0x348] sm:$0xff]
      %v655 = vld [vmem:[%s378 + $0x350] sm:$0xff]
      %v656 = vld [vmem:[%s378 + $0x358] sm:$0xff]
      %v657 = vld [vmem:[%s378 + $0x360] sm:$0xff]
      %v658 = vld [vmem:[%s378 + $0x368] sm:$0xff]
      %v659 = vld [vmem:[%s378 + $0x370] sm:$0xff]
      %v660 = vld [vmem:[%s378 + $0x378] sm:$0xff]
      %v661 = vld [vmem:[%s378 + $0x380] sm:$0xff]
      %v662 = vld [vmem:[%s378 + $0x388] sm:$0xff]
      %v663 = vld [vmem:[%s378 + $0x390] sm:$0xff]
      %v664 = vld [vmem:[%s378 + $0x398] sm:$0xff]
      %v665 = vld [vmem:[%s378 + $0x3a0] sm:$0xff]
      %v666 = vld [vmem:[%s378 + $0x3a8] sm:$0xff]
      %v667 = vld [vmem:[%s378 + $0x3b0] sm:$0xff]
      %v668 = vld [vmem:[%s378 + $0x3b8] sm:$0xff]
      %v669 = vld [vmem:[%s378 + $0x3c0] sm:$0xff]
      %v670 = vld [vmem:[%s378 + $0x3c8] sm:$0xff]
      %v671 = vld [vmem:[%s378 + $0x3d0] sm:$0xff]
      %v672 = vld [vmem:[%s378 + $0x3d8] sm:$0xff]
      %v673 = vld [vmem:[%s378 + $0x3e0] sm:$0xff]
      %v674 = vld [vmem:[%s378 + $0x3e8] sm:$0xff]
      %v675 = vld [vmem:[%s378 + $0x3f0] sm:$0xff]
      %v676 = vld [vmem:[%s378 + $0x3f8] sm:$0xff]
      %v677 = vld [vmem:[%s394] sm:$0xff]
      %v678 = vld [vmem:[%s394 + $0x8] sm:$0xff]
      %v679 = vld [vmem:[%s394 + $0x10] sm:$0xff]
      %v680 = vld [vmem:[%s394 + $0x18] sm:$0xff]
      %v681 = vld [vmem:[%s394 + $0x20] sm:$0xff]
      %v682 = vld [vmem:[%s394 + $0x28] sm:$0xff]
      %v683 = vld [vmem:[%s394 + $0x30] sm:$0xff]
      %v684 = vld [vmem:[%s394 + $0x38] sm:$0xff]
      %v685 = vld [vmem:[%s394 + $0x40] sm:$0xff]
      %v686 = vld [vmem:[%s394 + $0x48] sm:$0xff]
      %v687 = vld [vmem:[%s394 + $0x50] sm:$0xff]
      %v688 = vld [vmem:[%s394 + $0x58] sm:$0xff]
      %v689 = vld [vmem:[%s394 + $0x60] sm:$0xff]
      %v690 = vld [vmem:[%s394 + $0x68] sm:$0xff]
      %v691 = vld [vmem:[%s394 + $0x70] sm:$0xff]
      %v692 = vld [vmem:[%s394 + $0x78] sm:$0xff]
      %v693 = vld [vmem:[%s394 + $0x80] sm:$0xff]
      %v694 = vld [vmem:[%s394 + $0x88] sm:$0xff]
      %v695 = vld [vmem:[%s394 + $0x90] sm:$0xff]
      %v696 = vld [vmem:[%s394 + $0x98] sm:$0xff]
      %v697 = vld [vmem:[%s394 + $0xa0] sm:$0xff]
      %v698 = vld [vmem:[%s394 + $0xa8] sm:$0xff]
      %v699 = vld [vmem:[%s394 + $0xb0] sm:$0xff]
      %v700 = vld [vmem:[%s394 + $0xb8] sm:$0xff]
      %v701 = vld [vmem:[%s394 + $0xc0] sm:$0xff]
      %v702 = vld [vmem:[%s394 + $0xc8] sm:$0xff]
      %v703 = vld [vmem:[%s394 + $0xd0] sm:$0xff]
      %v704 = vld [vmem:[%s394 + $0xd8] sm:$0xff]
      %v705 = vld [vmem:[%s394 + $0xe0] sm:$0xff]
      %v706 = vld [vmem:[%s394 + $0xe8] sm:$0xff]
      %v707 = vld [vmem:[%s394 + $0xf0] sm:$0xff]
      %v708 = vld [vmem:[%s394 + $0xf8] sm:$0xff]
      %v709 = vld [vmem:[%s394 + $0x100] sm:$0xff]
      %v710 = vld [vmem:[%s394 + $0x108] sm:$0xff]
      %v711 = vld [vmem:[%s394 + $0x110] sm:$0xff]
      %v712 = vld [vmem:[%s394 + $0x118] sm:$0xff]
      %v713 = vld [vmem:[%s394 + $0x120] sm:$0xff]
      %v714 = vld [vmem:[%s394 + $0x128] sm:$0xff]
      %v715 = vld [vmem:[%s394 + $0x130] sm:$0xff]
      %v716 = vld [vmem:[%s394 + $0x138] sm:$0xff]
      %v717 = vld [vmem:[%s394 + $0x140] sm:$0xff]
      %v718 = vld [vmem:[%s394 + $0x148] sm:$0xff]
      %v719 = vld [vmem:[%s394 + $0x150] sm:$0xff]
      %v720 = vld [vmem:[%s394 + $0x158] sm:$0xff]
      %v721 = vld [vmem:[%s394 + $0x160] sm:$0xff]
      %v722 = vld [vmem:[%s394 + $0x168] sm:$0xff]
      %v723 = vld [vmem:[%s394 + $0x170] sm:$0xff]
      %v724 = vld [vmem:[%s394 + $0x178] sm:$0xff]
      %v725 = vld [vmem:[%s394 + $0x180] sm:$0xff]
      %v726 = vld [vmem:[%s394 + $0x188] sm:$0xff]
      %v727 = vld [vmem:[%s394 + $0x190] sm:$0xff]
      %v728 = vld [vmem:[%s394 + $0x198] sm:$0xff]
      %v729 = vld [vmem:[%s394 + $0x1a0] sm:$0xff]
      %v730 = vld [vmem:[%s394 + $0x1a8] sm:$0xff]
      %v731 = vld [vmem:[%s394 + $0x1b0] sm:$0xff]
      %v732 = vld [vmem:[%s394 + $0x1b8] sm:$0xff]
      %v733 = vld [vmem:[%s394 + $0x1c0] sm:$0xff]
      %v734 = vld [vmem:[%s394 + $0x1c8] sm:$0xff]
      %v735 = vld [vmem:[%s394 + $0x1d0] sm:$0xff]
      %v736 = vld [vmem:[%s394 + $0x1d8] sm:$0xff]
      %v737 = vld [vmem:[%s394 + $0x1e0] sm:$0xff]
      %v738 = vld [vmem:[%s394 + $0x1e8] sm:$0xff]
      %v739 = vld [vmem:[%s394 + $0x1f0] sm:$0xff]
      %v740 = vld [vmem:[%s394 + $0x1f8] sm:$0xff]
      %v741 = vld [vmem:[%s394 + $0x200] sm:$0xff]
      %v742 = vld [vmem:[%s394 + $0x208] sm:$0xff]
      %v743 = vld [vmem:[%s394 + $0x210] sm:$0xff]
      %v744 = vld [vmem:[%s394 + $0x218] sm:$0xff]
      %v745 = vld [vmem:[%s394 + $0x220] sm:$0xff]
      %v746 = vld [vmem:[%s394 + $0x228] sm:$0xff]
      %v747 = vld [vmem:[%s394 + $0x230] sm:$0xff]
      %v748 = vld [vmem:[%s394 + $0x238] sm:$0xff]
      %v749 = vld [vmem:[%s394 + $0x240] sm:$0xff]
      %v750 = vld [vmem:[%s394 + $0x248] sm:$0xff]
      %v751 = vld [vmem:[%s394 + $0x250] sm:$0xff]
      %v752 = vld [vmem:[%s394 + $0x258] sm:$0xff]
      %v753 = vld [vmem:[%s394 + $0x260] sm:$0xff]
      %v754 = vld [vmem:[%s394 + $0x268] sm:$0xff]
      %v755 = vld [vmem:[%s394 + $0x270] sm:$0xff]
      %v756 = vld [vmem:[%s394 + $0x278] sm:$0xff]
      %v757 = vld [vmem:[%s394 + $0x280] sm:$0xff]
      %v758 = vld [vmem:[%s394 + $0x288] sm:$0xff]
      %v759 = vld [vmem:[%s394 + $0x290] sm:$0xff]
      %v760 = vld [vmem:[%s394 + $0x298] sm:$0xff]
      %v761 = vld [vmem:[%s394 + $0x2a0] sm:$0xff]
      %v762 = vld [vmem:[%s394 + $0x2a8] sm:$0xff]
      %v763 = vld [vmem:[%s394 + $0x2b0] sm:$0xff]
      %v764 = vld [vmem:[%s394 + $0x2b8] sm:$0xff]
      %v765 = vld [vmem:[%s394 + $0x2c0] sm:$0xff]
      %v766 = vld [vmem:[%s394 + $0x2c8] sm:$0xff]
      %v767 = vld [vmem:[%s394 + $0x2d0] sm:$0xff]
      %v768 = vld [vmem:[%s394 + $0x2d8] sm:$0xff]
      %v769 = vld [vmem:[%s394 + $0x2e0] sm:$0xff]
      %v770 = vld [vmem:[%s394 + $0x2e8] sm:$0xff]
      %v771 = vld [vmem:[%s394 + $0x2f0] sm:$0xff]
      %v772 = vld [vmem:[%s394 + $0x2f8] sm:$0xff]
      %v773 = vld [vmem:[%s394 + $0x300] sm:$0xff]
      %v774 = vld [vmem:[%s394 + $0x308] sm:$0xff]
      %v775 = vld [vmem:[%s394 + $0x310] sm:$0xff]
      %v776 = vld [vmem:[%s394 + $0x318] sm:$0xff]
      %v777 = vld [vmem:[%s394 + $0x320] sm:$0xff]
      %v778 = vld [vmem:[%s394 + $0x328] sm:$0xff]
      %v779 = vld [vmem:[%s394 + $0x330] sm:$0xff]
      %v780 = vld [vmem:[%s394 + $0x338] sm:$0xff]
      %v781 = vld [vmem:[%s394 + $0x340] sm:$0xff]
      %v782 = vld [vmem:[%s394 + $0x348] sm:$0xff]
      %v783 = vld [vmem:[%s394 + $0x350] sm:$0xff]
      %v784 = vld [vmem:[%s394 + $0x358] sm:$0xff]
      %v785 = vld [vmem:[%s394 + $0x360] sm:$0xff]
      %v786 = vld [vmem:[%s394 + $0x368] sm:$0xff]
      %v787 = vld [vmem:[%s394 + $0x370] sm:$0xff]
      %v788 = vld [vmem:[%s394 + $0x378] sm:$0xff]
      %v789 = vld [vmem:[%s394 + $0x380] sm:$0xff]
      %v790 = vld [vmem:[%s394 + $0x388] sm:$0xff]
      %v791 = vld [vmem:[%s394 + $0x390] sm:$0xff]
      %v792 = vld [vmem:[%s394 + $0x398] sm:$0xff]
      %v793 = vld [vmem:[%s394 + $0x3a0] sm:$0xff]
      %v794 = vld [vmem:[%s394 + $0x3a8] sm:$0xff]
      %v795 = vld [vmem:[%s394 + $0x3b0] sm:$0xff]
      %v796 = vld [vmem:[%s394 + $0x3b8] sm:$0xff]
      %v797 = vld [vmem:[%s394 + $0x3c0] sm:$0xff]
      %v798 = vld [vmem:[%s394 + $0x3c8] sm:$0xff]
      %v799 = vld [vmem:[%s394 + $0x3d0] sm:$0xff]
      %v800 = vld [vmem:[%s394 + $0x3d8] sm:$0xff]
      %v801 = vld [vmem:[%s394 + $0x3e0] sm:$0xff]
      %v802 = vld [vmem:[%s394 + $0x3e8] sm:$0xff]
      %v803 = vld [vmem:[%s394 + $0x3f0] sm:$0xff]
      %v804 = vld [vmem:[%s394 + $0x3f8] sm:$0xff]
      %v933 = vunpack.c.l.b16 %v549
      %v934 = vunpack.c.h.b16 %v549
      %v935 = vunpack.c.l.b16 %v550
      %v936 = vunpack.c.h.b16 %v550
      %v937 = vunpack.c.l.b16 %v551
      %v938 = vunpack.c.h.b16 %v551
      %v939 = vunpack.c.l.b16 %v552
      %v940 = vunpack.c.h.b16 %v552
      %v941 = vunpack.c.l.b16 %v553
      %v942 = vunpack.c.h.b16 %v553
      %v943 = vunpack.c.l.b16 %v554
      %v944 = vunpack.c.h.b16 %v554
      %v945 = vunpack.c.l.b16 %v555
      %v946 = vunpack.c.h.b16 %v555
      %v947 = vunpack.c.l.b16 %v556
      %v948 = vunpack.c.h.b16 %v556
      %v949 = vunpack.c.l.b16 %v557
      %v950 = vunpack.c.h.b16 %v557
      %v951 = vunpack.c.l.b16 %v558
      %v952 = vunpack.c.h.b16 %v558
      %v953 = vunpack.c.l.b16 %v559
      %v954 = vunpack.c.h.b16 %v559
      %v955 = vunpack.c.l.b16 %v560
      %v956 = vunpack.c.h.b16 %v560
      %v957 = vunpack.c.l.b16 %v561
      %v958 = vunpack.c.h.b16 %v561
      %v959 = vunpack.c.l.b16 %v562
      %v960 = vunpack.c.h.b16 %v562
      %v961 = vunpack.c.l.b16 %v563
      %v962 = vunpack.c.h.b16 %v563
      %v963 = vunpack.c.l.b16 %v564
      %v964 = vunpack.c.h.b16 %v564
      %v965 = vunpack.c.l.b16 %v565
      %v966 = vunpack.c.h.b16 %v565
      %v967 = vunpack.c.l.b16 %v566
      %v968 = vunpack.c.h.b16 %v566
      %v969 = vunpack.c.l.b16 %v567
      %v970 = vunpack.c.h.b16 %v567
      %v971 = vunpack.c.l.b16 %v568
      %v972 = vunpack.c.h.b16 %v568
      %v973 = vunpack.c.l.b16 %v569
      %v974 = vunpack.c.h.b16 %v569
      %v975 = vunpack.c.l.b16 %v570
      %v976 = vunpack.c.h.b16 %v570
      %v977 = vunpack.c.l.b16 %v571
      %v978 = vunpack.c.h.b16 %v571
      %v979 = vunpack.c.l.b16 %v572
      %v980 = vunpack.c.h.b16 %v572
      %v981 = vunpack.c.l.b16 %v573
      %v982 = vunpack.c.h.b16 %v573
      %v983 = vunpack.c.l.b16 %v574
      %v984 = vunpack.c.h.b16 %v574
      %v985 = vunpack.c.l.b16 %v575
      %v986 = vunpack.c.h.b16 %v575
      %v987 = vunpack.c.l.b16 %v576
      %v988 = vunpack.c.h.b16 %v576
      %v989 = vunpack.c.l.b16 %v577
      %v990 = vunpack.c.h.b16 %v577
      %v991 = vunpack.c.l.b16 %v578
      %v992 = vunpack.c.h.b16 %v578
      %v993 = vunpack.c.l.b16 %v579
      %v994 = vunpack.c.h.b16 %v579
      %v995 = vunpack.c.l.b16 %v580
      %v996 = vunpack.c.h.b16 %v580
      %v997 = vunpack.c.l.b16 %v581
      %v998 = vunpack.c.h.b16 %v581
      %v999 = vunpack.c.l.b16 %v582
      %v1000 = vunpack.c.h.b16 %v582
      %v1001 = vunpack.c.l.b16 %v583
      %v1002 = vunpack.c.h.b16 %v583
      %v1003 = vunpack.c.l.b16 %v584
      %v1004 = vunpack.c.h.b16 %v584
      %v1005 = vunpack.c.l.b16 %v585
      %v1006 = vunpack.c.h.b16 %v585
      %v1007 = vunpack.c.l.b16 %v586
      %v1008 = vunpack.c.h.b16 %v586
      %v1009 = vunpack.c.l.b16 %v587
      %v1010 = vunpack.c.h.b16 %v587
      %v1011 = vunpack.c.l.b16 %v588
      %v1012 = vunpack.c.h.b16 %v588
      %v1013 = vunpack.c.l.b16 %v589
      %v1014 = vunpack.c.h.b16 %v589
      %v1015 = vunpack.c.l.b16 %v590
      %v1016 = vunpack.c.h.b16 %v590
      %v1017 = vunpack.c.l.b16 %v591
      %v1018 = vunpack.c.h.b16 %v591
      %v1019 = vunpack.c.l.b16 %v592
      %v1020 = vunpack.c.h.b16 %v592
      %v1021 = vunpack.c.l.b16 %v593
      %v1022 = vunpack.c.h.b16 %v593
      %v1023 = vunpack.c.l.b16 %v594
      %v1024 = vunpack.c.h.b16 %v594
      %v1025 = vunpack.c.l.b16 %v595
      %v1026 = vunpack.c.h.b16 %v595
      %v1027 = vunpack.c.l.b16 %v596
      %v1028 = vunpack.c.h.b16 %v596
      %v1029 = vunpack.c.l.b16 %v597
      %v1030 = vunpack.c.h.b16 %v597
      %v1031 = vunpack.c.l.b16 %v598
      %v1032 = vunpack.c.h.b16 %v598
      %v1033 = vunpack.c.l.b16 %v599
      %v1034 = vunpack.c.h.b16 %v599
      %v1035 = vunpack.c.l.b16 %v600
      %v1036 = vunpack.c.h.b16 %v600
      %v1037 = vunpack.c.l.b16 %v601
      %v1038 = vunpack.c.h.b16 %v601
      %v1039 = vunpack.c.l.b16 %v602
      %v1040 = vunpack.c.h.b16 %v602
      %v1041 = vunpack.c.l.b16 %v603
      %v1042 = vunpack.c.h.b16 %v603
      %v1043 = vunpack.c.l.b16 %v604
      %v1044 = vunpack.c.h.b16 %v604
      %v1045 = vunpack.c.l.b16 %v605
      %v1046 = vunpack.c.h.b16 %v605
      %v1047 = vunpack.c.l.b16 %v606
      %v1048 = vunpack.c.h.b16 %v606
      %v1049 = vunpack.c.l.b16 %v607
      %v1050 = vunpack.c.h.b16 %v607
      %v1051 = vunpack.c.l.b16 %v608
      %v1052 = vunpack.c.h.b16 %v608
      %v1053 = vunpack.c.l.b16 %v609
      %v1054 = vunpack.c.h.b16 %v609
      %v1055 = vunpack.c.l.b16 %v610
      %v1056 = vunpack.c.h.b16 %v610
      %v1057 = vunpack.c.l.b16 %v611
      %v1058 = vunpack.c.h.b16 %v611
      %v1059 = vunpack.c.l.b16 %v612
      %v1060 = vunpack.c.h.b16 %v612
      %v1061 = vunpack.c.l.b16 %v613
      %v1062 = vunpack.c.h.b16 %v613
      %v1063 = vunpack.c.l.b16 %v614
      %v1064 = vunpack.c.h.b16 %v614
      %v1065 = vunpack.c.l.b16 %v615
      %v1066 = vunpack.c.h.b16 %v615
      %v1067 = vunpack.c.l.b16 %v616
      %v1068 = vunpack.c.h.b16 %v616
      %v1069 = vunpack.c.l.b16 %v617
      %v1070 = vunpack.c.h.b16 %v617
      %v1071 = vunpack.c.l.b16 %v618
      %v1072 = vunpack.c.h.b16 %v618
      %v1073 = vunpack.c.l.b16 %v619
      %v1074 = vunpack.c.h.b16 %v619
      %v1075 = vunpack.c.l.b16 %v620
      %v1076 = vunpack.c.h.b16 %v620
      %v1077 = vunpack.c.l.b16 %v621
      %v1078 = vunpack.c.h.b16 %v621
      %v1079 = vunpack.c.l.b16 %v622
      %v1080 = vunpack.c.h.b16 %v622
      %v1081 = vunpack.c.l.b16 %v623
      %v1082 = vunpack.c.h.b16 %v623
      %v1083 = vunpack.c.l.b16 %v624
      %v1084 = vunpack.c.h.b16 %v624
      %v1085 = vunpack.c.l.b16 %v625
      %v1086 = vunpack.c.h.b16 %v625
      %v1087 = vunpack.c.l.b16 %v626
      %v1088 = vunpack.c.h.b16 %v626
      %v1089 = vunpack.c.l.b16 %v627
      %v1090 = vunpack.c.h.b16 %v627
      %v1091 = vunpack.c.l.b16 %v628
      %v1092 = vunpack.c.h.b16 %v628
      %v1093 = vunpack.c.l.b16 %v629
      %v1094 = vunpack.c.h.b16 %v629
      %v1095 = vunpack.c.l.b16 %v630
      %v1096 = vunpack.c.h.b16 %v630
      %v1097 = vunpack.c.l.b16 %v631
      %v1098 = vunpack.c.h.b16 %v631
      %v1099 = vunpack.c.l.b16 %v632
      %v1100 = vunpack.c.h.b16 %v632
      %v1101 = vunpack.c.l.b16 %v633
      %v1102 = vunpack.c.h.b16 %v633
      %v1103 = vunpack.c.l.b16 %v634
      %v1104 = vunpack.c.h.b16 %v634
      %v1105 = vunpack.c.l.b16 %v635
      %v1106 = vunpack.c.h.b16 %v635
      %v1107 = vunpack.c.l.b16 %v636
      %v1108 = vunpack.c.h.b16 %v636
      %v1109 = vunpack.c.l.b16 %v637
      %v1110 = vunpack.c.h.b16 %v637
      %v1111 = vunpack.c.l.b16 %v638
      %v1112 = vunpack.c.h.b16 %v638
      %v1113 = vunpack.c.l.b16 %v639
      %v1114 = vunpack.c.h.b16 %v639
      %v1115 = vunpack.c.l.b16 %v640
      %v1116 = vunpack.c.h.b16 %v640
      %v1117 = vunpack.c.l.b16 %v641
      %v1118 = vunpack.c.h.b16 %v641
      %v1119 = vunpack.c.l.b16 %v642
      %v1120 = vunpack.c.h.b16 %v642
      %v1121 = vunpack.c.l.b16 %v643
      %v1122 = vunpack.c.h.b16 %v643
      %v1123 = vunpack.c.l.b16 %v644
      %v1124 = vunpack.c.h.b16 %v644
      %v1125 = vunpack.c.l.b16 %v645
      %v1126 = vunpack.c.h.b16 %v645
      %v1127 = vunpack.c.l.b16 %v646
      %v1128 = vunpack.c.h.b16 %v646
      %v1129 = vunpack.c.l.b16 %v647
      %v1130 = vunpack.c.h.b16 %v647
      %v1131 = vunpack.c.l.b16 %v648
      %v1132 = vunpack.c.h.b16 %v648
      %v1133 = vunpack.c.l.b16 %v649
      %v1134 = vunpack.c.h.b16 %v649
      %v1135 = vunpack.c.l.b16 %v650
      %v1136 = vunpack.c.h.b16 %v650
      %v1137 = vunpack.c.l.b16 %v651
      %v1138 = vunpack.c.h.b16 %v651
      %v1139 = vunpack.c.l.b16 %v652
      %v1140 = vunpack.c.h.b16 %v652
      %v1141 = vunpack.c.l.b16 %v653
      %v1142 = vunpack.c.h.b16 %v653
      %v1143 = vunpack.c.l.b16 %v654
      %v1144 = vunpack.c.h.b16 %v654
      %v1145 = vunpack.c.l.b16 %v655
      %v1146 = vunpack.c.h.b16 %v655
      %v1147 = vunpack.c.l.b16 %v656
      %v1148 = vunpack.c.h.b16 %v656
      %v1149 = vunpack.c.l.b16 %v657
      %v1150 = vunpack.c.h.b16 %v657
      %v1151 = vunpack.c.l.b16 %v658
      %v1152 = vunpack.c.h.b16 %v658
      %v1153 = vunpack.c.l.b16 %v659
      %v1154 = vunpack.c.h.b16 %v659
      %v1155 = vunpack.c.l.b16 %v660
      %v1156 = vunpack.c.h.b16 %v660
      %v1157 = vunpack.c.l.b16 %v661
      %v1158 = vunpack.c.h.b16 %v661
      %v1159 = vunpack.c.l.b16 %v662
      %v1160 = vunpack.c.h.b16 %v662
      %v1161 = vunpack.c.l.b16 %v663
      %v1162 = vunpack.c.h.b16 %v663
      %v1163 = vunpack.c.l.b16 %v664
      %v1164 = vunpack.c.h.b16 %v664
      %v1165 = vunpack.c.l.b16 %v665
      %v1166 = vunpack.c.h.b16 %v665
      %v1167 = vunpack.c.l.b16 %v666
      %v1168 = vunpack.c.h.b16 %v666
      %v1169 = vunpack.c.l.b16 %v667
      %v1170 = vunpack.c.h.b16 %v667
      %v1171 = vunpack.c.l.b16 %v668
      %v1172 = vunpack.c.h.b16 %v668
      %v1173 = vunpack.c.l.b16 %v669
      %v1174 = vunpack.c.h.b16 %v669
      %v1175 = vunpack.c.l.b16 %v670
      %v1176 = vunpack.c.h.b16 %v670
      %v1177 = vunpack.c.l.b16 %v671
      %v1178 = vunpack.c.h.b16 %v671
      %v1179 = vunpack.c.l.b16 %v672
      %v1180 = vunpack.c.h.b16 %v672
      %v1181 = vunpack.c.l.b16 %v673
      %v1182 = vunpack.c.h.b16 %v673
      %v1183 = vunpack.c.l.b16 %v674
      %v1184 = vunpack.c.h.b16 %v674
      %v1185 = vunpack.c.l.b16 %v675
      %v1186 = vunpack.c.h.b16 %v675
      %v1187 = vunpack.c.l.b16 %v676
      %v1188 = vunpack.c.h.b16 %v676
      %v1189 = vpack.c.b16 %v941, %v933
      %v1190 = vpack.c.b16 %v942, %v934
      %v1191 = vpack.c.b16 %v943, %v935
      %v1192 = vpack.c.b16 %v944, %v936
      %v1193 = vpack.c.b16 %v945, %v937
      %v1194 = vpack.c.b16 %v946, %v938
      %v1195 = vpack.c.b16 %v947, %v939
      %v1196 = vpack.c.b16 %v948, %v940
      %v1197 = vpack.c.b16 %v957, %v949
      %v1198 = vpack.c.b16 %v958, %v950
      %v1199 = vpack.c.b16 %v959, %v951
      %v1200 = vpack.c.b16 %v960, %v952
      %v1201 = vpack.c.b16 %v961, %v953
      %v1202 = vpack.c.b16 %v962, %v954
      %v1203 = vpack.c.b16 %v963, %v955
      %v1204 = vpack.c.b16 %v964, %v956
      %v1205 = vpack.c.b16 %v973, %v965
      %v1206 = vpack.c.b16 %v974, %v966
      %v1207 = vpack.c.b16 %v975, %v967
      %v1208 = vpack.c.b16 %v976, %v968
      %v1209 = vpack.c.b16 %v977, %v969
      %v1210 = vpack.c.b16 %v978, %v970
      %v1211 = vpack.c.b16 %v979, %v971
      %v1212 = vpack.c.b16 %v980, %v972
      %v1213 = vpack.c.b16 %v989, %v981
      %v1214 = vpack.c.b16 %v990, %v982
      %v1215 = vpack.c.b16 %v991, %v983
      %v1216 = vpack.c.b16 %v992, %v984
      %v1217 = vpack.c.b16 %v993, %v985
      %v1218 = vpack.c.b16 %v994, %v986
      %v1219 = vpack.c.b16 %v995, %v987
      %v1220 = vpack.c.b16 %v996, %v988
      %v1221 = vpack.c.b16 %v1005, %v997
      %v1222 = vpack.c.b16 %v1006, %v998
      %v1223 = vpack.c.b16 %v1007, %v999
      %v1224 = vpack.c.b16 %v1008, %v1000
      %v1225 = vpack.c.b16 %v1009, %v1001
      %v1226 = vpack.c.b16 %v1010, %v1002
      %v1227 = vpack.c.b16 %v1011, %v1003
      %v1228 = vpack.c.b16 %v1012, %v1004
      %v1229 = vpack.c.b16 %v1021, %v1013
      %v1230 = vpack.c.b16 %v1022, %v1014
      %v1231 = vpack.c.b16 %v1023, %v1015
      %v1232 = vpack.c.b16 %v1024, %v1016
      %v1233 = vpack.c.b16 %v1025, %v1017
      %v1234 = vpack.c.b16 %v1026, %v1018
      %v1235 = vpack.c.b16 %v1027, %v1019
      %v1236 = vpack.c.b16 %v1028, %v1020
      %v1237 = vpack.c.b16 %v1037, %v1029
      %v1238 = vpack.c.b16 %v1038, %v1030
      %v1239 = vpack.c.b16 %v1039, %v1031
      %v1240 = vpack.c.b16 %v1040, %v1032
      %v1241 = vpack.c.b16 %v1041, %v1033
      %v1242 = vpack.c.b16 %v1042, %v1034
      %v1243 = vpack.c.b16 %v1043, %v1035
      %v1244 = vpack.c.b16 %v1044, %v1036
      %v1245 = vpack.c.b16 %v1053, %v1045
      %v1246 = vpack.c.b16 %v1054, %v1046
      %v1247 = vpack.c.b16 %v1055, %v1047
      %v1248 = vpack.c.b16 %v1056, %v1048
      %v1249 = vpack.c.b16 %v1057, %v1049
      %v1250 = vpack.c.b16 %v1058, %v1050
      %v1251 = vpack.c.b16 %v1059, %v1051
      %v1252 = vpack.c.b16 %v1060, %v1052
      %v1253 = vpack.c.b16 %v1069, %v1061
      %v1254 = vpack.c.b16 %v1070, %v1062
      %v1255 = vpack.c.b16 %v1071, %v1063
      %v1256 = vpack.c.b16 %v1072, %v1064
      %v1257 = vpack.c.b16 %v1073, %v1065
      %v1258 = vpack.c.b16 %v1074, %v1066
      %v1259 = vpack.c.b16 %v1075, %v1067
      %v1260 = vpack.c.b16 %v1076, %v1068
      %v1261 = vpack.c.b16 %v1085, %v1077
      %v1262 = vpack.c.b16 %v1086, %v1078
      %v1263 = vpack.c.b16 %v1087, %v1079
      %v1264 = vpack.c.b16 %v1088, %v1080
      %v1265 = vpack.c.b16 %v1089, %v1081
      %v1266 = vpack.c.b16 %v1090, %v1082
      %v1267 = vpack.c.b16 %v1091, %v1083
      %v1268 = vpack.c.b16 %v1092, %v1084
      %v1269 = vpack.c.b16 %v1101, %v1093
      %v1270 = vpack.c.b16 %v1102, %v1094
      %v1271 = vpack.c.b16 %v1103, %v1095
      %v1272 = vpack.c.b16 %v1104, %v1096
      %v1273 = vpack.c.b16 %v1105, %v1097
      %v1274 = vpack.c.b16 %v1106, %v1098
      %v1275 = vpack.c.b16 %v1107, %v1099
      %v1276 = vpack.c.b16 %v1108, %v1100
      %v1277 = vpack.c.b16 %v1117, %v1109
      %v1278 = vpack.c.b16 %v1118, %v1110
      %v1279 = vpack.c.b16 %v1119, %v1111
      %v1280 = vpack.c.b16 %v1120, %v1112
      %v1281 = vpack.c.b16 %v1121, %v1113
      %v1282 = vpack.c.b16 %v1122, %v1114
      %v1283 = vpack.c.b16 %v1123, %v1115
      %v1284 = vpack.c.b16 %v1124, %v1116
      %v1285 = vpack.c.b16 %v1133, %v1125
      %v1286 = vpack.c.b16 %v1134, %v1126
      %v1287 = vpack.c.b16 %v1135, %v1127
      %v1288 = vpack.c.b16 %v1136, %v1128
      %v1289 = vpack.c.b16 %v1137, %v1129
      %v1290 = vpack.c.b16 %v1138, %v1130
      %v1291 = vpack.c.b16 %v1139, %v1131
      %v1292 = vpack.c.b16 %v1140, %v1132
      %v1293 = vpack.c.b16 %v1149, %v1141
      %v1294 = vpack.c.b16 %v1150, %v1142
      %v1295 = vpack.c.b16 %v1151, %v1143
      %v1296 = vpack.c.b16 %v1152, %v1144
      %v1297 = vpack.c.b16 %v1153, %v1145
      %v1298 = vpack.c.b16 %v1154, %v1146
      %v1299 = vpack.c.b16 %v1155, %v1147
      %v1300 = vpack.c.b16 %v1156, %v1148
      %v1301 = vpack.c.b16 %v1165, %v1157
      %v1302 = vpack.c.b16 %v1166, %v1158
      %v1303 = vpack.c.b16 %v1167, %v1159
      %v1304 = vpack.c.b16 %v1168, %v1160
      %v1305 = vpack.c.b16 %v1169, %v1161
      %v1306 = vpack.c.b16 %v1170, %v1162
      %v1307 = vpack.c.b16 %v1171, %v1163
      %v1308 = vpack.c.b16 %v1172, %v1164
      %v1309 = vpack.c.b16 %v1181, %v1173
      %v1310 = vpack.c.b16 %v1182, %v1174
      %v1311 = vpack.c.b16 %v1183, %v1175
      %v1312 = vpack.c.b16 %v1184, %v1176
      %v1313 = vpack.c.b16 %v1185, %v1177
      %v1314 = vpack.c.b16 %v1186, %v1178
      %v1315 = vpack.c.b16 %v1187, %v1179
      %v1316 = vpack.c.b16 %v1188, %v1180
      %v1573 = vunpack.c.l.b16 %v677
      %v1574 = vunpack.c.h.b16 %v677
      %v1575 = vunpack.c.l.b16 %v678
      %v1576 = vunpack.c.h.b16 %v678
      %v1577 = vunpack.c.l.b16 %v679
      %v1578 = vunpack.c.h.b16 %v679
      %v1579 = vunpack.c.l.b16 %v680
      %v1580 = vunpack.c.h.b16 %v680
      %v1581 = vunpack.c.l.b16 %v681
      %v1582 = vunpack.c.h.b16 %v681
      %v1583 = vunpack.c.l.b16 %v682
      %v1584 = vunpack.c.h.b16 %v682
      %v1585 = vunpack.c.l.b16 %v683
      %v1586 = vunpack.c.h.b16 %v683
      %v1587 = vunpack.c.l.b16 %v684
      %v1588 = vunpack.c.h.b16 %v684
      %v1589 = vunpack.c.l.b16 %v685
      %v1590 = vunpack.c.h.b16 %v685
      %v1591 = vunpack.c.l.b16 %v686
      %v1592 = vunpack.c.h.b16 %v686
      %v1593 = vunpack.c.l.b16 %v687
      %v1594 = vunpack.c.h.b16 %v687
      %v1595 = vunpack.c.l.b16 %v688
      %v1596 = vunpack.c.h.b16 %v688
      %v1597 = vunpack.c.l.b16 %v689
      %v1598 = vunpack.c.h.b16 %v689
      %v1599 = vunpack.c.l.b16 %v690
      %v1600 = vunpack.c.h.b16 %v690
      %v1601 = vunpack.c.l.b16 %v691
      %v1602 = vunpack.c.h.b16 %v691
      %v1603 = vunpack.c.l.b16 %v692
      %v1604 = vunpack.c.h.b16 %v692
      %v1605 = vunpack.c.l.b16 %v693
      %v1606 = vunpack.c.h.b16 %v693
      %v1607 = vunpack.c.l.b16 %v694
      %v1608 = vunpack.c.h.b16 %v694
      %v1609 = vunpack.c.l.b16 %v695
      %v1610 = vunpack.c.h.b16 %v695
      %v1611 = vunpack.c.l.b16 %v696
      %v1612 = vunpack.c.h.b16 %v696
      %v1613 = vunpack.c.l.b16 %v697
      %v1614 = vunpack.c.h.b16 %v697
      %v1615 = vunpack.c.l.b16 %v698
      %v1616 = vunpack.c.h.b16 %v698
      %v1617 = vunpack.c.l.b16 %v699
      %v1618 = vunpack.c.h.b16 %v699
      %v1619 = vunpack.c.l.b16 %v700
      %v1620 = vunpack.c.h.b16 %v700
      %v1621 = vunpack.c.l.b16 %v701
      %v1622 = vunpack.c.h.b16 %v701
      %v1623 = vunpack.c.l.b16 %v702
      %v1624 = vunpack.c.h.b16 %v702
      %v1625 = vunpack.c.l.b16 %v703
      %v1626 = vunpack.c.h.b16 %v703
      %v1627 = vunpack.c.l.b16 %v704
      %v1628 = vunpack.c.h.b16 %v704
      %v1629 = vunpack.c.l.b16 %v705
      %v1630 = vunpack.c.h.b16 %v705
      %v1631 = vunpack.c.l.b16 %v706
      %v1632 = vunpack.c.h.b16 %v706
      %v1633 = vunpack.c.l.b16 %v707
      %v1634 = vunpack.c.h.b16 %v707
      %v1635 = vunpack.c.l.b16 %v708
      %v1636 = vunpack.c.h.b16 %v708
      %v1637 = vunpack.c.l.b16 %v709
      %v1638 = vunpack.c.h.b16 %v709
      %v1639 = vunpack.c.l.b16 %v710
      %v1640 = vunpack.c.h.b16 %v710
      %v1641 = vunpack.c.l.b16 %v711
      %v1642 = vunpack.c.h.b16 %v711
      %v1643 = vunpack.c.l.b16 %v712
      %v1644 = vunpack.c.h.b16 %v712
      %v1645 = vunpack.c.l.b16 %v713
      %v1646 = vunpack.c.h.b16 %v713
      %v1647 = vunpack.c.l.b16 %v714
      %v1648 = vunpack.c.h.b16 %v714
      %v1649 = vunpack.c.l.b16 %v715
      %v1650 = vunpack.c.h.b16 %v715
      %v1651 = vunpack.c.l.b16 %v716
      %v1652 = vunpack.c.h.b16 %v716
      %v1653 = vunpack.c.l.b16 %v717
      %v1654 = vunpack.c.h.b16 %v717
      %v1655 = vunpack.c.l.b16 %v718
      %v1656 = vunpack.c.h.b16 %v718
      %v1657 = vunpack.c.l.b16 %v719
      %v1658 = vunpack.c.h.b16 %v719
      %v1659 = vunpack.c.l.b16 %v720
      %v1660 = vunpack.c.h.b16 %v720
      %v1661 = vunpack.c.l.b16 %v721
      %v1662 = vunpack.c.h.b16 %v721
      %v1663 = vunpack.c.l.b16 %v722
      %v1664 = vunpack.c.h.b16 %v722
      %v1665 = vunpack.c.l.b16 %v723
      %v1666 = vunpack.c.h.b16 %v723
      %v1667 = vunpack.c.l.b16 %v724
      %v1668 = vunpack.c.h.b16 %v724
      %v1669 = vunpack.c.l.b16 %v725
      %v1670 = vunpack.c.h.b16 %v725
      %v1671 = vunpack.c.l.b16 %v726
      %v1672 = vunpack.c.h.b16 %v726
      %v1673 = vunpack.c.l.b16 %v727
      %v1674 = vunpack.c.h.b16 %v727
      %v1675 = vunpack.c.l.b16 %v728
      %v1676 = vunpack.c.h.b16 %v728
      %v1677 = vunpack.c.l.b16 %v729
      %v1678 = vunpack.c.h.b16 %v729
      %v1679 = vunpack.c.l.b16 %v730
      %v1680 = vunpack.c.h.b16 %v730
      %v1681 = vunpack.c.l.b16 %v731
      %v1682 = vunpack.c.h.b16 %v731
      %v1683 = vunpack.c.l.b16 %v732
      %v1684 = vunpack.c.h.b16 %v732
      %v1685 = vunpack.c.l.b16 %v733
      %v1686 = vunpack.c.h.b16 %v733
      %v1687 = vunpack.c.l.b16 %v734
      %v1688 = vunpack.c.h.b16 %v734
      %v1689 = vunpack.c.l.b16 %v735
      %v1690 = vunpack.c.h.b16 %v735
      %v1691 = vunpack.c.l.b16 %v736
      %v1692 = vunpack.c.h.b16 %v736
      %v1693 = vunpack.c.l.b16 %v737
      %v1694 = vunpack.c.h.b16 %v737
      %v1695 = vunpack.c.l.b16 %v738
      %v1696 = vunpack.c.h.b16 %v738
      %v1697 = vunpack.c.l.b16 %v739
      %v1698 = vunpack.c.h.b16 %v739
      %v1699 = vunpack.c.l.b16 %v740
      %v1700 = vunpack.c.h.b16 %v740
      %v1701 = vunpack.c.l.b16 %v741
      %v1702 = vunpack.c.h.b16 %v741
      %v1703 = vunpack.c.l.b16 %v742
      %v1704 = vunpack.c.h.b16 %v742
      %v1705 = vunpack.c.l.b16 %v743
      %v1706 = vunpack.c.h.b16 %v743
      %v1707 = vunpack.c.l.b16 %v744
      %v1708 = vunpack.c.h.b16 %v744
      %v1709 = vunpack.c.l.b16 %v745
      %v1710 = vunpack.c.h.b16 %v745
      %v1711 = vunpack.c.l.b16 %v746
      %v1712 = vunpack.c.h.b16 %v746
      %v1713 = vunpack.c.l.b16 %v747
      %v1714 = vunpack.c.h.b16 %v747
      %v1715 = vunpack.c.l.b16 %v748
      %v1716 = vunpack.c.h.b16 %v748
      %v1717 = vunpack.c.l.b16 %v749
      %v1718 = vunpack.c.h.b16 %v749
      %v1719 = vunpack.c.l.b16 %v750
      %v1720 = vunpack.c.h.b16 %v750
      %v1721 = vunpack.c.l.b16 %v751
      %v1722 = vunpack.c.h.b16 %v751
      %v1723 = vunpack.c.l.b16 %v752
      %v1724 = vunpack.c.h.b16 %v752
      %v1725 = vunpack.c.l.b16 %v753
      %v1726 = vunpack.c.h.b16 %v753
      %v1727 = vunpack.c.l.b16 %v754
      %v1728 = vunpack.c.h.b16 %v754
      %v1729 = vunpack.c.l.b16 %v755
      %v1730 = vunpack.c.h.b16 %v755
      %v1731 = vunpack.c.l.b16 %v756
      %v1732 = vunpack.c.h.b16 %v756
      %v1733 = vunpack.c.l.b16 %v757
      %v1734 = vunpack.c.h.b16 %v757
      %v1735 = vunpack.c.l.b16 %v758
      %v1736 = vunpack.c.h.b16 %v758
      %v1737 = vunpack.c.l.b16 %v759
      %v1738 = vunpack.c.h.b16 %v759
      %v1739 = vunpack.c.l.b16 %v760
      %v1740 = vunpack.c.h.b16 %v760
      %v1741 = vunpack.c.l.b16 %v761
      %v1742 = vunpack.c.h.b16 %v761
      %v1743 = vunpack.c.l.b16 %v762
      %v1744 = vunpack.c.h.b16 %v762
      %v1745 = vunpack.c.l.b16 %v763
      %v1746 = vunpack.c.h.b16 %v763
      %v1747 = vunpack.c.l.b16 %v764
      %v1748 = vunpack.c.h.b16 %v764
      %v1749 = vunpack.c.l.b16 %v765
      %v1750 = vunpack.c.h.b16 %v765
      %v1751 = vunpack.c.l.b16 %v766
      %v1752 = vunpack.c.h.b16 %v766
      %v1753 = vunpack.c.l.b16 %v767
      %v1754 = vunpack.c.h.b16 %v767
      %v1755 = vunpack.c.l.b16 %v768
      %v1756 = vunpack.c.h.b16 %v768
      %v1757 = vunpack.c.l.b16 %v769
      %v1758 = vunpack.c.h.b16 %v769
      %v1759 = vunpack.c.l.b16 %v770
      %v1760 = vunpack.c.h.b16 %v770
      %v1761 = vunpack.c.l.b16 %v771
      %v1762 = vunpack.c.h.b16 %v771
      %v1763 = vunpack.c.l.b16 %v772
      %v1764 = vunpack.c.h.b16 %v772
      %v1765 = vunpack.c.l.b16 %v773
      %v1766 = vunpack.c.h.b16 %v773
      %v1767 = vunpack.c.l.b16 %v774
      %v1768 = vunpack.c.h.b16 %v774
      %v1769 = vunpack.c.l.b16 %v775
      %v1770 = vunpack.c.h.b16 %v775
      %v1771 = vunpack.c.l.b16 %v776
      %v1772 = vunpack.c.h.b16 %v776
      %v1773 = vunpack.c.l.b16 %v777
      %v1774 = vunpack.c.h.b16 %v777
      %v1775 = vunpack.c.l.b16 %v778
      %v1776 = vunpack.c.h.b16 %v778
      %v1777 = vunpack.c.l.b16 %v779
      %v1778 = vunpack.c.h.b16 %v779
      %v1779 = vunpack.c.l.b16 %v780
      %v1780 = vunpack.c.h.b16 %v780
      %v1781 = vunpack.c.l.b16 %v781
      %v1782 = vunpack.c.h.b16 %v781
      %v1783 = vunpack.c.l.b16 %v782
      %v1784 = vunpack.c.h.b16 %v782
      %v1785 = vunpack.c.l.b16 %v783
      %v1786 = vunpack.c.h.b16 %v783
      %v1787 = vunpack.c.l.b16 %v784
      %v1788 = vunpack.c.h.b16 %v784
      %v1789 = vunpack.c.l.b16 %v785
      %v1790 = vunpack.c.h.b16 %v785
      %v1791 = vunpack.c.l.b16 %v786
      %v1792 = vunpack.c.h.b16 %v786
      %v1793 = vunpack.c.l.b16 %v787
      %v1794 = vunpack.c.h.b16 %v787
      %v1795 = vunpack.c.l.b16 %v788
      %v1796 = vunpack.c.h.b16 %v788
      %v1797 = vunpack.c.l.b16 %v789
      %v1798 = vunpack.c.h.b16 %v789
      %v1799 = vunpack.c.l.b16 %v790
      %v1800 = vunpack.c.h.b16 %v790
      %v1801 = vunpack.c.l.b16 %v791
      %v1802 = vunpack.c.h.b16 %v791
      %v1803 = vunpack.c.l.b16 %v792
      %v1804 = vunpack.c.h.b16 %v792
      %v1805 = vunpack.c.l.b16 %v793
      %v1806 = vunpack.c.h.b16 %v793
      %v1807 = vunpack.c.l.b16 %v794
      %v1808 = vunpack.c.h.b16 %v794
      %v1809 = vunpack.c.l.b16 %v795
      %v1810 = vunpack.c.h.b16 %v795
      %v1811 = vunpack.c.l.b16 %v796
      %v1812 = vunpack.c.h.b16 %v796
      %v1813 = vunpack.c.l.b16 %v797
      %v1814 = vunpack.c.h.b16 %v797
      %v1815 = vunpack.c.l.b16 %v798
      %v1816 = vunpack.c.h.b16 %v798
      %v1817 = vunpack.c.l.b16 %v799
      %v1818 = vunpack.c.h.b16 %v799
      %v1819 = vunpack.c.l.b16 %v800
      %v1820 = vunpack.c.h.b16 %v800
      %v1821 = vunpack.c.l.b16 %v801
      %v1822 = vunpack.c.h.b16 %v801
      %v1823 = vunpack.c.l.b16 %v802
      %v1824 = vunpack.c.h.b16 %v802
      %v1825 = vunpack.c.l.b16 %v803
      %v1826 = vunpack.c.h.b16 %v803
      %v1827 = vunpack.c.l.b16 %v804
      %v1828 = vunpack.c.h.b16 %v804
      %v1829 = vpack.c.b16 %v1575, %v1573
      %v1830 = vpack.c.b16 %v1576, %v1574
      %v1831 = vpack.c.b16 %v1579, %v1577
      %v1832 = vpack.c.b16 %v1580, %v1578
      %v1833 = vpack.c.b16 %v1583, %v1581
      %v1834 = vpack.c.b16 %v1584, %v1582
      %v1835 = vpack.c.b16 %v1587, %v1585
      %v1836 = vpack.c.b16 %v1588, %v1586
      %v1837 = vpack.c.b16 %v1591, %v1589
      %v1838 = vpack.c.b16 %v1592, %v1590
      %v1839 = vpack.c.b16 %v1595, %v1593
      %v1840 = vpack.c.b16 %v1596, %v1594
      %v1841 = vpack.c.b16 %v1599, %v1597
      %v1842 = vpack.c.b16 %v1600, %v1598
      %v1843 = vpack.c.b16 %v1603, %v1601
      %v1844 = vpack.c.b16 %v1604, %v1602
      %v1845 = vpack.c.b16 %v1607, %v1605
      %v1846 = vpack.c.b16 %v1608, %v1606
      %v1847 = vpack.c.b16 %v1611, %v1609
      %v1848 = vpack.c.b16 %v1612, %v1610
      %v1849 = vpack.c.b16 %v1615, %v1613
      %v1850 = vpack.c.b16 %v1616, %v1614
      %v1851 = vpack.c.b16 %v1619, %v1617
      %v1852 = vpack.c.b16 %v1620, %v1618
      %v1853 = vpack.c.b16 %v1623, %v1621
      %v1854 = vpack.c.b16 %v1624, %v1622
      %v1855 = vpack.c.b16 %v1627, %v1625
      %v1856 = vpack.c.b16 %v1628, %v1626
      %v1857 = vpack.c.b16 %v1631, %v1629
      %v1858 = vpack.c.b16 %v1632, %v1630
      %v1859 = vpack.c.b16 %v1635, %v1633
      %v1860 = vpack.c.b16 %v1636, %v1634
      %v1861 = vpack.c.b16 %v1639, %v1637
      %v1862 = vpack.c.b16 %v1640, %v1638
      %v1863 = vpack.c.b16 %v1643, %v1641
      %v1864 = vpack.c.b16 %v1644, %v1642
      %v1865 = vpack.c.b16 %v1647, %v1645
      %v1866 = vpack.c.b16 %v1648, %v1646
      %v1867 = vpack.c.b16 %v1651, %v1649
      %v1868 = vpack.c.b16 %v1652, %v1650
      %v1869 = vpack.c.b16 %v1655, %v1653
      %v1870 = vpack.c.b16 %v1656, %v1654
      %v1871 = vpack.c.b16 %v1659, %v1657
      %v1872 = vpack.c.b16 %v1660, %v1658
      %v1873 = vpack.c.b16 %v1663, %v1661
      %v1874 = vpack.c.b16 %v1664, %v1662
      %v1875 = vpack.c.b16 %v1667, %v1665
      %v1876 = vpack.c.b16 %v1668, %v1666
      %v1877 = vpack.c.b16 %v1671, %v1669
      %v1878 = vpack.c.b16 %v1672, %v1670
      %v1879 = vpack.c.b16 %v1675, %v1673
      %v1880 = vpack.c.b16 %v1676, %v1674
      %v1881 = vpack.c.b16 %v1679, %v1677
      %v1882 = vpack.c.b16 %v1680, %v1678
      %v1883 = vpack.c.b16 %v1683, %v1681
      %v1884 = vpack.c.b16 %v1684, %v1682
      %v1885 = vpack.c.b16 %v1687, %v1685
      %v1886 = vpack.c.b16 %v1688, %v1686
      %v1887 = vpack.c.b16 %v1691, %v1689
      %v1888 = vpack.c.b16 %v1692, %v1690
      %v1889 = vpack.c.b16 %v1695, %v1693
      %v1890 = vpack.c.b16 %v1696, %v1694
      %v1891 = vpack.c.b16 %v1699, %v1697
      %v1892 = vpack.c.b16 %v1700, %v1698
      %v1893 = vpack.c.b16 %v1703, %v1701
      %v1894 = vpack.c.b16 %v1704, %v1702
      %v1895 = vpack.c.b16 %v1707, %v1705
      %v1896 = vpack.c.b16 %v1708, %v1706
      %v1897 = vpack.c.b16 %v1711, %v1709
      %v1898 = vpack.c.b16 %v1712, %v1710
      %v1899 = vpack.c.b16 %v1715, %v1713
      %v1900 = vpack.c.b16 %v1716, %v1714
      %v1901 = vpack.c.b16 %v1719, %v1717
      %v1902 = vpack.c.b16 %v1720, %v1718
      %v1903 = vpack.c.b16 %v1723, %v1721
      %v1904 = vpack.c.b16 %v1724, %v1722
      %v1905 = vpack.c.b16 %v1727, %v1725
      %v1906 = vpack.c.b16 %v1728, %v1726
      %v1907 = vpack.c.b16 %v1731, %v1729
      %v1908 = vpack.c.b16 %v1732, %v1730
      %v1909 = vpack.c.b16 %v1735, %v1733
      %v1910 = vpack.c.b16 %v1736, %v1734
      %v1911 = vpack.c.b16 %v1739, %v1737
      %v1912 = vpack.c.b16 %v1740, %v1738
      %v1913 = vpack.c.b16 %v1743, %v1741
      %v1914 = vpack.c.b16 %v1744, %v1742
      %v1915 = vpack.c.b16 %v1747, %v1745
      %v1916 = vpack.c.b16 %v1748, %v1746
      %v1917 = vpack.c.b16 %v1751, %v1749
      %v1918 = vpack.c.b16 %v1752, %v1750
      %v1919 = vpack.c.b16 %v1755, %v1753
      %v1920 = vpack.c.b16 %v1756, %v1754
      %v1921 = vpack.c.b16 %v1759, %v1757
      %v1922 = vpack.c.b16 %v1760, %v1758
      %v1923 = vpack.c.b16 %v1763, %v1761
      %v1924 = vpack.c.b16 %v1764, %v1762
      %v1925 = vpack.c.b16 %v1767, %v1765
      %v1926 = vpack.c.b16 %v1768, %v1766
      %v1927 = vpack.c.b16 %v1771, %v1769
      %v1928 = vpack.c.b16 %v1772, %v1770
      %v1929 = vpack.c.b16 %v1775, %v1773
      %v1930 = vpack.c.b16 %v1776, %v1774
      %v1931 = vpack.c.b16 %v1779, %v1777
      %v1932 = vpack.c.b16 %v1780, %v1778
      %v1933 = vpack.c.b16 %v1783, %v1781
      %v1934 = vpack.c.b16 %v1784, %v1782
      %v1935 = vpack.c.b16 %v1787, %v1785
      %v1936 = vpack.c.b16 %v1788, %v1786
      %v1937 = vpack.c.b16 %v1791, %v1789
      %v1938 = vpack.c.b16 %v1792, %v1790
      %v1939 = vpack.c.b16 %v1795, %v1793
      %v1940 = vpack.c.b16 %v1796, %v1794
      %v1941 = vpack.c.b16 %v1799, %v1797
      %v1942 = vpack.c.b16 %v1800, %v1798
      %v1943 = vpack.c.b16 %v1803, %v1801
      %v1944 = vpack.c.b16 %v1804, %v1802
      %v1945 = vpack.c.b16 %v1807, %v1805
      %v1946 = vpack.c.b16 %v1808, %v1806
      %v1947 = vpack.c.b16 %v1811, %v1809
      %v1948 = vpack.c.b16 %v1812, %v1810
      %v1949 = vpack.c.b16 %v1815, %v1813
      %v1950 = vpack.c.b16 %v1816, %v1814
      %v1951 = vpack.c.b16 %v1819, %v1817
      %v1952 = vpack.c.b16 %v1820, %v1818
      %v1953 = vpack.c.b16 %v1823, %v1821
      %v1954 = vpack.c.b16 %v1824, %v1822
      %v1955 = vpack.c.b16 %v1827, %v1825
      %v1956 = vpack.c.b16 %v1828, %v1826
      %2085 = vmatpush.bf16.msra.mxu0 %v1843
      %2086 = vmatpush.bf16.msra.mxu0 %v1841
      %2087 = vmatpush.bf16.msra.mxu0 %v1839
      %2088 = vmatpush.bf16.msra.mxu0 %v1837
      %2089 = vmatpush.bf16.msra.mxu0 %v1835
      %2090 = vmatpush.bf16.msra.mxu0 %v1833
      %2091 = vmatpush.bf16.msra.mxu0 %v1831
      %2092 = vmatpush.bf16.msra.mxu0 %v1829
      %2093 = vmatmul.bf16.gmra.mxu0 %v1189
      %v2094 = vpop.f32.mrf.mxu0
      %v2095 = vadd.f32 0.0, %v2094
      %v2096 = vpop.f32.mrf.mxu0
      %v2097 = vadd.f32 0.0, %v2096
      %2098 = vmatmul.bf16.gmra.mxu0 %v1197
      %v2099 = vpop.f32.mrf.mxu0
      %v2100 = vadd.f32 0.0, %v2099
      %v2101 = vpop.f32.mrf.mxu0
      %v2102 = vadd.f32 0.0, %v2101
      %2103 = vmatmul.bf16.gmra.mxu0 %v1205
      %v2104 = vpop.f32.mrf.mxu0
      %v2105 = vadd.f32 0.0, %v2104
      %v2106 = vpop.f32.mrf.mxu0
      %v2107 = vadd.f32 0.0, %v2106
      %2108 = vmatmul.bf16.gmra.mxu0 %v1213
      %v2109 = vpop.f32.mrf.mxu0
      %v2110 = vadd.f32 0.0, %v2109
      %v2111 = vpop.f32.mrf.mxu0
      %v2112 = vadd.f32 0.0, %v2111
      %2113 = vmatmul.bf16.gmra.mxu0 %v1221
      %v2114 = vpop.f32.mrf.mxu0
      %v2115 = vadd.f32 0.0, %v2114
      %v2116 = vpop.f32.mrf.mxu0
      %v2117 = vadd.f32 0.0, %v2116
      %2118 = vmatmul.bf16.gmra.mxu0 %v1229
      %v2119 = vpop.f32.mrf.mxu0
      %v2120 = vadd.f32 0.0, %v2119
      %v2121 = vpop.f32.mrf.mxu0
      %v2122 = vadd.f32 0.0, %v2121
      %2123 = vmatmul.bf16.gmra.mxu0 %v1237
      %v2124 = vpop.f32.mrf.mxu0
      %v2125 = vadd.f32 0.0, %v2124
      %v2126 = vpop.f32.mrf.mxu0
      %v2127 = vadd.f32 0.0, %v2126
      %2128 = vmatmul.bf16.gmra.mxu0 %v1245
      %v2129 = vpop.f32.mrf.mxu0
      %v2130 = vadd.f32 0.0, %v2129
      %v2131 = vpop.f32.mrf.mxu0
      %v2132 = vadd.f32 0.0, %v2131
      %2133 = vmatmul.bf16.gmra.mxu0 %v1253
      %v2134 = vpop.f32.mrf.mxu0
      %v2135 = vadd.f32 0.0, %v2134
      %v2136 = vpop.f32.mrf.mxu0
      %v2137 = vadd.f32 0.0, %v2136
      %2138 = vmatmul.bf16.gmra.mxu0 %v1261
      %v2139 = vpop.f32.mrf.mxu0
      %v2140 = vadd.f32 0.0, %v2139
      %v2141 = vpop.f32.mrf.mxu0
      %v2142 = vadd.f32 0.0, %v2141
      %2143 = vmatmul.bf16.gmra.mxu0 %v1269
      %v2144 = vpop.f32.mrf.mxu0
      %v2145 = vadd.f32 0.0, %v2144
      %v2146 = vpop.f32.mrf.mxu0
      %v2147 = vadd.f32 0.0, %v2146
      %2148 = vmatmul.bf16.gmra.mxu0 %v1277
      %v2149 = vpop.f32.mrf.mxu0
      %v2150 = vadd.f32 0.0, %v2149
      %v2151 = vpop.f32.mrf.mxu0
      %v2152 = vadd.f32 0.0, %v2151
      %2153 = vmatmul.bf16.gmra.mxu0 %v1285
      %v2154 = vpop.f32.mrf.mxu0
      %v2155 = vadd.f32 0.0, %v2154
      %v2156 = vpop.f32.mrf.mxu0
      %v2157 = vadd.f32 0.0, %v2156
      %2158 = vmatmul.bf16.gmra.mxu0 %v1293
      %v2159 = vpop.f32.mrf.mxu0
      %v2160 = vadd.f32 0.0, %v2159
      %v2161 = vpop.f32.mrf.mxu0
      %v2162 = vadd.f32 0.0, %v2161
      %2163 = vmatmul.bf16.gmra.mxu0 %v1301
      %v2164 = vpop.f32.mrf.mxu0
      %v2165 = vadd.f32 0.0, %v2164
      %v2166 = vpop.f32.mrf.mxu0
      %v2167 = vadd.f32 0.0, %v2166
      %2168 = vmatmul.bf16.gmra.mxu0 %v1309
      %v2169 = vpop.f32.mrf.mxu0
      %v2170 = vadd.f32 0.0, %v2169
      %v2171 = vpop.f32.mrf.mxu0
      %v2172 = vadd.f32 0.0, %v2171
      %2173 = vdwg.mxu0
      %2174 = vmatpush.bf16.msra.mxu0 %v1859
      %2175 = vmatpush.bf16.msra.mxu0 %v1857
      %2176 = vmatpush.bf16.msra.mxu0 %v1855
      %2177 = vmatpush.bf16.msra.mxu0 %v1853
      %2178 = vmatpush.bf16.msra.mxu0 %v1851
      %2179 = vmatpush.bf16.msra.mxu0 %v1849
      %2180 = vmatpush.bf16.msra.mxu0 %v1847
      %2181 = vmatpush.bf16.msra.mxu0 %v1845
      %2182 = vmatmul.bf16.gmra.mxu0 %v1190
      %v2183 = vpop.f32.mrf.mxu0
      %v2184 = vadd.f32 %v2095, %v2183
      %v2185 = vpop.f32.mrf.mxu0
      %v2186 = vadd.f32 %v2097, %v2185
      %2187 = vmatmul.bf16.gmra.mxu0 %v1198
      %v2188 = vpop.f32.mrf.mxu0
      %v2189 = vadd.f32 %v2100, %v2188
      %v2190 = vpop.f32.mrf.mxu0
      %v2191 = vadd.f32 %v2102, %v2190
      %2192 = vmatmul.bf16.gmra.mxu0 %v1206
      %v2193 = vpop.f32.mrf.mxu0
      %v2194 = vadd.f32 %v2105, %v2193
      %v2195 = vpop.f32.mrf.mxu0
      %v2196 = vadd.f32 %v2107, %v2195
      %2197 = vmatmul.bf16.gmra.mxu0 %v1214
      %v2198 = vpop.f32.mrf.mxu0
      %v2199 = vadd.f32 %v2110, %v2198
      %v2200 = vpop.f32.mrf.mxu0
      %v2201 = vadd.f32 %v2112, %v2200
      %2202 = vmatmul.bf16.gmra.mxu0 %v1222
      %v2203 = vpop.f32.mrf.mxu0
      %v2204 = vadd.f32 %v2115, %v2203
      %v2205 = vpop.f32.mrf.mxu0
      %v2206 = vadd.f32 %v2117, %v2205
      %2207 = vmatmul.bf16.gmra.mxu0 %v1230
      %v2208 = vpop.f32.mrf.mxu0
      %v2209 = vadd.f32 %v2120, %v2208
      %v2210 = vpop.f32.mrf.mxu0
      %v2211 = vadd.f32 %v2122, %v2210
      %2212 = vmatmul.bf16.gmra.mxu0 %v1238
      %v2213 = vpop.f32.mrf.mxu0
      %v2214 = vadd.f32 %v2125, %v2213
      %v2215 = vpop.f32.mrf.mxu0
      %v2216 = vadd.f32 %v2127, %v2215
      %2217 = vmatmul.bf16.gmra.mxu0 %v1246
      %v2218 = vpop.f32.mrf.mxu0
      %v2219 = vadd.f32 %v2130, %v2218
      %v2220 = vpop.f32.mrf.mxu0
      %v2221 = vadd.f32 %v2132, %v2220
      %2222 = vmatmul.bf16.gmra.mxu0 %v1254
      %v2223 = vpop.f32.mrf.mxu0
      %v2224 = vadd.f32 %v2135, %v2223
      %v2225 = vpop.f32.mrf.mxu0
      %v2226 = vadd.f32 %v2137, %v2225
      %2227 = vmatmul.bf16.gmra.mxu0 %v1262
      %v2228 = vpop.f32.mrf.mxu0
      %v2229 = vadd.f32 %v2140, %v2228
      %v2230 = vpop.f32.mrf.mxu0
      %v2231 = vadd.f32 %v2142, %v2230
      %2232 = vmatmul.bf16.gmra.mxu0 %v1270
      %v2233 = vpop.f32.mrf.mxu0
      %v2234 = vadd.f32 %v2145, %v2233
      %v2235 = vpop.f32.mrf.mxu0
      %v2236 = vadd.f32 %v2147, %v2235
      %2237 = vmatmul.bf16.gmra.mxu0 %v1278
      %v2238 = vpop.f32.mrf.mxu0
      %v2239 = vadd.f32 %v2150, %v2238
      %v2240 = vpop.f32.mrf.mxu0
      %v2241 = vadd.f32 %v2152, %v2240
      %2242 = vmatmul.bf16.gmra.mxu0 %v1286
      %v2243 = vpop.f32.mrf.mxu0
      %v2244 = vadd.f32 %v2155, %v2243
      %v2245 = vpop.f32.mrf.mxu0
      %v2246 = vadd.f32 %v2157, %v2245
      %2247 = vmatmul.bf16.gmra.mxu0 %v1294
      %v2248 = vpop.f32.mrf.mxu0
      %v2249 = vadd.f32 %v2160, %v2248
      %v2250 = vpop.f32.mrf.mxu0
      %v2251 = vadd.f32 %v2162, %v2250
      %2252 = vmatmul.bf16.gmra.mxu0 %v1302
      %v2253 = vpop.f32.mrf.mxu0
      %v2254 = vadd.f32 %v2165, %v2253
      %v2255 = vpop.f32.mrf.mxu0
      %v2256 = vadd.f32 %v2167, %v2255
      %2257 = vmatmul.bf16.gmra.mxu0 %v1310
      %v2258 = vpop.f32.mrf.mxu0
      %v2259 = vadd.f32 %v2170, %v2258
      %v2260 = vpop.f32.mrf.mxu0
      %v2261 = vadd.f32 %v2172, %v2260
      %2262 = vdwg.mxu0
      %2263 = vmatpush.bf16.msra.mxu0 %v1875
      %2264 = vmatpush.bf16.msra.mxu0 %v1873
      %2265 = vmatpush.bf16.msra.mxu0 %v1871
      %2266 = vmatpush.bf16.msra.mxu0 %v1869
      %2267 = vmatpush.bf16.msra.mxu0 %v1867
      %2268 = vmatpush.bf16.msra.mxu0 %v1865
      %2269 = vmatpush.bf16.msra.mxu0 %v1863
      %2270 = vmatpush.bf16.msra.mxu0 %v1861
      %2271 = vmatmul.bf16.gmra.mxu0 %v1191
      %v2272 = vpop.f32.mrf.mxu0
      %v2273 = vadd.f32 %v2184, %v2272
      %v2274 = vpop.f32.mrf.mxu0
      %v2275 = vadd.f32 %v2186, %v2274
      %2276 = vmatmul.bf16.gmra.mxu0 %v1199
      %v2277 = vpop.f32.mrf.mxu0
      %v2278 = vadd.f32 %v2189, %v2277
      %v2279 = vpop.f32.mrf.mxu0
      %v2280 = vadd.f32 %v2191, %v2279
      %2281 = vmatmul.bf16.gmra.mxu0 %v1207
      %v2282 = vpop.f32.mrf.mxu0
      %v2283 = vadd.f32 %v2194, %v2282
      %v2284 = vpop.f32.mrf.mxu0
      %v2285 = vadd.f32 %v2196, %v2284
      %2286 = vmatmul.bf16.gmra.mxu0 %v1215
      %v2287 = vpop.f32.mrf.mxu0
      %v2288 = vadd.f32 %v2199, %v2287
      %v2289 = vpop.f32.mrf.mxu0
      %v2290 = vadd.f32 %v2201, %v2289
      %2291 = vmatmul.bf16.gmra.mxu0 %v1223
      %v2292 = vpop.f32.mrf.mxu0
      %v2293 = vadd.f32 %v2204, %v2292
      %v2294 = vpop.f32.mrf.mxu0
      %v2295 = vadd.f32 %v2206, %v2294
      %2296 = vmatmul.bf16.gmra.mxu0 %v1231
      %v2297 = vpop.f32.mrf.mxu0
      %v2298 = vadd.f32 %v2209, %v2297
      %v2299 = vpop.f32.mrf.mxu0
      %v2300 = vadd.f32 %v2211, %v2299
      %2301 = vmatmul.bf16.gmra.mxu0 %v1239
      %v2302 = vpop.f32.mrf.mxu0
      %v2303 = vadd.f32 %v2214, %v2302
      %v2304 = vpop.f32.mrf.mxu0
      %v2305 = vadd.f32 %v2216, %v2304
      %2306 = vmatmul.bf16.gmra.mxu0 %v1247
      %v2307 = vpop.f32.mrf.mxu0
      %v2308 = vadd.f32 %v2219, %v2307
      %v2309 = vpop.f32.mrf.mxu0
      %v2310 = vadd.f32 %v2221, %v2309
      %2311 = vmatmul.bf16.gmra.mxu0 %v1255
      %v2312 = vpop.f32.mrf.mxu0
      %v2313 = vadd.f32 %v2224, %v2312
      %v2314 = vpop.f32.mrf.mxu0
      %v2315 = vadd.f32 %v2226, %v2314
      %2316 = vmatmul.bf16.gmra.mxu0 %v1263
      %v2317 = vpop.f32.mrf.mxu0
      %v2318 = vadd.f32 %v2229, %v2317
      %v2319 = vpop.f32.mrf.mxu0
      %v2320 = vadd.f32 %v2231, %v2319
      %2321 = vmatmul.bf16.gmra.mxu0 %v1271
      %v2322 = vpop.f32.mrf.mxu0
      %v2323 = vadd.f32 %v2234, %v2322
      %v2324 = vpop.f32.mrf.mxu0
      %v2325 = vadd.f32 %v2236, %v2324
      %2326 = vmatmul.bf16.gmra.mxu0 %v1279
      %v2327 = vpop.f32.mrf.mxu0
      %v2328 = vadd.f32 %v2239, %v2327
      %v2329 = vpop.f32.mrf.mxu0
      %v2330 = vadd.f32 %v2241, %v2329
      %2331 = vmatmul.bf16.gmra.mxu0 %v1287
      %v2332 = vpop.f32.mrf.mxu0
      %v2333 = vadd.f32 %v2244, %v2332
      %v2334 = vpop.f32.mrf.mxu0
      %v2335 = vadd.f32 %v2246, %v2334
      %2336 = vmatmul.bf16.gmra.mxu0 %v1295
      %v2337 = vpop.f32.mrf.mxu0
      %v2338 = vadd.f32 %v2249, %v2337
      %v2339 = vpop.f32.mrf.mxu0
      %v2340 = vadd.f32 %v2251, %v2339
      %2341 = vmatmul.bf16.gmra.mxu0 %v1303
      %v2342 = vpop.f32.mrf.mxu0
      %v2343 = vadd.f32 %v2254, %v2342
      %v2344 = vpop.f32.mrf.mxu0
      %v2345 = vadd.f32 %v2256, %v2344
      %2346 = vmatmul.bf16.gmra.mxu0 %v1311
      %v2347 = vpop.f32.mrf.mxu0
      %v2348 = vadd.f32 %v2259, %v2347
      %v2349 = vpop.f32.mrf.mxu0
      %v2350 = vadd.f32 %v2261, %v2349
      %2351 = vdwg.mxu0
      %2352 = vmatpush.bf16.msra.mxu0 %v1891
      %2353 = vmatpush.bf16.msra.mxu0 %v1889
      %2354 = vmatpush.bf16.msra.mxu0 %v1887
      %2355 = vmatpush.bf16.msra.mxu0 %v1885
      %2356 = vmatpush.bf16.msra.mxu0 %v1883
      %2357 = vmatpush.bf16.msra.mxu0 %v1881
      %2358 = vmatpush.bf16.msra.mxu0 %v1879
      %2359 = vmatpush.bf16.msra.mxu0 %v1877
      %2360 = vmatmul.bf16.gmra.mxu0 %v1192
      %v2361 = vpop.f32.mrf.mxu0
      %v2362 = vadd.f32 %v2273, %v2361
      %v2363 = vpop.f32.mrf.mxu0
      %v2364 = vadd.f32 %v2275, %v2363
      %2365 = vmatmul.bf16.gmra.mxu0 %v1200
      %v2366 = vpop.f32.mrf.mxu0
      %v2367 = vadd.f32 %v2278, %v2366
      %v2368 = vpop.f32.mrf.mxu0
      %v2369 = vadd.f32 %v2280, %v2368
      %2370 = vmatmul.bf16.gmra.mxu0 %v1208
      %v2371 = vpop.f32.mrf.mxu0
      %v2372 = vadd.f32 %v2283, %v2371
      %v2373 = vpop.f32.mrf.mxu0
      %v2374 = vadd.f32 %v2285, %v2373
      %2375 = vmatmul.bf16.gmra.mxu0 %v1216
      %v2376 = vpop.f32.mrf.mxu0
      %v2377 = vadd.f32 %v2288, %v2376
      %v2378 = vpop.f32.mrf.mxu0
      %v2379 = vadd.f32 %v2290, %v2378
      %2380 = vmatmul.bf16.gmra.mxu0 %v1224
      %v2381 = vpop.f32.mrf.mxu0
      %v2382 = vadd.f32 %v2293, %v2381
      %v2383 = vpop.f32.mrf.mxu0
      %v2384 = vadd.f32 %v2295, %v2383
      %2385 = vmatmul.bf16.gmra.mxu0 %v1232
      %v2386 = vpop.f32.mrf.mxu0
      %v2387 = vadd.f32 %v2298, %v2386
      %v2388 = vpop.f32.mrf.mxu0
      %v2389 = vadd.f32 %v2300, %v2388
      %2390 = vmatmul.bf16.gmra.mxu0 %v1240
      %v2391 = vpop.f32.mrf.mxu0
      %v2392 = vadd.f32 %v2303, %v2391
      %v2393 = vpop.f32.mrf.mxu0
      %v2394 = vadd.f32 %v2305, %v2393
      %2395 = vmatmul.bf16.gmra.mxu0 %v1248
      %v2396 = vpop.f32.mrf.mxu0
      %v2397 = vadd.f32 %v2308, %v2396
      %v2398 = vpop.f32.mrf.mxu0
      %v2399 = vadd.f32 %v2310, %v2398
      %2400 = vmatmul.bf16.gmra.mxu0 %v1256
      %v2401 = vpop.f32.mrf.mxu0
      %v2402 = vadd.f32 %v2313, %v2401
      %v2403 = vpop.f32.mrf.mxu0
      %v2404 = vadd.f32 %v2315, %v2403
      %2405 = vmatmul.bf16.gmra.mxu0 %v1264
      %v2406 = vpop.f32.mrf.mxu0
      %v2407 = vadd.f32 %v2318, %v2406
      %v2408 = vpop.f32.mrf.mxu0
      %v2409 = vadd.f32 %v2320, %v2408
      %2410 = vmatmul.bf16.gmra.mxu0 %v1272
      %v2411 = vpop.f32.mrf.mxu0
      %v2412 = vadd.f32 %v2323, %v2411
      %v2413 = vpop.f32.mrf.mxu0
      %v2414 = vadd.f32 %v2325, %v2413
      %2415 = vmatmul.bf16.gmra.mxu0 %v1280
      %v2416 = vpop.f32.mrf.mxu0
      %v2417 = vadd.f32 %v2328, %v2416
      %v2418 = vpop.f32.mrf.mxu0
      %v2419 = vadd.f32 %v2330, %v2418
      %2420 = vmatmul.bf16.gmra.mxu0 %v1288
      %v2421 = vpop.f32.mrf.mxu0
      %v2422 = vadd.f32 %v2333, %v2421
      %v2423 = vpop.f32.mrf.mxu0
      %v2424 = vadd.f32 %v2335, %v2423
      %2425 = vmatmul.bf16.gmra.mxu0 %v1296
      %v2426 = vpop.f32.mrf.mxu0
      %v2427 = vadd.f32 %v2338, %v2426
      %v2428 = vpop.f32.mrf.mxu0
      %v2429 = vadd.f32 %v2340, %v2428
      %2430 = vmatmul.bf16.gmra.mxu0 %v1304
      %v2431 = vpop.f32.mrf.mxu0
      %v2432 = vadd.f32 %v2343, %v2431
      %v2433 = vpop.f32.mrf.mxu0
      %v2434 = vadd.f32 %v2345, %v2433
      %2435 = vmatmul.bf16.gmra.mxu0 %v1312
      %v2436 = vpop.f32.mrf.mxu0
      %v2437 = vadd.f32 %v2348, %v2436
      %v2438 = vpop.f32.mrf.mxu0
      %v2439 = vadd.f32 %v2350, %v2438
      %2440 = vdwg.mxu0
      %2441 = vmatpush.bf16.msra.mxu0 %v1907
      %2442 = vmatpush.bf16.msra.mxu0 %v1905
      %2443 = vmatpush.bf16.msra.mxu0 %v1903
      %2444 = vmatpush.bf16.msra.mxu0 %v1901
      %2445 = vmatpush.bf16.msra.mxu0 %v1899
      %2446 = vmatpush.bf16.msra.mxu0 %v1897
      %2447 = vmatpush.bf16.msra.mxu0 %v1895
      %2448 = vmatpush.bf16.msra.mxu0 %v1893
      %2449 = vmatmul.bf16.gmra.mxu0 %v1193
      %v2450 = vpop.f32.mrf.mxu0
      %v2451 = vadd.f32 %v2362, %v2450
      %v2452 = vpop.f32.mrf.mxu0
      %v2453 = vadd.f32 %v2364, %v2452
      %2454 = vmatmul.bf16.gmra.mxu0 %v1201
      %v2455 = vpop.f32.mrf.mxu0
      %v2456 = vadd.f32 %v2367, %v2455
      %v2457 = vpop.f32.mrf.mxu0
      %v2458 = vadd.f32 %v2369, %v2457
      %2459 = vmatmul.bf16.gmra.mxu0 %v1209
      %v2460 = vpop.f32.mrf.mxu0
      %v2461 = vadd.f32 %v2372, %v2460
      %v2462 = vpop.f32.mrf.mxu0
      %v2463 = vadd.f32 %v2374, %v2462
      %2464 = vmatmul.bf16.gmra.mxu0 %v1217
      %v2465 = vpop.f32.mrf.mxu0
      %v2466 = vadd.f32 %v2377, %v2465
      %v2467 = vpop.f32.mrf.mxu0
      %v2468 = vadd.f32 %v2379, %v2467
      %2469 = vmatmul.bf16.gmra.mxu0 %v1225
      %v2470 = vpop.f32.mrf.mxu0
      %v2471 = vadd.f32 %v2382, %v2470
      %v2472 = vpop.f32.mrf.mxu0
      %v2473 = vadd.f32 %v2384, %v2472
      %2474 = vmatmul.bf16.gmra.mxu0 %v1233
      %v2475 = vpop.f32.mrf.mxu0
      %v2476 = vadd.f32 %v2387, %v2475
      %v2477 = vpop.f32.mrf.mxu0
      %v2478 = vadd.f32 %v2389, %v2477
      %2479 = vmatmul.bf16.gmra.mxu0 %v1241
      %v2480 = vpop.f32.mrf.mxu0
      %v2481 = vadd.f32 %v2392, %v2480
      %v2482 = vpop.f32.mrf.mxu0
      %v2483 = vadd.f32 %v2394, %v2482
      %2484 = vmatmul.bf16.gmra.mxu0 %v1249
      %v2485 = vpop.f32.mrf.mxu0
      %v2486 = vadd.f32 %v2397, %v2485
      %v2487 = vpop.f32.mrf.mxu0
      %v2488 = vadd.f32 %v2399, %v2487
      %2489 = vmatmul.bf16.gmra.mxu0 %v1257
      %v2490 = vpop.f32.mrf.mxu0
      %v2491 = vadd.f32 %v2402, %v2490
      %v2492 = vpop.f32.mrf.mxu0
      %v2493 = vadd.f32 %v2404, %v2492
      %2494 = vmatmul.bf16.gmra.mxu0 %v1265
      %v2495 = vpop.f32.mrf.mxu0
      %v2496 = vadd.f32 %v2407, %v2495
      %v2497 = vpop.f32.mrf.mxu0
      %v2498 = vadd.f32 %v2409, %v2497
      %2499 = vmatmul.bf16.gmra.mxu0 %v1273
      %v2500 = vpop.f32.mrf.mxu0
      %v2501 = vadd.f32 %v2412, %v2500
      %v2502 = vpop.f32.mrf.mxu0
      %v2503 = vadd.f32 %v2414, %v2502
      %2504 = vmatmul.bf16.gmra.mxu0 %v1281
      %v2505 = vpop.f32.mrf.mxu0
      %v2506 = vadd.f32 %v2417, %v2505
      %v2507 = vpop.f32.mrf.mxu0
      %v2508 = vadd.f32 %v2419, %v2507
      %2509 = vmatmul.bf16.gmra.mxu0 %v1289
      %v2510 = vpop.f32.mrf.mxu0
      %v2511 = vadd.f32 %v2422, %v2510
      %v2512 = vpop.f32.mrf.mxu0
      %v2513 = vadd.f32 %v2424, %v2512
      %2514 = vmatmul.bf16.gmra.mxu0 %v1297
      %v2515 = vpop.f32.mrf.mxu0
      %v2516 = vadd.f32 %v2427, %v2515
      %v2517 = vpop.f32.mrf.mxu0
      %v2518 = vadd.f32 %v2429, %v2517
      %2519 = vmatmul.bf16.gmra.mxu0 %v1305
      %v2520 = vpop.f32.mrf.mxu0
      %v2521 = vadd.f32 %v2432, %v2520
      %v2522 = vpop.f32.mrf.mxu0
      %v2523 = vadd.f32 %v2434, %v2522
      %2524 = vmatmul.bf16.gmra.mxu0 %v1313
      %v2525 = vpop.f32.mrf.mxu0
      %v2526 = vadd.f32 %v2437, %v2525
      %v2527 = vpop.f32.mrf.mxu0
      %v2528 = vadd.f32 %v2439, %v2527
      %2529 = vdwg.mxu0
      %2530 = vmatpush.bf16.msra.mxu0 %v1923
      %2531 = vmatpush.bf16.msra.mxu0 %v1921
      %2532 = vmatpush.bf16.msra.mxu0 %v1919
      %2533 = vmatpush.bf16.msra.mxu0 %v1917
      %2534 = vmatpush.bf16.msra.mxu0 %v1915
      %2535 = vmatpush.bf16.msra.mxu0 %v1913
      %2536 = vmatpush.bf16.msra.mxu0 %v1911
      %2537 = vmatpush.bf16.msra.mxu0 %v1909
      %2538 = vmatmul.bf16.gmra.mxu0 %v1194
      %v2539 = vpop.f32.mrf.mxu0
      %v2540 = vadd.f32 %v2451, %v2539
      %v2541 = vpop.f32.mrf.mxu0
      %v2542 = vadd.f32 %v2453, %v2541
      %2543 = vmatmul.bf16.gmra.mxu0 %v1202
      %v2544 = vpop.f32.mrf.mxu0
      %v2545 = vadd.f32 %v2456, %v2544
      %v2546 = vpop.f32.mrf.mxu0
      %v2547 = vadd.f32 %v2458, %v2546
      %2548 = vmatmul.bf16.gmra.mxu0 %v1210
      %v2549 = vpop.f32.mrf.mxu0
      %v2550 = vadd.f32 %v2461, %v2549
      %v2551 = vpop.f32.mrf.mxu0
      %v2552 = vadd.f32 %v2463, %v2551
      %2553 = vmatmul.bf16.gmra.mxu0 %v1218
      %v2554 = vpop.f32.mrf.mxu0
      %v2555 = vadd.f32 %v2466, %v2554
      %v2556 = vpop.f32.mrf.mxu0
      %v2557 = vadd.f32 %v2468, %v2556
      %2558 = vmatmul.bf16.gmra.mxu0 %v1226
      %v2559 = vpop.f32.mrf.mxu0
      %v2560 = vadd.f32 %v2471, %v2559
      %v2561 = vpop.f32.mrf.mxu0
      %v2562 = vadd.f32 %v2473, %v2561
      %2563 = vmatmul.bf16.gmra.mxu0 %v1234
      %v2564 = vpop.f32.mrf.mxu0
      %v2565 = vadd.f32 %v2476, %v2564
      %v2566 = vpop.f32.mrf.mxu0
      %v2567 = vadd.f32 %v2478, %v2566
      %2568 = vmatmul.bf16.gmra.mxu0 %v1242
      %v2569 = vpop.f32.mrf.mxu0
      %v2570 = vadd.f32 %v2481, %v2569
      %v2571 = vpop.f32.mrf.mxu0
      %v2572 = vadd.f32 %v2483, %v2571
      %2573 = vmatmul.bf16.gmra.mxu0 %v1250
      %v2574 = vpop.f32.mrf.mxu0
      %v2575 = vadd.f32 %v2486, %v2574
      %v2576 = vpop.f32.mrf.mxu0
      %v2577 = vadd.f32 %v2488, %v2576
      %2578 = vmatmul.bf16.gmra.mxu0 %v1258
      %v2579 = vpop.f32.mrf.mxu0
      %v2580 = vadd.f32 %v2491, %v2579
      %v2581 = vpop.f32.mrf.mxu0
      %v2582 = vadd.f32 %v2493, %v2581
      %2583 = vmatmul.bf16.gmra.mxu0 %v1266
      %v2584 = vpop.f32.mrf.mxu0
      %v2585 = vadd.f32 %v2496, %v2584
      %v2586 = vpop.f32.mrf.mxu0
      %v2587 = vadd.f32 %v2498, %v2586
      %2588 = vmatmul.bf16.gmra.mxu0 %v1274
      %v2589 = vpop.f32.mrf.mxu0
      %v2590 = vadd.f32 %v2501, %v2589
      %v2591 = vpop.f32.mrf.mxu0
      %v2592 = vadd.f32 %v2503, %v2591
      %2593 = vmatmul.bf16.gmra.mxu0 %v1282
      %v2594 = vpop.f32.mrf.mxu0
      %v2595 = vadd.f32 %v2506, %v2594
      %v2596 = vpop.f32.mrf.mxu0
      %v2597 = vadd.f32 %v2508, %v2596
      %2598 = vmatmul.bf16.gmra.mxu0 %v1290
      %v2599 = vpop.f32.mrf.mxu0
      %v2600 = vadd.f32 %v2511, %v2599
      %v2601 = vpop.f32.mrf.mxu0
      %v2602 = vadd.f32 %v2513, %v2601
      %2603 = vmatmul.bf16.gmra.mxu0 %v1298
      %v2604 = vpop.f32.mrf.mxu0
      %v2605 = vadd.f32 %v2516, %v2604
      %v2606 = vpop.f32.mrf.mxu0
      %v2607 = vadd.f32 %v2518, %v2606
      %2608 = vmatmul.bf16.gmra.mxu0 %v1306
      %v2609 = vpop.f32.mrf.mxu0
      %v2610 = vadd.f32 %v2521, %v2609
      %v2611 = vpop.f32.mrf.mxu0
      %v2612 = vadd.f32 %v2523, %v2611
      %2613 = vmatmul.bf16.gmra.mxu0 %v1314
      %v2614 = vpop.f32.mrf.mxu0
      %v2615 = vadd.f32 %v2526, %v2614
      %v2616 = vpop.f32.mrf.mxu0
      %v2617 = vadd.f32 %v2528, %v2616
      %2618 = vdwg.mxu0
      %2619 = vmatpush.bf16.msra.mxu0 %v1939
      %2620 = vmatpush.bf16.msra.mxu0 %v1937
      %2621 = vmatpush.bf16.msra.mxu0 %v1935
      %2622 = vmatpush.bf16.msra.mxu0 %v1933
      %2623 = vmatpush.bf16.msra.mxu0 %v1931
      %2624 = vmatpush.bf16.msra.mxu0 %v1929
      %2625 = vmatpush.bf16.msra.mxu0 %v1927
      %2626 = vmatpush.bf16.msra.mxu0 %v1925
      %2627 = vmatmul.bf16.gmra.mxu0 %v1195
      %v2628 = vpop.f32.mrf.mxu0
      %v2629 = vadd.f32 %v2540, %v2628
      %v2630 = vpop.f32.mrf.mxu0
      %v2631 = vadd.f32 %v2542, %v2630
      %2632 = vmatmul.bf16.gmra.mxu0 %v1203
      %v2633 = vpop.f32.mrf.mxu0
      %v2634 = vadd.f32 %v2545, %v2633
      %v2635 = vpop.f32.mrf.mxu0
      %v2636 = vadd.f32 %v2547, %v2635
      %2637 = vmatmul.bf16.gmra.mxu0 %v1211
      %v2638 = vpop.f32.mrf.mxu0
      %v2639 = vadd.f32 %v2550, %v2638
      %v2640 = vpop.f32.mrf.mxu0
      %v2641 = vadd.f32 %v2552, %v2640
      %2642 = vmatmul.bf16.gmra.mxu0 %v1219
      %v2643 = vpop.f32.mrf.mxu0
      %v2644 = vadd.f32 %v2555, %v2643
      %v2645 = vpop.f32.mrf.mxu0
      %v2646 = vadd.f32 %v2557, %v2645
      %2647 = vmatmul.bf16.gmra.mxu0 %v1227
      %v2648 = vpop.f32.mrf.mxu0
      %v2649 = vadd.f32 %v2560, %v2648
      %v2650 = vpop.f32.mrf.mxu0
      %v2651 = vadd.f32 %v2562, %v2650
      %2652 = vmatmul.bf16.gmra.mxu0 %v1235
      %v2653 = vpop.f32.mrf.mxu0
      %v2654 = vadd.f32 %v2565, %v2653
      %v2655 = vpop.f32.mrf.mxu0
      %v2656 = vadd.f32 %v2567, %v2655
      %2657 = vmatmul.bf16.gmra.mxu0 %v1243
      %v2658 = vpop.f32.mrf.mxu0
      %v2659 = vadd.f32 %v2570, %v2658
      %v2660 = vpop.f32.mrf.mxu0
      %v2661 = vadd.f32 %v2572, %v2660
      %2662 = vmatmul.bf16.gmra.mxu0 %v1251
      %v2663 = vpop.f32.mrf.mxu0
      %v2664 = vadd.f32 %v2575, %v2663
      %v2665 = vpop.f32.mrf.mxu0
      %v2666 = vadd.f32 %v2577, %v2665
      %2667 = vmatmul.bf16.gmra.mxu0 %v1259
      %v2668 = vpop.f32.mrf.mxu0
      %v2669 = vadd.f32 %v2580, %v2668
      %v2670 = vpop.f32.mrf.mxu0
      %v2671 = vadd.f32 %v2582, %v2670
      %2672 = vmatmul.bf16.gmra.mxu0 %v1267
      %v2673 = vpop.f32.mrf.mxu0
      %v2674 = vadd.f32 %v2585, %v2673
      %v2675 = vpop.f32.mrf.mxu0
      %v2676 = vadd.f32 %v2587, %v2675
      %2677 = vmatmul.bf16.gmra.mxu0 %v1275
      %v2678 = vpop.f32.mrf.mxu0
      %v2679 = vadd.f32 %v2590, %v2678
      %v2680 = vpop.f32.mrf.mxu0
      %v2681 = vadd.f32 %v2592, %v2680
      %2682 = vmatmul.bf16.gmra.mxu0 %v1283
      %v2683 = vpop.f32.mrf.mxu0
      %v2684 = vadd.f32 %v2595, %v2683
      %v2685 = vpop.f32.mrf.mxu0
      %v2686 = vadd.f32 %v2597, %v2685
      %2687 = vmatmul.bf16.gmra.mxu0 %v1291
      %v2688 = vpop.f32.mrf.mxu0
      %v2689 = vadd.f32 %v2600, %v2688
      %v2690 = vpop.f32.mrf.mxu0
      %v2691 = vadd.f32 %v2602, %v2690
      %2692 = vmatmul.bf16.gmra.mxu0 %v1299
      %v2693 = vpop.f32.mrf.mxu0
      %v2694 = vadd.f32 %v2605, %v2693
      %v2695 = vpop.f32.mrf.mxu0
      %v2696 = vadd.f32 %v2607, %v2695
      %2697 = vmatmul.bf16.gmra.mxu0 %v1307
      %v2698 = vpop.f32.mrf.mxu0
      %v2699 = vadd.f32 %v2610, %v2698
      %v2700 = vpop.f32.mrf.mxu0
      %v2701 = vadd.f32 %v2612, %v2700
      %2702 = vmatmul.bf16.gmra.mxu0 %v1315
      %v2703 = vpop.f32.mrf.mxu0
      %v2704 = vadd.f32 %v2615, %v2703
      %v2705 = vpop.f32.mrf.mxu0
      %v2706 = vadd.f32 %v2617, %v2705
      %2707 = vdwg.mxu0
      %2708 = vmatpush.bf16.msra.mxu0 %v1955
      %2709 = vmatpush.bf16.msra.mxu0 %v1953
      %2710 = vmatpush.bf16.msra.mxu0 %v1951
      %2711 = vmatpush.bf16.msra.mxu0 %v1949
      %2712 = vmatpush.bf16.msra.mxu0 %v1947
      %2713 = vmatpush.bf16.msra.mxu0 %v1945
      %2714 = vmatpush.bf16.msra.mxu0 %v1943
      %2715 = vmatpush.bf16.msra.mxu0 %v1941
      %2716 = vmatmul.bf16.gmra.mxu0 %v1196
      %v2717 = vpop.f32.mrf.mxu0
      %v2718 = vadd.f32 %v2629, %v2717
      %v2719 = vpop.f32.mrf.mxu0
      %v2720 = vadd.f32 %v2631, %v2719
      %2721 = vmatmul.bf16.gmra.mxu0 %v1204
      %v2722 = vpop.f32.mrf.mxu0
      %v2723 = vadd.f32 %v2634, %v2722
      %v2724 = vpop.f32.mrf.mxu0
      %v2725 = vadd.f32 %v2636, %v2724
      %2726 = vmatmul.bf16.gmra.mxu0 %v1212
      %v2727 = vpop.f32.mrf.mxu0
      %v2728 = vadd.f32 %v2639, %v2727
      %v2729 = vpop.f32.mrf.mxu0
      %v2730 = vadd.f32 %v2641, %v2729
      %2731 = vmatmul.bf16.gmra.mxu0 %v1220
      %v2732 = vpop.f32.mrf.mxu0
      %v2733 = vadd.f32 %v2644, %v2732
      %v2734 = vpop.f32.mrf.mxu0
      %v2735 = vadd.f32 %v2646, %v2734
      %2736 = vmatmul.bf16.gmra.mxu0 %v1228
      %v2737 = vpop.f32.mrf.mxu0
      %v2738 = vadd.f32 %v2649, %v2737
      %v2739 = vpop.f32.mrf.mxu0
      %v2740 = vadd.f32 %v2651, %v2739
      %2741 = vmatmul.bf16.gmra.mxu0 %v1236
      %v2742 = vpop.f32.mrf.mxu0
      %v2743 = vadd.f32 %v2654, %v2742
      %v2744 = vpop.f32.mrf.mxu0
      %v2745 = vadd.f32 %v2656, %v2744
      %2746 = vmatmul.bf16.gmra.mxu0 %v1244
      %v2747 = vpop.f32.mrf.mxu0
      %v2748 = vadd.f32 %v2659, %v2747
      %v2749 = vpop.f32.mrf.mxu0
      %v2750 = vadd.f32 %v2661, %v2749
      %2751 = vmatmul.bf16.gmra.mxu0 %v1252
      %v2752 = vpop.f32.mrf.mxu0
      %v2753 = vadd.f32 %v2664, %v2752
      %v2754 = vpop.f32.mrf.mxu0
      %v2755 = vadd.f32 %v2666, %v2754
      %2756 = vmatmul.bf16.gmra.mxu0 %v1260
      %v2757 = vpop.f32.mrf.mxu0
      %v2758 = vadd.f32 %v2669, %v2757
      %v2759 = vpop.f32.mrf.mxu0
      %v2760 = vadd.f32 %v2671, %v2759
      %2761 = vmatmul.bf16.gmra.mxu0 %v1268
      %v2762 = vpop.f32.mrf.mxu0
      %v2763 = vadd.f32 %v2674, %v2762
      %v2764 = vpop.f32.mrf.mxu0
      %v2765 = vadd.f32 %v2676, %v2764
      %2766 = vmatmul.bf16.gmra.mxu0 %v1276
      %v2767 = vpop.f32.mrf.mxu0
      %v2768 = vadd.f32 %v2679, %v2767
      %v2769 = vpop.f32.mrf.mxu0
      %v2770 = vadd.f32 %v2681, %v2769
      %2771 = vmatmul.bf16.gmra.mxu0 %v1284
      %v2772 = vpop.f32.mrf.mxu0
      %v2773 = vadd.f32 %v2684, %v2772
      %v2774 = vpop.f32.mrf.mxu0
      %v2775 = vadd.f32 %v2686, %v2774
      %2776 = vmatmul.bf16.gmra.mxu0 %v1292
      %v2777 = vpop.f32.mrf.mxu0
      %v2778 = vadd.f32 %v2689, %v2777
      %v2779 = vpop.f32.mrf.mxu0
      %v2780 = vadd.f32 %v2691, %v2779
      %2781 = vmatmul.bf16.gmra.mxu0 %v1300
      %v2782 = vpop.f32.mrf.mxu0
      %v2783 = vadd.f32 %v2694, %v2782
      %v2784 = vpop.f32.mrf.mxu0
      %v2785 = vadd.f32 %v2696, %v2784
      %2786 = vmatmul.bf16.gmra.mxu0 %v1308
      %v2787 = vpop.f32.mrf.mxu0
      %v2788 = vadd.f32 %v2699, %v2787
      %v2789 = vpop.f32.mrf.mxu0
      %v2790 = vadd.f32 %v2701, %v2789
      %2791 = vmatmul.bf16.gmra.mxu0 %v1316
      %v2792 = vpop.f32.mrf.mxu0
      %v2793 = vadd.f32 %v2704, %v2792
      %v2794 = vpop.f32.mrf.mxu0
      %v2795 = vadd.f32 %v2706, %v2794
      %2796 = vdwg.mxu0
      %2797 = vmatpush.bf16.msra.mxu0 %v1844
      %2798 = vmatpush.bf16.msra.mxu0 %v1842
      %2799 = vmatpush.bf16.msra.mxu0 %v1840
      %2800 = vmatpush.bf16.msra.mxu0 %v1838
      %2801 = vmatpush.bf16.msra.mxu0 %v1836
      %2802 = vmatpush.bf16.msra.mxu0 %v1834
      %2803 = vmatpush.bf16.msra.mxu0 %v1832
      %2804 = vmatpush.bf16.msra.mxu0 %v1830
      %2805 = vmatmul.bf16.gmra.mxu0 %v1189
      %v2806 = vpop.f32.mrf.mxu0
      %v2807 = vadd.f32 0.0, %v2806
      %v2808 = vpop.f32.mrf.mxu0
      %v2809 = vadd.f32 0.0, %v2808
      %2810 = vmatmul.bf16.gmra.mxu0 %v1197
      %v2811 = vpop.f32.mrf.mxu0
      %v2812 = vadd.f32 0.0, %v2811
      %v2813 = vpop.f32.mrf.mxu0
      %v2814 = vadd.f32 0.0, %v2813
      %2815 = vmatmul.bf16.gmra.mxu0 %v1205
      %v2816 = vpop.f32.mrf.mxu0
      %v2817 = vadd.f32 0.0, %v2816
      %v2818 = vpop.f32.mrf.mxu0
      %v2819 = vadd.f32 0.0, %v2818
      %2820 = vmatmul.bf16.gmra.mxu0 %v1213
      %v2821 = vpop.f32.mrf.mxu0
      %v2822 = vadd.f32 0.0, %v2821
      %v2823 = vpop.f32.mrf.mxu0
      %v2824 = vadd.f32 0.0, %v2823
      %2825 = vmatmul.bf16.gmra.mxu0 %v1221
      %v2826 = vpop.f32.mrf.mxu0
      %v2827 = vadd.f32 0.0, %v2826
      %v2828 = vpop.f32.mrf.mxu0
      %v2829 = vadd.f32 0.0, %v2828
      %2830 = vmatmul.bf16.gmra.mxu0 %v1229
      %v2831 = vpop.f32.mrf.mxu0
      %v2832 = vadd.f32 0.0, %v2831
      %v2833 = vpop.f32.mrf.mxu0
      %v2834 = vadd.f32 0.0, %v2833
      %2835 = vmatmul.bf16.gmra.mxu0 %v1237
      %v2836 = vpop.f32.mrf.mxu0
      %v2837 = vadd.f32 0.0, %v2836
      %v2838 = vpop.f32.mrf.mxu0
      %v2839 = vadd.f32 0.0, %v2838
      %2840 = vmatmul.bf16.gmra.mxu0 %v1245
      %v2841 = vpop.f32.mrf.mxu0
      %v2842 = vadd.f32 0.0, %v2841
      %v2843 = vpop.f32.mrf.mxu0
      %v2844 = vadd.f32 0.0, %v2843
      %2845 = vmatmul.bf16.gmra.mxu0 %v1253
      %v2846 = vpop.f32.mrf.mxu0
      %v2847 = vadd.f32 0.0, %v2846
      %v2848 = vpop.f32.mrf.mxu0
      %v2849 = vadd.f32 0.0, %v2848
      %2850 = vmatmul.bf16.gmra.mxu0 %v1261
      %v2851 = vpop.f32.mrf.mxu0
      %v2852 = vadd.f32 0.0, %v2851
      %v2853 = vpop.f32.mrf.mxu0
      %v2854 = vadd.f32 0.0, %v2853
      %2855 = vmatmul.bf16.gmra.mxu0 %v1269
      %v2856 = vpop.f32.mrf.mxu0
      %v2857 = vadd.f32 0.0, %v2856
      %v2858 = vpop.f32.mrf.mxu0
      %v2859 = vadd.f32 0.0, %v2858
      %2860 = vmatmul.bf16.gmra.mxu0 %v1277
      %v2861 = vpop.f32.mrf.mxu0
      %v2862 = vadd.f32 0.0, %v2861
      %v2863 = vpop.f32.mrf.mxu0
      %v2864 = vadd.f32 0.0, %v2863
      %2865 = vmatmul.bf16.gmra.mxu0 %v1285
      %v2866 = vpop.f32.mrf.mxu0
      %v2867 = vadd.f32 0.0, %v2866
      %v2868 = vpop.f32.mrf.mxu0
      %v2869 = vadd.f32 0.0, %v2868
      %2870 = vmatmul.bf16.gmra.mxu0 %v1293
      %v2871 = vpop.f32.mrf.mxu0
      %v2872 = vadd.f32 0.0, %v2871
      %v2873 = vpop.f32.mrf.mxu0
      %v2874 = vadd.f32 0.0, %v2873
      %2875 = vmatmul.bf16.gmra.mxu0 %v1301
      %v2876 = vpop.f32.mrf.mxu0
      %v2877 = vadd.f32 0.0, %v2876
      %v2878 = vpop.f32.mrf.mxu0
      %v2879 = vadd.f32 0.0, %v2878
      %2880 = vmatmul.bf16.gmra.mxu0 %v1309
      %v2881 = vpop.f32.mrf.mxu0
      %v2882 = vadd.f32 0.0, %v2881
      %v2883 = vpop.f32.mrf.mxu0
      %v2884 = vadd.f32 0.0, %v2883
      %2885 = vdwg.mxu0
      %2886 = vmatpush.bf16.msra.mxu0 %v1860
      %2887 = vmatpush.bf16.msra.mxu0 %v1858
      %2888 = vmatpush.bf16.msra.mxu0 %v1856
      %2889 = vmatpush.bf16.msra.mxu0 %v1854
      %2890 = vmatpush.bf16.msra.mxu0 %v1852
      %2891 = vmatpush.bf16.msra.mxu0 %v1850
      %2892 = vmatpush.bf16.msra.mxu0 %v1848
      %2893 = vmatpush.bf16.msra.mxu0 %v1846
      %2894 = vmatmul.bf16.gmra.mxu0 %v1190
      %v2895 = vpop.f32.mrf.mxu0
      %v2896 = vadd.f32 %v2807, %v2895
      %v2897 = vpop.f32.mrf.mxu0
      %v2898 = vadd.f32 %v2809, %v2897
      %2899 = vmatmul.bf16.gmra.mxu0 %v1198
      %v2900 = vpop.f32.mrf.mxu0
      %v2901 = vadd.f32 %v2812, %v2900
      %v2902 = vpop.f32.mrf.mxu0
      %v2903 = vadd.f32 %v2814, %v2902
      %2904 = vmatmul.bf16.gmra.mxu0 %v1206
      %v2905 = vpop.f32.mrf.mxu0
      %v2906 = vadd.f32 %v2817, %v2905
      %v2907 = vpop.f32.mrf.mxu0
      %v2908 = vadd.f32 %v2819, %v2907
      %2909 = vmatmul.bf16.gmra.mxu0 %v1214
      %v2910 = vpop.f32.mrf.mxu0
      %v2911 = vadd.f32 %v2822, %v2910
      %v2912 = vpop.f32.mrf.mxu0
      %v2913 = vadd.f32 %v2824, %v2912
      %2914 = vmatmul.bf16.gmra.mxu0 %v1222
      %v2915 = vpop.f32.mrf.mxu0
      %v2916 = vadd.f32 %v2827, %v2915
      %v2917 = vpop.f32.mrf.mxu0
      %v2918 = vadd.f32 %v2829, %v2917
      %2919 = vmatmul.bf16.gmra.mxu0 %v1230
      %v2920 = vpop.f32.mrf.mxu0
      %v2921 = vadd.f32 %v2832, %v2920
      %v2922 = vpop.f32.mrf.mxu0
      %v2923 = vadd.f32 %v2834, %v2922
      %2924 = vmatmul.bf16.gmra.mxu0 %v1238
      %v2925 = vpop.f32.mrf.mxu0
      %v2926 = vadd.f32 %v2837, %v2925
      %v2927 = vpop.f32.mrf.mxu0
      %v2928 = vadd.f32 %v2839, %v2927
      %2929 = vmatmul.bf16.gmra.mxu0 %v1246
      %v2930 = vpop.f32.mrf.mxu0
      %v2931 = vadd.f32 %v2842, %v2930
      %v2932 = vpop.f32.mrf.mxu0
      %v2933 = vadd.f32 %v2844, %v2932
      %2934 = vmatmul.bf16.gmra.mxu0 %v1254
      %v2935 = vpop.f32.mrf.mxu0
      %v2936 = vadd.f32 %v2847, %v2935
      %v2937 = vpop.f32.mrf.mxu0
      %v2938 = vadd.f32 %v2849, %v2937
      %2939 = vmatmul.bf16.gmra.mxu0 %v1262
      %v2940 = vpop.f32.mrf.mxu0
      %v2941 = vadd.f32 %v2852, %v2940
      %v2942 = vpop.f32.mrf.mxu0
      %v2943 = vadd.f32 %v2854, %v2942
      %2944 = vmatmul.bf16.gmra.mxu0 %v1270
      %v2945 = vpop.f32.mrf.mxu0
      %v2946 = vadd.f32 %v2857, %v2945
      %v2947 = vpop.f32.mrf.mxu0
      %v2948 = vadd.f32 %v2859, %v2947
      %2949 = vmatmul.bf16.gmra.mxu0 %v1278
      %v2950 = vpop.f32.mrf.mxu0
      %v2951 = vadd.f32 %v2862, %v2950
      %v2952 = vpop.f32.mrf.mxu0
      %v2953 = vadd.f32 %v2864, %v2952
      %2954 = vmatmul.bf16.gmra.mxu0 %v1286
      %v2955 = vpop.f32.mrf.mxu0
      %v2956 = vadd.f32 %v2867, %v2955
      %v2957 = vpop.f32.mrf.mxu0
      %v2958 = vadd.f32 %v2869, %v2957
      %2959 = vmatmul.bf16.gmra.mxu0 %v1294
      %v2960 = vpop.f32.mrf.mxu0
      %v2961 = vadd.f32 %v2872, %v2960
      %v2962 = vpop.f32.mrf.mxu0
      %v2963 = vadd.f32 %v2874, %v2962
      %2964 = vmatmul.bf16.gmra.mxu0 %v1302
      %v2965 = vpop.f32.mrf.mxu0
      %v2966 = vadd.f32 %v2877, %v2965
      %v2967 = vpop.f32.mrf.mxu0
      %v2968 = vadd.f32 %v2879, %v2967
      %2969 = vmatmul.bf16.gmra.mxu0 %v1310
      %v2970 = vpop.f32.mrf.mxu0
      %v2971 = vadd.f32 %v2882, %v2970
      %v2972 = vpop.f32.mrf.mxu0
      %v2973 = vadd.f32 %v2884, %v2972
      %2974 = vdwg.mxu0
      %2975 = vmatpush.bf16.msra.mxu0 %v1876
      %2976 = vmatpush.bf16.msra.mxu0 %v1874
      %2977 = vmatpush.bf16.msra.mxu0 %v1872
      %2978 = vmatpush.bf16.msra.mxu0 %v1870
      %2979 = vmatpush.bf16.msra.mxu0 %v1868
      %2980 = vmatpush.bf16.msra.mxu0 %v1866
      %2981 = vmatpush.bf16.msra.mxu0 %v1864
      %2982 = vmatpush.bf16.msra.mxu0 %v1862
      %2983 = vmatmul.bf16.gmra.mxu0 %v1191
      %v2984 = vpop.f32.mrf.mxu0
      %v2985 = vadd.f32 %v2896, %v2984
      %v2986 = vpop.f32.mrf.mxu0
      %v2987 = vadd.f32 %v2898, %v2986
      %2988 = vmatmul.bf16.gmra.mxu0 %v1199
      %v2989 = vpop.f32.mrf.mxu0
      %v2990 = vadd.f32 %v2901, %v2989
      %v2991 = vpop.f32.mrf.mxu0
      %v2992 = vadd.f32 %v2903, %v2991
      %2993 = vmatmul.bf16.gmra.mxu0 %v1207
      %v2994 = vpop.f32.mrf.mxu0
      %v2995 = vadd.f32 %v2906, %v2994
      %v2996 = vpop.f32.mrf.mxu0
      %v2997 = vadd.f32 %v2908, %v2996
      %2998 = vmatmul.bf16.gmra.mxu0 %v1215
      %v2999 = vpop.f32.mrf.mxu0
      %v3000 = vadd.f32 %v2911, %v2999
      %v3001 = vpop.f32.mrf.mxu0
      %v3002 = vadd.f32 %v2913, %v3001
      %3003 = vmatmul.bf16.gmra.mxu0 %v1223
      %v3004 = vpop.f32.mrf.mxu0
      %v3005 = vadd.f32 %v2916, %v3004
      %v3006 = vpop.f32.mrf.mxu0
      %v3007 = vadd.f32 %v2918, %v3006
      %3008 = vmatmul.bf16.gmra.mxu0 %v1231
      %v3009 = vpop.f32.mrf.mxu0
      %v3010 = vadd.f32 %v2921, %v3009
      %v3011 = vpop.f32.mrf.mxu0
      %v3012 = vadd.f32 %v2923, %v3011
      %3013 = vmatmul.bf16.gmra.mxu0 %v1239
      %v3014 = vpop.f32.mrf.mxu0
      %v3015 = vadd.f32 %v2926, %v3014
      %v3016 = vpop.f32.mrf.mxu0
      %v3017 = vadd.f32 %v2928, %v3016
      %3018 = vmatmul.bf16.gmra.mxu0 %v1247
      %v3019 = vpop.f32.mrf.mxu0
      %v3020 = vadd.f32 %v2931, %v3019
      %v3021 = vpop.f32.mrf.mxu0
      %v3022 = vadd.f32 %v2933, %v3021
      %3023 = vmatmul.bf16.gmra.mxu0 %v1255
      %v3024 = vpop.f32.mrf.mxu0
      %v3025 = vadd.f32 %v2936, %v3024
      %v3026 = vpop.f32.mrf.mxu0
      %v3027 = vadd.f32 %v2938, %v3026
      %3028 = vmatmul.bf16.gmra.mxu0 %v1263
      %v3029 = vpop.f32.mrf.mxu0
      %v3030 = vadd.f32 %v2941, %v3029
      %v3031 = vpop.f32.mrf.mxu0
      %v3032 = vadd.f32 %v2943, %v3031
      %3033 = vmatmul.bf16.gmra.mxu0 %v1271
      %v3034 = vpop.f32.mrf.mxu0
      %v3035 = vadd.f32 %v2946, %v3034
      %v3036 = vpop.f32.mrf.mxu0
      %v3037 = vadd.f32 %v2948, %v3036
      %3038 = vmatmul.bf16.gmra.mxu0 %v1279
      %v3039 = vpop.f32.mrf.mxu0
      %v3040 = vadd.f32 %v2951, %v3039
      %v3041 = vpop.f32.mrf.mxu0
      %v3042 = vadd.f32 %v2953, %v3041
      %3043 = vmatmul.bf16.gmra.mxu0 %v1287
      %v3044 = vpop.f32.mrf.mxu0
      %v3045 = vadd.f32 %v2956, %v3044
      %v3046 = vpop.f32.mrf.mxu0
      %v3047 = vadd.f32 %v2958, %v3046
      %3048 = vmatmul.bf16.gmra.mxu0 %v1295
      %v3049 = vpop.f32.mrf.mxu0
      %v3050 = vadd.f32 %v2961, %v3049
      %v3051 = vpop.f32.mrf.mxu0
      %v3052 = vadd.f32 %v2963, %v3051
      %3053 = vmatmul.bf16.gmra.mxu0 %v1303
      %v3054 = vpop.f32.mrf.mxu0
      %v3055 = vadd.f32 %v2966, %v3054
      %v3056 = vpop.f32.mrf.mxu0
      %v3057 = vadd.f32 %v2968, %v3056
      %3058 = vmatmul.bf16.gmra.mxu0 %v1311
      %v3059 = vpop.f32.mrf.mxu0
      %v3060 = vadd.f32 %v2971, %v3059
      %v3061 = vpop.f32.mrf.mxu0
      %v3062 = vadd.f32 %v2973, %v3061
      %3063 = vdwg.mxu0
      %3064 = vmatpush.bf16.msra.mxu0 %v1892
      %3065 = vmatpush.bf16.msra.mxu0 %v1890
      %3066 = vmatpush.bf16.msra.mxu0 %v1888
      %3067 = vmatpush.bf16.msra.mxu0 %v1886
      %3068 = vmatpush.bf16.msra.mxu0 %v1884
      %3069 = vmatpush.bf16.msra.mxu0 %v1882
      %3070 = vmatpush.bf16.msra.mxu0 %v1880
      %3071 = vmatpush.bf16.msra.mxu0 %v1878
      %3072 = vmatmul.bf16.gmra.mxu0 %v1192
      %v3073 = vpop.f32.mrf.mxu0
      %v3074 = vadd.f32 %v2985, %v3073
      %v3075 = vpop.f32.mrf.mxu0
      %v3076 = vadd.f32 %v2987, %v3075
      %3077 = vmatmul.bf16.gmra.mxu0 %v1200
      %v3078 = vpop.f32.mrf.mxu0
      %v3079 = vadd.f32 %v2990, %v3078
      %v3080 = vpop.f32.mrf.mxu0
      %v3081 = vadd.f32 %v2992, %v3080
      %3082 = vmatmul.bf16.gmra.mxu0 %v1208
      %v3083 = vpop.f32.mrf.mxu0
      %v3084 = vadd.f32 %v2995, %v3083
      %v3085 = vpop.f32.mrf.mxu0
      %v3086 = vadd.f32 %v2997, %v3085
      %3087 = vmatmul.bf16.gmra.mxu0 %v1216
      %v3088 = vpop.f32.mrf.mxu0
      %v3089 = vadd.f32 %v3000, %v3088
      %v3090 = vpop.f32.mrf.mxu0
      %v3091 = vadd.f32 %v3002, %v3090
      %3092 = vmatmul.bf16.gmra.mxu0 %v1224
      %v3093 = vpop.f32.mrf.mxu0
      %v3094 = vadd.f32 %v3005, %v3093
      %v3095 = vpop.f32.mrf.mxu0
      %v3096 = vadd.f32 %v3007, %v3095
      %3097 = vmatmul.bf16.gmra.mxu0 %v1232
      %v3098 = vpop.f32.mrf.mxu0
      %v3099 = vadd.f32 %v3010, %v3098
      %v3100 = vpop.f32.mrf.mxu0
      %v3101 = vadd.f32 %v3012, %v3100
      %3102 = vmatmul.bf16.gmra.mxu0 %v1240
      %v3103 = vpop.f32.mrf.mxu0
      %v3104 = vadd.f32 %v3015, %v3103
      %v3105 = vpop.f32.mrf.mxu0
      %v3106 = vadd.f32 %v3017, %v3105
      %3107 = vmatmul.bf16.gmra.mxu0 %v1248
      %v3108 = vpop.f32.mrf.mxu0
      %v3109 = vadd.f32 %v3020, %v3108
      %v3110 = vpop.f32.mrf.mxu0
      %v3111 = vadd.f32 %v3022, %v3110
      %3112 = vmatmul.bf16.gmra.mxu0 %v1256
      %v3113 = vpop.f32.mrf.mxu0
      %v3114 = vadd.f32 %v3025, %v3113
      %v3115 = vpop.f32.mrf.mxu0
      %v3116 = vadd.f32 %v3027, %v3115
      %3117 = vmatmul.bf16.gmra.mxu0 %v1264
      %v3118 = vpop.f32.mrf.mxu0
      %v3119 = vadd.f32 %v3030, %v3118
      %v3120 = vpop.f32.mrf.mxu0
      %v3121 = vadd.f32 %v3032, %v3120
      %3122 = vmatmul.bf16.gmra.mxu0 %v1272
      %v3123 = vpop.f32.mrf.mxu0
      %v3124 = vadd.f32 %v3035, %v3123
      %v3125 = vpop.f32.mrf.mxu0
      %v3126 = vadd.f32 %v3037, %v3125
      %3127 = vmatmul.bf16.gmra.mxu0 %v1280
      %v3128 = vpop.f32.mrf.mxu0
      %v3129 = vadd.f32 %v3040, %v3128
      %v3130 = vpop.f32.mrf.mxu0
      %v3131 = vadd.f32 %v3042, %v3130
      %3132 = vmatmul.bf16.gmra.mxu0 %v1288
      %v3133 = vpop.f32.mrf.mxu0
      %v3134 = vadd.f32 %v3045, %v3133
      %v3135 = vpop.f32.mrf.mxu0
      %v3136 = vadd.f32 %v3047, %v3135
      %3137 = vmatmul.bf16.gmra.mxu0 %v1296
      %v3138 = vpop.f32.mrf.mxu0
      %v3139 = vadd.f32 %v3050, %v3138
      %v3140 = vpop.f32.mrf.mxu0
      %v3141 = vadd.f32 %v3052, %v3140
      %3142 = vmatmul.bf16.gmra.mxu0 %v1304
      %v3143 = vpop.f32.mrf.mxu0
      %v3144 = vadd.f32 %v3055, %v3143
      %v3145 = vpop.f32.mrf.mxu0
      %v3146 = vadd.f32 %v3057, %v3145
      %3147 = vmatmul.bf16.gmra.mxu0 %v1312
      %v3148 = vpop.f32.mrf.mxu0
      %v3149 = vadd.f32 %v3060, %v3148
      %v3150 = vpop.f32.mrf.mxu0
      %v3151 = vadd.f32 %v3062, %v3150
      %3152 = vdwg.mxu0
      %3153 = vmatpush.bf16.msra.mxu0 %v1908
      %3154 = vmatpush.bf16.msra.mxu0 %v1906
      %3155 = vmatpush.bf16.msra.mxu0 %v1904
      %3156 = vmatpush.bf16.msra.mxu0 %v1902
      %3157 = vmatpush.bf16.msra.mxu0 %v1900
      %3158 = vmatpush.bf16.msra.mxu0 %v1898
      %3159 = vmatpush.bf16.msra.mxu0 %v1896
      %3160 = vmatpush.bf16.msra.mxu0 %v1894
      %3161 = vmatmul.bf16.gmra.mxu0 %v1193
      %v3162 = vpop.f32.mrf.mxu0
      %v3163 = vadd.f32 %v3074, %v3162
      %v3164 = vpop.f32.mrf.mxu0
      %v3165 = vadd.f32 %v3076, %v3164
      %3166 = vmatmul.bf16.gmra.mxu0 %v1201
      %v3167 = vpop.f32.mrf.mxu0
      %v3168 = vadd.f32 %v3079, %v3167
      %v3169 = vpop.f32.mrf.mxu0
      %v3170 = vadd.f32 %v3081, %v3169
      %3171 = vmatmul.bf16.gmra.mxu0 %v1209
      %v3172 = vpop.f32.mrf.mxu0
      %v3173 = vadd.f32 %v3084, %v3172
      %v3174 = vpop.f32.mrf.mxu0
      %v3175 = vadd.f32 %v3086, %v3174
      %3176 = vmatmul.bf16.gmra.mxu0 %v1217
      %v3177 = vpop.f32.mrf.mxu0
      %v3178 = vadd.f32 %v3089, %v3177
      %v3179 = vpop.f32.mrf.mxu0
      %v3180 = vadd.f32 %v3091, %v3179
      %3181 = vmatmul.bf16.gmra.mxu0 %v1225
      %v3182 = vpop.f32.mrf.mxu0
      %v3183 = vadd.f32 %v3094, %v3182
      %v3184 = vpop.f32.mrf.mxu0
      %v3185 = vadd.f32 %v3096, %v3184
      %3186 = vmatmul.bf16.gmra.mxu0 %v1233
      %v3187 = vpop.f32.mrf.mxu0
      %v3188 = vadd.f32 %v3099, %v3187
      %v3189 = vpop.f32.mrf.mxu0
      %v3190 = vadd.f32 %v3101, %v3189
      %3191 = vmatmul.bf16.gmra.mxu0 %v1241
      %v3192 = vpop.f32.mrf.mxu0
      %v3193 = vadd.f32 %v3104, %v3192
      %v3194 = vpop.f32.mrf.mxu0
      %v3195 = vadd.f32 %v3106, %v3194
      %3196 = vmatmul.bf16.gmra.mxu0 %v1249
      %v3197 = vpop.f32.mrf.mxu0
      %v3198 = vadd.f32 %v3109, %v3197
      %v3199 = vpop.f32.mrf.mxu0
      %v3200 = vadd.f32 %v3111, %v3199
      %3201 = vmatmul.bf16.gmra.mxu0 %v1257
      %v3202 = vpop.f32.mrf.mxu0
      %v3203 = vadd.f32 %v3114, %v3202
      %v3204 = vpop.f32.mrf.mxu0
      %v3205 = vadd.f32 %v3116, %v3204
      %3206 = vmatmul.bf16.gmra.mxu0 %v1265
      %v3207 = vpop.f32.mrf.mxu0
      %v3208 = vadd.f32 %v3119, %v3207
      %v3209 = vpop.f32.mrf.mxu0
      %v3210 = vadd.f32 %v3121, %v3209
      %3211 = vmatmul.bf16.gmra.mxu0 %v1273
      %v3212 = vpop.f32.mrf.mxu0
      %v3213 = vadd.f32 %v3124, %v3212
      %v3214 = vpop.f32.mrf.mxu0
      %v3215 = vadd.f32 %v3126, %v3214
      %3216 = vmatmul.bf16.gmra.mxu0 %v1281
      %v3217 = vpop.f32.mrf.mxu0
      %v3218 = vadd.f32 %v3129, %v3217
      %v3219 = vpop.f32.mrf.mxu0
      %v3220 = vadd.f32 %v3131, %v3219
      %3221 = vmatmul.bf16.gmra.mxu0 %v1289
      %v3222 = vpop.f32.mrf.mxu0
      %v3223 = vadd.f32 %v3134, %v3222
      %v3224 = vpop.f32.mrf.mxu0
      %v3225 = vadd.f32 %v3136, %v3224
      %3226 = vmatmul.bf16.gmra.mxu0 %v1297
      %v3227 = vpop.f32.mrf.mxu0
      %v3228 = vadd.f32 %v3139, %v3227
      %v3229 = vpop.f32.mrf.mxu0
      %v3230 = vadd.f32 %v3141, %v3229
      %3231 = vmatmul.bf16.gmra.mxu0 %v1305
      %v3232 = vpop.f32.mrf.mxu0
      %v3233 = vadd.f32 %v3144, %v3232
      %v3234 = vpop.f32.mrf.mxu0
      %v3235 = vadd.f32 %v3146, %v3234
      %3236 = vmatmul.bf16.gmra.mxu0 %v1313
      %v3237 = vpop.f32.mrf.mxu0
      %v3238 = vadd.f32 %v3149, %v3237
      %v3239 = vpop.f32.mrf.mxu0
      %v3240 = vadd.f32 %v3151, %v3239
      %3241 = vdwg.mxu0
      %3242 = vmatpush.bf16.msra.mxu0 %v1924
      %3243 = vmatpush.bf16.msra.mxu0 %v1922
      %3244 = vmatpush.bf16.msra.mxu0 %v1920
      %3245 = vmatpush.bf16.msra.mxu0 %v1918
      %3246 = vmatpush.bf16.msra.mxu0 %v1916
      %3247 = vmatpush.bf16.msra.mxu0 %v1914
      %3248 = vmatpush.bf16.msra.mxu0 %v1912
      %3249 = vmatpush.bf16.msra.mxu0 %v1910
      %3250 = vmatmul.bf16.gmra.mxu0 %v1194
      %v3251 = vpop.f32.mrf.mxu0
      %v3252 = vadd.f32 %v3163, %v3251
      %v3253 = vpop.f32.mrf.mxu0
      %v3254 = vadd.f32 %v3165, %v3253
      %3255 = vmatmul.bf16.gmra.mxu0 %v1202
      %v3256 = vpop.f32.mrf.mxu0
      %v3257 = vadd.f32 %v3168, %v3256
      %v3258 = vpop.f32.mrf.mxu0
      %v3259 = vadd.f32 %v3170, %v3258
      %3260 = vmatmul.bf16.gmra.mxu0 %v1210
      %v3261 = vpop.f32.mrf.mxu0
      %v3262 = vadd.f32 %v3173, %v3261
      %v3263 = vpop.f32.mrf.mxu0
      %v3264 = vadd.f32 %v3175, %v3263
      %3265 = vmatmul.bf16.gmra.mxu0 %v1218
      %v3266 = vpop.f32.mrf.mxu0
      %v3267 = vadd.f32 %v3178, %v3266
      %v3268 = vpop.f32.mrf.mxu0
      %v3269 = vadd.f32 %v3180, %v3268
      %3270 = vmatmul.bf16.gmra.mxu0 %v1226
      %v3271 = vpop.f32.mrf.mxu0
      %v3272 = vadd.f32 %v3183, %v3271
      %v3273 = vpop.f32.mrf.mxu0
      %v3274 = vadd.f32 %v3185, %v3273
      %3275 = vmatmul.bf16.gmra.mxu0 %v1234
      %v3276 = vpop.f32.mrf.mxu0
      %v3277 = vadd.f32 %v3188, %v3276
      %v3278 = vpop.f32.mrf.mxu0
      %v3279 = vadd.f32 %v3190, %v3278
      %3280 = vmatmul.bf16.gmra.mxu0 %v1242
      %v3281 = vpop.f32.mrf.mxu0
      %v3282 = vadd.f32 %v3193, %v3281
      %v3283 = vpop.f32.mrf.mxu0
      %v3284 = vadd.f32 %v3195, %v3283
      %3285 = vmatmul.bf16.gmra.mxu0 %v1250
      %v3286 = vpop.f32.mrf.mxu0
      %v3287 = vadd.f32 %v3198, %v3286
      %v3288 = vpop.f32.mrf.mxu0
      %v3289 = vadd.f32 %v3200, %v3288
      %3290 = vmatmul.bf16.gmra.mxu0 %v1258
      %v3291 = vpop.f32.mrf.mxu0
      %v3292 = vadd.f32 %v3203, %v3291
      %v3293 = vpop.f32.mrf.mxu0
      %v3294 = vadd.f32 %v3205, %v3293
      %3295 = vmatmul.bf16.gmra.mxu0 %v1266
      %v3296 = vpop.f32.mrf.mxu0
      %v3297 = vadd.f32 %v3208, %v3296
      %v3298 = vpop.f32.mrf.mxu0
      %v3299 = vadd.f32 %v3210, %v3298
      %3300 = vmatmul.bf16.gmra.mxu0 %v1274
      %v3301 = vpop.f32.mrf.mxu0
      %v3302 = vadd.f32 %v3213, %v3301
      %v3303 = vpop.f32.mrf.mxu0
      %v3304 = vadd.f32 %v3215, %v3303
      %3305 = vmatmul.bf16.gmra.mxu0 %v1282
      %v3306 = vpop.f32.mrf.mxu0
      %v3307 = vadd.f32 %v3218, %v3306
      %v3308 = vpop.f32.mrf.mxu0
      %v3309 = vadd.f32 %v3220, %v3308
      %3310 = vmatmul.bf16.gmra.mxu0 %v1290
      %v3311 = vpop.f32.mrf.mxu0
      %v3312 = vadd.f32 %v3223, %v3311
      %v3313 = vpop.f32.mrf.mxu0
      %v3314 = vadd.f32 %v3225, %v3313
      %3315 = vmatmul.bf16.gmra.mxu0 %v1298
      %v3316 = vpop.f32.mrf.mxu0
      %v3317 = vadd.f32 %v3228, %v3316
      %v3318 = vpop.f32.mrf.mxu0
      %v3319 = vadd.f32 %v3230, %v3318
      %3320 = vmatmul.bf16.gmra.mxu0 %v1306
      %v3321 = vpop.f32.mrf.mxu0
      %v3322 = vadd.f32 %v3233, %v3321
      %v3323 = vpop.f32.mrf.mxu0
      %v3324 = vadd.f32 %v3235, %v3323
      %3325 = vmatmul.bf16.gmra.mxu0 %v1314
      %v3326 = vpop.f32.mrf.mxu0
      %v3327 = vadd.f32 %v3238, %v3326
      %v3328 = vpop.f32.mrf.mxu0
      %v3329 = vadd.f32 %v3240, %v3328
      %3330 = vdwg.mxu0
      %3331 = vmatpush.bf16.msra.mxu0 %v1940
      %3332 = vmatpush.bf16.msra.mxu0 %v1938
      %3333 = vmatpush.bf16.msra.mxu0 %v1936
      %3334 = vmatpush.bf16.msra.mxu0 %v1934
      %3335 = vmatpush.bf16.msra.mxu0 %v1932
      %3336 = vmatpush.bf16.msra.mxu0 %v1930
      %3337 = vmatpush.bf16.msra.mxu0 %v1928
      %3338 = vmatpush.bf16.msra.mxu0 %v1926
      %3339 = vmatmul.bf16.gmra.mxu0 %v1195
      %v3340 = vpop.f32.mrf.mxu0
      %v3341 = vadd.f32 %v3252, %v3340
      %v3342 = vpop.f32.mrf.mxu0
      %v3343 = vadd.f32 %v3254, %v3342
      %3344 = vmatmul.bf16.gmra.mxu0 %v1203
      %v3345 = vpop.f32.mrf.mxu0
      %v3346 = vadd.f32 %v3257, %v3345
      %v3347 = vpop.f32.mrf.mxu0
      %v3348 = vadd.f32 %v3259, %v3347
      %3349 = vmatmul.bf16.gmra.mxu0 %v1211
      %v3350 = vpop.f32.mrf.mxu0
      %v3351 = vadd.f32 %v3262, %v3350
      %v3352 = vpop.f32.mrf.mxu0
      %v3353 = vadd.f32 %v3264, %v3352
      %3354 = vmatmul.bf16.gmra.mxu0 %v1219
      %v3355 = vpop.f32.mrf.mxu0
      %v3356 = vadd.f32 %v3267, %v3355
      %v3357 = vpop.f32.mrf.mxu0
      %v3358 = vadd.f32 %v3269, %v3357
      %3359 = vmatmul.bf16.gmra.mxu0 %v1227
      %v3360 = vpop.f32.mrf.mxu0
      %v3361 = vadd.f32 %v3272, %v3360
      %v3362 = vpop.f32.mrf.mxu0
      %v3363 = vadd.f32 %v3274, %v3362
      %3364 = vmatmul.bf16.gmra.mxu0 %v1235
      %v3365 = vpop.f32.mrf.mxu0
      %v3366 = vadd.f32 %v3277, %v3365
      %v3367 = vpop.f32.mrf.mxu0
      %v3368 = vadd.f32 %v3279, %v3367
      %3369 = vmatmul.bf16.gmra.mxu0 %v1243
      %v3370 = vpop.f32.mrf.mxu0
      %v3371 = vadd.f32 %v3282, %v3370
      %v3372 = vpop.f32.mrf.mxu0
      %v3373 = vadd.f32 %v3284, %v3372
      %3374 = vmatmul.bf16.gmra.mxu0 %v1251
      %v3375 = vpop.f32.mrf.mxu0
      %v3376 = vadd.f32 %v3287, %v3375
      %v3377 = vpop.f32.mrf.mxu0
      %v3378 = vadd.f32 %v3289, %v3377
      %3379 = vmatmul.bf16.gmra.mxu0 %v1259
      %v3380 = vpop.f32.mrf.mxu0
      %v3381 = vadd.f32 %v3292, %v3380
      %v3382 = vpop.f32.mrf.mxu0
      %v3383 = vadd.f32 %v3294, %v3382
      %3384 = vmatmul.bf16.gmra.mxu0 %v1267
      %v3385 = vpop.f32.mrf.mxu0
      %v3386 = vadd.f32 %v3297, %v3385
      %v3387 = vpop.f32.mrf.mxu0
      %v3388 = vadd.f32 %v3299, %v3387
      %3389 = vmatmul.bf16.gmra.mxu0 %v1275
      %v3390 = vpop.f32.mrf.mxu0
      %v3391 = vadd.f32 %v3302, %v3390
      %v3392 = vpop.f32.mrf.mxu0
      %v3393 = vadd.f32 %v3304, %v3392
      %3394 = vmatmul.bf16.gmra.mxu0 %v1283
      %v3395 = vpop.f32.mrf.mxu0
      %v3396 = vadd.f32 %v3307, %v3395
      %v3397 = vpop.f32.mrf.mxu0
      %v3398 = vadd.f32 %v3309, %v3397
      %3399 = vmatmul.bf16.gmra.mxu0 %v1291
      %v3400 = vpop.f32.mrf.mxu0
      %v3401 = vadd.f32 %v3312, %v3400
      %v3402 = vpop.f32.mrf.mxu0
      %v3403 = vadd.f32 %v3314, %v3402
      %3404 = vmatmul.bf16.gmra.mxu0 %v1299
      %v3405 = vpop.f32.mrf.mxu0
      %v3406 = vadd.f32 %v3317, %v3405
      %v3407 = vpop.f32.mrf.mxu0
      %v3408 = vadd.f32 %v3319, %v3407
      %3409 = vmatmul.bf16.gmra.mxu0 %v1307
      %v3410 = vpop.f32.mrf.mxu0
      %v3411 = vadd.f32 %v3322, %v3410
      %v3412 = vpop.f32.mrf.mxu0
      %v3413 = vadd.f32 %v3324, %v3412
      %3414 = vmatmul.bf16.gmra.mxu0 %v1315
      %v3415 = vpop.f32.mrf.mxu0
      %v3416 = vadd.f32 %v3327, %v3415
      %v3417 = vpop.f32.mrf.mxu0
      %v3418 = vadd.f32 %v3329, %v3417
      %3419 = vdwg.mxu0
      %3420 = vmatpush.bf16.msra.mxu0 %v1956
      %3421 = vmatpush.bf16.msra.mxu0 %v1954
      %3422 = vmatpush.bf16.msra.mxu0 %v1952
      %3423 = vmatpush.bf16.msra.mxu0 %v1950
      %3424 = vmatpush.bf16.msra.mxu0 %v1948
      %3425 = vmatpush.bf16.msra.mxu0 %v1946
      %3426 = vmatpush.bf16.msra.mxu0 %v1944
      %3427 = vmatpush.bf16.msra.mxu0 %v1942
      %3428 = vmatmul.bf16.gmra.mxu0 %v1196
      %v3429 = vpop.f32.mrf.mxu0
      %v3430 = vadd.f32 %v3341, %v3429
      %v3431 = vpop.f32.mrf.mxu0
      %v3432 = vadd.f32 %v3343, %v3431
      %3433 = vmatmul.bf16.gmra.mxu0 %v1204
      %v3434 = vpop.f32.mrf.mxu0
      %v3435 = vadd.f32 %v3346, %v3434
      %v3436 = vpop.f32.mrf.mxu0
      %v3437 = vadd.f32 %v3348, %v3436
      %3438 = vmatmul.bf16.gmra.mxu0 %v1212
      %v3439 = vpop.f32.mrf.mxu0
      %v3440 = vadd.f32 %v3351, %v3439
      %v3441 = vpop.f32.mrf.mxu0
      %v3442 = vadd.f32 %v3353, %v3441
      %3443 = vmatmul.bf16.gmra.mxu0 %v1220
      %v3444 = vpop.f32.mrf.mxu0
      %v3445 = vadd.f32 %v3356, %v3444
      %v3446 = vpop.f32.mrf.mxu0
      %v3447 = vadd.f32 %v3358, %v3446
      %3448 = vmatmul.bf16.gmra.mxu0 %v1228
      %v3449 = vpop.f32.mrf.mxu0
      %v3450 = vadd.f32 %v3361, %v3449
      %v3451 = vpop.f32.mrf.mxu0
      %v3452 = vadd.f32 %v3363, %v3451
      %3453 = vmatmul.bf16.gmra.mxu0 %v1236
      %v3454 = vpop.f32.mrf.mxu0
      %v3455 = vadd.f32 %v3366, %v3454
      %v3456 = vpop.f32.mrf.mxu0
      %v3457 = vadd.f32 %v3368, %v3456
      %3458 = vmatmul.bf16.gmra.mxu0 %v1244
      %v3459 = vpop.f32.mrf.mxu0
      %v3460 = vadd.f32 %v3371, %v3459
      %v3461 = vpop.f32.mrf.mxu0
      %v3462 = vadd.f32 %v3373, %v3461
      %3463 = vmatmul.bf16.gmra.mxu0 %v1252
      %v3464 = vpop.f32.mrf.mxu0
      %v3465 = vadd.f32 %v3376, %v3464
      %v3466 = vpop.f32.mrf.mxu0
      %v3467 = vadd.f32 %v3378, %v3466
      %3468 = vmatmul.bf16.gmra.mxu0 %v1260
      %v3469 = vpop.f32.mrf.mxu0
      %v3470 = vadd.f32 %v3381, %v3469
      %v3471 = vpop.f32.mrf.mxu0
      %v3472 = vadd.f32 %v3383, %v3471
      %3473 = vmatmul.bf16.gmra.mxu0 %v1268
      %v3474 = vpop.f32.mrf.mxu0
      %v3475 = vadd.f32 %v3386, %v3474
      %v3476 = vpop.f32.mrf.mxu0
      %v3477 = vadd.f32 %v3388, %v3476
      %3478 = vmatmul.bf16.gmra.mxu0 %v1276
      %v3479 = vpop.f32.mrf.mxu0
      %v3480 = vadd.f32 %v3391, %v3479
      %v3481 = vpop.f32.mrf.mxu0
      %v3482 = vadd.f32 %v3393, %v3481
      %3483 = vmatmul.bf16.gmra.mxu0 %v1284
      %v3484 = vpop.f32.mrf.mxu0
      %v3485 = vadd.f32 %v3396, %v3484
      %v3486 = vpop.f32.mrf.mxu0
      %v3487 = vadd.f32 %v3398, %v3486
      %3488 = vmatmul.bf16.gmra.mxu0 %v1292
      %v3489 = vpop.f32.mrf.mxu0
      %v3490 = vadd.f32 %v3401, %v3489
      %v3491 = vpop.f32.mrf.mxu0
      %v3492 = vadd.f32 %v3403, %v3491
      %3493 = vmatmul.bf16.gmra.mxu0 %v1300
      %v3494 = vpop.f32.mrf.mxu0
      %v3495 = vadd.f32 %v3406, %v3494
      %v3496 = vpop.f32.mrf.mxu0
      %v3497 = vadd.f32 %v3408, %v3496
      %3498 = vmatmul.bf16.gmra.mxu0 %v1308
      %v3499 = vpop.f32.mrf.mxu0
      %v3500 = vadd.f32 %v3411, %v3499
      %v3501 = vpop.f32.mrf.mxu0
      %v3502 = vadd.f32 %v3413, %v3501
      %3503 = vmatmul.bf16.gmra.mxu0 %v1316
      %v3504 = vpop.f32.mrf.mxu0
      %v3505 = vadd.f32 %v3416, %v3504
      %v3506 = vpop.f32.mrf.mxu0
      %v3507 = vadd.f32 %v3418, %v3506
      %3508 = vdwg.mxu0
      %v3509 = vadd.f32 %v485, %v2718
      %v3510 = vadd.f32 %v486, %v3430
      %v3511 = vadd.f32 %v487, %v2720
      %v3512 = vadd.f32 %v488, %v3432
      %v3513 = vadd.f32 %v489, %v2723
      %v3514 = vadd.f32 %v490, %v3435
      %v3515 = vadd.f32 %v491, %v2725
      %v3516 = vadd.f32 %v492, %v3437
      %v3517 = vadd.f32 %v493, %v2728
      %v3518 = vadd.f32 %v494, %v3440
      %v3519 = vadd.f32 %v495, %v2730
      %v3520 = vadd.f32 %v496, %v3442
      %v3521 = vadd.f32 %v497, %v2733
      %v3522 = vadd.f32 %v498, %v3445
      %v3523 = vadd.f32 %v499, %v2735
      %v3524 = vadd.f32 %v500, %v3447
      %v3525 = vadd.f32 %v501, %v2738
      %v3526 = vadd.f32 %v502, %v3450
      %v3527 = vadd.f32 %v503, %v2740
      %v3528 = vadd.f32 %v504, %v3452
      %v3529 = vadd.f32 %v505, %v2743
      %v3530 = vadd.f32 %v506, %v3455
      %v3531 = vadd.f32 %v507, %v2745
      %v3532 = vadd.f32 %v508, %v3457
      %v3533 = vadd.f32 %v509, %v2748
      %v3534 = vadd.f32 %v510, %v3460
      %v3535 = vadd.f32 %v511, %v2750
      %v3536 = vadd.f32 %v512, %v3462
      %v3537 = vadd.f32 %v513, %v2753
      %v3538 = vadd.f32 %v514, %v3465
      %v3539 = vadd.f32 %v515, %v2755
      %v3540 = vadd.f32 %v516, %v3467
      %v3541 = vadd.f32 %v517, %v2758
      %v3542 = vadd.f32 %v518, %v3470
      %v3543 = vadd.f32 %v519, %v2760
      %v3544 = vadd.f32 %v520, %v3472
      %v3545 = vadd.f32 %v521, %v2763
      %v3546 = vadd.f32 %v522, %v3475
      %v3547 = vadd.f32 %v523, %v2765
      %v3548 = vadd.f32 %v524, %v3477
      %v3549 = vadd.f32 %v525, %v2768
      %v3550 = vadd.f32 %v526, %v3480
      %v3551 = vadd.f32 %v527, %v2770
      %v3552 = vadd.f32 %v528, %v3482
      %v3553 = vadd.f32 %v529, %v2773
      %v3554 = vadd.f32 %v530, %v3485
      %v3555 = vadd.f32 %v531, %v2775
      %v3556 = vadd.f32 %v532, %v3487
      %v3557 = vadd.f32 %v533, %v2778
      %v3558 = vadd.f32 %v534, %v3490
      %v3559 = vadd.f32 %v535, %v2780
      %v3560 = vadd.f32 %v536, %v3492
      %v3561 = vadd.f32 %v537, %v2783
      %v3562 = vadd.f32 %v538, %v3495
      %v3563 = vadd.f32 %v539, %v2785
      %v3564 = vadd.f32 %v540, %v3497
      %v3565 = vadd.f32 %v541, %v2788
      %v3566 = vadd.f32 %v542, %v3500
      %v3567 = vadd.f32 %v543, %v2790
      %v3568 = vadd.f32 %v544, %v3502
      %v3569 = vadd.f32 %v545, %v2793
      %v3570 = vadd.f32 %v546, %v3505
      %v3571 = vadd.f32 %v547, %v2795
      %v3572 = vadd.f32 %v548, %v3507
      %3573 = vst [vmem:[#allocation2] sm:$0xff] %v3509
      %3574 = vst [vmem:[#allocation2 + $0x8] sm:$0xff] %v3510
      %3575 = vst [vmem:[#allocation2 + $0x10] sm:$0xff] %v3511
      %3576 = vst [vmem:[#allocation2 + $0x18] sm:$0xff] %v3512
      %3577 = vst [vmem:[#allocation2 + $0x20] sm:$0xff] %v3513
      %3578 = vst [vmem:[#allocation2 + $0x28] sm:$0xff] %v3514
      %3579 = vst [vmem:[#allocation2 + $0x30] sm:$0xff] %v3515
      %3580 = vst [vmem:[#allocation2 + $0x38] sm:$0xff] %v3516
      %3581 = vst [vmem:[#allocation2 + $0x40] sm:$0xff] %v3517
      %3582 = vst [vmem:[#allocation2 + $0x48] sm:$0xff] %v3518
      %3583 = vst [vmem:[#allocation2 + $0x50] sm:$0xff] %v3519
      %3584 = vst [vmem:[#allocation2 + $0x58] sm:$0xff] %v3520
      %3585 = vst [vmem:[#allocation2 + $0x60] sm:$0xff] %v3521
      %3586 = vst [vmem:[#allocation2 + $0x68] sm:$0xff] %v3522
      %3587 = vst [vmem:[#allocation2 + $0x70] sm:$0xff] %v3523
      %3588 = vst [vmem:[#allocation2 + $0x78] sm:$0xff] %v3524
      %3589 = vst [vmem:[#allocation2 + $0x80] sm:$0xff] %v3525
      %3590 = vst [vmem:[#allocation2 + $0x88] sm:$0xff] %v3526
      %3591 = vst [vmem:[#allocation2 + $0x90] sm:$0xff] %v3527
      %3592 = vst [vmem:[#allocation2 + $0x98] sm:$0xff] %v3528
      %3593 = vst [vmem:[#allocation2 + $0xa0] sm:$0xff] %v3529
      %3594 = vst [vmem:[#allocation2 + $0xa8] sm:$0xff] %v3530
      %3595 = vst [vmem:[#allocation2 + $0xb0] sm:$0xff] %v3531
      %3596 = vst [vmem:[#allocation2 + $0xb8] sm:$0xff] %v3532
      %3597 = vst [vmem:[#allocation2 + $0xc0] sm:$0xff] %v3533
      %3598 = vst [vmem:[#allocation2 + $0xc8] sm:$0xff] %v3534
      %3599 = vst [vmem:[#allocation2 + $0xd0] sm:$0xff] %v3535
      %3600 = vst [vmem:[#allocation2 + $0xd8] sm:$0xff] %v3536
      %3601 = vst [vmem:[#allocation2 + $0xe0] sm:$0xff] %v3537
      %3602 = vst [vmem:[#allocation2 + $0xe8] sm:$0xff] %v3538
      %3603 = vst [vmem:[#allocation2 + $0xf0] sm:$0xff] %v3539
      %3604 = vst [vmem:[#allocation2 + $0xf8] sm:$0xff] %v3540
      %3605 = vst [vmem:[#allocation2 + $0x100] sm:$0xff] %v3541
      %3606 = vst [vmem:[#allocation2 + $0x108] sm:$0xff] %v3542
      %3607 = vst [vmem:[#allocation2 + $0x110] sm:$0xff] %v3543
      %3608 = vst [vmem:[#allocation2 + $0x118] sm:$0xff] %v3544
      %3609 = vst [vmem:[#allocation2 + $0x120] sm:$0xff] %v3545
      %3610 = vst [vmem:[#allocation2 + $0x128] sm:$0xff] %v3546
      %3611 = vst [vmem:[#allocation2 + $0x130] sm:$0xff] %v3547
      %3612 = vst [vmem:[#allocation2 + $0x138] sm:$0xff] %v3548
      %3613 = vst [vmem:[#allocation2 + $0x140] sm:$0xff] %v3549
      %3614 = vst [vmem:[#allocation2 + $0x148] sm:$0xff] %v3550
      %3615 = vst [vmem:[#allocation2 + $0x150] sm:$0xff] %v3551
      %3616 = vst [vmem:[#allocation2 + $0x158] sm:$0xff] %v3552
      %3617 = vst [vmem:[#allocation2 + $0x160] sm:$0xff] %v3553
      %3618 = vst [vmem:[#allocation2 + $0x168] sm:$0xff] %v3554
      %3619 = vst [vmem:[#allocation2 + $0x170] sm:$0xff] %v3555
      %3620 = vst [vmem:[#allocation2 + $0x178] sm:$0xff] %v3556
      %3621 = vst [vmem:[#allocation2 + $0x180] sm:$0xff] %v3557
      %3622 = vst [vmem:[#allocation2 + $0x188] sm:$0xff] %v3558
      %3623 = vst [vmem:[#allocation2 + $0x190] sm:$0xff] %v3559
      %3624 = vst [vmem:[#allocation2 + $0x198] sm:$0xff] %v3560
      %3625 = vst [vmem:[#allocation2 + $0x1a0] sm:$0xff] %v3561
      %3626 = vst [vmem:[#allocation2 + $0x1a8] sm:$0xff] %v3562
      %3627 = vst [vmem:[#allocation2 + $0x1b0] sm:$0xff] %v3563
      %3628 = vst [vmem:[#allocation2 + $0x1b8] sm:$0xff] %v3564
      %3629 = vst [vmem:[#allocation2 + $0x1c0] sm:$0xff] %v3565
      %3630 = vst [vmem:[#allocation2 + $0x1c8] sm:$0xff] %v3566
      %3631 = vst [vmem:[#allocation2 + $0x1d0] sm:$0xff] %v3567
      %3632 = vst [vmem:[#allocation2 + $0x1d8] sm:$0xff] %v3568
      %3633 = vst [vmem:[#allocation2 + $0x1e0] sm:$0xff] %v3569
      %3634 = vst [vmem:[#allocation2 + $0x1e8] sm:$0xff] %v3570
      %3635 = vst [vmem:[#allocation2 + $0x1f0] sm:$0xff] %v3571
      %3636 = vst [vmem:[#allocation2 + $0x1f8] sm:$0xff] %v3572
      // Predicated region
      $region49: #{hourglass_forward.5} parent=43 // pred_check
        %p3637 = pneg %p417
      $region50: #{hourglass_forward.5} parent=43 // pred_check_branch
        %3639 = sbr.rel (%p3637) target = $region52
      $region51: #{hourglass_forward.5} parent=43 // pred_region
        %v3640 = vld [vmem:[#allocation2] sm:$0xff]
        %v3641 = vld [vmem:[#allocation2 + $0x8] sm:$0xff]
        %v3642 = vld [vmem:[#allocation2 + $0x10] sm:$0xff]
        %v3643 = vld [vmem:[#allocation2 + $0x18] sm:$0xff]
        %v3644 = vld [vmem:[#allocation2 + $0x20] sm:$0xff]
        %v3645 = vld [vmem:[#allocation2 + $0x28] sm:$0xff]
        %v3646 = vld [vmem:[#allocation2 + $0x30] sm:$0xff]
        %v3647 = vld [vmem:[#allocation2 + $0x38] sm:$0xff]
        %v3648 = vld [vmem:[#allocation2 + $0x40] sm:$0xff]
        %v3649 = vld [vmem:[#allocation2 + $0x48] sm:$0xff]
        %v3650 = vld [vmem:[#allocation2 + $0x50] sm:$0xff]
        %v3651 = vld [vmem:[#allocation2 + $0x58] sm:$0xff]
        %v3652 = vld [vmem:[#allocation2 + $0x60] sm:$0xff]
        %v3653 = vld [vmem:[#allocation2 + $0x68] sm:$0xff]
        %v3654 = vld [vmem:[#allocation2 + $0x70] sm:$0xff]
        %v3655 = vld [vmem:[#allocation2 + $0x78] sm:$0xff]
        %v3656 = vld [vmem:[#allocation2 + $0x80] sm:$0xff]
        %v3657 = vld [vmem:[#allocation2 + $0x88] sm:$0xff]
        %v3658 = vld [vmem:[#allocation2 + $0x90] sm:$0xff]
        %v3659 = vld [vmem:[#allocation2 + $0x98] sm:$0xff]
        %v3660 = vld [vmem:[#allocation2 + $0xa0] sm:$0xff]
        %v3661 = vld [vmem:[#allocation2 + $0xa8] sm:$0xff]
        %v3662 = vld [vmem:[#allocation2 + $0xb0] sm:$0xff]
        %v3663 = vld [vmem:[#allocation2 + $0xb8] sm:$0xff]
        %v3664 = vld [vmem:[#allocation2 + $0xc0] sm:$0xff]
        %v3665 = vld [vmem:[#allocation2 + $0xc8] sm:$0xff]
        %v3666 = vld [vmem:[#allocation2 + $0xd0] sm:$0xff]
        %v3667 = vld [vmem:[#allocation2 + $0xd8] sm:$0xff]
        %v3668 = vld [vmem:[#allocation2 + $0xe0] sm:$0xff]
        %v3669 = vld [vmem:[#allocation2 + $0xe8] sm:$0xff]
        %v3670 = vld [vmem:[#allocation2 + $0xf0] sm:$0xff]
        %v3671 = vld [vmem:[#allocation2 + $0xf8] sm:$0xff]
        %v3672 = vld [vmem:[#allocation2 + $0x100] sm:$0xff]
        %v3673 = vld [vmem:[#allocation2 + $0x108] sm:$0xff]
        %v3674 = vld [vmem:[#allocation2 + $0x110] sm:$0xff]
        %v3675 = vld [vmem:[#allocation2 + $0x118] sm:$0xff]
        %v3676 = vld [vmem:[#allocation2 + $0x120] sm:$0xff]
        %v3677 = vld [vmem:[#allocation2 + $0x128] sm:$0xff]
        %v3678 = vld [vmem:[#allocation2 + $0x130] sm:$0xff]
        %v3679 = vld [vmem:[#allocation2 + $0x138] sm:$0xff]
        %v3680 = vld [vmem:[#allocation2 + $0x140] sm:$0xff]
        %v3681 = vld [vmem:[#allocation2 + $0x148] sm:$0xff]
        %v3682 = vld [vmem:[#allocation2 + $0x150] sm:$0xff]
        %v3683 = vld [vmem:[#allocation2 + $0x158] sm:$0xff]
        %v3684 = vld [vmem:[#allocation2 + $0x160] sm:$0xff]
        %v3685 = vld [vmem:[#allocation2 + $0x168] sm:$0xff]
        %v3686 = vld [vmem:[#allocation2 + $0x170] sm:$0xff]
        %v3687 = vld [vmem:[#allocation2 + $0x178] sm:$0xff]
        %v3688 = vld [vmem:[#allocation2 + $0x180] sm:$0xff]
        %v3689 = vld [vmem:[#allocation2 + $0x188] sm:$0xff]
        %v3690 = vld [vmem:[#allocation2 + $0x190] sm:$0xff]
        %v3691 = vld [vmem:[#allocation2 + $0x198] sm:$0xff]
        %v3692 = vld [vmem:[#allocation2 + $0x1a0] sm:$0xff]
        %v3693 = vld [vmem:[#allocation2 + $0x1a8] sm:$0xff]
        %v3694 = vld [vmem:[#allocation2 + $0x1b0] sm:$0xff]
        %v3695 = vld [vmem:[#allocation2 + $0x1b8] sm:$0xff]
        %v3696 = vld [vmem:[#allocation2 + $0x1c0] sm:$0xff]
        %v3697 = vld [vmem:[#allocation2 + $0x1c8] sm:$0xff]
        %v3698 = vld [vmem:[#allocation2 + $0x1d0] sm:$0xff]
        %v3699 = vld [vmem:[#allocation2 + $0x1d8] sm:$0xff]
        %v3700 = vld [vmem:[#allocation2 + $0x1e0] sm:$0xff]
        %v3701 = vld [vmem:[#allocation2 + $0x1e8] sm:$0xff]
        %v3702 = vld [vmem:[#allocation2 + $0x1f0] sm:$0xff]
        %v3703 = vld [vmem:[#allocation2 + $0x1f8] sm:$0xff]
        %v3704 = vld [vmem:[%s400] sm:$0x3]
        %v3706 = vperm.slane %v3704, 0
        %v3707 = vperm.slane %v3704, 1
        %v3710 = vmul.f32 %v3640, %v3706
        %v3711 = vmul.f32 %v3641, %v3707
        %v3712 = vmul.f32 %v3642, %v3706
        %v3713 = vmul.f32 %v3643, %v3707
        %v3714 = vmul.f32 %v3644, %v3706
        %v3715 = vmul.f32 %v3645, %v3707
        %v3716 = vmul.f32 %v3646, %v3706
        %v3717 = vmul.f32 %v3647, %v3707
        %v3718 = vmul.f32 %v3648, %v3706
        %v3719 = vmul.f32 %v3649, %v3707
        %v3720 = vmul.f32 %v3650, %v3706
        %v3721 = vmul.f32 %v3651, %v3707
        %v3722 = vmul.f32 %v3652, %v3706
        %v3723 = vmul.f32 %v3653, %v3707
        %v3724 = vmul.f32 %v3654, %v3706
        %v3725 = vmul.f32 %v3655, %v3707
        %v3726 = vmul.f32 %v3656, %v3706
        %v3727 = vmul.f32 %v3657, %v3707
        %v3728 = vmul.f32 %v3658, %v3706
        %v3729 = vmul.f32 %v3659, %v3707
        %v3730 = vmul.f32 %v3660, %v3706
        %v3731 = vmul.f32 %v3661, %v3707
        %v3732 = vmul.f32 %v3662, %v3706
        %v3733 = vmul.f32 %v3663, %v3707
        %v3734 = vmul.f32 %v3664, %v3706
        %v3735 = vmul.f32 %v3665, %v3707
        %v3736 = vmul.f32 %v3666, %v3706
        %v3737 = vmul.f32 %v3667, %v3707
        %v3738 = vmul.f32 %v3668, %v3706
        %v3739 = vmul.f32 %v3669, %v3707
        %v3740 = vmul.f32 %v3670, %v3706
        %v3741 = vmul.f32 %v3671, %v3707
        %v3742 = vmul.f32 %v3672, %v3706
        %v3743 = vmul.f32 %v3673, %v3707
        %v3744 = vmul.f32 %v3674, %v3706
        %v3745 = vmul.f32 %v3675, %v3707
        %v3746 = vmul.f32 %v3676, %v3706
        %v3747 = vmul.f32 %v3677, %v3707
        %v3748 = vmul.f32 %v3678, %v3706
        %v3749 = vmul.f32 %v3679, %v3707
        %v3750 = vmul.f32 %v3680, %v3706
        %v3751 = vmul.f32 %v3681, %v3707
        %v3752 = vmul.f32 %v3682, %v3706
        %v3753 = vmul.f32 %v3683, %v3707
        %v3754 = vmul.f32 %v3684, %v3706
        %v3755 = vmul.f32 %v3685, %v3707
        %v3756 = vmul.f32 %v3686, %v3706
        %v3757 = vmul.f32 %v3687, %v3707
        %v3758 = vmul.f32 %v3688, %v3706
        %v3759 = vmul.f32 %v3689, %v3707
        %v3760 = vmul.f32 %v3690, %v3706
        %v3761 = vmul.f32 %v3691, %v3707
        %v3762 = vmul.f32 %v3692, %v3706
        %v3763 = vmul.f32 %v3693, %v3707
        %v3764 = vmul.f32 %v3694, %v3706
        %v3765 = vmul.f32 %v3695, %v3707
        %v3766 = vmul.f32 %v3696, %v3706
        %v3767 = vmul.f32 %v3697, %v3707
        %v3768 = vmul.f32 %v3698, %v3706
        %v3769 = vmul.f32 %v3699, %v3707
        %v3770 = vmul.f32 %v3700, %v3706
        %v3771 = vmul.f32 %v3701, %v3707
        %v3772 = vmul.f32 %v3702, %v3706
        %v3773 = vmul.f32 %v3703, %v3707
        %v3774 = vld [vmem:[%s405] sm:$0x3]
        %v3776 = vperm.slane %v3774, 0
        %v3777 = vperm.slane %v3774, 1
        %v3780 = vadd.f32 %v3710, %v3776
        %v3781 = vadd.f32 %v3711, %v3777
        %v3782 = vadd.f32 %v3712, %v3776
        %v3783 = vadd.f32 %v3713, %v3777
        %v3784 = vadd.f32 %v3714, %v3776
        %v3785 = vadd.f32 %v3715, %v3777
        %v3786 = vadd.f32 %v3716, %v3776
        %v3787 = vadd.f32 %v3717, %v3777
        %v3788 = vadd.f32 %v3718, %v3776
        %v3789 = vadd.f32 %v3719, %v3777
        %v3790 = vadd.f32 %v3720, %v3776
        %v3791 = vadd.f32 %v3721, %v3777
        %v3792 = vadd.f32 %v3722, %v3776
        %v3793 = vadd.f32 %v3723, %v3777
        %v3794 = vadd.f32 %v3724, %v3776
        %v3795 = vadd.f32 %v3725, %v3777
        %v3796 = vadd.f32 %v3726, %v3776
        %v3797 = vadd.f32 %v3727, %v3777
        %v3798 = vadd.f32 %v3728, %v3776
        %v3799 = vadd.f32 %v3729, %v3777
        %v3800 = vadd.f32 %v3730, %v3776
        %v3801 = vadd.f32 %v3731, %v3777
        %v3802 = vadd.f32 %v3732, %v3776
        %v3803 = vadd.f32 %v3733, %v3777
        %v3804 = vadd.f32 %v3734, %v3776
        %v3805 = vadd.f32 %v3735, %v3777
        %v3806 = vadd.f32 %v3736, %v3776
        %v3807 = vadd.f32 %v3737, %v3777
        %v3808 = vadd.f32 %v3738, %v3776
        %v3809 = vadd.f32 %v3739, %v3777
        %v3810 = vadd.f32 %v3740, %v3776
        %v3811 = vadd.f32 %v3741, %v3777
        %v3812 = vadd.f32 %v3742, %v3776
        %v3813 = vadd.f32 %v3743, %v3777
        %v3814 = vadd.f32 %v3744, %v3776
        %v3815 = vadd.f32 %v3745, %v3777
        %v3816 = vadd.f32 %v3746, %v3776
        %v3817 = vadd.f32 %v3747, %v3777
        %v3818 = vadd.f32 %v3748, %v3776
        %v3819 = vadd.f32 %v3749, %v3777
        %v3820 = vadd.f32 %v3750, %v3776
        %v3821 = vadd.f32 %v3751, %v3777
        %v3822 = vadd.f32 %v3752, %v3776
        %v3823 = vadd.f32 %v3753, %v3777
        %v3824 = vadd.f32 %v3754, %v3776
        %v3825 = vadd.f32 %v3755, %v3777
        %v3826 = vadd.f32 %v3756, %v3776
        %v3827 = vadd.f32 %v3757, %v3777
        %v3828 = vadd.f32 %v3758, %v3776
        %v3829 = vadd.f32 %v3759, %v3777
        %v3830 = vadd.f32 %v3760, %v3776
        %v3831 = vadd.f32 %v3761, %v3777
        %v3832 = vadd.f32 %v3762, %v3776
        %v3833 = vadd.f32 %v3763, %v3777
        %v3834 = vadd.f32 %v3764, %v3776
        %v3835 = vadd.f32 %v3765, %v3777
        %v3836 = vadd.f32 %v3766, %v3776
        %v3837 = vadd.f32 %v3767, %v3777
        %v3838 = vadd.f32 %v3768, %v3776
        %v3839 = vadd.f32 %v3769, %v3777
        %v3840 = vadd.f32 %v3770, %v3776
        %v3841 = vadd.f32 %v3771, %v3777
        %v3842 = vadd.f32 %v3772, %v3776
        %v3843 = vadd.f32 %v3773, %v3777
        %v3844 = vmax.f32 %v3780, 0.0
        %v3845 = vmax.f32 %v3781, 0.0
        %v3846 = vmax.f32 %v3782, 0.0
        %v3847 = vmax.f32 %v3783, 0.0
        %v3848 = vmax.f32 %v3784, 0.0
        %v3849 = vmax.f32 %v3785, 0.0
        %v3850 = vmax.f32 %v3786, 0.0
        %v3851 = vmax.f32 %v3787, 0.0
        %v3852 = vmax.f32 %v3788, 0.0
        %v3853 = vmax.f32 %v3789, 0.0
        %v3854 = vmax.f32 %v3790, 0.0
        %v3855 = vmax.f32 %v3791, 0.0
        %v3856 = vmax.f32 %v3792, 0.0
        %v3857 = vmax.f32 %v3793, 0.0
        %v3858 = vmax.f32 %v3794, 0.0
        %v3859 = vmax.f32 %v3795, 0.0
        %v3860 = vmax.f32 %v3796, 0.0
        %v3861 = vmax.f32 %v3797, 0.0
        %v3862 = vmax.f32 %v3798, 0.0
        %v3863 = vmax.f32 %v3799, 0.0
        %v3864 = vmax.f32 %v3800, 0.0
        %v3865 = vmax.f32 %v3801, 0.0
        %v3866 = vmax.f32 %v3802, 0.0
        %v3867 = vmax.f32 %v3803, 0.0
        %v3868 = vmax.f32 %v3804, 0.0
        %v3869 = vmax.f32 %v3805, 0.0
        %v3870 = vmax.f32 %v3806, 0.0
        %v3871 = vmax.f32 %v3807, 0.0
        %v3872 = vmax.f32 %v3808, 0.0
        %v3873 = vmax.f32 %v3809, 0.0
        %v3874 = vmax.f32 %v3810, 0.0
        %v3875 = vmax.f32 %v3811, 0.0
        %v3876 = vmax.f32 %v3812, 0.0
        %v3877 = vmax.f32 %v3813, 0.0
        %v3878 = vmax.f32 %v3814, 0.0
        %v3879 = vmax.f32 %v3815, 0.0
        %v3880 = vmax.f32 %v3816, 0.0
        %v3881 = vmax.f32 %v3817, 0.0
        %v3882 = vmax.f32 %v3818, 0.0
        %v3883 = vmax.f32 %v3819, 0.0
        %v3884 = vmax.f32 %v3820, 0.0
        %v3885 = vmax.f32 %v3821, 0.0
        %v3886 = vmax.f32 %v3822, 0.0
        %v3887 = vmax.f32 %v3823, 0.0
        %v3888 = vmax.f32 %v3824, 0.0
        %v3889 = vmax.f32 %v3825, 0.0
        %v3890 = vmax.f32 %v3826, 0.0
        %v3891 = vmax.f32 %v3827, 0.0
        %v3892 = vmax.f32 %v3828, 0.0
        %v3893 = vmax.f32 %v3829, 0.0
        %v3894 = vmax.f32 %v3830, 0.0
        %v3895 = vmax.f32 %v3831, 0.0
        %v3896 = vmax.f32 %v3832, 0.0
        %v3897 = vmax.f32 %v3833, 0.0
        %v3898 = vmax.f32 %v3834, 0.0
        %v3899 = vmax.f32 %v3835, 0.0
        %v3900 = vmax.f32 %v3836, 0.0
        %v3901 = vmax.f32 %v3837, 0.0
        %v3902 = vmax.f32 %v3838, 0.0
        %v3903 = vmax.f32 %v3839, 0.0
        %v3904 = vmax.f32 %v3840, 0.0
        %v3905 = vmax.f32 %v3841, 0.0
        %v3906 = vmax.f32 %v3842, 0.0
        %v3907 = vmax.f32 %v3843, 0.0
        %v3908 = vpack.c.bf16 %v3846, %v3844
        %v3909 = vpack.c.bf16 %v3847, %v3845
        %v3910 = vpack.c.bf16 %v3850, %v3848
        %v3911 = vpack.c.bf16 %v3851, %v3849
        %v3912 = vpack.c.bf16 %v3854, %v3852
        %v3913 = vpack.c.bf16 %v3855, %v3853
        %v3914 = vpack.c.bf16 %v3858, %v3856
        %v3915 = vpack.c.bf16 %v3859, %v3857
        %v3916 = vpack.c.bf16 %v3862, %v3860
        %v3917 = vpack.c.bf16 %v3863, %v3861
        %v3918 = vpack.c.bf16 %v3866, %v3864
        %v3919 = vpack.c.bf16 %v3867, %v3865
        %v3920 = vpack.c.bf16 %v3870, %v3868
        %v3921 = vpack.c.bf16 %v3871, %v3869
        %v3922 = vpack.c.bf16 %v3874, %v3872
        %v3923 = vpack.c.bf16 %v3875, %v3873
        %v3924 = vpack.c.bf16 %v3878, %v3876
        %v3925 = vpack.c.bf16 %v3879, %v3877
        %v3926 = vpack.c.bf16 %v3882, %v3880
        %v3927 = vpack.c.bf16 %v3883, %v3881
        %v3928 = vpack.c.bf16 %v3886, %v3884
        %v3929 = vpack.c.bf16 %v3887, %v3885
        %v3930 = vpack.c.bf16 %v3890, %v3888
        %v3931 = vpack.c.bf16 %v3891, %v3889
        %v3932 = vpack.c.bf16 %v3894, %v3892
        %v3933 = vpack.c.bf16 %v3895, %v3893
        %v3934 = vpack.c.bf16 %v3898, %v3896
        %v3935 = vpack.c.bf16 %v3899, %v3897
        %v3936 = vpack.c.bf16 %v3902, %v3900
        %v3937 = vpack.c.bf16 %v3903, %v3901
        %v3938 = vpack.c.bf16 %v3906, %v3904
        %v3939 = vpack.c.bf16 %v3907, %v3905
        %v3940 = vld [vmem:[%s4] sm:$0xf]
        %v3941 = vld [vmem:[%s4 + $0x4] sm:$0xf]
        %v3942 = vld [vmem:[%s4 + $0x8] sm:$0xf]
        %v3943 = vld [vmem:[%s4 + $0xc] sm:$0xf]
        %v3944 = vld [vmem:[%s4 + $0x10] sm:$0xf]
        %v3945 = vld [vmem:[%s4 + $0x14] sm:$0xf]
        %v3946 = vld [vmem:[%s4 + $0x18] sm:$0xf]
        %v3947 = vld [vmem:[%s4 + $0x1c] sm:$0xf]
        %v3948 = vld [vmem:[%s4 + $0x20] sm:$0xf]
        %v3949 = vld [vmem:[%s4 + $0x24] sm:$0xf]
        %v3950 = vld [vmem:[%s4 + $0x28] sm:$0xf]
        %v3951 = vld [vmem:[%s4 + $0x2c] sm:$0xf]
        %v3952 = vld [vmem:[%s4 + $0x30] sm:$0xf]
        %v3953 = vld [vmem:[%s4 + $0x34] sm:$0xf]
        %v3954 = vld [vmem:[%s4 + $0x38] sm:$0xf]
        %v3955 = vld [vmem:[%s4 + $0x3c] sm:$0xf]
        %v3956 = vld [vmem:[%s4 + $0x40] sm:$0xf]
        %v3957 = vld [vmem:[%s4 + $0x44] sm:$0xf]
        %v3958 = vld [vmem:[%s4 + $0x48] sm:$0xf]
        %v3959 = vld [vmem:[%s4 + $0x4c] sm:$0xf]
        %v3960 = vld [vmem:[%s4 + $0x50] sm:$0xf]
        %v3961 = vld [vmem:[%s4 + $0x54] sm:$0xf]
        %v3962 = vld [vmem:[%s4 + $0x58] sm:$0xf]
        %v3963 = vld [vmem:[%s4 + $0x5c] sm:$0xf]
        %v3964 = vld [vmem:[%s4 + $0x60] sm:$0xf]
        %v3965 = vld [vmem:[%s4 + $0x64] sm:$0xf]
        %v3966 = vld [vmem:[%s4 + $0x68] sm:$0xf]
        %v3967 = vld [vmem:[%s4 + $0x6c] sm:$0xf]
        %v3968 = vld [vmem:[%s4 + $0x70] sm:$0xf]
        %v3969 = vld [vmem:[%s4 + $0x74] sm:$0xf]
        %v3970 = vld [vmem:[%s4 + $0x78] sm:$0xf]
        %v3971 = vld [vmem:[%s4 + $0x7c] sm:$0xf]
        %v3972 = vld [vmem:[%s5] sm:$0x1]
        %v3974 = vperm.slane %v3972, 0
        %v4008 = vunpack.c.l.b16 %v3940
        %v4009 = vunpack.c.l.b16 %v3941
        %v4010 = vunpack.c.l.b16 %v3942
        %v4011 = vunpack.c.l.b16 %v3943
        %v4012 = vunpack.c.l.b16 %v3944
        %v4013 = vunpack.c.l.b16 %v3945
        %v4014 = vunpack.c.l.b16 %v3946
        %v4015 = vunpack.c.l.b16 %v3947
        %v4016 = vunpack.c.l.b16 %v3948
        %v4017 = vunpack.c.l.b16 %v3949
        %v4018 = vunpack.c.l.b16 %v3950
        %v4019 = vunpack.c.l.b16 %v3951
        %v4020 = vunpack.c.l.b16 %v3952
        %v4021 = vunpack.c.l.b16 %v3953
        %v4022 = vunpack.c.l.b16 %v3954
        %v4023 = vunpack.c.l.b16 %v3955
        %v4024 = vunpack.c.l.b16 %v3956
        %v4025 = vunpack.c.l.b16 %v3957
        %v4026 = vunpack.c.l.b16 %v3958
        %v4027 = vunpack.c.l.b16 %v3959
        %v4028 = vunpack.c.l.b16 %v3960
        %v4029 = vunpack.c.l.b16 %v3961
        %v4030 = vunpack.c.l.b16 %v3962
        %v4031 = vunpack.c.l.b16 %v3963
        %v4032 = vunpack.c.l.b16 %v3964
        %v4033 = vunpack.c.l.b16 %v3965
        %v4034 = vunpack.c.l.b16 %v3966
        %v4035 = vunpack.c.l.b16 %v3967
        %v4036 = vunpack.c.l.b16 %v3968
        %v4037 = vunpack.c.l.b16 %v3969
        %v4038 = vunpack.c.l.b16 %v3970
        %v4039 = vunpack.c.l.b16 %v3971
        %v4040 = vpack.c.b16 %v4009, %v4008
        %v4041 = vpack.c.b16 %v4011, %v4010
        %v4042 = vpack.c.b16 %v4013, %v4012
        %v4043 = vpack.c.b16 %v4015, %v4014
        %v4044 = vpack.c.b16 %v4017, %v4016
        %v4045 = vpack.c.b16 %v4019, %v4018
        %v4046 = vpack.c.b16 %v4021, %v4020
        %v4047 = vpack.c.b16 %v4023, %v4022
        %v4048 = vpack.c.b16 %v4025, %v4024
        %v4049 = vpack.c.b16 %v4027, %v4026
        %v4050 = vpack.c.b16 %v4029, %v4028
        %v4051 = vpack.c.b16 %v4031, %v4030
        %v4052 = vpack.c.b16 %v4033, %v4032
        %v4053 = vpack.c.b16 %v4035, %v4034
        %v4054 = vpack.c.b16 %v4037, %v4036
        %v4055 = vpack.c.b16 %v4039, %v4038
        %4072 = vmatpush.bf16.msra.mxu0 %v4047
        %4073 = vmatpush.bf16.msra.mxu0 %v4046
        %4074 = vmatpush.bf16.msra.mxu0 %v4045
        %4075 = vmatpush.bf16.msra.mxu0 %v4044
        %4076 = vmatpush.bf16.msra.mxu0 %v4043
        %4077 = vmatpush.bf16.msra.mxu0 %v4042
        %4078 = vmatpush.bf16.msra.mxu0 %v4041
        %4079 = vmatpush.bf16.msra.mxu0 %v4040
        %4080 = vmatmul.bf16.gmra.mxu0 %v3908
        %v4081 = vpop.f32.mrf.mxu0
        %v4082 = vadd.f32 %v3974, %v4081
        %v4083 = vpop.f32.mrf.mxu0
        %v4084 = vadd.f32 %v3974, %v4083
        %4085 = vmatmul.bf16.gmra.mxu0 %v3910
        %v4086 = vpop.f32.mrf.mxu0
        %v4087 = vadd.f32 %v3974, %v4086
        %v4088 = vpop.f32.mrf.mxu0
        %v4089 = vadd.f32 %v3974, %v4088
        %4090 = vmatmul.bf16.gmra.mxu0 %v3912
        %v4091 = vpop.f32.mrf.mxu0
        %v4092 = vadd.f32 %v3974, %v4091
        %v4093 = vpop.f32.mrf.mxu0
        %v4094 = vadd.f32 %v3974, %v4093
        %4095 = vmatmul.bf16.gmra.mxu0 %v3914
        %v4096 = vpop.f32.mrf.mxu0
        %v4097 = vadd.f32 %v3974, %v4096
        %v4098 = vpop.f32.mrf.mxu0
        %v4099 = vadd.f32 %v3974, %v4098
        %4100 = vmatmul.bf16.gmra.mxu0 %v3916
        %v4101 = vpop.f32.mrf.mxu0
        %v4102 = vadd.f32 %v3974, %v4101
        %v4103 = vpop.f32.mrf.mxu0
        %v4104 = vadd.f32 %v3974, %v4103
        %4105 = vmatmul.bf16.gmra.mxu0 %v3918
        %v4106 = vpop.f32.mrf.mxu0
        %v4107 = vadd.f32 %v3974, %v4106
        %v4108 = vpop.f32.mrf.mxu0
        %v4109 = vadd.f32 %v3974, %v4108
        %4110 = vmatmul.bf16.gmra.mxu0 %v3920
        %v4111 = vpop.f32.mrf.mxu0
        %v4112 = vadd.f32 %v3974, %v4111
        %v4113 = vpop.f32.mrf.mxu0
        %v4114 = vadd.f32 %v3974, %v4113
        %4115 = vmatmul.bf16.gmra.mxu0 %v3922
        %v4116 = vpop.f32.mrf.mxu0
        %v4117 = vadd.f32 %v3974, %v4116
        %v4118 = vpop.f32.mrf.mxu0
        %v4119 = vadd.f32 %v3974, %v4118
        %4120 = vmatmul.bf16.gmra.mxu0 %v3924
        %v4121 = vpop.f32.mrf.mxu0
        %v4122 = vadd.f32 %v3974, %v4121
        %v4123 = vpop.f32.mrf.mxu0
        %v4124 = vadd.f32 %v3974, %v4123
        %4125 = vmatmul.bf16.gmra.mxu0 %v3926
        %v4126 = vpop.f32.mrf.mxu0
        %v4127 = vadd.f32 %v3974, %v4126
        %v4128 = vpop.f32.mrf.mxu0
        %v4129 = vadd.f32 %v3974, %v4128
        %4130 = vmatmul.bf16.gmra.mxu0 %v3928
        %v4131 = vpop.f32.mrf.mxu0
        %v4132 = vadd.f32 %v3974, %v4131
        %v4133 = vpop.f32.mrf.mxu0
        %v4134 = vadd.f32 %v3974, %v4133
        %4135 = vmatmul.bf16.gmra.mxu0 %v3930
        %v4136 = vpop.f32.mrf.mxu0
        %v4137 = vadd.f32 %v3974, %v4136
        %v4138 = vpop.f32.mrf.mxu0
        %v4139 = vadd.f32 %v3974, %v4138
        %4140 = vmatmul.bf16.gmra.mxu0 %v3932
        %v4141 = vpop.f32.mrf.mxu0
        %v4142 = vadd.f32 %v3974, %v4141
        %v4143 = vpop.f32.mrf.mxu0
        %v4144 = vadd.f32 %v3974, %v4143
        %4145 = vmatmul.bf16.gmra.mxu0 %v3934
        %v4146 = vpop.f32.mrf.mxu0
        %v4147 = vadd.f32 %v3974, %v4146
        %v4148 = vpop.f32.mrf.mxu0
        %v4149 = vadd.f32 %v3974, %v4148
        %4150 = vmatmul.bf16.gmra.mxu0 %v3936
        %v4151 = vpop.f32.mrf.mxu0
        %v4152 = vadd.f32 %v3974, %v4151
        %v4153 = vpop.f32.mrf.mxu0
        %v4154 = vadd.f32 %v3974, %v4153
        %4155 = vmatmul.bf16.gmra.mxu0 %v3938
        %v4156 = vpop.f32.mrf.mxu0
        %v4157 = vadd.f32 %v3974, %v4156
        %v4158 = vpop.f32.mrf.mxu0
        %v4159 = vadd.f32 %v3974, %v4158
        %4160 = vdwg.mxu0
        %4161 = vmatpush.bf16.msra.mxu0 %v4055
        %4162 = vmatpush.bf16.msra.mxu0 %v4054
        %4163 = vmatpush.bf16.msra.mxu0 %v4053
        %4164 = vmatpush.bf16.msra.mxu0 %v4052
        %4165 = vmatpush.bf16.msra.mxu0 %v4051
        %4166 = vmatpush.bf16.msra.mxu0 %v4050
        %4167 = vmatpush.bf16.msra.mxu0 %v4049
        %4168 = vmatpush.bf16.msra.mxu0 %v4048
        %4169 = vmatmul.bf16.gmra.mxu0 %v3909
        %v4170 = vpop.f32.mrf.mxu0
        %v4171 = vadd.f32 %v4082, %v4170
        %v4172 = vpop.f32.mrf.mxu0
        %v4173 = vadd.f32 %v4084, %v4172
        %4174 = vmatmul.bf16.gmra.mxu0 %v3911
        %v4175 = vpop.f32.mrf.mxu0
        %v4176 = vadd.f32 %v4087, %v4175
        %v4177 = vpop.f32.mrf.mxu0
        %v4178 = vadd.f32 %v4089, %v4177
        %4179 = vmatmul.bf16.gmra.mxu0 %v3913
        %v4180 = vpop.f32.mrf.mxu0
        %v4181 = vadd.f32 %v4092, %v4180
        %v4182 = vpop.f32.mrf.mxu0
        %v4183 = vadd.f32 %v4094, %v4182
        %4184 = vmatmul.bf16.gmra.mxu0 %v3915
        %v4185 = vpop.f32.mrf.mxu0
        %v4186 = vadd.f32 %v4097, %v4185
        %v4187 = vpop.f32.mrf.mxu0
        %v4188 = vadd.f32 %v4099, %v4187
        %4189 = vmatmul.bf16.gmra.mxu0 %v3917
        %v4190 = vpop.f32.mrf.mxu0
        %v4191 = vadd.f32 %v4102, %v4190
        %v4192 = vpop.f32.mrf.mxu0
        %v4193 = vadd.f32 %v4104, %v4192
        %4194 = vmatmul.bf16.gmra.mxu0 %v3919
        %v4195 = vpop.f32.mrf.mxu0
        %v4196 = vadd.f32 %v4107, %v4195
        %v4197 = vpop.f32.mrf.mxu0
        %v4198 = vadd.f32 %v4109, %v4197
        %4199 = vmatmul.bf16.gmra.mxu0 %v3921
        %v4200 = vpop.f32.mrf.mxu0
        %v4201 = vadd.f32 %v4112, %v4200
        %v4202 = vpop.f32.mrf.mxu0
        %v4203 = vadd.f32 %v4114, %v4202
        %4204 = vmatmul.bf16.gmra.mxu0 %v3923
        %v4205 = vpop.f32.mrf.mxu0
        %v4206 = vadd.f32 %v4117, %v4205
        %v4207 = vpop.f32.mrf.mxu0
        %v4208 = vadd.f32 %v4119, %v4207
        %4209 = vmatmul.bf16.gmra.mxu0 %v3925
        %v4210 = vpop.f32.mrf.mxu0
        %v4211 = vadd.f32 %v4122, %v4210
        %v4212 = vpop.f32.mrf.mxu0
        %v4213 = vadd.f32 %v4124, %v4212
        %4214 = vmatmul.bf16.gmra.mxu0 %v3927
        %v4215 = vpop.f32.mrf.mxu0
        %v4216 = vadd.f32 %v4127, %v4215
        %v4217 = vpop.f32.mrf.mxu0
        %v4218 = vadd.f32 %v4129, %v4217
        %4219 = vmatmul.bf16.gmra.mxu0 %v3929
        %v4220 = vpop.f32.mrf.mxu0
        %v4221 = vadd.f32 %v4132, %v4220
        %v4222 = vpop.f32.mrf.mxu0
        %v4223 = vadd.f32 %v4134, %v4222
        %4224 = vmatmul.bf16.gmra.mxu0 %v3931
        %v4225 = vpop.f32.mrf.mxu0
        %v4226 = vadd.f32 %v4137, %v4225
        %v4227 = vpop.f32.mrf.mxu0
        %v4228 = vadd.f32 %v4139, %v4227
        %4229 = vmatmul.bf16.gmra.mxu0 %v3933
        %v4230 = vpop.f32.mrf.mxu0
        %v4231 = vadd.f32 %v4142, %v4230
        %v4232 = vpop.f32.mrf.mxu0
        %v4233 = vadd.f32 %v4144, %v4232
        %4234 = vmatmul.bf16.gmra.mxu0 %v3935
        %v4235 = vpop.f32.mrf.mxu0
        %v4236 = vadd.f32 %v4147, %v4235
        %v4237 = vpop.f32.mrf.mxu0
        %v4238 = vadd.f32 %v4149, %v4237
        %4239 = vmatmul.bf16.gmra.mxu0 %v3937
        %v4240 = vpop.f32.mrf.mxu0
        %v4241 = vadd.f32 %v4152, %v4240
        %v4242 = vpop.f32.mrf.mxu0
        %v4243 = vadd.f32 %v4154, %v4242
        %4244 = vmatmul.bf16.gmra.mxu0 %v3939
        %v4245 = vpop.f32.mrf.mxu0
        %v4246 = vadd.f32 %v4157, %v4245
        %v4247 = vpop.f32.mrf.mxu0
        %v4248 = vadd.f32 %v4159, %v4247
        %4249 = vdwg.mxu0
        %4250 = vst [vmem:[%s415] sm:$0xff] %v4171
        %4251 = vst [vmem:[%s415 + $0x8] sm:$0xff] %v4173
        %4252 = vst [vmem:[%s415 + $0x10] sm:$0xff] %v4176
        %4253 = vst [vmem:[%s415 + $0x18] sm:$0xff] %v4178
        %4254 = vst [vmem:[%s415 + $0x20] sm:$0xff] %v4181
        %4255 = vst [vmem:[%s415 + $0x28] sm:$0xff] %v4183
        %4256 = vst [vmem:[%s415 + $0x30] sm:$0xff] %v4186
        %4257 = vst [vmem:[%s415 + $0x38] sm:$0xff] %v4188
        %4258 = vst [vmem:[%s415 + $0x40] sm:$0xff] %v4191
        %4259 = vst [vmem:[%s415 + $0x48] sm:$0xff] %v4193
        %4260 = vst [vmem:[%s415 + $0x50] sm:$0xff] %v4196
        %4261 = vst [vmem:[%s415 + $0x58] sm:$0xff] %v4198
        %4262 = vst [vmem:[%s415 + $0x60] sm:$0xff] %v4201
        %4263 = vst [vmem:[%s415 + $0x68] sm:$0xff] %v4203
        %4264 = vst [vmem:[%s415 + $0x70] sm:$0xff] %v4206
        %4265 = vst [vmem:[%s415 + $0x78] sm:$0xff] %v4208
        %4266 = vst [vmem:[%s415 + $0x80] sm:$0xff] %v4211
        %4267 = vst [vmem:[%s415 + $0x88] sm:$0xff] %v4213
        %4268 = vst [vmem:[%s415 + $0x90] sm:$0xff] %v4216
        %4269 = vst [vmem:[%s415 + $0x98] sm:$0xff] %v4218
        %4270 = vst [vmem:[%s415 + $0xa0] sm:$0xff] %v4221
        %4271 = vst [vmem:[%s415 + $0xa8] sm:$0xff] %v4223
        %4272 = vst [vmem:[%s415 + $0xb0] sm:$0xff] %v4226
        %4273 = vst [vmem:[%s415 + $0xb8] sm:$0xff] %v4228
        %4274 = vst [vmem:[%s415 + $0xc0] sm:$0xff] %v4231
        %4275 = vst [vmem:[%s415 + $0xc8] sm:$0xff] %v4233
        %4276 = vst [vmem:[%s415 + $0xd0] sm:$0xff] %v4236
        %4277 = vst [vmem:[%s415 + $0xd8] sm:$0xff] %v4238
        %4278 = vst [vmem:[%s415 + $0xe0] sm:$0xff] %v4241
        %4279 = vst [vmem:[%s415 + $0xe8] sm:$0xff] %v4243
        %4280 = vst [vmem:[%s415 + $0xf0] sm:$0xff] %v4246
        %4281 = vst [vmem:[%s415 + $0xf8] sm:$0xff] %v4248
      $region52: #{hourglass_forward.5} parent=43 // pred_fallthru
        _
      %s4282 = smul.u32 32, %s24
      %p4283 = scmp.lt.s32.totalorder %s23, 3
      %s4284 = scalar_select %p4283, %s23, 3
      %p4285 = scmp.lt.s32.totalorder %s4282, 63
      %s4286 = scalar_select %p4285, %s4282, 63
      %s4287 = smul.addr %s4284, 64
      %s4288 = sadd.s32 %s4286, %s4287
      %s4289 = smul.addr %s4288, 8
      %s4290 = scalar_lea.vmem %s6, %s4289
      // Predicated region
      $region53: #{hourglass_forward.5} parent=43 // pred_check
        %p4291 = pneg %p217
      $region54: #{hourglass_forward.5} parent=43 // pred_check_branch
        %4293 = sbr.rel (%p4291) target = $region56
      $region55: #{hourglass_forward.5} parent=43 // pred_region
        %s4294 = smul.u32 32, %s24
      $region56: #{hourglass_forward.5} parent=43 // pred_fallthru
        _
    $region44: #{hourglass_forward.5} parent=5 // pred_fallthru
      _
    %p4295 = scmp.le.s32.totalorder 2, %s12
    // Predicated region
    $region57: #{hourglass_forward.5} parent=5 // pred_check
      %p4296 = pneg %p4295
    $region58: #{hourglass_forward.5} parent=5 // pred_check_branch
      %4298 = sbr.rel (%p4296) target = $region60
    $region59: #{hourglass_forward.5} parent=5 // pred_region
      %s4299 = ssub.s32 %s12, 2
      // Predicated region
      $region61: #{hourglass_forward.5} parent=59 // pred_check
        %p4300 = pneg %p223
      $region62: #{hourglass_forward.5} parent=59 // pred_check_branch
        %4302 = sbr.rel (%p4300) target = $region64
      $region63: #{hourglass_forward.5} parent=59 // pred_region
        %s4303 = smul.u32 32, %s28
        %p4304 = scmp.lt.s32.totalorder %s27, 3
        %s4305 = scalar_select %p4304, %s27, 3
        %p4306 = scmp.lt.s32.totalorder %s4303, 63
        %s4307 = scalar_select %p4306, %s4303, 63
        %s4308 = smul.addr %s4305, 64
        %s4309 = sadd.s32 %s4307, %s4308
        %s4310 = smul.addr %s4309, 8
        %s4311 = scalar_lea.vmem %s6, %s4310
      $region64: #{hourglass_forward.5} parent=59 // pred_fallthru
        _
    $region60: #{hourglass_forward.5} parent=5 // pred_fallthru
      _
  $region6: #{hourglass_forward.5} parent=0 // loop_footer
    %s16 = sadd.s32 1, %s12
  $region7: #{hourglass_forward.5} parent=0 // loop_footer_branch
    %11 = sbr.rel target = $region3
  $region8: #{hourglass_forward.5} parent=0 // loop_exit
    _

</llo_original>
